<compile_context>
chip_gen: v7x
topology: tpu7x:2x2x1
jax: 0.10.0
libtpu: 0.0.40
codegen_flags: <defaults>
</compile_context>

<pallas_src>
import jax
import jax.numpy as jnp
from jax import lax
from jax.experimental import pallas as pl
from jax.experimental.pallas import tpu as pltpu

# ---- deterministic stand-ins for the module-level globals ------------------
IMG_SIZE = 32
S = (4, 8)                                      # grid size per scale
SCALE = (IMG_SIZE // S[0], IMG_SIZE // S[1])    # pixels per cell: (8, 4)
N = 3                                           # anchors per scale
C = 1                                           # classes
ANCHOR_BOXES = (
    ((1.5, 1.5), (2.0, 3.0), (3.5, 2.5)),       # scale 0, in cell units
    ((0.8, 0.8), (1.2, 2.0), (2.0, 1.2)),       # scale 1, in cell units
)
CH = 1 + 4 + C                                  # [obj, bx, by, lw, lh, cls...]

MAX_BOXES = 8                                   # fixed upper bound on boxes/sample
LANES = 128
SUBLANES = 8

_FLAT = tuple(s * s * N * CH for s in S)        # 288, 1152
# rows per scale, padded to a multiple of 8 sublanes -> (8, 16)
_ROWS = tuple(SUBLANES * pl.cdiv(pl.cdiv(f, LANES), SUBLANES) for f in _FLAT)
_ROW_OFF = (0, _ROWS[0])
_TOTAL_ROWS = sum(_ROWS)                        # 24


def _encode_one_box(tgt, idx_mat, s, scale, anchors, b, count, x, y, w, h):
    """Apply one bbox to one scale's lane-dense target slab (value -> value)."""
    n = len(anchors)

    cx = x / scale
    cy = y / scale
    px = cx.astype(jnp.int32)                   # int() truncation (coords >= 0)
    py = cy.astype(jnp.int32)
    bx = cx - px.astype(jnp.float32)
    by = cy - py.astype(jnp.float32)
    bw = w / scale
    bh = h / scale

    cell_base = (px * s + py) * (n * CH)        # flat offset of this grid cell

    # to_exclude[px, py, a] == 1  <=>  anchor a already positively assigned at
    # this cell  <=>  its class channel (offset +5) is exactly 1 (only written
    # on assignment, never cleared).  Read via masked full-slab reductions
    # (each slab is <= 2 vregs, far cheaper than a dynamic sub-tile gather).
    excluded = []
    for a in range(n):
        m = jnp.where(idx_mat == cell_base + a * CH + 5, tgt, 0.0)
        flag = jnp.sum(jnp.sum(m, axis=1, keepdims=True), axis=0, keepdims=True)
        excluded.append(flag == 1.0)            # (1, 1) bool

    # --- match_anchor_box: IoU of (w, h) boxes anchored at the origin -------
    # NOTE: exact f32 IoU (no approx reciprocal) so the 0.4/0.5 thresholds and
    # the iou == iou_best tie-break stay faithful to the reference.
    ious = []
    for a, (aw, ah) in enumerate(anchors):
        iw = jnp.minimum(jnp.float32(aw), bw)
        ih = jnp.minimum(jnp.float32(ah), bh)
        inter = iw * ih
        iou = inter / (bw * bh + jnp.float32(aw * ah) - inter)
        ious.append(jnp.where(excluded[a], 0.0, iou))   # excluded -> IoU 0, (1,1)

    iou_best = ious[0]
    for a in range(1, n):
        iou_best = jnp.maximum(iou_best, ious[a])

    # first argmax (torch.argmax tie-break: smallest index among the maxima)
    best = jnp.int32(n - 1)
    for a in range(n - 2, -1, -1):
        best = jnp.where(ious[a] == iou_best, jnp.int32(a), best)

    # else: assigned_anchor_box is None; rows b >= count are padding boxes
    valid = (iou_best >= 0.4) & (b < count)

    aw_best = jnp.float32(anchors[0][0])
    ah_best = jnp.float32(anchors[0][1])
    for a in range(1, n):
        aw_best = jnp.where(best == a, jnp.float32(anchors[a][0]), aw_best)
        ah_best = jnp.where(best == a, jnp.float32(anchors[a][1]), ah_best)

    lw = jnp.log(bw / aw_best + 1e-6)
    lh = jnp.log(bh / ah_best + 1e-6)

    # --- positive assignment: channels 0..5 of the best anchor ---------------
    k = idx_mat - (cell_base + best * CH)       # per-element channel offset
    pos_val = jnp.where(k == 1, bx,
              jnp.where(k == 2, by,
              jnp.where(k == 3, lw,
              jnp.where(k == 4, lh, 1.0))))     # k == 0 (obj) / k == 5 (cls) -> 1
    tgt = jnp.where(valid & (k >= 0) & (k < 6), pos_val, tgt)

    # --- ignore anchors: IoU > 0.5 and IoU != best IoU ------------------------
    ign = [(ious[a] > 0.5) & (ious[a] != iou_best) for a in range(n)]
    n_ign = ign[0].astype(jnp.int32)
    for a in range(1, n):
        n_ign = n_ign + ign[a].astype(jnp.int32)
    # PyTorch quirk: a single ignore index squeezes to a 0-d tensor whose
    # iteration raises and is swallowed by try/except, so ignores only apply
    # when there are >= 2 of them.
    apply_ignore = valid & (n_ign >= 2)
    hit_any = ign[0] & (idx_mat == cell_base + 0 * CH)
    for a in range(1, n):
        hit_any = hit_any | (ign[a] & (idx_mat == cell_base + a * CH))
    tgt = jnp.where(apply_ignore & hit_any, -1.0, tgt)

    return tgt


def _fused_kernel(count_ref, bboxes_ref, out_ref):
    count = count_ref[0]

    # hoisted loop-invariant flat-index matrices (one per scale)
    idx_mats = []
    for rows in _ROWS:
        r = lax.broadcasted_iota(jnp.int32, (rows, LANES), 0)
        c = lax.broadcasted_iota(jnp.int32, (rows, LANES), 1)
        idx_mats.append(r * LANES + c)

    def body(b, tgts):
        x = bboxes_ref[4 * b + 0]
        y = bboxes_ref[4 * b + 1]
        w = bboxes_ref[4 * b + 2]
        h = bboxes_ref[4 * b + 3]
        return tuple(
            _encode_one_box(tgts[i], idx_mats[i], S[i], float(SCALE[i]),
                            ANCHOR_BOXES[i], b, count, x, y, w, h)
            for i in range(len(S)))

    init = tuple(jnp.zeros((rows, LANES), jnp.float32) for rows in _ROWS)
    tgt0, tgt1 = lax.fori_loop(0, MAX_BOXES, body, init, unroll=True)

    # single lane-dense, sublane-aligned output store (8 + 16 rows)
    out_ref[0:_ROWS[0], :] = tgt0
    out_ref[_ROWS[0]:, :] = tgt1


@jax.jit
def _encode_targets(count, flat_bboxes):
    slab = pl.pallas_call(
        _fused_kernel,
        out_shape=jax.ShapeDtypeStruct((_TOTAL_ROWS, LANES), jnp.float32),
        in_specs=[pl.BlockSpec(memory_space=pltpu.MemorySpace.SMEM),
                  pl.BlockSpec(memory_space=pltpu.MemorySpace.SMEM)],
        out_specs=pl.BlockSpec(memory_space=pltpu.MemorySpace.VMEM),
    )(count, flat_bboxes)

    targets = []
    for i in range(len(S)):
        s = S[i]
        part = slab[_ROW_OFF[i]:_ROW_OFF[i] + _ROWS[i]]
        targets.append(part.reshape(-1)[: _FLAT[i]].reshape(s, s, N, CH))
    return tuple(targets)


def final_transform(sample):
    """JAX/Pallas equivalent of FinalTranform.forward(sample)."""
    image = sample["image"]                     # passed through untouched
    bboxes = jnp.asarray(sample["bboxes"], jnp.float32)
    # labels are accepted (the reference iterates them) but never used: the
    # class channel (index 5) is always set to 1.
    _ = sample["labels"]

    n_boxes = bboxes.shape[0]
    if n_boxes > MAX_BOXES:
        raise ValueError(f"at most {MAX_BOXES} boxes supported, got {n_boxes}")

    padded = jnp.zeros((MAX_BOXES, 4), jnp.float32).at[:n_boxes, :].set(bboxes)
    count = jnp.full((1,), n_boxes, jnp.int32)

    targets = _encode_targets(count, padded.reshape(-1))
    return image, list(targets)


if __name__ == "__main__":
    key = jax.random.PRNGKey(0)
    k_xy, k_wh, k_img = jax.random.split(key, 3)

    n_boxes = 4
    xy = jax.random.uniform(k_xy, (n_boxes, 2), jnp.float32,
                            minval=0.0, maxval=IMG_SIZE - 1.0)
    wh = jax.random.uniform(k_wh, (n_boxes, 2), jnp.float32,
                            minval=3.0, maxval=20.0)
    bboxes = jnp.concatenate([xy, wh], axis=1)          # (4, 4): x, y, w, h
    labels = jnp.zeros((n_boxes,), jnp.int32)
    image = jax.random.normal(k_img, (3, IMG_SIZE, IMG_SIZE), jnp.float32)

    sample = {"image": image, "bboxes": bboxes, "labels": labels}
    image_out, targets = final_transform(sample)

    jax.block_until_ready(image_out)
    for t in targets:
        jax.block_until_ready(t)

    assert image_out.shape == (3, IMG_SIZE, IMG_SIZE)
    assert [t.shape for t in targets] == [(S[i], S[i], N, CH) for i in range(len(S))]
    assert all(bool(jnp.isfinite(t).all()) for t in targets)
    print("KERNEL_OK")
</pallas_src>

<mosaic_0001>
module attributes {stable_mosaic.version = 11 : i64} {
  func.func @_fused_kernel(%arg0: memref<1xi32, #tpu.memory_space<smem>>, %arg1: memref<32xf32, #tpu.memory_space<smem>>, %arg2: memref<24x128xf32, #tpu.memory_space<vmem>>) attributes {dimension_semantics = [], scalar_prefetch = 0 : i64, scratch_operands = 0 : i64, tpu.core_type = #tpu.core_type<tc>} {
    %c0 = arith.constant 0 : index
    %0 = memref.load %arg0[%c0] : memref<1xi32, #tpu.memory_space<smem>>
    %1 = tpu.iota {dimensions = array<i32: 0>} : vector<8x128xi32>
    %2 = tpu.iota {dimensions = array<i32: 1>} : vector<8x128xi32>
    %c128_i32 = arith.constant 128 : i32
    %3 = vector.broadcast %c128_i32 : i32 to vector<8x128xi32>
    %4 = arith.muli %1, %3 : vector<8x128xi32>
    %5 = arith.addi %4, %2 : vector<8x128xi32>
    %6 = tpu.iota {dimensions = array<i32: 0>} : vector<16x128xi32>
    %7 = tpu.iota {dimensions = array<i32: 1>} : vector<16x128xi32>
    %c128_i32_0 = arith.constant 128 : i32
    %8 = vector.broadcast %c128_i32_0 : i32 to vector<16x128xi32>
    %9 = arith.muli %6, %8 : vector<16x128xi32>
    %10 = arith.addi %9, %7 : vector<16x128xi32>
    %cst = arith.constant 0.000000e+00 : f32
    %11 = vector.broadcast %cst : f32 to vector<8x128xf32>
    %cst_1 = arith.constant 0.000000e+00 : f32
    %12 = vector.broadcast %cst_1 : f32 to vector<16x128xf32>
    %c0_i32 = arith.constant 0 : i32
    %c4_i32 = arith.constant 4 : i32
    %13 = arith.muli %c4_i32, %c0_i32 : i32
    %c0_i32_2 = arith.constant 0 : i32
    %14 = arith.addi %13, %c0_i32_2 : i32
    %15 = arith.index_cast %14 : i32 to index
    %16 = memref.load %arg1[%15] : memref<32xf32, #tpu.memory_space<smem>>
    %c4_i32_3 = arith.constant 4 : i32
    %17 = arith.muli %c4_i32_3, %c0_i32 : i32
    %c1_i32 = arith.constant 1 : i32
    %18 = arith.addi %17, %c1_i32 : i32
    %19 = arith.index_cast %18 : i32 to index
    %20 = memref.load %arg1[%19] : memref<32xf32, #tpu.memory_space<smem>>
    %c4_i32_4 = arith.constant 4 : i32
    %21 = arith.muli %c4_i32_4, %c0_i32 : i32
    %c2_i32 = arith.constant 2 : i32
    %22 = arith.addi %21, %c2_i32 : i32
    %23 = arith.index_cast %22 : i32 to index
    %24 = memref.load %arg1[%23] : memref<32xf32, #tpu.memory_space<smem>>
    %c4_i32_5 = arith.constant 4 : i32
    %25 = arith.muli %c4_i32_5, %c0_i32 : i32
    %c3_i32 = arith.constant 3 : i32
    %26 = arith.addi %25, %c3_i32 : i32
    %27 = arith.index_cast %26 : i32 to index
    %28 = memref.load %arg1[%27] : memref<32xf32, #tpu.memory_space<smem>>
    %cst_6 = arith.constant 8.000000e+00 : f32
    %29 = arith.divf %16, %cst_6 : f32
    %cst_7 = arith.constant 8.000000e+00 : f32
    %30 = arith.divf %20, %cst_7 : f32
    %31 = arith.fptosi %29 : f32 to i32
    %32 = arith.fptosi %30 : f32 to i32
    %33 = arith.sitofp %31 : i32 to f32
    %34 = arith.subf %29, %33 : f32
    %35 = arith.sitofp %32 : i32 to f32
    %36 = arith.subf %30, %35 : f32
    %cst_8 = arith.constant 8.000000e+00 : f32
    %37 = arith.divf %24, %cst_8 : f32
    %cst_9 = arith.constant 8.000000e+00 : f32
    %38 = arith.divf %28, %cst_9 : f32
    %c4_i32_10 = arith.constant 4 : i32
    %39 = arith.muli %31, %c4_i32_10 : i32
    %40 = arith.addi %39, %32 : i32
    %c18_i32 = arith.constant 18 : i32
    %41 = arith.muli %40, %c18_i32 : i32
    %c0_i32_11 = arith.constant 0 : i32
    %42 = arith.addi %41, %c0_i32_11 : i32
    %c5_i32 = arith.constant 5 : i32
    %43 = arith.addi %42, %c5_i32 : i32
    %44 = vector.broadcast %43 : i32 to vector<8x128xi32>
    %45 = arith.cmpi eq, %5, %44 : vector<8x128xi32>
    %cst_12 = arith.constant 0.000000e+00 : f32
    %46 = vector.broadcast %cst_12 : f32 to vector<8x128xf32>
    %47 = arith.select %45, %11, %46 : vector<8x128xi1>, vector<8x128xf32>
    %cst_13 = arith.constant dense<0.000000e+00> : vector<8xf32>
    %48 = vector.multi_reduction <add>, %47, %cst_13 [1] : vector<8x128xf32> to vector<8xf32>
    %49 = vector.shape_cast %48 : vector<8xf32> to vector<8x1xf32>
    %cst_14 = arith.constant dense<0.000000e+00> : vector<1xf32>
    %50 = vector.multi_reduction <add>, %49, %cst_14 [0] : vector<8x1xf32> to vector<1xf32>
    %51 = vector.shape_cast %50 : vector<1xf32> to vector<1x1xf32>
    %cst_15 = arith.constant 1.000000e+00 : f32
    %52 = vector.broadcast %cst_15 : f32 to vector<1x1xf32>
    %53 = arith.cmpf oeq, %51, %52 : vector<1x1xf32>
    %c6_i32 = arith.constant 6 : i32
    %54 = arith.addi %41, %c6_i32 : i32
    %c5_i32_16 = arith.constant 5 : i32
    %55 = arith.addi %54, %c5_i32_16 : i32
    %56 = vector.broadcast %55 : i32 to vector<8x128xi32>
    %57 = arith.cmpi eq, %5, %56 : vector<8x128xi32>
    %cst_17 = arith.constant 0.000000e+00 : f32
    %58 = vector.broadcast %cst_17 : f32 to vector<8x128xf32>
    %59 = arith.select %57, %11, %58 : vector<8x128xi1>, vector<8x128xf32>
    %cst_18 = arith.constant dense<0.000000e+00> : vector<8xf32>
    %60 = vector.multi_reduction <add>, %59, %cst_18 [1] : vector<8x128xf32> to vector<8xf32>
    %61 = vector.shape_cast %60 : vector<8xf32> to vector<8x1xf32>
    %cst_19 = arith.constant dense<0.000000e+00> : vector<1xf32>
    %62 = vector.multi_reduction <add>, %61, %cst_19 [0] : vector<8x1xf32> to vector<1xf32>
    %63 = vector.shape_cast %62 : vector<1xf32> to vector<1x1xf32>
    %cst_20 = arith.constant 1.000000e+00 : f32
    %64 = vector.broadcast %cst_20 : f32 to vector<1x1xf32>
    %65 = arith.cmpf oeq, %63, %64 : vector<1x1xf32>
    %c12_i32 = arith.constant 12 : i32
    %66 = arith.addi %41, %c12_i32 : i32
    %c5_i32_21 = arith.constant 5 : i32
    %67 = arith.addi %66, %c5_i32_21 : i32
    %68 = vector.broadcast %67 : i32 to vector<8x128xi32>
    %69 = arith.cmpi eq, %5, %68 : vector<8x128xi32>
    %cst_22 = arith.constant 0.000000e+00 : f32
    %70 = vector.broadcast %cst_22 : f32 to vector<8x128xf32>
    %71 = arith.select %69, %11, %70 : vector<8x128xi1>, vector<8x128xf32>
    %cst_23 = arith.constant dense<0.000000e+00> : vector<8xf32>
    %72 = vector.multi_reduction <add>, %71, %cst_23 [1] : vector<8x128xf32> to vector<8xf32>
    %73 = vector.shape_cast %72 : vector<8xf32> to vector<8x1xf32>
    %cst_24 = arith.constant dense<0.000000e+00> : vector<1xf32>
    %74 = vector.multi_reduction <add>, %73, %cst_24 [0] : vector<8x1xf32> to vector<1xf32>
    %75 = vector.shape_cast %74 : vector<1xf32> to vector<1x1xf32>
    %cst_25 = arith.constant 1.000000e+00 : f32
    %76 = vector.broadcast %cst_25 : f32 to vector<1x1xf32>
    %77 = arith.cmpf oeq, %75, %76 : vector<1x1xf32>
    %cst_26 = arith.constant 1.500000e+00 : f32
    %78 = arith.minimumf %cst_26, %37 : f32
    %cst_27 = arith.constant 1.500000e+00 : f32
    %79 = arith.minimumf %cst_27, %38 : f32
    %80 = arith.mulf %78, %79 : f32
    %81 = arith.mulf %37, %38 : f32
    %cst_28 = arith.constant 2.250000e+00 : f32
    %82 = arith.addf %81, %cst_28 : f32
    %83 = arith.subf %82, %80 : f32
    %84 = arith.divf %80, %83 : f32
    %cst_29 = arith.constant 0.000000e+00 : f32
    %85 = vector.broadcast %cst_29 : f32 to vector<1x1xf32>
    %86 = vector.broadcast %84 : f32 to vector<1x1xf32>
    %87 = arith.select %53, %85, %86 : vector<1x1xi1>, vector<1x1xf32>
    %cst_30 = arith.constant 2.000000e+00 : f32
    %88 = arith.minimumf %cst_30, %37 : f32
    %cst_31 = arith.constant 3.000000e+00 : f32
    %89 = arith.minimumf %cst_31, %38 : f32
    %90 = arith.mulf %88, %89 : f32
    %91 = arith.mulf %37, %38 : f32
    %cst_32 = arith.constant 6.000000e+00 : f32
    %92 = arith.addf %91, %cst_32 : f32
    %93 = arith.subf %92, %90 : f32
    %94 = arith.divf %90, %93 : f32
    %cst_33 = arith.constant 0.000000e+00 : f32
    %95 = vector.broadcast %cst_33 : f32 to vector<1x1xf32>
    %96 = vector.broadcast %94 : f32 to vector<1x1xf32>
    %97 = arith.select %65, %95, %96 : vector<1x1xi1>, vector<1x1xf32>
    %cst_34 = arith.constant 3.500000e+00 : f32
    %98 = arith.minimumf %cst_34, %37 : f32
    %cst_35 = arith.constant 2.500000e+00 : f32
    %99 = arith.minimumf %cst_35, %38 : f32
    %100 = arith.mulf %98, %99 : f32
    %101 = arith.mulf %37, %38 : f32
    %cst_36 = arith.constant 8.750000e+00 : f32
    %102 = arith.addf %101, %cst_36 : f32
    %103 = arith.subf %102, %100 : f32
    %104 = arith.divf %100, %103 : f32
    %cst_37 = arith.constant 0.000000e+00 : f32
    %105 = vector.broadcast %cst_37 : f32 to vector<1x1xf32>
    %106 = vector.broadcast %104 : f32 to vector<1x1xf32>
    %107 = arith.select %77, %105, %106 : vector<1x1xi1>, vector<1x1xf32>
    %108 = arith.maximumf %87, %97 : vector<1x1xf32>
    %109 = arith.maximumf %108, %107 : vector<1x1xf32>
    %110 = arith.cmpf oeq, %97, %109 : vector<1x1xf32>
    %c1_i32_38 = arith.constant 1 : i32
    %c2_i32_39 = arith.constant 2 : i32
    %111 = vector.broadcast %c1_i32_38 : i32 to vector<1x1xi32>
    %112 = vector.broadcast %c2_i32_39 : i32 to vector<1x1xi32>
    %113 = arith.select %110, %111, %112 : vector<1x1xi1>, vector<1x1xi32>
    %114 = arith.cmpf oeq, %87, %109 : vector<1x1xf32>
    %c0_i32_40 = arith.constant 0 : i32
    %115 = vector.broadcast %c0_i32_40 : i32 to vector<1x1xi32>
    %116 = arith.select %114, %115, %113 : vector<1x1xi1>, vector<1x1xi32>
    %cst_41 = arith.constant 4.000000e-01 : f32
    %117 = vector.broadcast %cst_41 : f32 to vector<1x1xf32>
    %118 = arith.cmpf oge, %109, %117 : vector<1x1xf32>
    %119 = arith.cmpi slt, %c0_i32, %0 : i32
    %120 = vector.broadcast %119 : i1 to vector<1x1xi1>
    %121 = arith.andi %118, %120 : vector<1x1xi1>
    %c1_i32_42 = arith.constant 1 : i32
    %122 = vector.broadcast %c1_i32_42 : i32 to vector<1x1xi32>
    %123 = arith.cmpi eq, %116, %122 : vector<1x1xi32>
    %cst_43 = arith.constant 2.000000e+00 : f32
    %cst_44 = arith.constant 1.500000e+00 : f32
    %124 = vector.broadcast %cst_43 : f32 to vector<1x1xf32>
    %125 = vector.broadcast %cst_44 : f32 to vector<1x1xf32>
    %126 = arith.select %123, %124, %125 : vector<1x1xi1>, vector<1x1xf32>
    %c1_i32_45 = arith.constant 1 : i32
    %127 = vector.broadcast %c1_i32_45 : i32 to vector<1x1xi32>
    %128 = arith.cmpi eq, %116, %127 : vector<1x1xi32>
    %cst_46 = arith.constant 3.000000e+00 : f32
    %cst_47 = arith.constant 1.500000e+00 : f32
    %129 = vector.broadcast %cst_46 : f32 to vector<1x1xf32>
    %130 = vector.broadcast %cst_47 : f32 to vector<1x1xf32>
    %131 = arith.select %128, %129, %130 : vector<1x1xi1>, vector<1x1xf32>
    %c2_i32_48 = arith.constant 2 : i32
    %132 = vector.broadcast %c2_i32_48 : i32 to vector<1x1xi32>
    %133 = arith.cmpi eq, %116, %132 : vector<1x1xi32>
    %cst_49 = arith.constant 3.500000e+00 : f32
    %134 = vector.broadcast %cst_49 : f32 to vector<1x1xf32>
    %135 = arith.select %133, %134, %126 : vector<1x1xi1>, vector<1x1xf32>
    %c2_i32_50 = arith.constant 2 : i32
    %136 = vector.broadcast %c2_i32_50 : i32 to vector<1x1xi32>
    %137 = arith.cmpi eq, %116, %136 : vector<1x1xi32>
    %cst_51 = arith.constant 2.500000e+00 : f32
    %138 = vector.broadcast %cst_51 : f32 to vector<1x1xf32>
    %139 = arith.select %137, %138, %131 : vector<1x1xi1>, vector<1x1xf32>
    %140 = vector.broadcast %37 : f32 to vector<1x1xf32>
    %141 = arith.divf %140, %135 : vector<1x1xf32>
    %cst_52 = arith.constant 9.99999997E-7 : f32
    %142 = vector.broadcast %cst_52 : f32 to vector<1x1xf32>
    %143 = arith.addf %141, %142 : vector<1x1xf32>
    %144 = math.log %143 : vector<1x1xf32>
    %145 = vector.broadcast %38 : f32 to vector<1x1xf32>
    %146 = arith.divf %145, %139 : vector<1x1xf32>
    %cst_53 = arith.constant 9.99999997E-7 : f32
    %147 = vector.broadcast %cst_53 : f32 to vector<1x1xf32>
    %148 = arith.addf %146, %147 : vector<1x1xf32>
    %149 = math.log %148 : vector<1x1xf32>
    %c6_i32_54 = arith.constant 6 : i32
    %150 = vector.broadcast %c6_i32_54 : i32 to vector<1x1xi32>
    %151 = arith.muli %116, %150 : vector<1x1xi32>
    %152 = vector.broadcast %41 : i32 to vector<1x1xi32>
    %153 = arith.addi %152, %151 : vector<1x1xi32>
    %154 = vector.broadcast %153 : vector<1x1xi32> to vector<8x128xi32>
    %155 = arith.subi %5, %154 : vector<8x128xi32>
    %c1_i32_55 = arith.constant 1 : i32
    %156 = vector.broadcast %c1_i32_55 : i32 to vector<8x128xi32>
    %157 = arith.cmpi eq, %155, %156 : vector<8x128xi32>
    %c2_i32_56 = arith.constant 2 : i32
    %158 = vector.broadcast %c2_i32_56 : i32 to vector<8x128xi32>
    %159 = arith.cmpi eq, %155, %158 : vector<8x128xi32>
    %c3_i32_57 = arith.constant 3 : i32
    %160 = vector.broadcast %c3_i32_57 : i32 to vector<8x128xi32>
    %161 = arith.cmpi eq, %155, %160 : vector<8x128xi32>
    %c4_i32_58 = arith.constant 4 : i32
    %162 = vector.broadcast %c4_i32_58 : i32 to vector<8x128xi32>
    %163 = arith.cmpi eq, %155, %162 : vector<8x128xi32>
    %cst_59 = arith.constant 1.000000e+00 : f32
    %164 = vector.shape_cast %149 : vector<1x1xf32> to vector<1x1xf32>
    %165 = vector.broadcast %164 : vector<1x1xf32> to vector<8x128xf32>
    %166 = vector.broadcast %cst_59 : f32 to vector<8x128xf32>
    %167 = arith.select %163, %165, %166 : vector<8x128xi1>, vector<8x128xf32>
    %168 = vector.shape_cast %144 : vector<1x1xf32> to vector<1x1xf32>
    %169 = vector.broadcast %168 : vector<1x1xf32> to vector<8x128xf32>
    %170 = arith.select %161, %169, %167 : vector<8x128xi1>, vector<8x128xf32>
    %171 = vector.broadcast %36 : f32 to vector<8x128xf32>
    %172 = arith.select %159, %171, %170 : vector<8x128xi1>, vector<8x128xf32>
    %173 = vector.broadcast %34 : f32 to vector<8x128xf32>
    %174 = arith.select %157, %173, %172 : vector<8x128xi1>, vector<8x128xf32>
    %c0_i32_60 = arith.constant 0 : i32
    %175 = vector.broadcast %c0_i32_60 : i32 to vector<8x128xi32>
    %176 = arith.cmpi sge, %155, %175 : vector<8x128xi32>
    %177 = vector.broadcast %121 : vector<1x1xi1> to vector<8x128xi1>
    %178 = arith.andi %177, %176 : vector<8x128xi1>
    %c6_i32_61 = arith.constant 6 : i32
    %179 = vector.broadcast %c6_i32_61 : i32 to vector<8x128xi32>
    %180 = arith.cmpi slt, %155, %179 : vector<8x128xi32>
    %181 = arith.andi %178, %180 : vector<8x128xi1>
    %182 = arith.select %181, %174, %11 : vector<8x128xi1>, vector<8x128xf32>
    %cst_62 = arith.constant 5.000000e-01 : f32
    %183 = vector.broadcast %cst_62 : f32 to vector<1x1xf32>
    %184 = arith.cmpf ogt, %87, %183 : vector<1x1xf32>
    %185 = arith.cmpf one, %87, %109 : vector<1x1xf32>
    %186 = arith.andi %184, %185 : vector<1x1xi1>
    %cst_63 = arith.constant 5.000000e-01 : f32
    %187 = vector.broadcast %cst_63 : f32 to vector<1x1xf32>
    %188 = arith.cmpf ogt, %97, %187 : vector<1x1xf32>
    %189 = arith.cmpf one, %97, %109 : vector<1x1xf32>
    %190 = arith.andi %188, %189 : vector<1x1xi1>
    %cst_64 = arith.constant 5.000000e-01 : f32
    %191 = vector.broadcast %cst_64 : f32 to vector<1x1xf32>
    %192 = arith.cmpf ogt, %107, %191 : vector<1x1xf32>
    %193 = arith.cmpf one, %107, %109 : vector<1x1xf32>
    %194 = arith.andi %192, %193 : vector<1x1xi1>
    %195 = arith.extui %186 : vector<1x1xi1> to vector<1x1xi32>
    %196 = arith.extui %190 : vector<1x1xi1> to vector<1x1xi32>
    %197 = arith.addi %195, %196 : vector<1x1xi32>
    %198 = arith.extui %194 : vector<1x1xi1> to vector<1x1xi32>
    %199 = arith.addi %197, %198 : vector<1x1xi32>
    %c2_i32_65 = arith.constant 2 : i32
    %200 = vector.broadcast %c2_i32_65 : i32 to vector<1x1xi32>
    %201 = arith.cmpi sge, %199, %200 : vector<1x1xi32>
    %202 = arith.andi %121, %201 : vector<1x1xi1>
    %c0_i32_66 = arith.constant 0 : i32
    %203 = arith.addi %41, %c0_i32_66 : i32
    %204 = vector.broadcast %203 : i32 to vector<8x128xi32>
    %205 = arith.cmpi eq, %5, %204 : vector<8x128xi32>
    %206 = vector.broadcast %186 : vector<1x1xi1> to vector<8x128xi1>
    %207 = arith.andi %206, %205 : vector<8x128xi1>
    %c6_i32_67 = arith.constant 6 : i32
    %208 = arith.addi %41, %c6_i32_67 : i32
    %209 = vector.broadcast %208 : i32 to vector<8x128xi32>
    %210 = arith.cmpi eq, %5, %209 : vector<8x128xi32>
    %211 = vector.broadcast %190 : vector<1x1xi1> to vector<8x128xi1>
    %212 = arith.andi %211, %210 : vector<8x128xi1>
    %213 = arith.ori %207, %212 : vector<8x128xi1>
    %c12_i32_68 = arith.constant 12 : i32
    %214 = arith.addi %41, %c12_i32_68 : i32
    %215 = vector.broadcast %214 : i32 to vector<8x128xi32>
    %216 = arith.cmpi eq, %5, %215 : vector<8x128xi32>
    %217 = vector.broadcast %194 : vector<1x1xi1> to vector<8x128xi1>
    %218 = arith.andi %217, %216 : vector<8x128xi1>
    %219 = arith.ori %213, %218 : vector<8x128xi1>
    %220 = vector.broadcast %202 : vector<1x1xi1> to vector<8x128xi1>
    %221 = arith.andi %220, %219 : vector<8x128xi1>
    %cst_69 = arith.constant -1.000000e+00 : f32
    %222 = vector.broadcast %cst_69 : f32 to vector<8x128xf32>
    %223 = arith.select %221, %222, %182 : vector<8x128xi1>, vector<8x128xf32>
    %cst_70 = arith.constant 4.000000e+00 : f32
    %224 = arith.divf %16, %cst_70 : f32
    %cst_71 = arith.constant 4.000000e+00 : f32
    %225 = arith.divf %20, %cst_71 : f32
    %226 = arith.fptosi %224 : f32 to i32
    %227 = arith.fptosi %225 : f32 to i32
    %228 = arith.sitofp %226 : i32 to f32
    %229 = arith.subf %224, %228 : f32
    %230 = arith.sitofp %227 : i32 to f32
    %231 = arith.subf %225, %230 : f32
    %cst_72 = arith.constant 4.000000e+00 : f32
    %232 = arith.divf %24, %cst_72 : f32
    %cst_73 = arith.constant 4.000000e+00 : f32
    %233 = arith.divf %28, %cst_73 : f32
    %c8_i32 = arith.constant 8 : i32
    %234 = arith.muli %226, %c8_i32 : i32
    %235 = arith.addi %234, %227 : i32
    %c18_i32_74 = arith.constant 18 : i32
    %236 = arith.muli %235, %c18_i32_74 : i32
    %c0_i32_75 = arith.constant 0 : i32
    %237 = arith.addi %236, %c0_i32_75 : i32
    %c5_i32_76 = arith.constant 5 : i32
    %238 = arith.addi %237, %c5_i32_76 : i32
    %239 = vector.broadcast %238 : i32 to vector<16x128xi32>
    %240 = arith.cmpi eq, %10, %239 : vector<16x128xi32>
    %cst_77 = arith.constant 0.000000e+00 : f32
    %241 = vector.broadcast %cst_77 : f32 to vector<16x128xf32>
    %242 = arith.select %240, %12, %241 : vector<16x128xi1>, vector<16x128xf32>
    %cst_78 = arith.constant dense<0.000000e+00> : vector<16xf32>
    %243 = vector.multi_reduction <add>, %242, %cst_78 [1] : vector<16x128xf32> to vector<16xf32>
    %244 = vector.shape_cast %243 : vector<16xf32> to vector<16x1xf32>
    %cst_79 = arith.constant dense<0.000000e+00> : vector<1xf32>
    %245 = vector.multi_reduction <add>, %244, %cst_79 [0] : vector<16x1xf32> to vector<1xf32>
    %246 = vector.shape_cast %245 : vector<1xf32> to vector<1x1xf32>
    %cst_80 = arith.constant 1.000000e+00 : f32
    %247 = vector.broadcast %cst_80 : f32 to vector<1x1xf32>
    %248 = arith.cmpf oeq, %246, %247 : vector<1x1xf32>
    %c6_i32_81 = arith.constant 6 : i32
    %249 = arith.addi %236, %c6_i32_81 : i32
    %c5_i32_82 = arith.constant 5 : i32
    %250 = arith.addi %249, %c5_i32_82 : i32
    %251 = vector.broadcast %250 : i32 to vector<16x128xi32>
    %252 = arith.cmpi eq, %10, %251 : vector<16x128xi32>
    %cst_83 = arith.constant 0.000000e+00 : f32
    %253 = vector.broadcast %cst_83 : f32 to vector<16x128xf32>
    %254 = arith.select %252, %12, %253 : vector<16x128xi1>, vector<16x128xf32>
    %cst_84 = arith.constant dense<0.000000e+00> : vector<16xf32>
    %255 = vector.multi_reduction <add>, %254, %cst_84 [1] : vector<16x128xf32> to vector<16xf32>
    %256 = vector.shape_cast %255 : vector<16xf32> to vector<16x1xf32>
    %cst_85 = arith.constant dense<0.000000e+00> : vector<1xf32>
    %257 = vector.multi_reduction <add>, %256, %cst_85 [0] : vector<16x1xf32> to vector<1xf32>
    %258 = vector.shape_cast %257 : vector<1xf32> to vector<1x1xf32>
    %cst_86 = arith.constant 1.000000e+00 : f32
    %259 = vector.broadcast %cst_86 : f32 to vector<1x1xf32>
    %260 = arith.cmpf oeq, %258, %259 : vector<1x1xf32>
    %c12_i32_87 = arith.constant 12 : i32
    %261 = arith.addi %236, %c12_i32_87 : i32
    %c5_i32_88 = arith.constant 5 : i32
    %262 = arith.addi %261, %c5_i32_88 : i32
    %263 = vector.broadcast %262 : i32 to vector<16x128xi32>
    %264 = arith.cmpi eq, %10, %263 : vector<16x128xi32>
    %cst_89 = arith.constant 0.000000e+00 : f32
    %265 = vector.broadcast %cst_89 : f32 to vector<16x128xf32>
    %266 = arith.select %264, %12, %265 : vector<16x128xi1>, vector<16x128xf32>
    %cst_90 = arith.constant dense<0.000000e+00> : vector<16xf32>
    %267 = vector.multi_reduction <add>, %266, %cst_90 [1] : vector<16x128xf32> to vector<16xf32>
    %268 = vector.shape_cast %267 : vector<16xf32> to vector<16x1xf32>
    %cst_91 = arith.constant dense<0.000000e+00> : vector<1xf32>
    %269 = vector.multi_reduction <add>, %268, %cst_91 [0] : vector<16x1xf32> to vector<1xf32>
    %270 = vector.shape_cast %269 : vector<1xf32> to vector<1x1xf32>
    %cst_92 = arith.constant 1.000000e+00 : f32
    %271 = vector.broadcast %cst_92 : f32 to vector<1x1xf32>
    %272 = arith.cmpf oeq, %270, %271 : vector<1x1xf32>
    %cst_93 = arith.constant 8.000000e-01 : f32
    %273 = arith.minimumf %cst_93, %232 : f32
    %cst_94 = arith.constant 8.000000e-01 : f32
    %274 = arith.minimumf %cst_94, %233 : f32
    %275 = arith.mulf %273, %274 : f32
    %276 = arith.mulf %232, %233 : f32
    %cst_95 = arith.constant 6.400000e-01 : f32
    %277 = arith.addf %276, %cst_95 : f32
    %278 = arith.subf %277, %275 : f32
    %279 = arith.divf %275, %278 : f32
    %cst_96 = arith.constant 0.000000e+00 : f32
    %280 = vector.broadcast %cst_96 : f32 to vector<1x1xf32>
    %281 = vector.broadcast %279 : f32 to vector<1x1xf32>
    %282 = arith.select %248, %280, %281 : vector<1x1xi1>, vector<1x1xf32>
    %cst_97 = arith.constant 1.200000e+00 : f32
    %283 = arith.minimumf %cst_97, %232 : f32
    %cst_98 = arith.constant 2.000000e+00 : f32
    %284 = arith.minimumf %cst_98, %233 : f32
    %285 = arith.mulf %283, %284 : f32
    %286 = arith.mulf %232, %233 : f32
    %cst_99 = arith.constant 2.400000e+00 : f32
    %287 = arith.addf %286, %cst_99 : f32
    %288 = arith.subf %287, %285 : f32
    %289 = arith.divf %285, %288 : f32
    %cst_100 = arith.constant 0.000000e+00 : f32
    %290 = vector.broadcast %cst_100 : f32 to vector<1x1xf32>
    %291 = vector.broadcast %289 : f32 to vector<1x1xf32>
    %292 = arith.select %260, %290, %291 : vector<1x1xi1>, vector<1x1xf32>
    %cst_101 = arith.constant 2.000000e+00 : f32
    %293 = arith.minimumf %cst_101, %232 : f32
    %cst_102 = arith.constant 1.200000e+00 : f32
    %294 = arith.minimumf %cst_102, %233 : f32
    %295 = arith.mulf %293, %294 : f32
    %296 = arith.mulf %232, %233 : f32
    %cst_103 = arith.constant 2.400000e+00 : f32
    %297 = arith.addf %296, %cst_103 : f32
    %298 = arith.subf %297, %295 : f32
    %299 = arith.divf %295, %298 : f32
    %cst_104 = arith.constant 0.000000e+00 : f32
    %300 = vector.broadcast %cst_104 : f32 to vector<1x1xf32>
    %301 = vector.broadcast %299 : f32 to vector<1x1xf32>
    %302 = arith.select %272, %300, %301 : vector<1x1xi1>, vector<1x1xf32>
    %303 = arith.maximumf %282, %292 : vector<1x1xf32>
    %304 = arith.maximumf %303, %302 : vector<1x1xf32>
    %305 = arith.cmpf oeq, %292, %304 : vector<1x1xf32>
    %c1_i32_105 = arith.constant 1 : i32
    %c2_i32_106 = arith.constant 2 : i32
    %306 = vector.broadcast %c1_i32_105 : i32 to vector<1x1xi32>
    %307 = vector.broadcast %c2_i32_106 : i32 to vector<1x1xi32>
    %308 = arith.select %305, %306, %307 : vector<1x1xi1>, vector<1x1xi32>
    %309 = arith.cmpf oeq, %282, %304 : vector<1x1xf32>
    %c0_i32_107 = arith.constant 0 : i32
    %310 = vector.broadcast %c0_i32_107 : i32 to vector<1x1xi32>
    %311 = arith.select %309, %310, %308 : vector<1x1xi1>, vector<1x1xi32>
    %cst_108 = arith.constant 4.000000e-01 : f32
    %312 = vector.broadcast %cst_108 : f32 to vector<1x1xf32>
    %313 = arith.cmpf oge, %304, %312 : vector<1x1xf32>
    %314 = arith.cmpi slt, %c0_i32, %0 : i32
    %315 = vector.broadcast %314 : i1 to vector<1x1xi1>
    %316 = arith.andi %313, %315 : vector<1x1xi1>
    %c1_i32_109 = arith.constant 1 : i32
    %317 = vector.broadcast %c1_i32_109 : i32 to vector<1x1xi32>
    %318 = arith.cmpi eq, %311, %317 : vector<1x1xi32>
    %cst_110 = arith.constant 1.200000e+00 : f32
    %cst_111 = arith.constant 8.000000e-01 : f32
    %319 = vector.broadcast %cst_110 : f32 to vector<1x1xf32>
    %320 = vector.broadcast %cst_111 : f32 to vector<1x1xf32>
    %321 = arith.select %318, %319, %320 : vector<1x1xi1>, vector<1x1xf32>
    %c1_i32_112 = arith.constant 1 : i32
    %322 = vector.broadcast %c1_i32_112 : i32 to vector<1x1xi32>
    %323 = arith.cmpi eq, %311, %322 : vector<1x1xi32>
    %cst_113 = arith.constant 2.000000e+00 : f32
    %cst_114 = arith.constant 8.000000e-01 : f32
    %324 = vector.broadcast %cst_113 : f32 to vector<1x1xf32>
    %325 = vector.broadcast %cst_114 : f32 to vector<1x1xf32>
    %326 = arith.select %323, %324, %325 : vector<1x1xi1>, vector<1x1xf32>
    %c2_i32_115 = arith.constant 2 : i32
    %327 = vector.broadcast %c2_i32_115 : i32 to vector<1x1xi32>
    %328 = arith.cmpi eq, %311, %327 : vector<1x1xi32>
    %cst_116 = arith.constant 2.000000e+00 : f32
    %329 = vector.broadcast %cst_116 : f32 to vector<1x1xf32>
    %330 = arith.select %328, %329, %321 : vector<1x1xi1>, vector<1x1xf32>
    %c2_i32_117 = arith.constant 2 : i32
    %331 = vector.broadcast %c2_i32_117 : i32 to vector<1x1xi32>
    %332 = arith.cmpi eq, %311, %331 : vector<1x1xi32>
    %cst_118 = arith.constant 1.200000e+00 : f32
    %333 = vector.broadcast %cst_118 : f32 to vector<1x1xf32>
    %334 = arith.select %332, %333, %326 : vector<1x1xi1>, vector<1x1xf32>
    %335 = vector.broadcast %232 : f32 to vector<1x1xf32>
    %336 = arith.divf %335, %330 : vector<1x1xf32>
    %cst_119 = arith.constant 9.99999997E-7 : f32
    %337 = vector.broadcast %cst_119 : f32 to vector<1x1xf32>
    %338 = arith.addf %336, %337 : vector<1x1xf32>
    %339 = math.log %338 : vector<1x1xf32>
    %340 = vector.broadcast %233 : f32 to vector<1x1xf32>
    %341 = arith.divf %340, %334 : vector<1x1xf32>
    %cst_120 = arith.constant 9.99999997E-7 : f32
    %342 = vector.broadcast %cst_120 : f32 to vector<1x1xf32>
    %343 = arith.addf %341, %342 : vector<1x1xf32>
    %344 = math.log %343 : vector<1x1xf32>
    %c6_i32_121 = arith.constant 6 : i32
    %345 = vector.broadcast %c6_i32_121 : i32 to vector<1x1xi32>
    %346 = arith.muli %311, %345 : vector<1x1xi32>
    %347 = vector.broadcast %236 : i32 to vector<1x1xi32>
    %348 = arith.addi %347, %346 : vector<1x1xi32>
    %349 = vector.broadcast %348 : vector<1x1xi32> to vector<16x128xi32>
    %350 = arith.subi %10, %349 : vector<16x128xi32>
    %c1_i32_122 = arith.constant 1 : i32
    %351 = vector.broadcast %c1_i32_122 : i32 to vector<16x128xi32>
    %352 = arith.cmpi eq, %350, %351 : vector<16x128xi32>
    %c2_i32_123 = arith.constant 2 : i32
    %353 = vector.broadcast %c2_i32_123 : i32 to vector<16x128xi32>
    %354 = arith.cmpi eq, %350, %353 : vector<16x128xi32>
    %c3_i32_124 = arith.constant 3 : i32
    %355 = vector.broadcast %c3_i32_124 : i32 to vector<16x128xi32>
    %356 = arith.cmpi eq, %350, %355 : vector<16x128xi32>
    %c4_i32_125 = arith.constant 4 : i32
    %357 = vector.broadcast %c4_i32_125 : i32 to vector<16x128xi32>
    %358 = arith.cmpi eq, %350, %357 : vector<16x128xi32>
    %cst_126 = arith.constant 1.000000e+00 : f32
    %359 = vector.shape_cast %344 : vector<1x1xf32> to vector<1x1xf32>
    %360 = vector.broadcast %359 : vector<1x1xf32> to vector<16x128xf32>
    %361 = vector.broadcast %cst_126 : f32 to vector<16x128xf32>
    %362 = arith.select %358, %360, %361 : vector<16x128xi1>, vector<16x128xf32>
    %363 = vector.shape_cast %339 : vector<1x1xf32> to vector<1x1xf32>
    %364 = vector.broadcast %363 : vector<1x1xf32> to vector<16x128xf32>
    %365 = arith.select %356, %364, %362 : vector<16x128xi1>, vector<16x128xf32>
    %366 = vector.broadcast %231 : f32 to vector<16x128xf32>
    %367 = arith.select %354, %366, %365 : vector<16x128xi1>, vector<16x128xf32>
    %368 = vector.broadcast %229 : f32 to vector<16x128xf32>
    %369 = arith.select %352, %368, %367 : vector<16x128xi1>, vector<16x128xf32>
    %c0_i32_127 = arith.constant 0 : i32
    %370 = vector.broadcast %c0_i32_127 : i32 to vector<16x128xi32>
    %371 = arith.cmpi sge, %350, %370 : vector<16x128xi32>
    %372 = vector.broadcast %316 : vector<1x1xi1> to vector<16x128xi1>
    %373 = arith.andi %372, %371 : vector<16x128xi1>
    %c6_i32_128 = arith.constant 6 : i32
    %374 = vector.broadcast %c6_i32_128 : i32 to vector<16x128xi32>
    %375 = arith.cmpi slt, %350, %374 : vector<16x128xi32>
    %376 = arith.andi %373, %375 : vector<16x128xi1>
    %377 = arith.select %376, %369, %12 : vector<16x128xi1>, vector<16x128xf32>
    %cst_129 = arith.constant 5.000000e-01 : f32
    %378 = vector.broadcast %cst_129 : f32 to vector<1x1xf32>
    %379 = arith.cmpf ogt, %282, %378 : vector<1x1xf32>
    %380 = arith.cmpf one, %282, %304 : vector<1x1xf32>
    %381 = arith.andi %379, %380 : vector<1x1xi1>
    %cst_130 = arith.constant 5.000000e-01 : f32
    %382 = vector.broadcast %cst_130 : f32 to vector<1x1xf32>
    %383 = arith.cmpf ogt, %292, %382 : vector<1x1xf32>
    %384 = arith.cmpf one, %292, %304 : vector<1x1xf32>
    %385 = arith.andi %383, %384 : vector<1x1xi1>
    %cst_131 = arith.constant 5.000000e-01 : f32
    %386 = vector.broadcast %cst_131 : f32 to vector<1x1xf32>
    %387 = arith.cmpf ogt, %302, %386 : vector<1x1xf32>
    %388 = arith.cmpf one, %302, %304 : vector<1x1xf32>
    %389 = arith.andi %387, %388 : vector<1x1xi1>
    %390 = arith.extui %381 : vector<1x1xi1> to vector<1x1xi32>
    %391 = arith.extui %385 : vector<1x1xi1> to vector<1x1xi32>
    %392 = arith.addi %390, %391 : vector<1x1xi32>
    %393 = arith.extui %389 : vector<1x1xi1> to vector<1x1xi32>
    %394 = arith.addi %392, %393 : vector<1x1xi32>
    %c2_i32_132 = arith.constant 2 : i32
    %395 = vector.broadcast %c2_i32_132 : i32 to vector<1x1xi32>
    %396 = arith.cmpi sge, %394, %395 : vector<1x1xi32>
    %397 = arith.andi %316, %396 : vector<1x1xi1>
    %c0_i32_133 = arith.constant 0 : i32
    %398 = arith.addi %236, %c0_i32_133 : i32
    %399 = vector.broadcast %398 : i32 to vector<16x128xi32>
    %400 = arith.cmpi eq, %10, %399 : vector<16x128xi32>
    %401 = vector.broadcast %381 : vector<1x1xi1> to vector<16x128xi1>
    %402 = arith.andi %401, %400 : vector<16x128xi1>
    %c6_i32_134 = arith.constant 6 : i32
    %403 = arith.addi %236, %c6_i32_134 : i32
    %404 = vector.broadcast %403 : i32 to vector<16x128xi32>
    %405 = arith.cmpi eq, %10, %404 : vector<16x128xi32>
    %406 = vector.broadcast %385 : vector<1x1xi1> to vector<16x128xi1>
    %407 = arith.andi %406, %405 : vector<16x128xi1>
    %408 = arith.ori %402, %407 : vector<16x128xi1>
    %c12_i32_135 = arith.constant 12 : i32
    %409 = arith.addi %236, %c12_i32_135 : i32
    %410 = vector.broadcast %409 : i32 to vector<16x128xi32>
    %411 = arith.cmpi eq, %10, %410 : vector<16x128xi32>
    %412 = vector.broadcast %389 : vector<1x1xi1> to vector<16x128xi1>
    %413 = arith.andi %412, %411 : vector<16x128xi1>
    %414 = arith.ori %408, %413 : vector<16x128xi1>
    %415 = vector.broadcast %397 : vector<1x1xi1> to vector<16x128xi1>
    %416 = arith.andi %415, %414 : vector<16x128xi1>
    %cst_136 = arith.constant -1.000000e+00 : f32
    %417 = vector.broadcast %cst_136 : f32 to vector<16x128xf32>
    %418 = arith.select %416, %417, %377 : vector<16x128xi1>, vector<16x128xf32>
    %c1_i32_137 = arith.constant 1 : i32
    %c4_i32_138 = arith.constant 4 : i32
    %419 = arith.muli %c4_i32_138, %c1_i32_137 : i32
    %c0_i32_139 = arith.constant 0 : i32
    %420 = arith.addi %419, %c0_i32_139 : i32
    %421 = arith.index_cast %420 : i32 to index
    %422 = memref.load %arg1[%421] : memref<32xf32, #tpu.memory_space<smem>>
    %c4_i32_140 = arith.constant 4 : i32
    %423 = arith.muli %c4_i32_140, %c1_i32_137 : i32
    %c1_i32_141 = arith.constant 1 : i32
    %424 = arith.addi %423, %c1_i32_141 : i32
    %425 = arith.index_cast %424 : i32 to index
    %426 = memref.load %arg1[%425] : memref<32xf32, #tpu.memory_space<smem>>
    %c4_i32_142 = arith.constant 4 : i32
    %427 = arith.muli %c4_i32_142, %c1_i32_137 : i32
    %c2_i32_143 = arith.constant 2 : i32
    %428 = arith.addi %427, %c2_i32_143 : i32
    %429 = arith.index_cast %428 : i32 to index
    %430 = memref.load %arg1[%429] : memref<32xf32, #tpu.memory_space<smem>>
    %c4_i32_144 = arith.constant 4 : i32
    %431 = arith.muli %c4_i32_144, %c1_i32_137 : i32
    %c3_i32_145 = arith.constant 3 : i32
    %432 = arith.addi %431, %c3_i32_145 : i32
    %433 = arith.index_cast %432 : i32 to index
    %434 = memref.load %arg1[%433] : memref<32xf32, #tpu.memory_space<smem>>
    %cst_146 = arith.constant 8.000000e+00 : f32
    %435 = arith.divf %422, %cst_146 : f32
    %cst_147 = arith.constant 8.000000e+00 : f32
    %436 = arith.divf %426, %cst_147 : f32
    %437 = arith.fptosi %435 : f32 to i32
    %438 = arith.fptosi %436 : f32 to i32
    %439 = arith.sitofp %437 : i32 to f32
    %440 = arith.subf %435, %439 : f32
    %441 = arith.sitofp %438 : i32 to f32
    %442 = arith.subf %436, %441 : f32
    %cst_148 = arith.constant 8.000000e+00 : f32
    %443 = arith.divf %430, %cst_148 : f32
    %cst_149 = arith.constant 8.000000e+00 : f32
    %444 = arith.divf %434, %cst_149 : f32
    %c4_i32_150 = arith.constant 4 : i32
    %445 = arith.muli %437, %c4_i32_150 : i32
    %446 = arith.addi %445, %438 : i32
    %c18_i32_151 = arith.constant 18 : i32
    %447 = arith.muli %446, %c18_i32_151 : i32
    %c0_i32_152 = arith.constant 0 : i32
    %448 = arith.addi %447, %c0_i32_152 : i32
    %c5_i32_153 = arith.constant 5 : i32
    %449 = arith.addi %448, %c5_i32_153 : i32
    %450 = vector.broadcast %449 : i32 to vector<8x128xi32>
    %451 = arith.cmpi eq, %5, %450 : vector<8x128xi32>
    %cst_154 = arith.constant 0.000000e+00 : f32
    %452 = vector.broadcast %cst_154 : f32 to vector<8x128xf32>
    %453 = arith.select %451, %223, %452 : vector<8x128xi1>, vector<8x128xf32>
    %cst_155 = arith.constant dense<0.000000e+00> : vector<8xf32>
    %454 = vector.multi_reduction <add>, %453, %cst_155 [1] : vector<8x128xf32> to vector<8xf32>
    %455 = vector.shape_cast %454 : vector<8xf32> to vector<8x1xf32>
    %cst_156 = arith.constant dense<0.000000e+00> : vector<1xf32>
    %456 = vector.multi_reduction <add>, %455, %cst_156 [0] : vector<8x1xf32> to vector<1xf32>
    %457 = vector.shape_cast %456 : vector<1xf32> to vector<1x1xf32>
    %cst_157 = arith.constant 1.000000e+00 : f32
    %458 = vector.broadcast %cst_157 : f32 to vector<1x1xf32>
    %459 = arith.cmpf oeq, %457, %458 : vector<1x1xf32>
    %c6_i32_158 = arith.constant 6 : i32
    %460 = arith.addi %447, %c6_i32_158 : i32
    %c5_i32_159 = arith.constant 5 : i32
    %461 = arith.addi %460, %c5_i32_159 : i32
    %462 = vector.broadcast %461 : i32 to vector<8x128xi32>
    %463 = arith.cmpi eq, %5, %462 : vector<8x128xi32>
    %cst_160 = arith.constant 0.000000e+00 : f32
    %464 = vector.broadcast %cst_160 : f32 to vector<8x128xf32>
    %465 = arith.select %463, %223, %464 : vector<8x128xi1>, vector<8x128xf32>
    %cst_161 = arith.constant dense<0.000000e+00> : vector<8xf32>
    %466 = vector.multi_reduction <add>, %465, %cst_161 [1] : vector<8x128xf32> to vector<8xf32>
    %467 = vector.shape_cast %466 : vector<8xf32> to vector<8x1xf32>
    %cst_162 = arith.constant dense<0.000000e+00> : vector<1xf32>
    %468 = vector.multi_reduction <add>, %467, %cst_162 [0] : vector<8x1xf32> to vector<1xf32>
    %469 = vector.shape_cast %468 : vector<1xf32> to vector<1x1xf32>
    %cst_163 = arith.constant 1.000000e+00 : f32
    %470 = vector.broadcast %cst_163 : f32 to vector<1x1xf32>
    %471 = arith.cmpf oeq, %469, %470 : vector<1x1xf32>
    %c12_i32_164 = arith.constant 12 : i32
    %472 = arith.addi %447, %c12_i32_164 : i32
    %c5_i32_165 = arith.constant 5 : i32
    %473 = arith.addi %472, %c5_i32_165 : i32
    %474 = vector.broadcast %473 : i32 to vector<8x128xi32>
    %475 = arith.cmpi eq, %5, %474 : vector<8x128xi32>
    %cst_166 = arith.constant 0.000000e+00 : f32
    %476 = vector.broadcast %cst_166 : f32 to vector<8x128xf32>
    %477 = arith.select %475, %223, %476 : vector<8x128xi1>, vector<8x128xf32>
    %cst_167 = arith.constant dense<0.000000e+00> : vector<8xf32>
    %478 = vector.multi_reduction <add>, %477, %cst_167 [1] : vector<8x128xf32> to vector<8xf32>
    %479 = vector.shape_cast %478 : vector<8xf32> to vector<8x1xf32>
    %cst_168 = arith.constant dense<0.000000e+00> : vector<1xf32>
    %480 = vector.multi_reduction <add>, %479, %cst_168 [0] : vector<8x1xf32> to vector<1xf32>
    %481 = vector.shape_cast %480 : vector<1xf32> to vector<1x1xf32>
    %cst_169 = arith.constant 1.000000e+00 : f32
    %482 = vector.broadcast %cst_169 : f32 to vector<1x1xf32>
    %483 = arith.cmpf oeq, %481, %482 : vector<1x1xf32>
    %cst_170 = arith.constant 1.500000e+00 : f32
    %484 = arith.minimumf %cst_170, %443 : f32
    %cst_171 = arith.constant 1.500000e+00 : f32
    %485 = arith.minimumf %cst_171, %444 : f32
    %486 = arith.mulf %484, %485 : f32
    %487 = arith.mulf %443, %444 : f32
    %cst_172 = arith.constant 2.250000e+00 : f32
    %488 = arith.addf %487, %cst_172 : f32
    %489 = arith.subf %488, %486 : f32
    %490 = arith.divf %486, %489 : f32
    %cst_173 = arith.constant 0.000000e+00 : f32
    %491 = vector.broadcast %cst_173 : f32 to vector<1x1xf32>
    %492 = vector.broadcast %490 : f32 to vector<1x1xf32>
    %493 = arith.select %459, %491, %492 : vector<1x1xi1>, vector<1x1xf32>
    %cst_174 = arith.constant 2.000000e+00 : f32
    %494 = arith.minimumf %cst_174, %443 : f32
    %cst_175 = arith.constant 3.000000e+00 : f32
    %495 = arith.minimumf %cst_175, %444 : f32
    %496 = arith.mulf %494, %495 : f32
    %497 = arith.mulf %443, %444 : f32
    %cst_176 = arith.constant 6.000000e+00 : f32
    %498 = arith.addf %497, %cst_176 : f32
    %499 = arith.subf %498, %496 : f32
    %500 = arith.divf %496, %499 : f32
    %cst_177 = arith.constant 0.000000e+00 : f32
    %501 = vector.broadcast %cst_177 : f32 to vector<1x1xf32>
    %502 = vector.broadcast %500 : f32 to vector<1x1xf32>
    %503 = arith.select %471, %501, %502 : vector<1x1xi1>, vector<1x1xf32>
    %cst_178 = arith.constant 3.500000e+00 : f32
    %504 = arith.minimumf %cst_178, %443 : f32
    %cst_179 = arith.constant 2.500000e+00 : f32
    %505 = arith.minimumf %cst_179, %444 : f32
    %506 = arith.mulf %504, %505 : f32
    %507 = arith.mulf %443, %444 : f32
    %cst_180 = arith.constant 8.750000e+00 : f32
    %508 = arith.addf %507, %cst_180 : f32
    %509 = arith.subf %508, %506 : f32
    %510 = arith.divf %506, %509 : f32
    %cst_181 = arith.constant 0.000000e+00 : f32
    %511 = vector.broadcast %cst_181 : f32 to vector<1x1xf32>
    %512 = vector.broadcast %510 : f32 to vector<1x1xf32>
    %513 = arith.select %483, %511, %512 : vector<1x1xi1>, vector<1x1xf32>
    %514 = arith.maximumf %493, %503 : vector<1x1xf32>
    %515 = arith.maximumf %514, %513 : vector<1x1xf32>
    %516 = arith.cmpf oeq, %503, %515 : vector<1x1xf32>
    %c1_i32_182 = arith.constant 1 : i32
    %c2_i32_183 = arith.constant 2 : i32
    %517 = vector.broadcast %c1_i32_182 : i32 to vector<1x1xi32>
    %518 = vector.broadcast %c2_i32_183 : i32 to vector<1x1xi32>
    %519 = arith.select %516, %517, %518 : vector<1x1xi1>, vector<1x1xi32>
    %520 = arith.cmpf oeq, %493, %515 : vector<1x1xf32>
    %c0_i32_184 = arith.constant 0 : i32
    %521 = vector.broadcast %c0_i32_184 : i32 to vector<1x1xi32>
    %522 = arith.select %520, %521, %519 : vector<1x1xi1>, vector<1x1xi32>
    %cst_185 = arith.constant 4.000000e-01 : f32
    %523 = vector.broadcast %cst_185 : f32 to vector<1x1xf32>
    %524 = arith.cmpf oge, %515, %523 : vector<1x1xf32>
    %525 = arith.cmpi slt, %c1_i32_137, %0 : i32
    %526 = vector.broadcast %525 : i1 to vector<1x1xi1>
    %527 = arith.andi %524, %526 : vector<1x1xi1>
    %c1_i32_186 = arith.constant 1 : i32
    %528 = vector.broadcast %c1_i32_186 : i32 to vector<1x1xi32>
    %529 = arith.cmpi eq, %522, %528 : vector<1x1xi32>
    %cst_187 = arith.constant 2.000000e+00 : f32
    %cst_188 = arith.constant 1.500000e+00 : f32
    %530 = vector.broadcast %cst_187 : f32 to vector<1x1xf32>
    %531 = vector.broadcast %cst_188 : f32 to vector<1x1xf32>
    %532 = arith.select %529, %530, %531 : vector<1x1xi1>, vector<1x1xf32>
    %c1_i32_189 = arith.constant 1 : i32
    %533 = vector.broadcast %c1_i32_189 : i32 to vector<1x1xi32>
    %534 = arith.cmpi eq, %522, %533 : vector<1x1xi32>
    %cst_190 = arith.constant 3.000000e+00 : f32
    %cst_191 = arith.constant 1.500000e+00 : f32
    %535 = vector.broadcast %cst_190 : f32 to vector<1x1xf32>
    %536 = vector.broadcast %cst_191 : f32 to vector<1x1xf32>
    %537 = arith.select %534, %535, %536 : vector<1x1xi1>, vector<1x1xf32>
    %c2_i32_192 = arith.constant 2 : i32
    %538 = vector.broadcast %c2_i32_192 : i32 to vector<1x1xi32>
    %539 = arith.cmpi eq, %522, %538 : vector<1x1xi32>
    %cst_193 = arith.constant 3.500000e+00 : f32
    %540 = vector.broadcast %cst_193 : f32 to vector<1x1xf32>
    %541 = arith.select %539, %540, %532 : vector<1x1xi1>, vector<1x1xf32>
    %c2_i32_194 = arith.constant 2 : i32
    %542 = vector.broadcast %c2_i32_194 : i32 to vector<1x1xi32>
    %543 = arith.cmpi eq, %522, %542 : vector<1x1xi32>
    %cst_195 = arith.constant 2.500000e+00 : f32
    %544 = vector.broadcast %cst_195 : f32 to vector<1x1xf32>
    %545 = arith.select %543, %544, %537 : vector<1x1xi1>, vector<1x1xf32>
    %546 = vector.broadcast %443 : f32 to vector<1x1xf32>
    %547 = arith.divf %546, %541 : vector<1x1xf32>
    %cst_196 = arith.constant 9.99999997E-7 : f32
    %548 = vector.broadcast %cst_196 : f32 to vector<1x1xf32>
    %549 = arith.addf %547, %548 : vector<1x1xf32>
    %550 = math.log %549 : vector<1x1xf32>
    %551 = vector.broadcast %444 : f32 to vector<1x1xf32>
    %552 = arith.divf %551, %545 : vector<1x1xf32>
    %cst_197 = arith.constant 9.99999997E-7 : f32
    %553 = vector.broadcast %cst_197 : f32 to vector<1x1xf32>
    %554 = arith.addf %552, %553 : vector<1x1xf32>
    %555 = math.log %554 : vector<1x1xf32>
    %c6_i32_198 = arith.constant 6 : i32
    %556 = vector.broadcast %c6_i32_198 : i32 to vector<1x1xi32>
    %557 = arith.muli %522, %556 : vector<1x1xi32>
    %558 = vector.broadcast %447 : i32 to vector<1x1xi32>
    %559 = arith.addi %558, %557 : vector<1x1xi32>
    %560 = vector.broadcast %559 : vector<1x1xi32> to vector<8x128xi32>
    %561 = arith.subi %5, %560 : vector<8x128xi32>
    %c1_i32_199 = arith.constant 1 : i32
    %562 = vector.broadcast %c1_i32_199 : i32 to vector<8x128xi32>
    %563 = arith.cmpi eq, %561, %562 : vector<8x128xi32>
    %c2_i32_200 = arith.constant 2 : i32
    %564 = vector.broadcast %c2_i32_200 : i32 to vector<8x128xi32>
    %565 = arith.cmpi eq, %561, %564 : vector<8x128xi32>
    %c3_i32_201 = arith.constant 3 : i32
    %566 = vector.broadcast %c3_i32_201 : i32 to vector<8x128xi32>
    %567 = arith.cmpi eq, %561, %566 : vector<8x128xi32>
    %c4_i32_202 = arith.constant 4 : i32
    %568 = vector.broadcast %c4_i32_202 : i32 to vector<8x128xi32>
    %569 = arith.cmpi eq, %561, %568 : vector<8x128xi32>
    %cst_203 = arith.constant 1.000000e+00 : f32
    %570 = vector.shape_cast %555 : vector<1x1xf32> to vector<1x1xf32>
    %571 = vector.broadcast %570 : vector<1x1xf32> to vector<8x128xf32>
    %572 = vector.broadcast %cst_203 : f32 to vector<8x128xf32>
    %573 = arith.select %569, %571, %572 : vector<8x128xi1>, vector<8x128xf32>
    %574 = vector.shape_cast %550 : vector<1x1xf32> to vector<1x1xf32>
    %575 = vector.broadcast %574 : vector<1x1xf32> to vector<8x128xf32>
    %576 = arith.select %567, %575, %573 : vector<8x128xi1>, vector<8x128xf32>
    %577 = vector.broadcast %442 : f32 to vector<8x128xf32>
    %578 = arith.select %565, %577, %576 : vector<8x128xi1>, vector<8x128xf32>
    %579 = vector.broadcast %440 : f32 to vector<8x128xf32>
    %580 = arith.select %563, %579, %578 : vector<8x128xi1>, vector<8x128xf32>
    %c0_i32_204 = arith.constant 0 : i32
    %581 = vector.broadcast %c0_i32_204 : i32 to vector<8x128xi32>
    %582 = arith.cmpi sge, %561, %581 : vector<8x128xi32>
    %583 = vector.broadcast %527 : vector<1x1xi1> to vector<8x128xi1>
    %584 = arith.andi %583, %582 : vector<8x128xi1>
    %c6_i32_205 = arith.constant 6 : i32
    %585 = vector.broadcast %c6_i32_205 : i32 to vector<8x128xi32>
    %586 = arith.cmpi slt, %561, %585 : vector<8x128xi32>
    %587 = arith.andi %584, %586 : vector<8x128xi1>
    %588 = arith.select %587, %580, %223 : vector<8x128xi1>, vector<8x128xf32>
    %cst_206 = arith.constant 5.000000e-01 : f32
    %589 = vector.broadcast %cst_206 : f32 to vector<1x1xf32>
    %590 = arith.cmpf ogt, %493, %589 : vector<1x1xf32>
    %591 = arith.cmpf one, %493, %515 : vector<1x1xf32>
    %592 = arith.andi %590, %591 : vector<1x1xi1>
    %cst_207 = arith.constant 5.000000e-01 : f32
    %593 = vector.broadcast %cst_207 : f32 to vector<1x1xf32>
    %594 = arith.cmpf ogt, %503, %593 : vector<1x1xf32>
    %595 = arith.cmpf one, %503, %515 : vector<1x1xf32>
    %596 = arith.andi %594, %595 : vector<1x1xi1>
    %cst_208 = arith.constant 5.000000e-01 : f32
    %597 = vector.broadcast %cst_208 : f32 to vector<1x1xf32>
    %598 = arith.cmpf ogt, %513, %597 : vector<1x1xf32>
    %599 = arith.cmpf one, %513, %515 : vector<1x1xf32>
    %600 = arith.andi %598, %599 : vector<1x1xi1>
    %601 = arith.extui %592 : vector<1x1xi1> to vector<1x1xi32>
    %602 = arith.extui %596 : vector<1x1xi1> to vector<1x1xi32>
    %603 = arith.addi %601, %602 : vector<1x1xi32>
    %604 = arith.extui %600 : vector<1x1xi1> to vector<1x1xi32>
    %605 = arith.addi %603, %604 : vector<1x1xi32>
    %c2_i32_209 = arith.constant 2 : i32
    %606 = vector.broadcast %c2_i32_209 : i32 to vector<1x1xi32>
    %607 = arith.cmpi sge, %605, %606 : vector<1x1xi32>
    %608 = arith.andi %527, %607 : vector<1x1xi1>
    %c0_i32_210 = arith.constant 0 : i32
    %609 = arith.addi %447, %c0_i32_210 : i32
    %610 = vector.broadcast %609 : i32 to vector<8x128xi32>
    %611 = arith.cmpi eq, %5, %610 : vector<8x128xi32>
    %612 = vector.broadcast %592 : vector<1x1xi1> to vector<8x128xi1>
    %613 = arith.andi %612, %611 : vector<8x128xi1>
    %c6_i32_211 = arith.constant 6 : i32
    %614 = arith.addi %447, %c6_i32_211 : i32
    %615 = vector.broadcast %614 : i32 to vector<8x128xi32>
    %616 = arith.cmpi eq, %5, %615 : vector<8x128xi32>
    %617 = vector.broadcast %596 : vector<1x1xi1> to vector<8x128xi1>
    %618 = arith.andi %617, %616 : vector<8x128xi1>
    %619 = arith.ori %613, %618 : vector<8x128xi1>
    %c12_i32_212 = arith.constant 12 : i32
    %620 = arith.addi %447, %c12_i32_212 : i32
    %621 = vector.broadcast %620 : i32 to vector<8x128xi32>
    %622 = arith.cmpi eq, %5, %621 : vector<8x128xi32>
    %623 = vector.broadcast %600 : vector<1x1xi1> to vector<8x128xi1>
    %624 = arith.andi %623, %622 : vector<8x128xi1>
    %625 = arith.ori %619, %624 : vector<8x128xi1>
    %626 = vector.broadcast %608 : vector<1x1xi1> to vector<8x128xi1>
    %627 = arith.andi %626, %625 : vector<8x128xi1>
    %cst_213 = arith.constant -1.000000e+00 : f32
    %628 = vector.broadcast %cst_213 : f32 to vector<8x128xf32>
    %629 = arith.select %627, %628, %588 : vector<8x128xi1>, vector<8x128xf32>
    %cst_214 = arith.constant 4.000000e+00 : f32
    %630 = arith.divf %422, %cst_214 : f32
    %cst_215 = arith.constant 4.000000e+00 : f32
    %631 = arith.divf %426, %cst_215 : f32
    %632 = arith.fptosi %630 : f32 to i32
    %633 = arith.fptosi %631 : f32 to i32
    %634 = arith.sitofp %632 : i32 to f32
    %635 = arith.subf %630, %634 : f32
    %636 = arith.sitofp %633 : i32 to f32
    %637 = arith.subf %631, %636 : f32
    %cst_216 = arith.constant 4.000000e+00 : f32
    %638 = arith.divf %430, %cst_216 : f32
    %cst_217 = arith.constant 4.000000e+00 : f32
    %639 = arith.divf %434, %cst_217 : f32
    %c8_i32_218 = arith.constant 8 : i32
    %640 = arith.muli %632, %c8_i32_218 : i32
    %641 = arith.addi %640, %633 : i32
    %c18_i32_219 = arith.constant 18 : i32
    %642 = arith.muli %641, %c18_i32_219 : i32
    %c0_i32_220 = arith.constant 0 : i32
    %643 = arith.addi %642, %c0_i32_220 : i32
    %c5_i32_221 = arith.constant 5 : i32
    %644 = arith.addi %643, %c5_i32_221 : i32
    %645 = vector.broadcast %644 : i32 to vector<16x128xi32>
    %646 = arith.cmpi eq, %10, %645 : vector<16x128xi32>
    %cst_222 = arith.constant 0.000000e+00 : f32
    %647 = vector.broadcast %cst_222 : f32 to vector<16x128xf32>
    %648 = arith.select %646, %418, %647 : vector<16x128xi1>, vector<16x128xf32>
    %cst_223 = arith.constant dense<0.000000e+00> : vector<16xf32>
    %649 = vector.multi_reduction <add>, %648, %cst_223 [1] : vector<16x128xf32> to vector<16xf32>
    %650 = vector.shape_cast %649 : vector<16xf32> to vector<16x1xf32>
    %cst_224 = arith.constant dense<0.000000e+00> : vector<1xf32>
    %651 = vector.multi_reduction <add>, %650, %cst_224 [0] : vector<16x1xf32> to vector<1xf32>
    %652 = vector.shape_cast %651 : vector<1xf32> to vector<1x1xf32>
    %cst_225 = arith.constant 1.000000e+00 : f32
    %653 = vector.broadcast %cst_225 : f32 to vector<1x1xf32>
    %654 = arith.cmpf oeq, %652, %653 : vector<1x1xf32>
    %c6_i32_226 = arith.constant 6 : i32
    %655 = arith.addi %642, %c6_i32_226 : i32
    %c5_i32_227 = arith.constant 5 : i32
    %656 = arith.addi %655, %c5_i32_227 : i32
    %657 = vector.broadcast %656 : i32 to vector<16x128xi32>
    %658 = arith.cmpi eq, %10, %657 : vector<16x128xi32>
    %cst_228 = arith.constant 0.000000e+00 : f32
    %659 = vector.broadcast %cst_228 : f32 to vector<16x128xf32>
    %660 = arith.select %658, %418, %659 : vector<16x128xi1>, vector<16x128xf32>
    %cst_229 = arith.constant dense<0.000000e+00> : vector<16xf32>
    %661 = vector.multi_reduction <add>, %660, %cst_229 [1] : vector<16x128xf32> to vector<16xf32>
    %662 = vector.shape_cast %661 : vector<16xf32> to vector<16x1xf32>
    %cst_230 = arith.constant dense<0.000000e+00> : vector<1xf32>
    %663 = vector.multi_reduction <add>, %662, %cst_230 [0] : vector<16x1xf32> to vector<1xf32>
    %664 = vector.shape_cast %663 : vector<1xf32> to vector<1x1xf32>
    %cst_231 = arith.constant 1.000000e+00 : f32
    %665 = vector.broadcast %cst_231 : f32 to vector<1x1xf32>
    %666 = arith.cmpf oeq, %664, %665 : vector<1x1xf32>
    %c12_i32_232 = arith.constant 12 : i32
    %667 = arith.addi %642, %c12_i32_232 : i32
    %c5_i32_233 = arith.constant 5 : i32
    %668 = arith.addi %667, %c5_i32_233 : i32
    %669 = vector.broadcast %668 : i32 to vector<16x128xi32>
    %670 = arith.cmpi eq, %10, %669 : vector<16x128xi32>
    %cst_234 = arith.constant 0.000000e+00 : f32
    %671 = vector.broadcast %cst_234 : f32 to vector<16x128xf32>
    %672 = arith.select %670, %418, %671 : vector<16x128xi1>, vector<16x128xf32>
    %cst_235 = arith.constant dense<0.000000e+00> : vector<16xf32>
    %673 = vector.multi_reduction <add>, %672, %cst_235 [1] : vector<16x128xf32> to vector<16xf32>
    %674 = vector.shape_cast %673 : vector<16xf32> to vector<16x1xf32>
    %cst_236 = arith.constant dense<0.000000e+00> : vector<1xf32>
    %675 = vector.multi_reduction <add>, %674, %cst_236 [0] : vector<16x1xf32> to vector<1xf32>
    %676 = vector.shape_cast %675 : vector<1xf32> to vector<1x1xf32>
    %cst_237 = arith.constant 1.000000e+00 : f32
    %677 = vector.broadcast %cst_237 : f32 to vector<1x1xf32>
    %678 = arith.cmpf oeq, %676, %677 : vector<1x1xf32>
    %cst_238 = arith.constant 8.000000e-01 : f32
    %679 = arith.minimumf %cst_238, %638 : f32
    %cst_239 = arith.constant 8.000000e-01 : f32
    %680 = arith.minimumf %cst_239, %639 : f32
    %681 = arith.mulf %679, %680 : f32
    %682 = arith.mulf %638, %639 : f32
    %cst_240 = arith.constant 6.400000e-01 : f32
    %683 = arith.addf %682, %cst_240 : f32
    %684 = arith.subf %683, %681 : f32
    %685 = arith.divf %681, %684 : f32
    %cst_241 = arith.constant 0.000000e+00 : f32
    %686 = vector.broadcast %cst_241 : f32 to vector<1x1xf32>
    %687 = vector.broadcast %685 : f32 to vector<1x1xf32>
    %688 = arith.select %654, %686, %687 : vector<1x1xi1>, vector<1x1xf32>
    %cst_242 = arith.constant 1.200000e+00 : f32
    %689 = arith.minimumf %cst_242, %638 : f32
    %cst_243 = arith.constant 2.000000e+00 : f32
    %690 = arith.minimumf %cst_243, %639 : f32
    %691 = arith.mulf %689, %690 : f32
    %692 = arith.mulf %638, %639 : f32
    %cst_244 = arith.constant 2.400000e+00 : f32
    %693 = arith.addf %692, %cst_244 : f32
    %694 = arith.subf %693, %691 : f32
    %695 = arith.divf %691, %694 : f32
    %cst_245 = arith.constant 0.000000e+00 : f32
    %696 = vector.broadcast %cst_245 : f32 to vector<1x1xf32>
    %697 = vector.broadcast %695 : f32 to vector<1x1xf32>
    %698 = arith.select %666, %696, %697 : vector<1x1xi1>, vector<1x1xf32>
    %cst_246 = arith.constant 2.000000e+00 : f32
    %699 = arith.minimumf %cst_246, %638 : f32
    %cst_247 = arith.constant 1.200000e+00 : f32
    %700 = arith.minimumf %cst_247, %639 : f32
    %701 = arith.mulf %699, %700 : f32
    %702 = arith.mulf %638, %639 : f32
    %cst_248 = arith.constant 2.400000e+00 : f32
    %703 = arith.addf %702, %cst_248 : f32
    %704 = arith.subf %703, %701 : f32
    %705 = arith.divf %701, %704 : f32
    %cst_249 = arith.constant 0.000000e+00 : f32
    %706 = vector.broadcast %cst_249 : f32 to vector<1x1xf32>
    %707 = vector.broadcast %705 : f32 to vector<1x1xf32>
    %708 = arith.select %678, %706, %707 : vector<1x1xi1>, vector<1x1xf32>
    %709 = arith.maximumf %688, %698 : vector<1x1xf32>
    %710 = arith.maximumf %709, %708 : vector<1x1xf32>
    %711 = arith.cmpf oeq, %698, %710 : vector<1x1xf32>
    %c1_i32_250 = arith.constant 1 : i32
    %c2_i32_251 = arith.constant 2 : i32
    %712 = vector.broadcast %c1_i32_250 : i32 to vector<1x1xi32>
    %713 = vector.broadcast %c2_i32_251 : i32 to vector<1x1xi32>
    %714 = arith.select %711, %712, %713 : vector<1x1xi1>, vector<1x1xi32>
    %715 = arith.cmpf oeq, %688, %710 : vector<1x1xf32>
    %c0_i32_252 = arith.constant 0 : i32
    %716 = vector.broadcast %c0_i32_252 : i32 to vector<1x1xi32>
    %717 = arith.select %715, %716, %714 : vector<1x1xi1>, vector<1x1xi32>
    %cst_253 = arith.constant 4.000000e-01 : f32
    %718 = vector.broadcast %cst_253 : f32 to vector<1x1xf32>
    %719 = arith.cmpf oge, %710, %718 : vector<1x1xf32>
    %720 = arith.cmpi slt, %c1_i32_137, %0 : i32
    %721 = vector.broadcast %720 : i1 to vector<1x1xi1>
    %722 = arith.andi %719, %721 : vector<1x1xi1>
    %c1_i32_254 = arith.constant 1 : i32
    %723 = vector.broadcast %c1_i32_254 : i32 to vector<1x1xi32>
    %724 = arith.cmpi eq, %717, %723 : vector<1x1xi32>
    %cst_255 = arith.constant 1.200000e+00 : f32
    %cst_256 = arith.constant 8.000000e-01 : f32
    %725 = vector.broadcast %cst_255 : f32 to vector<1x1xf32>
    %726 = vector.broadcast %cst_256 : f32 to vector<1x1xf32>
    %727 = arith.select %724, %725, %726 : vector<1x1xi1>, vector<1x1xf32>
    %c1_i32_257 = arith.constant 1 : i32
    %728 = vector.broadcast %c1_i32_257 : i32 to vector<1x1xi32>
    %729 = arith.cmpi eq, %717, %728 : vector<1x1xi32>
    %cst_258 = arith.constant 2.000000e+00 : f32
    %cst_259 = arith.constant 8.000000e-01 : f32
    %730 = vector.broadcast %cst_258 : f32 to vector<1x1xf32>
    %731 = vector.broadcast %cst_259 : f32 to vector<1x1xf32>
    %732 = arith.select %729, %730, %731 : vector<1x1xi1>, vector<1x1xf32>
    %c2_i32_260 = arith.constant 2 : i32
    %733 = vector.broadcast %c2_i32_260 : i32 to vector<1x1xi32>
    %734 = arith.cmpi eq, %717, %733 : vector<1x1xi32>
    %cst_261 = arith.constant 2.000000e+00 : f32
    %735 = vector.broadcast %cst_261 : f32 to vector<1x1xf32>
    %736 = arith.select %734, %735, %727 : vector<1x1xi1>, vector<1x1xf32>
    %c2_i32_262 = arith.constant 2 : i32
    %737 = vector.broadcast %c2_i32_262 : i32 to vector<1x1xi32>
    %738 = arith.cmpi eq, %717, %737 : vector<1x1xi32>
    %cst_263 = arith.constant 1.200000e+00 : f32
    %739 = vector.broadcast %cst_263 : f32 to vector<1x1xf32>
    %740 = arith.select %738, %739, %732 : vector<1x1xi1>, vector<1x1xf32>
    %741 = vector.broadcast %638 : f32 to vector<1x1xf32>
    %742 = arith.divf %741, %736 : vector<1x1xf32>
    %cst_264 = arith.constant 9.99999997E-7 : f32
    %743 = vector.broadcast %cst_264 : f32 to vector<1x1xf32>
    %744 = arith.addf %742, %743 : vector<1x1xf32>
    %745 = math.log %744 : vector<1x1xf32>
    %746 = vector.broadcast %639 : f32 to vector<1x1xf32>
    %747 = arith.divf %746, %740 : vector<1x1xf32>
    %cst_265 = arith.constant 9.99999997E-7 : f32
    %748 = vector.broadcast %cst_265 : f32 to vector<1x1xf32>
    %749 = arith.addf %747, %748 : vector<1x1xf32>
    %750 = math.log %749 : vector<1x1xf32>
    %c6_i32_266 = arith.constant 6 : i32
    %751 = vector.broadcast %c6_i32_266 : i32 to vector<1x1xi32>
    %752 = arith.muli %717, %751 : vector<1x1xi32>
    %753 = vector.broadcast %642 : i32 to vector<1x1xi32>
    %754 = arith.addi %753, %752 : vector<1x1xi32>
    %755 = vector.broadcast %754 : vector<1x1xi32> to vector<16x128xi32>
    %756 = arith.subi %10, %755 : vector<16x128xi32>
    %c1_i32_267 = arith.constant 1 : i32
    %757 = vector.broadcast %c1_i32_267 : i32 to vector<16x128xi32>
    %758 = arith.cmpi eq, %756, %757 : vector<16x128xi32>
    %c2_i32_268 = arith.constant 2 : i32
    %759 = vector.broadcast %c2_i32_268 : i32 to vector<16x128xi32>
    %760 = arith.cmpi eq, %756, %759 : vector<16x128xi32>
    %c3_i32_269 = arith.constant 3 : i32
    %761 = vector.broadcast %c3_i32_269 : i32 to vector<16x128xi32>
    %762 = arith.cmpi eq, %756, %761 : vector<16x128xi32>
    %c4_i32_270 = arith.constant 4 : i32
    %763 = vector.broadcast %c4_i32_270 : i32 to vector<16x128xi32>
    %764 = arith.cmpi eq, %756, %763 : vector<16x128xi32>
    %cst_271 = arith.constant 1.000000e+00 : f32
    %765 = vector.shape_cast %750 : vector<1x1xf32> to vector<1x1xf32>
    %766 = vector.broadcast %765 : vector<1x1xf32> to vector<16x128xf32>
    %767 = vector.broadcast %cst_271 : f32 to vector<16x128xf32>
    %768 = arith.select %764, %766, %767 : vector<16x128xi1>, vector<16x128xf32>
    %769 = vector.shape_cast %745 : vector<1x1xf32> to vector<1x1xf32>
    %770 = vector.broadcast %769 : vector<1x1xf32> to vector<16x128xf32>
    %771 = arith.select %762, %770, %768 : vector<16x128xi1>, vector<16x128xf32>
    %772 = vector.broadcast %637 : f32 to vector<16x128xf32>
    %773 = arith.select %760, %772, %771 : vector<16x128xi1>, vector<16x128xf32>
    %774 = vector.broadcast %635 : f32 to vector<16x128xf32>
    %775 = arith.select %758, %774, %773 : vector<16x128xi1>, vector<16x128xf32>
    %c0_i32_272 = arith.constant 0 : i32
    %776 = vector.broadcast %c0_i32_272 : i32 to vector<16x128xi32>
    %777 = arith.cmpi sge, %756, %776 : vector<16x128xi32>
    %778 = vector.broadcast %722 : vector<1x1xi1> to vector<16x128xi1>
    %779 = arith.andi %778, %777 : vector<16x128xi1>
    %c6_i32_273 = arith.constant 6 : i32
    %780 = vector.broadcast %c6_i32_273 : i32 to vector<16x128xi32>
    %781 = arith.cmpi slt, %756, %780 : vector<16x128xi32>
    %782 = arith.andi %779, %781 : vector<16x128xi1>
    %783 = arith.select %782, %775, %418 : vector<16x128xi1>, vector<16x128xf32>
    %cst_274 = arith.constant 5.000000e-01 : f32
    %784 = vector.broadcast %cst_274 : f32 to vector<1x1xf32>
    %785 = arith.cmpf ogt, %688, %784 : vector<1x1xf32>
    %786 = arith.cmpf one, %688, %710 : vector<1x1xf32>
    %787 = arith.andi %785, %786 : vector<1x1xi1>
    %cst_275 = arith.constant 5.000000e-01 : f32
    %788 = vector.broadcast %cst_275 : f32 to vector<1x1xf32>
    %789 = arith.cmpf ogt, %698, %788 : vector<1x1xf32>
    %790 = arith.cmpf one, %698, %710 : vector<1x1xf32>
    %791 = arith.andi %789, %790 : vector<1x1xi1>
    %cst_276 = arith.constant 5.000000e-01 : f32
    %792 = vector.broadcast %cst_276 : f32 to vector<1x1xf32>
    %793 = arith.cmpf ogt, %708, %792 : vector<1x1xf32>
    %794 = arith.cmpf one, %708, %710 : vector<1x1xf32>
    %795 = arith.andi %793, %794 : vector<1x1xi1>
    %796 = arith.extui %787 : vector<1x1xi1> to vector<1x1xi32>
    %797 = arith.extui %791 : vector<1x1xi1> to vector<1x1xi32>
    %798 = arith.addi %796, %797 : vector<1x1xi32>
    %799 = arith.extui %795 : vector<1x1xi1> to vector<1x1xi32>
    %800 = arith.addi %798, %799 : vector<1x1xi32>
    %c2_i32_277 = arith.constant 2 : i32
    %801 = vector.broadcast %c2_i32_277 : i32 to vector<1x1xi32>
    %802 = arith.cmpi sge, %800, %801 : vector<1x1xi32>
    %803 = arith.andi %722, %802 : vector<1x1xi1>
    %c0_i32_278 = arith.constant 0 : i32
    %804 = arith.addi %642, %c0_i32_278 : i32
    %805 = vector.broadcast %804 : i32 to vector<16x128xi32>
    %806 = arith.cmpi eq, %10, %805 : vector<16x128xi32>
    %807 = vector.broadcast %787 : vector<1x1xi1> to vector<16x128xi1>
    %808 = arith.andi %807, %806 : vector<16x128xi1>
    %c6_i32_279 = arith.constant 6 : i32
    %809 = arith.addi %642, %c6_i32_279 : i32
    %810 = vector.broadcast %809 : i32 to vector<16x128xi32>
    %811 = arith.cmpi eq, %10, %810 : vector<16x128xi32>
    %812 = vector.broadcast %791 : vector<1x1xi1> to vector<16x128xi1>
    %813 = arith.andi %812, %811 : vector<16x128xi1>
    %814 = arith.ori %808, %813 : vector<16x128xi1>
    %c12_i32_280 = arith.constant 12 : i32
    %815 = arith.addi %642, %c12_i32_280 : i32
    %816 = vector.broadcast %815 : i32 to vector<16x128xi32>
    %817 = arith.cmpi eq, %10, %816 : vector<16x128xi32>
    %818 = vector.broadcast %795 : vector<1x1xi1> to vector<16x128xi1>
    %819 = arith.andi %818, %817 : vector<16x128xi1>
    %820 = arith.ori %814, %819 : vector<16x128xi1>
    %821 = vector.broadcast %803 : vector<1x1xi1> to vector<16x128xi1>
    %822 = arith.andi %821, %820 : vector<16x128xi1>
    %cst_281 = arith.constant -1.000000e+00 : f32
    %823 = vector.broadcast %cst_281 : f32 to vector<16x128xf32>
    %824 = arith.select %822, %823, %783 : vector<16x128xi1>, vector<16x128xf32>
    %c2_i32_282 = arith.constant 2 : i32
    %c4_i32_283 = arith.constant 4 : i32
    %825 = arith.muli %c4_i32_283, %c2_i32_282 : i32
    %c0_i32_284 = arith.constant 0 : i32
    %826 = arith.addi %825, %c0_i32_284 : i32
    %827 = arith.index_cast %826 : i32 to index
    %828 = memref.load %arg1[%827] : memref<32xf32, #tpu.memory_space<smem>>
    %c4_i32_285 = arith.constant 4 : i32
    %829 = arith.muli %c4_i32_285, %c2_i32_282 : i32
    %c1_i32_286 = arith.constant 1 : i32
    %830 = arith.addi %829, %c1_i32_286 : i32
    %831 = arith.index_cast %830 : i32 to index
    %832 = memref.load %arg1[%831] : memref<32xf32, #tpu.memory_space<smem>>
    %c4_i32_287 = arith.constant 4 : i32
    %833 = arith.muli %c4_i32_287, %c2_i32_282 : i32
    %c2_i32_288 = arith.constant 2 : i32
    %834 = arith.addi %833, %c2_i32_288 : i32
    %835 = arith.index_cast %834 : i32 to index
    %836 = memref.load %arg1[%835] : memref<32xf32, #tpu.memory_space<smem>>
    %c4_i32_289 = arith.constant 4 : i32
    %837 = arith.muli %c4_i32_289, %c2_i32_282 : i32
    %c3_i32_290 = arith.constant 3 : i32
    %838 = arith.addi %837, %c3_i32_290 : i32
    %839 = arith.index_cast %838 : i32 to index
    %840 = memref.load %arg1[%839] : memref<32xf32, #tpu.memory_space<smem>>
    %cst_291 = arith.constant 8.000000e+00 : f32
    %841 = arith.divf %828, %cst_291 : f32
    %cst_292 = arith.constant 8.000000e+00 : f32
    %842 = arith.divf %832, %cst_292 : f32
    %843 = arith.fptosi %841 : f32 to i32
    %844 = arith.fptosi %842 : f32 to i32
    %845 = arith.sitofp %843 : i32 to f32
    %846 = arith.subf %841, %845 : f32
    %847 = arith.sitofp %844 : i32 to f32
    %848 = arith.subf %842, %847 : f32
    %cst_293 = arith.constant 8.000000e+00 : f32
    %849 = arith.divf %836, %cst_293 : f32
    %cst_294 = arith.constant 8.000000e+00 : f32
    %850 = arith.divf %840, %cst_294 : f32
    %c4_i32_295 = arith.constant 4 : i32
    %851 = arith.muli %843, %c4_i32_295 : i32
    %852 = arith.addi %851, %844 : i32
    %c18_i32_296 = arith.constant 18 : i32
    %853 = arith.muli %852, %c18_i32_296 : i32
    %c0_i32_297 = arith.constant 0 : i32
    %854 = arith.addi %853, %c0_i32_297 : i32
    %c5_i32_298 = arith.constant 5 : i32
    %855 = arith.addi %854, %c5_i32_298 : i32
    %856 = vector.broadcast %855 : i32 to vector<8x128xi32>
    %857 = arith.cmpi eq, %5, %856 : vector<8x128xi32>
    %cst_299 = arith.constant 0.000000e+00 : f32
    %858 = vector.broadcast %cst_299 : f32 to vector<8x128xf32>
    %859 = arith.select %857, %629, %858 : vector<8x128xi1>, vector<8x128xf32>
    %cst_300 = arith.constant dense<0.000000e+00> : vector<8xf32>
    %860 = vector.multi_reduction <add>, %859, %cst_300 [1] : vector<8x128xf32> to vector<8xf32>
    %861 = vector.shape_cast %860 : vector<8xf32> to vector<8x1xf32>
    %cst_301 = arith.constant dense<0.000000e+00> : vector<1xf32>
    %862 = vector.multi_reduction <add>, %861, %cst_301 [0] : vector<8x1xf32> to vector<1xf32>
    %863 = vector.shape_cast %862 : vector<1xf32> to vector<1x1xf32>
    %cst_302 = arith.constant 1.000000e+00 : f32
    %864 = vector.broadcast %cst_302 : f32 to vector<1x1xf32>
    %865 = arith.cmpf oeq, %863, %864 : vector<1x1xf32>
    %c6_i32_303 = arith.constant 6 : i32
    %866 = arith.addi %853, %c6_i32_303 : i32
    %c5_i32_304 = arith.constant 5 : i32
    %867 = arith.addi %866, %c5_i32_304 : i32
    %868 = vector.broadcast %867 : i32 to vector<8x128xi32>
    %869 = arith.cmpi eq, %5, %868 : vector<8x128xi32>
    %cst_305 = arith.constant 0.000000e+00 : f32
    %870 = vector.broadcast %cst_305 : f32 to vector<8x128xf32>
    %871 = arith.select %869, %629, %870 : vector<8x128xi1>, vector<8x128xf32>
    %cst_306 = arith.constant dense<0.000000e+00> : vector<8xf32>
    %872 = vector.multi_reduction <add>, %871, %cst_306 [1] : vector<8x128xf32> to vector<8xf32>
    %873 = vector.shape_cast %872 : vector<8xf32> to vector<8x1xf32>
    %cst_307 = arith.constant dense<0.000000e+00> : vector<1xf32>
    %874 = vector.multi_reduction <add>, %873, %cst_307 [0] : vector<8x1xf32> to vector<1xf32>
    %875 = vector.shape_cast %874 : vector<1xf32> to vector<1x1xf32>
    %cst_308 = arith.constant 1.000000e+00 : f32
    %876 = vector.broadcast %cst_308 : f32 to vector<1x1xf32>
    %877 = arith.cmpf oeq, %875, %876 : vector<1x1xf32>
    %c12_i32_309 = arith.constant 12 : i32
    %878 = arith.addi %853, %c12_i32_309 : i32
    %c5_i32_310 = arith.constant 5 : i32
    %879 = arith.addi %878, %c5_i32_310 : i32
    %880 = vector.broadcast %879 : i32 to vector<8x128xi32>
    %881 = arith.cmpi eq, %5, %880 : vector<8x128xi32>
    %cst_311 = arith.constant 0.000000e+00 : f32
    %882 = vector.broadcast %cst_311 : f32 to vector<8x128xf32>
    %883 = arith.select %881, %629, %882 : vector<8x128xi1>, vector<8x128xf32>
    %cst_312 = arith.constant dense<0.000000e+00> : vector<8xf32>
    %884 = vector.multi_reduction <add>, %883, %cst_312 [1] : vector<8x128xf32> to vector<8xf32>
    %885 = vector.shape_cast %884 : vector<8xf32> to vector<8x1xf32>
    %cst_313 = arith.constant dense<0.000000e+00> : vector<1xf32>
    %886 = vector.multi_reduction <add>, %885, %cst_313 [0] : vector<8x1xf32> to vector<1xf32>
    %887 = vector.shape_cast %886 : vector<1xf32> to vector<1x1xf32>
    %cst_314 = arith.constant 1.000000e+00 : f32
    %888 = vector.broadcast %cst_314 : f32 to vector<1x1xf32>
    %889 = arith.cmpf oeq, %887, %888 : vector<1x1xf32>
    %cst_315 = arith.constant 1.500000e+00 : f32
    %890 = arith.minimumf %cst_315, %849 : f32
    %cst_316 = arith.constant 1.500000e+00 : f32
    %891 = arith.minimumf %cst_316, %850 : f32
    %892 = arith.mulf %890, %891 : f32
    %893 = arith.mulf %849, %850 : f32
    %cst_317 = arith.constant 2.250000e+00 : f32
    %894 = arith.addf %893, %cst_317 : f32
    %895 = arith.subf %894, %892 : f32
    %896 = arith.divf %892, %895 : f32
    %cst_318 = arith.constant 0.000000e+00 : f32
    %897 = vector.broadcast %cst_318 : f32 to vector<1x1xf32>
    %898 = vector.broadcast %896 : f32 to vector<1x1xf32>
    %899 = arith.select %865, %897, %898 : vector<1x1xi1>, vector<1x1xf32>
    %cst_319 = arith.constant 2.000000e+00 : f32
    %900 = arith.minimumf %cst_319, %849 : f32
    %cst_320 = arith.constant 3.000000e+00 : f32
    %901 = arith.minimumf %cst_320, %850 : f32
    %902 = arith.mulf %900, %901 : f32
    %903 = arith.mulf %849, %850 : f32
    %cst_321 = arith.constant 6.000000e+00 : f32
    %904 = arith.addf %903, %cst_321 : f32
    %905 = arith.subf %904, %902 : f32
    %906 = arith.divf %902, %905 : f32
    %cst_322 = arith.constant 0.000000e+00 : f32
    %907 = vector.broadcast %cst_322 : f32 to vector<1x1xf32>
    %908 = vector.broadcast %906 : f32 to vector<1x1xf32>
    %909 = arith.select %877, %907, %908 : vector<1x1xi1>, vector<1x1xf32>
    %cst_323 = arith.constant 3.500000e+00 : f32
    %910 = arith.minimumf %cst_323, %849 : f32
    %cst_324 = arith.constant 2.500000e+00 : f32
    %911 = arith.minimumf %cst_324, %850 : f32
    %912 = arith.mulf %910, %911 : f32
    %913 = arith.mulf %849, %850 : f32
    %cst_325 = arith.constant 8.750000e+00 : f32
    %914 = arith.addf %913, %cst_325 : f32
    %915 = arith.subf %914, %912 : f32
    %916 = arith.divf %912, %915 : f32
    %cst_326 = arith.constant 0.000000e+00 : f32
    %917 = vector.broadcast %cst_326 : f32 to vector<1x1xf32>
    %918 = vector.broadcast %916 : f32 to vector<1x1xf32>
    %919 = arith.select %889, %917, %918 : vector<1x1xi1>, vector<1x1xf32>
    %920 = arith.maximumf %899, %909 : vector<1x1xf32>
    %921 = arith.maximumf %920, %919 : vector<1x1xf32>
    %922 = arith.cmpf oeq, %909, %921 : vector<1x1xf32>
    %c1_i32_327 = arith.constant 1 : i32
    %c2_i32_328 = arith.constant 2 : i32
    %923 = vector.broadcast %c1_i32_327 : i32 to vector<1x1xi32>
    %924 = vector.broadcast %c2_i32_328 : i32 to vector<1x1xi32>
    %925 = arith.select %922, %923, %924 : vector<1x1xi1>, vector<1x1xi32>
    %926 = arith.cmpf oeq, %899, %921 : vector<1x1xf32>
    %c0_i32_329 = arith.constant 0 : i32
    %927 = vector.broadcast %c0_i32_329 : i32 to vector<1x1xi32>
    %928 = arith.select %926, %927, %925 : vector<1x1xi1>, vector<1x1xi32>
    %cst_330 = arith.constant 4.000000e-01 : f32
    %929 = vector.broadcast %cst_330 : f32 to vector<1x1xf32>
    %930 = arith.cmpf oge, %921, %929 : vector<1x1xf32>
    %931 = arith.cmpi slt, %c2_i32_282, %0 : i32
    %932 = vector.broadcast %931 : i1 to vector<1x1xi1>
    %933 = arith.andi %930, %932 : vector<1x1xi1>
    %c1_i32_331 = arith.constant 1 : i32
    %934 = vector.broadcast %c1_i32_331 : i32 to vector<1x1xi32>
    %935 = arith.cmpi eq, %928, %934 : vector<1x1xi32>
    %cst_332 = arith.constant 2.000000e+00 : f32
    %cst_333 = arith.constant 1.500000e+00 : f32
    %936 = vector.broadcast %cst_332 : f32 to vector<1x1xf32>
    %937 = vector.broadcast %cst_333 : f32 to vector<1x1xf32>
    %938 = arith.select %935, %936, %937 : vector<1x1xi1>, vector<1x1xf32>
    %c1_i32_334 = arith.constant 1 : i32
    %939 = vector.broadcast %c1_i32_334 : i32 to vector<1x1xi32>
    %940 = arith.cmpi eq, %928, %939 : vector<1x1xi32>
    %cst_335 = arith.constant 3.000000e+00 : f32
    %cst_336 = arith.constant 1.500000e+00 : f32
    %941 = vector.broadcast %cst_335 : f32 to vector<1x1xf32>
    %942 = vector.broadcast %cst_336 : f32 to vector<1x1xf32>
    %943 = arith.select %940, %941, %942 : vector<1x1xi1>, vector<1x1xf32>
    %c2_i32_337 = arith.constant 2 : i32
    %944 = vector.broadcast %c2_i32_337 : i32 to vector<1x1xi32>
    %945 = arith.cmpi eq, %928, %944 : vector<1x1xi32>
    %cst_338 = arith.constant 3.500000e+00 : f32
    %946 = vector.broadcast %cst_338 : f32 to vector<1x1xf32>
    %947 = arith.select %945, %946, %938 : vector<1x1xi1>, vector<1x1xf32>
    %c2_i32_339 = arith.constant 2 : i32
    %948 = vector.broadcast %c2_i32_339 : i32 to vector<1x1xi32>
    %949 = arith.cmpi eq, %928, %948 : vector<1x1xi32>
    %cst_340 = arith.constant 2.500000e+00 : f32
    %950 = vector.broadcast %cst_340 : f32 to vector<1x1xf32>
    %951 = arith.select %949, %950, %943 : vector<1x1xi1>, vector<1x1xf32>
    %952 = vector.broadcast %849 : f32 to vector<1x1xf32>
    %953 = arith.divf %952, %947 : vector<1x1xf32>
    %cst_341 = arith.constant 9.99999997E-7 : f32
    %954 = vector.broadcast %cst_341 : f32 to vector<1x1xf32>
    %955 = arith.addf %953, %954 : vector<1x1xf32>
    %956 = math.log %955 : vector<1x1xf32>
    %957 = vector.broadcast %850 : f32 to vector<1x1xf32>
    %958 = arith.divf %957, %951 : vector<1x1xf32>
    %cst_342 = arith.constant 9.99999997E-7 : f32
    %959 = vector.broadcast %cst_342 : f32 to vector<1x1xf32>
    %960 = arith.addf %958, %959 : vector<1x1xf32>
    %961 = math.log %960 : vector<1x1xf32>
    %c6_i32_343 = arith.constant 6 : i32
    %962 = vector.broadcast %c6_i32_343 : i32 to vector<1x1xi32>
    %963 = arith.muli %928, %962 : vector<1x1xi32>
    %964 = vector.broadcast %853 : i32 to vector<1x1xi32>
    %965 = arith.addi %964, %963 : vector<1x1xi32>
    %966 = vector.broadcast %965 : vector<1x1xi32> to vector<8x128xi32>
    %967 = arith.subi %5, %966 : vector<8x128xi32>
    %c1_i32_344 = arith.constant 1 : i32
    %968 = vector.broadcast %c1_i32_344 : i32 to vector<8x128xi32>
    %969 = arith.cmpi eq, %967, %968 : vector<8x128xi32>
    %c2_i32_345 = arith.constant 2 : i32
    %970 = vector.broadcast %c2_i32_345 : i32 to vector<8x128xi32>
    %971 = arith.cmpi eq, %967, %970 : vector<8x128xi32>
    %c3_i32_346 = arith.constant 3 : i32
    %972 = vector.broadcast %c3_i32_346 : i32 to vector<8x128xi32>
    %973 = arith.cmpi eq, %967, %972 : vector<8x128xi32>
    %c4_i32_347 = arith.constant 4 : i32
    %974 = vector.broadcast %c4_i32_347 : i32 to vector<8x128xi32>
    %975 = arith.cmpi eq, %967, %974 : vector<8x128xi32>
    %cst_348 = arith.constant 1.000000e+00 : f32
    %976 = vector.shape_cast %961 : vector<1x1xf32> to vector<1x1xf32>
    %977 = vector.broadcast %976 : vector<1x1xf32> to vector<8x128xf32>
    %978 = vector.broadcast %cst_348 : f32 to vector<8x128xf32>
    %979 = arith.select %975, %977, %978 : vector<8x128xi1>, vector<8x128xf32>
    %980 = vector.shape_cast %956 : vector<1x1xf32> to vector<1x1xf32>
    %981 = vector.broadcast %980 : vector<1x1xf32> to vector<8x128xf32>
    %982 = arith.select %973, %981, %979 : vector<8x128xi1>, vector<8x128xf32>
    %983 = vector.broadcast %848 : f32 to vector<8x128xf32>
    %984 = arith.select %971, %983, %982 : vector<8x128xi1>, vector<8x128xf32>
    %985 = vector.broadcast %846 : f32 to vector<8x128xf32>
    %986 = arith.select %969, %985, %984 : vector<8x128xi1>, vector<8x128xf32>
    %c0_i32_349 = arith.constant 0 : i32
    %987 = vector.broadcast %c0_i32_349 : i32 to vector<8x128xi32>
    %988 = arith.cmpi sge, %967, %987 : vector<8x128xi32>
    %989 = vector.broadcast %933 : vector<1x1xi1> to vector<8x128xi1>
    %990 = arith.andi %989, %988 : vector<8x128xi1>
    %c6_i32_350 = arith.constant 6 : i32
    %991 = vector.broadcast %c6_i32_350 : i32 to vector<8x128xi32>
    %992 = arith.cmpi slt, %967, %991 : vector<8x128xi32>
    %993 = arith.andi %990, %992 : vector<8x128xi1>
    %994 = arith.select %993, %986, %629 : vector<8x128xi1>, vector<8x128xf32>
    %cst_351 = arith.constant 5.000000e-01 : f32
    %995 = vector.broadcast %cst_351 : f32 to vector<1x1xf32>
    %996 = arith.cmpf ogt, %899, %995 : vector<1x1xf32>
    %997 = arith.cmpf one, %899, %921 : vector<1x1xf32>
    %998 = arith.andi %996, %997 : vector<1x1xi1>
    %cst_352 = arith.constant 5.000000e-01 : f32
    %999 = vector.broadcast %cst_352 : f32 to vector<1x1xf32>
    %1000 = arith.cmpf ogt, %909, %999 : vector<1x1xf32>
    %1001 = arith.cmpf one, %909, %921 : vector<1x1xf32>
    %1002 = arith.andi %1000, %1001 : vector<1x1xi1>
    %cst_353 = arith.constant 5.000000e-01 : f32
    %1003 = vector.broadcast %cst_353 : f32 to vector<1x1xf32>
    %1004 = arith.cmpf ogt, %919, %1003 : vector<1x1xf32>
    %1005 = arith.cmpf one, %919, %921 : vector<1x1xf32>
    %1006 = arith.andi %1004, %1005 : vector<1x1xi1>
    %1007 = arith.extui %998 : vector<1x1xi1> to vector<1x1xi32>
    %1008 = arith.extui %1002 : vector<1x1xi1> to vector<1x1xi32>
    %1009 = arith.addi %1007, %1008 : vector<1x1xi32>
    %1010 = arith.extui %1006 : vector<1x1xi1> to vector<1x1xi32>
    %1011 = arith.addi %1009, %1010 : vector<1x1xi32>
    %c2_i32_354 = arith.constant 2 : i32
    %1012 = vector.broadcast %c2_i32_354 : i32 to vector<1x1xi32>
    %1013 = arith.cmpi sge, %1011, %1012 : vector<1x1xi32>
    %1014 = arith.andi %933, %1013 : vector<1x1xi1>
    %c0_i32_355 = arith.constant 0 : i32
    %1015 = arith.addi %853, %c0_i32_355 : i32
    %1016 = vector.broadcast %1015 : i32 to vector<8x128xi32>
    %1017 = arith.cmpi eq, %5, %1016 : vector<8x128xi32>
    %1018 = vector.broadcast %998 : vector<1x1xi1> to vector<8x128xi1>
    %1019 = arith.andi %1018, %1017 : vector<8x128xi1>
    %c6_i32_356 = arith.constant 6 : i32
    %1020 = arith.addi %853, %c6_i32_356 : i32
    %1021 = vector.broadcast %1020 : i32 to vector<8x128xi32>
    %1022 = arith.cmpi eq, %5, %1021 : vector<8x128xi32>
    %1023 = vector.broadcast %1002 : vector<1x1xi1> to vector<8x128xi1>
    %1024 = arith.andi %1023, %1022 : vector<8x128xi1>
    %1025 = arith.ori %1019, %1024 : vector<8x128xi1>
    %c12_i32_357 = arith.constant 12 : i32
    %1026 = arith.addi %853, %c12_i32_357 : i32
    %1027 = vector.broadcast %1026 : i32 to vector<8x128xi32>
    %1028 = arith.cmpi eq, %5, %1027 : vector<8x128xi32>
    %1029 = vector.broadcast %1006 : vector<1x1xi1> to vector<8x128xi1>
    %1030 = arith.andi %1029, %1028 : vector<8x128xi1>
    %1031 = arith.ori %1025, %1030 : vector<8x128xi1>
    %1032 = vector.broadcast %1014 : vector<1x1xi1> to vector<8x128xi1>
    %1033 = arith.andi %1032, %1031 : vector<8x128xi1>
    %cst_358 = arith.constant -1.000000e+00 : f32
    %1034 = vector.broadcast %cst_358 : f32 to vector<8x128xf32>
    %1035 = arith.select %1033, %1034, %994 : vector<8x128xi1>, vector<8x128xf32>
    %cst_359 = arith.constant 4.000000e+00 : f32
    %1036 = arith.divf %828, %cst_359 : f32
    %cst_360 = arith.constant 4.000000e+00 : f32
    %1037 = arith.divf %832, %cst_360 : f32
    %1038 = arith.fptosi %1036 : f32 to i32
    %1039 = arith.fptosi %1037 : f32 to i32
    %1040 = arith.sitofp %1038 : i32 to f32
    %1041 = arith.subf %1036, %1040 : f32
    %1042 = arith.sitofp %1039 : i32 to f32
    %1043 = arith.subf %1037, %1042 : f32
    %cst_361 = arith.constant 4.000000e+00 : f32
    %1044 = arith.divf %836, %cst_361 : f32
    %cst_362 = arith.constant 4.000000e+00 : f32
    %1045 = arith.divf %840, %cst_362 : f32
    %c8_i32_363 = arith.constant 8 : i32
    %1046 = arith.muli %1038, %c8_i32_363 : i32
    %1047 = arith.addi %1046, %1039 : i32
    %c18_i32_364 = arith.constant 18 : i32
    %1048 = arith.muli %1047, %c18_i32_364 : i32
    %c0_i32_365 = arith.constant 0 : i32
    %1049 = arith.addi %1048, %c0_i32_365 : i32
    %c5_i32_366 = arith.constant 5 : i32
    %1050 = arith.addi %1049, %c5_i32_366 : i32
    %1051 = vector.broadcast %1050 : i32 to vector<16x128xi32>
    %1052 = arith.cmpi eq, %10, %1051 : vector<16x128xi32>
    %cst_367 = arith.constant 0.000000e+00 : f32
    %1053 = vector.broadcast %cst_367 : f32 to vector<16x128xf32>
    %1054 = arith.select %1052, %824, %1053 : vector<16x128xi1>, vector<16x128xf32>
    %cst_368 = arith.constant dense<0.000000e+00> : vector<16xf32>
    %1055 = vector.multi_reduction <add>, %1054, %cst_368 [1] : vector<16x128xf32> to vector<16xf32>
    %1056 = vector.shape_cast %1055 : vector<16xf32> to vector<16x1xf32>
    %cst_369 = arith.constant dense<0.000000e+00> : vector<1xf32>
    %1057 = vector.multi_reduction <add>, %1056, %cst_369 [0] : vector<16x1xf32> to vector<1xf32>
    %1058 = vector.shape_cast %1057 : vector<1xf32> to vector<1x1xf32>
    %cst_370 = arith.constant 1.000000e+00 : f32
    %1059 = vector.broadcast %cst_370 : f32 to vector<1x1xf32>
    %1060 = arith.cmpf oeq, %1058, %1059 : vector<1x1xf32>
    %c6_i32_371 = arith.constant 6 : i32
    %1061 = arith.addi %1048, %c6_i32_371 : i32
    %c5_i32_372 = arith.constant 5 : i32
    %1062 = arith.addi %1061, %c5_i32_372 : i32
    %1063 = vector.broadcast %1062 : i32 to vector<16x128xi32>
    %1064 = arith.cmpi eq, %10, %1063 : vector<16x128xi32>
    %cst_373 = arith.constant 0.000000e+00 : f32
    %1065 = vector.broadcast %cst_373 : f32 to vector<16x128xf32>
    %1066 = arith.select %1064, %824, %1065 : vector<16x128xi1>, vector<16x128xf32>
    %cst_374 = arith.constant dense<0.000000e+00> : vector<16xf32>
    %1067 = vector.multi_reduction <add>, %1066, %cst_374 [1] : vector<16x128xf32> to vector<16xf32>
    %1068 = vector.shape_cast %1067 : vector<16xf32> to vector<16x1xf32>
    %cst_375 = arith.constant dense<0.000000e+00> : vector<1xf32>
    %1069 = vector.multi_reduction <add>, %1068, %cst_375 [0] : vector<16x1xf32> to vector<1xf32>
    %1070 = vector.shape_cast %1069 : vector<1xf32> to vector<1x1xf32>
    %cst_376 = arith.constant 1.000000e+00 : f32
    %1071 = vector.broadcast %cst_376 : f32 to vector<1x1xf32>
    %1072 = arith.cmpf oeq, %1070, %1071 : vector<1x1xf32>
    %c12_i32_377 = arith.constant 12 : i32
    %1073 = arith.addi %1048, %c12_i32_377 : i32
    %c5_i32_378 = arith.constant 5 : i32
    %1074 = arith.addi %1073, %c5_i32_378 : i32
    %1075 = vector.broadcast %1074 : i32 to vector<16x128xi32>
    %1076 = arith.cmpi eq, %10, %1075 : vector<16x128xi32>
    %cst_379 = arith.constant 0.000000e+00 : f32
    %1077 = vector.broadcast %cst_379 : f32 to vector<16x128xf32>
    %1078 = arith.select %1076, %824, %1077 : vector<16x128xi1>, vector<16x128xf32>
    %cst_380 = arith.constant dense<0.000000e+00> : vector<16xf32>
    %1079 = vector.multi_reduction <add>, %1078, %cst_380 [1] : vector<16x128xf32> to vector<16xf32>
    %1080 = vector.shape_cast %1079 : vector<16xf32> to vector<16x1xf32>
    %cst_381 = arith.constant dense<0.000000e+00> : vector<1xf32>
    %1081 = vector.multi_reduction <add>, %1080, %cst_381 [0] : vector<16x1xf32> to vector<1xf32>
    %1082 = vector.shape_cast %1081 : vector<1xf32> to vector<1x1xf32>
    %cst_382 = arith.constant 1.000000e+00 : f32
    %1083 = vector.broadcast %cst_382 : f32 to vector<1x1xf32>
    %1084 = arith.cmpf oeq, %1082, %1083 : vector<1x1xf32>
    %cst_383 = arith.constant 8.000000e-01 : f32
    %1085 = arith.minimumf %cst_383, %1044 : f32
    %cst_384 = arith.constant 8.000000e-01 : f32
    %1086 = arith.minimumf %cst_384, %1045 : f32
    %1087 = arith.mulf %1085, %1086 : f32
    %1088 = arith.mulf %1044, %1045 : f32
    %cst_385 = arith.constant 6.400000e-01 : f32
    %1089 = arith.addf %1088, %cst_385 : f32
    %1090 = arith.subf %1089, %1087 : f32
    %1091 = arith.divf %1087, %1090 : f32
    %cst_386 = arith.constant 0.000000e+00 : f32
    %1092 = vector.broadcast %cst_386 : f32 to vector<1x1xf32>
    %1093 = vector.broadcast %1091 : f32 to vector<1x1xf32>
    %1094 = arith.select %1060, %1092, %1093 : vector<1x1xi1>, vector<1x1xf32>
    %cst_387 = arith.constant 1.200000e+00 : f32
    %1095 = arith.minimumf %cst_387, %1044 : f32
    %cst_388 = arith.constant 2.000000e+00 : f32
    %1096 = arith.minimumf %cst_388, %1045 : f32
    %1097 = arith.mulf %1095, %1096 : f32
    %1098 = arith.mulf %1044, %1045 : f32
    %cst_389 = arith.constant 2.400000e+00 : f32
    %1099 = arith.addf %1098, %cst_389 : f32
    %1100 = arith.subf %1099, %1097 : f32
    %1101 = arith.divf %1097, %1100 : f32
    %cst_390 = arith.constant 0.000000e+00 : f32
    %1102 = vector.broadcast %cst_390 : f32 to vector<1x1xf32>
    %1103 = vector.broadcast %1101 : f32 to vector<1x1xf32>
    %1104 = arith.select %1072, %1102, %1103 : vector<1x1xi1>, vector<1x1xf32>
    %cst_391 = arith.constant 2.000000e+00 : f32
    %1105 = arith.minimumf %cst_391, %1044 : f32
    %cst_392 = arith.constant 1.200000e+00 : f32
    %1106 = arith.minimumf %cst_392, %1045 : f32
    %1107 = arith.mulf %1105, %1106 : f32
    %1108 = arith.mulf %1044, %1045 : f32
    %cst_393 = arith.constant 2.400000e+00 : f32
    %1109 = arith.addf %1108, %cst_393 : f32
    %1110 = arith.subf %1109, %1107 : f32
    %1111 = arith.divf %1107, %1110 : f32
    %cst_394 = arith.constant 0.000000e+00 : f32
    %1112 = vector.broadcast %cst_394 : f32 to vector<1x1xf32>
    %1113 = vector.broadcast %1111 : f32 to vector<1x1xf32>
    %1114 = arith.select %1084, %1112, %1113 : vector<1x1xi1>, vector<1x1xf32>
    %1115 = arith.maximumf %1094, %1104 : vector<1x1xf32>
    %1116 = arith.maximumf %1115, %1114 : vector<1x1xf32>
    %1117 = arith.cmpf oeq, %1104, %1116 : vector<1x1xf32>
    %c1_i32_395 = arith.constant 1 : i32
    %c2_i32_396 = arith.constant 2 : i32
    %1118 = vector.broadcast %c1_i32_395 : i32 to vector<1x1xi32>
    %1119 = vector.broadcast %c2_i32_396 : i32 to vector<1x1xi32>
    %1120 = arith.select %1117, %1118, %1119 : vector<1x1xi1>, vector<1x1xi32>
    %1121 = arith.cmpf oeq, %1094, %1116 : vector<1x1xf32>
    %c0_i32_397 = arith.constant 0 : i32
    %1122 = vector.broadcast %c0_i32_397 : i32 to vector<1x1xi32>
    %1123 = arith.select %1121, %1122, %1120 : vector<1x1xi1>, vector<1x1xi32>
    %cst_398 = arith.constant 4.000000e-01 : f32
    %1124 = vector.broadcast %cst_398 : f32 to vector<1x1xf32>
    %1125 = arith.cmpf oge, %1116, %1124 : vector<1x1xf32>
    %1126 = arith.cmpi slt, %c2_i32_282, %0 : i32
    %1127 = vector.broadcast %1126 : i1 to vector<1x1xi1>
    %1128 = arith.andi %1125, %1127 : vector<1x1xi1>
    %c1_i32_399 = arith.constant 1 : i32
    %1129 = vector.broadcast %c1_i32_399 : i32 to vector<1x1xi32>
    %1130 = arith.cmpi eq, %1123, %1129 : vector<1x1xi32>
    %cst_400 = arith.constant 1.200000e+00 : f32
    %cst_401 = arith.constant 8.000000e-01 : f32
    %1131 = vector.broadcast %cst_400 : f32 to vector<1x1xf32>
    %1132 = vector.broadcast %cst_401 : f32 to vector<1x1xf32>
    %1133 = arith.select %1130, %1131, %1132 : vector<1x1xi1>, vector<1x1xf32>
    %c1_i32_402 = arith.constant 1 : i32
    %1134 = vector.broadcast %c1_i32_402 : i32 to vector<1x1xi32>
    %1135 = arith.cmpi eq, %1123, %1134 : vector<1x1xi32>
    %cst_403 = arith.constant 2.000000e+00 : f32
    %cst_404 = arith.constant 8.000000e-01 : f32
    %1136 = vector.broadcast %cst_403 : f32 to vector<1x1xf32>
    %1137 = vector.broadcast %cst_404 : f32 to vector<1x1xf32>
    %1138 = arith.select %1135, %1136, %1137 : vector<1x1xi1>, vector<1x1xf32>
    %c2_i32_405 = arith.constant 2 : i32
    %1139 = vector.broadcast %c2_i32_405 : i32 to vector<1x1xi32>
    %1140 = arith.cmpi eq, %1123, %1139 : vector<1x1xi32>
    %cst_406 = arith.constant 2.000000e+00 : f32
    %1141 = vector.broadcast %cst_406 : f32 to vector<1x1xf32>
    %1142 = arith.select %1140, %1141, %1133 : vector<1x1xi1>, vector<1x1xf32>
    %c2_i32_407 = arith.constant 2 : i32
    %1143 = vector.broadcast %c2_i32_407 : i32 to vector<1x1xi32>
    %1144 = arith.cmpi eq, %1123, %1143 : vector<1x1xi32>
    %cst_408 = arith.constant 1.200000e+00 : f32
    %1145 = vector.broadcast %cst_408 : f32 to vector<1x1xf32>
    %1146 = arith.select %1144, %1145, %1138 : vector<1x1xi1>, vector<1x1xf32>
    %1147 = vector.broadcast %1044 : f32 to vector<1x1xf32>
    %1148 = arith.divf %1147, %1142 : vector<1x1xf32>
    %cst_409 = arith.constant 9.99999997E-7 : f32
    %1149 = vector.broadcast %cst_409 : f32 to vector<1x1xf32>
    %1150 = arith.addf %1148, %1149 : vector<1x1xf32>
    %1151 = math.log %1150 : vector<1x1xf32>
    %1152 = vector.broadcast %1045 : f32 to vector<1x1xf32>
    %1153 = arith.divf %1152, %1146 : vector<1x1xf32>
    %cst_410 = arith.constant 9.99999997E-7 : f32
    %1154 = vector.broadcast %cst_410 : f32 to vector<1x1xf32>
    %1155 = arith.addf %1153, %1154 : vector<1x1xf32>
    %1156 = math.log %1155 : vector<1x1xf32>
    %c6_i32_411 = arith.constant 6 : i32
    %1157 = vector.broadcast %c6_i32_411 : i32 to vector<1x1xi32>
    %1158 = arith.muli %1123, %1157 : vector<1x1xi32>
    %1159 = vector.broadcast %1048 : i32 to vector<1x1xi32>
    %1160 = arith.addi %1159, %1158 : vector<1x1xi32>
    %1161 = vector.broadcast %1160 : vector<1x1xi32> to vector<16x128xi32>
    %1162 = arith.subi %10, %1161 : vector<16x128xi32>
    %c1_i32_412 = arith.constant 1 : i32
    %1163 = vector.broadcast %c1_i32_412 : i32 to vector<16x128xi32>
    %1164 = arith.cmpi eq, %1162, %1163 : vector<16x128xi32>
    %c2_i32_413 = arith.constant 2 : i32
    %1165 = vector.broadcast %c2_i32_413 : i32 to vector<16x128xi32>
    %1166 = arith.cmpi eq, %1162, %1165 : vector<16x128xi32>
    %c3_i32_414 = arith.constant 3 : i32
    %1167 = vector.broadcast %c3_i32_414 : i32 to vector<16x128xi32>
    %1168 = arith.cmpi eq, %1162, %1167 : vector<16x128xi32>
    %c4_i32_415 = arith.constant 4 : i32
    %1169 = vector.broadcast %c4_i32_415 : i32 to vector<16x128xi32>
    %1170 = arith.cmpi eq, %1162, %1169 : vector<16x128xi32>
    %cst_416 = arith.constant 1.000000e+00 : f32
    %1171 = vector.shape_cast %1156 : vector<1x1xf32> to vector<1x1xf32>
    %1172 = vector.broadcast %1171 : vector<1x1xf32> to vector<16x128xf32>
    %1173 = vector.broadcast %cst_416 : f32 to vector<16x128xf32>
    %1174 = arith.select %1170, %1172, %1173 : vector<16x128xi1>, vector<16x128xf32>
    %1175 = vector.shape_cast %1151 : vector<1x1xf32> to vector<1x1xf32>
    %1176 = vector.broadcast %1175 : vector<1x1xf32> to vector<16x128xf32>
    %1177 = arith.select %1168, %1176, %1174 : vector<16x128xi1>, vector<16x128xf32>
    %1178 = vector.broadcast %1043 : f32 to vector<16x128xf32>
    %1179 = arith.select %1166, %1178, %1177 : vector<16x128xi1>, vector<16x128xf32>
    %1180 = vector.broadcast %1041 : f32 to vector<16x128xf32>
    %1181 = arith.select %1164, %1180, %1179 : vector<16x128xi1>, vector<16x128xf32>
    %c0_i32_417 = arith.constant 0 : i32
    %1182 = vector.broadcast %c0_i32_417 : i32 to vector<16x128xi32>
    %1183 = arith.cmpi sge, %1162, %1182 : vector<16x128xi32>
    %1184 = vector.broadcast %1128 : vector<1x1xi1> to vector<16x128xi1>
    %1185 = arith.andi %1184, %1183 : vector<16x128xi1>
    %c6_i32_418 = arith.constant 6 : i32
    %1186 = vector.broadcast %c6_i32_418 : i32 to vector<16x128xi32>
    %1187 = arith.cmpi slt, %1162, %1186 : vector<16x128xi32>
    %1188 = arith.andi %1185, %1187 : vector<16x128xi1>
    %1189 = arith.select %1188, %1181, %824 : vector<16x128xi1>, vector<16x128xf32>
    %cst_419 = arith.constant 5.000000e-01 : f32
    %1190 = vector.broadcast %cst_419 : f32 to vector<1x1xf32>
    %1191 = arith.cmpf ogt, %1094, %1190 : vector<1x1xf32>
    %1192 = arith.cmpf one, %1094, %1116 : vector<1x1xf32>
    %1193 = arith.andi %1191, %1192 : vector<1x1xi1>
    %cst_420 = arith.constant 5.000000e-01 : f32
    %1194 = vector.broadcast %cst_420 : f32 to vector<1x1xf32>
    %1195 = arith.cmpf ogt, %1104, %1194 : vector<1x1xf32>
    %1196 = arith.cmpf one, %1104, %1116 : vector<1x1xf32>
    %1197 = arith.andi %1195, %1196 : vector<1x1xi1>
    %cst_421 = arith.constant 5.000000e-01 : f32
    %1198 = vector.broadcast %cst_421 : f32 to vector<1x1xf32>
    %1199 = arith.cmpf ogt, %1114, %1198 : vector<1x1xf32>
    %1200 = arith.cmpf one, %1114, %1116 : vector<1x1xf32>
    %1201 = arith.andi %1199, %1200 : vector<1x1xi1>
    %1202 = arith.extui %1193 : vector<1x1xi1> to vector<1x1xi32>
    %1203 = arith.extui %1197 : vector<1x1xi1> to vector<1x1xi32>
    %1204 = arith.addi %1202, %1203 : vector<1x1xi32>
    %1205 = arith.extui %1201 : vector<1x1xi1> to vector<1x1xi32>
    %1206 = arith.addi %1204, %1205 : vector<1x1xi32>
    %c2_i32_422 = arith.constant 2 : i32
    %1207 = vector.broadcast %c2_i32_422 : i32 to vector<1x1xi32>
    %1208 = arith.cmpi sge, %1206, %1207 : vector<1x1xi32>
    %1209 = arith.andi %1128, %1208 : vector<1x1xi1>
    %c0_i32_423 = arith.constant 0 : i32
    %1210 = arith.addi %1048, %c0_i32_423 : i32
    %1211 = vector.broadcast %1210 : i32 to vector<16x128xi32>
    %1212 = arith.cmpi eq, %10, %1211 : vector<16x128xi32>
    %1213 = vector.broadcast %1193 : vector<1x1xi1> to vector<16x128xi1>
    %1214 = arith.andi %1213, %1212 : vector<16x128xi1>
    %c6_i32_424 = arith.constant 6 : i32
    %1215 = arith.addi %1048, %c6_i32_424 : i32
    %1216 = vector.broadcast %1215 : i32 to vector<16x128xi32>
    %1217 = arith.cmpi eq, %10, %1216 : vector<16x128xi32>
    %1218 = vector.broadcast %1197 : vector<1x1xi1> to vector<16x128xi1>
    %1219 = arith.andi %1218, %1217 : vector<16x128xi1>
    %1220 = arith.ori %1214, %1219 : vector<16x128xi1>
    %c12_i32_425 = arith.constant 12 : i32
    %1221 = arith.addi %1048, %c12_i32_425 : i32
    %1222 = vector.broadcast %1221 : i32 to vector<16x128xi32>
    %1223 = arith.cmpi eq, %10, %1222 : vector<16x128xi32>
    %1224 = vector.broadcast %1201 : vector<1x1xi1> to vector<16x128xi1>
    %1225 = arith.andi %1224, %1223 : vector<16x128xi1>
    %1226 = arith.ori %1220, %1225 : vector<16x128xi1>
    %1227 = vector.broadcast %1209 : vector<1x1xi1> to vector<16x128xi1>
    %1228 = arith.andi %1227, %1226 : vector<16x128xi1>
    %cst_426 = arith.constant -1.000000e+00 : f32
    %1229 = vector.broadcast %cst_426 : f32 to vector<16x128xf32>
    %1230 = arith.select %1228, %1229, %1189 : vector<16x128xi1>, vector<16x128xf32>
    %c3_i32_427 = arith.constant 3 : i32
    %c4_i32_428 = arith.constant 4 : i32
    %1231 = arith.muli %c4_i32_428, %c3_i32_427 : i32
    %c0_i32_429 = arith.constant 0 : i32
    %1232 = arith.addi %1231, %c0_i32_429 : i32
    %1233 = arith.index_cast %1232 : i32 to index
    %1234 = memref.load %arg1[%1233] : memref<32xf32, #tpu.memory_space<smem>>
    %c4_i32_430 = arith.constant 4 : i32
    %1235 = arith.muli %c4_i32_430, %c3_i32_427 : i32
    %c1_i32_431 = arith.constant 1 : i32
    %1236 = arith.addi %1235, %c1_i32_431 : i32
    %1237 = arith.index_cast %1236 : i32 to index
    %1238 = memref.load %arg1[%1237] : memref<32xf32, #tpu.memory_space<smem>>
    %c4_i32_432 = arith.constant 4 : i32
    %1239 = arith.muli %c4_i32_432, %c3_i32_427 : i32
    %c2_i32_433 = arith.constant 2 : i32
    %1240 = arith.addi %1239, %c2_i32_433 : i32
    %1241 = arith.index_cast %1240 : i32 to index
    %1242 = memref.load %arg1[%1241] : memref<32xf32, #tpu.memory_space<smem>>
    %c4_i32_434 = arith.constant 4 : i32
    %1243 = arith.muli %c4_i32_434, %c3_i32_427 : i32
    %c3_i32_435 = arith.constant 3 : i32
    %1244 = arith.addi %1243, %c3_i32_435 : i32
    %1245 = arith.index_cast %1244 : i32 to index
    %1246 = memref.load %arg1[%1245] : memref<32xf32, #tpu.memory_space<smem>>
    %cst_436 = arith.constant 8.000000e+00 : f32
    %1247 = arith.divf %1234, %cst_436 : f32
    %cst_437 = arith.constant 8.000000e+00 : f32
    %1248 = arith.divf %1238, %cst_437 : f32
    %1249 = arith.fptosi %1247 : f32 to i32
    %1250 = arith.fptosi %1248 : f32 to i32
    %1251 = arith.sitofp %1249 : i32 to f32
    %1252 = arith.subf %1247, %1251 : f32
    %1253 = arith.sitofp %1250 : i32 to f32
    %1254 = arith.subf %1248, %1253 : f32
    %cst_438 = arith.constant 8.000000e+00 : f32
    %1255 = arith.divf %1242, %cst_438 : f32
    %cst_439 = arith.constant 8.000000e+00 : f32
    %1256 = arith.divf %1246, %cst_439 : f32
    %c4_i32_440 = arith.constant 4 : i32
    %1257 = arith.muli %1249, %c4_i32_440 : i32
    %1258 = arith.addi %1257, %1250 : i32
    %c18_i32_441 = arith.constant 18 : i32
    %1259 = arith.muli %1258, %c18_i32_441 : i32
    %c0_i32_442 = arith.constant 0 : i32
    %1260 = arith.addi %1259, %c0_i32_442 : i32
    %c5_i32_443 = arith.constant 5 : i32
    %1261 = arith.addi %1260, %c5_i32_443 : i32
    %1262 = vector.broadcast %1261 : i32 to vector<8x128xi32>
    %1263 = arith.cmpi eq, %5, %1262 : vector<8x128xi32>
    %cst_444 = arith.constant 0.000000e+00 : f32
    %1264 = vector.broadcast %cst_444 : f32 to vector<8x128xf32>
    %1265 = arith.select %1263, %1035, %1264 : vector<8x128xi1>, vector<8x128xf32>
    %cst_445 = arith.constant dense<0.000000e+00> : vector<8xf32>
    %1266 = vector.multi_reduction <add>, %1265, %cst_445 [1] : vector<8x128xf32> to vector<8xf32>
    %1267 = vector.shape_cast %1266 : vector<8xf32> to vector<8x1xf32>
    %cst_446 = arith.constant dense<0.000000e+00> : vector<1xf32>
    %1268 = vector.multi_reduction <add>, %1267, %cst_446 [0] : vector<8x1xf32> to vector<1xf32>
    %1269 = vector.shape_cast %1268 : vector<1xf32> to vector<1x1xf32>
    %cst_447 = arith.constant 1.000000e+00 : f32
    %1270 = vector.broadcast %cst_447 : f32 to vector<1x1xf32>
    %1271 = arith.cmpf oeq, %1269, %1270 : vector<1x1xf32>
    %c6_i32_448 = arith.constant 6 : i32
    %1272 = arith.addi %1259, %c6_i32_448 : i32
    %c5_i32_449 = arith.constant 5 : i32
    %1273 = arith.addi %1272, %c5_i32_449 : i32
    %1274 = vector.broadcast %1273 : i32 to vector<8x128xi32>
    %1275 = arith.cmpi eq, %5, %1274 : vector<8x128xi32>
    %cst_450 = arith.constant 0.000000e+00 : f32
    %1276 = vector.broadcast %cst_450 : f32 to vector<8x128xf32>
    %1277 = arith.select %1275, %1035, %1276 : vector<8x128xi1>, vector<8x128xf32>
    %cst_451 = arith.constant dense<0.000000e+00> : vector<8xf32>
    %1278 = vector.multi_reduction <add>, %1277, %cst_451 [1] : vector<8x128xf32> to vector<8xf32>
    %1279 = vector.shape_cast %1278 : vector<8xf32> to vector<8x1xf32>
    %cst_452 = arith.constant dense<0.000000e+00> : vector<1xf32>
    %1280 = vector.multi_reduction <add>, %1279, %cst_452 [0] : vector<8x1xf32> to vector<1xf32>
    %1281 = vector.shape_cast %1280 : vector<1xf32> to vector<1x1xf32>
    %cst_453 = arith.constant 1.000000e+00 : f32
    %1282 = vector.broadcast %cst_453 : f32 to vector<1x1xf32>
    %1283 = arith.cmpf oeq, %1281, %1282 : vector<1x1xf32>
    %c12_i32_454 = arith.constant 12 : i32
    %1284 = arith.addi %1259, %c12_i32_454 : i32
    %c5_i32_455 = arith.constant 5 : i32
    %1285 = arith.addi %1284, %c5_i32_455 : i32
    %1286 = vector.broadcast %1285 : i32 to vector<8x128xi32>
    %1287 = arith.cmpi eq, %5, %1286 : vector<8x128xi32>
    %cst_456 = arith.constant 0.000000e+00 : f32
    %1288 = vector.broadcast %cst_456 : f32 to vector<8x128xf32>
    %1289 = arith.select %1287, %1035, %1288 : vector<8x128xi1>, vector<8x128xf32>
    %cst_457 = arith.constant dense<0.000000e+00> : vector<8xf32>
    %1290 = vector.multi_reduction <add>, %1289, %cst_457 [1] : vector<8x128xf32> to vector<8xf32>
    %1291 = vector.shape_cast %1290 : vector<8xf32> to vector<8x1xf32>
    %cst_458 = arith.constant dense<0.000000e+00> : vector<1xf32>
    %1292 = vector.multi_reduction <add>, %1291, %cst_458 [0] : vector<8x1xf32> to vector<1xf32>
    %1293 = vector.shape_cast %1292 : vector<1xf32> to vector<1x1xf32>
    %cst_459 = arith.constant 1.000000e+00 : f32
    %1294 = vector.broadcast %cst_459 : f32 to vector<1x1xf32>
    %1295 = arith.cmpf oeq, %1293, %1294 : vector<1x1xf32>
    %cst_460 = arith.constant 1.500000e+00 : f32
    %1296 = arith.minimumf %cst_460, %1255 : f32
    %cst_461 = arith.constant 1.500000e+00 : f32
    %1297 = arith.minimumf %cst_461, %1256 : f32
    %1298 = arith.mulf %1296, %1297 : f32
    %1299 = arith.mulf %1255, %1256 : f32
    %cst_462 = arith.constant 2.250000e+00 : f32
    %1300 = arith.addf %1299, %cst_462 : f32
    %1301 = arith.subf %1300, %1298 : f32
    %1302 = arith.divf %1298, %1301 : f32
    %cst_463 = arith.constant 0.000000e+00 : f32
    %1303 = vector.broadcast %cst_463 : f32 to vector<1x1xf32>
    %1304 = vector.broadcast %1302 : f32 to vector<1x1xf32>
    %1305 = arith.select %1271, %1303, %1304 : vector<1x1xi1>, vector<1x1xf32>
    %cst_464 = arith.constant 2.000000e+00 : f32
    %1306 = arith.minimumf %cst_464, %1255 : f32
    %cst_465 = arith.constant 3.000000e+00 : f32
    %1307 = arith.minimumf %cst_465, %1256 : f32
    %1308 = arith.mulf %1306, %1307 : f32
    %1309 = arith.mulf %1255, %1256 : f32
    %cst_466 = arith.constant 6.000000e+00 : f32
    %1310 = arith.addf %1309, %cst_466 : f32
    %1311 = arith.subf %1310, %1308 : f32
    %1312 = arith.divf %1308, %1311 : f32
    %cst_467 = arith.constant 0.000000e+00 : f32
    %1313 = vector.broadcast %cst_467 : f32 to vector<1x1xf32>
    %1314 = vector.broadcast %1312 : f32 to vector<1x1xf32>
    %1315 = arith.select %1283, %1313, %1314 : vector<1x1xi1>, vector<1x1xf32>
    %cst_468 = arith.constant 3.500000e+00 : f32
    %1316 = arith.minimumf %cst_468, %1255 : f32
    %cst_469 = arith.constant 2.500000e+00 : f32
    %1317 = arith.minimumf %cst_469, %1256 : f32
    %1318 = arith.mulf %1316, %1317 : f32
    %1319 = arith.mulf %1255, %1256 : f32
    %cst_470 = arith.constant 8.750000e+00 : f32
    %1320 = arith.addf %1319, %cst_470 : f32
    %1321 = arith.subf %1320, %1318 : f32
    %1322 = arith.divf %1318, %1321 : f32
    %cst_471 = arith.constant 0.000000e+00 : f32
    %1323 = vector.broadcast %cst_471 : f32 to vector<1x1xf32>
    %1324 = vector.broadcast %1322 : f32 to vector<1x1xf32>
    %1325 = arith.select %1295, %1323, %1324 : vector<1x1xi1>, vector<1x1xf32>
    %1326 = arith.maximumf %1305, %1315 : vector<1x1xf32>
    %1327 = arith.maximumf %1326, %1325 : vector<1x1xf32>
    %1328 = arith.cmpf oeq, %1315, %1327 : vector<1x1xf32>
    %c1_i32_472 = arith.constant 1 : i32
    %c2_i32_473 = arith.constant 2 : i32
    %1329 = vector.broadcast %c1_i32_472 : i32 to vector<1x1xi32>
    %1330 = vector.broadcast %c2_i32_473 : i32 to vector<1x1xi32>
    %1331 = arith.select %1328, %1329, %1330 : vector<1x1xi1>, vector<1x1xi32>
    %1332 = arith.cmpf oeq, %1305, %1327 : vector<1x1xf32>
    %c0_i32_474 = arith.constant 0 : i32
    %1333 = vector.broadcast %c0_i32_474 : i32 to vector<1x1xi32>
    %1334 = arith.select %1332, %1333, %1331 : vector<1x1xi1>, vector<1x1xi32>
    %cst_475 = arith.constant 4.000000e-01 : f32
    %1335 = vector.broadcast %cst_475 : f32 to vector<1x1xf32>
    %1336 = arith.cmpf oge, %1327, %1335 : vector<1x1xf32>
    %1337 = arith.cmpi slt, %c3_i32_427, %0 : i32
    %1338 = vector.broadcast %1337 : i1 to vector<1x1xi1>
    %1339 = arith.andi %1336, %1338 : vector<1x1xi1>
    %c1_i32_476 = arith.constant 1 : i32
    %1340 = vector.broadcast %c1_i32_476 : i32 to vector<1x1xi32>
    %1341 = arith.cmpi eq, %1334, %1340 : vector<1x1xi32>
    %cst_477 = arith.constant 2.000000e+00 : f32
    %cst_478 = arith.constant 1.500000e+00 : f32
    %1342 = vector.broadcast %cst_477 : f32 to vector<1x1xf32>
    %1343 = vector.broadcast %cst_478 : f32 to vector<1x1xf32>
    %1344 = arith.select %1341, %1342, %1343 : vector<1x1xi1>, vector<1x1xf32>
    %c1_i32_479 = arith.constant 1 : i32
    %1345 = vector.broadcast %c1_i32_479 : i32 to vector<1x1xi32>
    %1346 = arith.cmpi eq, %1334, %1345 : vector<1x1xi32>
    %cst_480 = arith.constant 3.000000e+00 : f32
    %cst_481 = arith.constant 1.500000e+00 : f32
    %1347 = vector.broadcast %cst_480 : f32 to vector<1x1xf32>
    %1348 = vector.broadcast %cst_481 : f32 to vector<1x1xf32>
    %1349 = arith.select %1346, %1347, %1348 : vector<1x1xi1>, vector<1x1xf32>
    %c2_i32_482 = arith.constant 2 : i32
    %1350 = vector.broadcast %c2_i32_482 : i32 to vector<1x1xi32>
    %1351 = arith.cmpi eq, %1334, %1350 : vector<1x1xi32>
    %cst_483 = arith.constant 3.500000e+00 : f32
    %1352 = vector.broadcast %cst_483 : f32 to vector<1x1xf32>
    %1353 = arith.select %1351, %1352, %1344 : vector<1x1xi1>, vector<1x1xf32>
    %c2_i32_484 = arith.constant 2 : i32
    %1354 = vector.broadcast %c2_i32_484 : i32 to vector<1x1xi32>
    %1355 = arith.cmpi eq, %1334, %1354 : vector<1x1xi32>
    %cst_485 = arith.constant 2.500000e+00 : f32
    %1356 = vector.broadcast %cst_485 : f32 to vector<1x1xf32>
    %1357 = arith.select %1355, %1356, %1349 : vector<1x1xi1>, vector<1x1xf32>
    %1358 = vector.broadcast %1255 : f32 to vector<1x1xf32>
    %1359 = arith.divf %1358, %1353 : vector<1x1xf32>
    %cst_486 = arith.constant 9.99999997E-7 : f32
    %1360 = vector.broadcast %cst_486 : f32 to vector<1x1xf32>
    %1361 = arith.addf %1359, %1360 : vector<1x1xf32>
    %1362 = math.log %1361 : vector<1x1xf32>
    %1363 = vector.broadcast %1256 : f32 to vector<1x1xf32>
    %1364 = arith.divf %1363, %1357 : vector<1x1xf32>
    %cst_487 = arith.constant 9.99999997E-7 : f32
    %1365 = vector.broadcast %cst_487 : f32 to vector<1x1xf32>
    %1366 = arith.addf %1364, %1365 : vector<1x1xf32>
    %1367 = math.log %1366 : vector<1x1xf32>
    %c6_i32_488 = arith.constant 6 : i32
    %1368 = vector.broadcast %c6_i32_488 : i32 to vector<1x1xi32>
    %1369 = arith.muli %1334, %1368 : vector<1x1xi32>
    %1370 = vector.broadcast %1259 : i32 to vector<1x1xi32>
    %1371 = arith.addi %1370, %1369 : vector<1x1xi32>
    %1372 = vector.broadcast %1371 : vector<1x1xi32> to vector<8x128xi32>
    %1373 = arith.subi %5, %1372 : vector<8x128xi32>
    %c1_i32_489 = arith.constant 1 : i32
    %1374 = vector.broadcast %c1_i32_489 : i32 to vector<8x128xi32>
    %1375 = arith.cmpi eq, %1373, %1374 : vector<8x128xi32>
    %c2_i32_490 = arith.constant 2 : i32
    %1376 = vector.broadcast %c2_i32_490 : i32 to vector<8x128xi32>
    %1377 = arith.cmpi eq, %1373, %1376 : vector<8x128xi32>
    %c3_i32_491 = arith.constant 3 : i32
    %1378 = vector.broadcast %c3_i32_491 : i32 to vector<8x128xi32>
    %1379 = arith.cmpi eq, %1373, %1378 : vector<8x128xi32>
    %c4_i32_492 = arith.constant 4 : i32
    %1380 = vector.broadcast %c4_i32_492 : i32 to vector<8x128xi32>
    %1381 = arith.cmpi eq, %1373, %1380 : vector<8x128xi32>
    %cst_493 = arith.constant 1.000000e+00 : f32
    %1382 = vector.shape_cast %1367 : vector<1x1xf32> to vector<1x1xf32>
    %1383 = vector.broadcast %1382 : vector<1x1xf32> to vector<8x128xf32>
    %1384 = vector.broadcast %cst_493 : f32 to vector<8x128xf32>
    %1385 = arith.select %1381, %1383, %1384 : vector<8x128xi1>, vector<8x128xf32>
    %1386 = vector.shape_cast %1362 : vector<1x1xf32> to vector<1x1xf32>
    %1387 = vector.broadcast %1386 : vector<1x1xf32> to vector<8x128xf32>
    %1388 = arith.select %1379, %1387, %1385 : vector<8x128xi1>, vector<8x128xf32>
    %1389 = vector.broadcast %1254 : f32 to vector<8x128xf32>
    %1390 = arith.select %1377, %1389, %1388 : vector<8x128xi1>, vector<8x128xf32>
    %1391 = vector.broadcast %1252 : f32 to vector<8x128xf32>
    %1392 = arith.select %1375, %1391, %1390 : vector<8x128xi1>, vector<8x128xf32>
    %c0_i32_494 = arith.constant 0 : i32
    %1393 = vector.broadcast %c0_i32_494 : i32 to vector<8x128xi32>
    %1394 = arith.cmpi sge, %1373, %1393 : vector<8x128xi32>
    %1395 = vector.broadcast %1339 : vector<1x1xi1> to vector<8x128xi1>
    %1396 = arith.andi %1395, %1394 : vector<8x128xi1>
    %c6_i32_495 = arith.constant 6 : i32
    %1397 = vector.broadcast %c6_i32_495 : i32 to vector<8x128xi32>
    %1398 = arith.cmpi slt, %1373, %1397 : vector<8x128xi32>
    %1399 = arith.andi %1396, %1398 : vector<8x128xi1>
    %1400 = arith.select %1399, %1392, %1035 : vector<8x128xi1>, vector<8x128xf32>
    %cst_496 = arith.constant 5.000000e-01 : f32
    %1401 = vector.broadcast %cst_496 : f32 to vector<1x1xf32>
    %1402 = arith.cmpf ogt, %1305, %1401 : vector<1x1xf32>
    %1403 = arith.cmpf one, %1305, %1327 : vector<1x1xf32>
    %1404 = arith.andi %1402, %1403 : vector<1x1xi1>
    %cst_497 = arith.constant 5.000000e-01 : f32
    %1405 = vector.broadcast %cst_497 : f32 to vector<1x1xf32>
    %1406 = arith.cmpf ogt, %1315, %1405 : vector<1x1xf32>
    %1407 = arith.cmpf one, %1315, %1327 : vector<1x1xf32>
    %1408 = arith.andi %1406, %1407 : vector<1x1xi1>
    %cst_498 = arith.constant 5.000000e-01 : f32
    %1409 = vector.broadcast %cst_498 : f32 to vector<1x1xf32>
    %1410 = arith.cmpf ogt, %1325, %1409 : vector<1x1xf32>
    %1411 = arith.cmpf one, %1325, %1327 : vector<1x1xf32>
    %1412 = arith.andi %1410, %1411 : vector<1x1xi1>
    %1413 = arith.extui %1404 : vector<1x1xi1> to vector<1x1xi32>
    %1414 = arith.extui %1408 : vector<1x1xi1> to vector<1x1xi32>
    %1415 = arith.addi %1413, %1414 : vector<1x1xi32>
    %1416 = arith.extui %1412 : vector<1x1xi1> to vector<1x1xi32>
    %1417 = arith.addi %1415, %1416 : vector<1x1xi32>
    %c2_i32_499 = arith.constant 2 : i32
    %1418 = vector.broadcast %c2_i32_499 : i32 to vector<1x1xi32>
    %1419 = arith.cmpi sge, %1417, %1418 : vector<1x1xi32>
    %1420 = arith.andi %1339, %1419 : vector<1x1xi1>
    %c0_i32_500 = arith.constant 0 : i32
    %1421 = arith.addi %1259, %c0_i32_500 : i32
    %1422 = vector.broadcast %1421 : i32 to vector<8x128xi32>
    %1423 = arith.cmpi eq, %5, %1422 : vector<8x128xi32>
    %1424 = vector.broadcast %1404 : vector<1x1xi1> to vector<8x128xi1>
    %1425 = arith.andi %1424, %1423 : vector<8x128xi1>
    %c6_i32_501 = arith.constant 6 : i32
    %1426 = arith.addi %1259, %c6_i32_501 : i32
    %1427 = vector.broadcast %1426 : i32 to vector<8x128xi32>
    %1428 = arith.cmpi eq, %5, %1427 : vector<8x128xi32>
    %1429 = vector.broadcast %1408 : vector<1x1xi1> to vector<8x128xi1>
    %1430 = arith.andi %1429, %1428 : vector<8x128xi1>
    %1431 = arith.ori %1425, %1430 : vector<8x128xi1>
    %c12_i32_502 = arith.constant 12 : i32
    %1432 = arith.addi %1259, %c12_i32_502 : i32
    %1433 = vector.broadcast %1432 : i32 to vector<8x128xi32>
    %1434 = arith.cmpi eq, %5, %1433 : vector<8x128xi32>
    %1435 = vector.broadcast %1412 : vector<1x1xi1> to vector<8x128xi1>
    %1436 = arith.andi %1435, %1434 : vector<8x128xi1>
    %1437 = arith.ori %1431, %1436 : vector<8x128xi1>
    %1438 = vector.broadcast %1420 : vector<1x1xi1> to vector<8x128xi1>
    %1439 = arith.andi %1438, %1437 : vector<8x128xi1>
    %cst_503 = arith.constant -1.000000e+00 : f32
    %1440 = vector.broadcast %cst_503 : f32 to vector<8x128xf32>
    %1441 = arith.select %1439, %1440, %1400 : vector<8x128xi1>, vector<8x128xf32>
    %cst_504 = arith.constant 4.000000e+00 : f32
    %1442 = arith.divf %1234, %cst_504 : f32
    %cst_505 = arith.constant 4.000000e+00 : f32
    %1443 = arith.divf %1238, %cst_505 : f32
    %1444 = arith.fptosi %1442 : f32 to i32
    %1445 = arith.fptosi %1443 : f32 to i32
    %1446 = arith.sitofp %1444 : i32 to f32
    %1447 = arith.subf %1442, %1446 : f32
    %1448 = arith.sitofp %1445 : i32 to f32
    %1449 = arith.subf %1443, %1448 : f32
    %cst_506 = arith.constant 4.000000e+00 : f32
    %1450 = arith.divf %1242, %cst_506 : f32
    %cst_507 = arith.constant 4.000000e+00 : f32
    %1451 = arith.divf %1246, %cst_507 : f32
    %c8_i32_508 = arith.constant 8 : i32
    %1452 = arith.muli %1444, %c8_i32_508 : i32
    %1453 = arith.addi %1452, %1445 : i32
    %c18_i32_509 = arith.constant 18 : i32
    %1454 = arith.muli %1453, %c18_i32_509 : i32
    %c0_i32_510 = arith.constant 0 : i32
    %1455 = arith.addi %1454, %c0_i32_510 : i32
    %c5_i32_511 = arith.constant 5 : i32
    %1456 = arith.addi %1455, %c5_i32_511 : i32
    %1457 = vector.broadcast %1456 : i32 to vector<16x128xi32>
    %1458 = arith.cmpi eq, %10, %1457 : vector<16x128xi32>
    %cst_512 = arith.constant 0.000000e+00 : f32
    %1459 = vector.broadcast %cst_512 : f32 to vector<16x128xf32>
    %1460 = arith.select %1458, %1230, %1459 : vector<16x128xi1>, vector<16x128xf32>
    %cst_513 = arith.constant dense<0.000000e+00> : vector<16xf32>
    %1461 = vector.multi_reduction <add>, %1460, %cst_513 [1] : vector<16x128xf32> to vector<16xf32>
    %1462 = vector.shape_cast %1461 : vector<16xf32> to vector<16x1xf32>
    %cst_514 = arith.constant dense<0.000000e+00> : vector<1xf32>
    %1463 = vector.multi_reduction <add>, %1462, %cst_514 [0] : vector<16x1xf32> to vector<1xf32>
    %1464 = vector.shape_cast %1463 : vector<1xf32> to vector<1x1xf32>
    %cst_515 = arith.constant 1.000000e+00 : f32
    %1465 = vector.broadcast %cst_515 : f32 to vector<1x1xf32>
    %1466 = arith.cmpf oeq, %1464, %1465 : vector<1x1xf32>
    %c6_i32_516 = arith.constant 6 : i32
    %1467 = arith.addi %1454, %c6_i32_516 : i32
    %c5_i32_517 = arith.constant 5 : i32
    %1468 = arith.addi %1467, %c5_i32_517 : i32
    %1469 = vector.broadcast %1468 : i32 to vector<16x128xi32>
    %1470 = arith.cmpi eq, %10, %1469 : vector<16x128xi32>
    %cst_518 = arith.constant 0.000000e+00 : f32
    %1471 = vector.broadcast %cst_518 : f32 to vector<16x128xf32>
    %1472 = arith.select %1470, %1230, %1471 : vector<16x128xi1>, vector<16x128xf32>
    %cst_519 = arith.constant dense<0.000000e+00> : vector<16xf32>
    %1473 = vector.multi_reduction <add>, %1472, %cst_519 [1] : vector<16x128xf32> to vector<16xf32>
    %1474 = vector.shape_cast %1473 : vector<16xf32> to vector<16x1xf32>
    %cst_520 = arith.constant dense<0.000000e+00> : vector<1xf32>
    %1475 = vector.multi_reduction <add>, %1474, %cst_520 [0] : vector<16x1xf32> to vector<1xf32>
    %1476 = vector.shape_cast %1475 : vector<1xf32> to vector<1x1xf32>
    %cst_521 = arith.constant 1.000000e+00 : f32
    %1477 = vector.broadcast %cst_521 : f32 to vector<1x1xf32>
    %1478 = arith.cmpf oeq, %1476, %1477 : vector<1x1xf32>
    %c12_i32_522 = arith.constant 12 : i32
    %1479 = arith.addi %1454, %c12_i32_522 : i32
    %c5_i32_523 = arith.constant 5 : i32
    %1480 = arith.addi %1479, %c5_i32_523 : i32
    %1481 = vector.broadcast %1480 : i32 to vector<16x128xi32>
    %1482 = arith.cmpi eq, %10, %1481 : vector<16x128xi32>
    %cst_524 = arith.constant 0.000000e+00 : f32
    %1483 = vector.broadcast %cst_524 : f32 to vector<16x128xf32>
    %1484 = arith.select %1482, %1230, %1483 : vector<16x128xi1>, vector<16x128xf32>
    %cst_525 = arith.constant dense<0.000000e+00> : vector<16xf32>
    %1485 = vector.multi_reduction <add>, %1484, %cst_525 [1] : vector<16x128xf32> to vector<16xf32>
    %1486 = vector.shape_cast %1485 : vector<16xf32> to vector<16x1xf32>
    %cst_526 = arith.constant dense<0.000000e+00> : vector<1xf32>
    %1487 = vector.multi_reduction <add>, %1486, %cst_526 [0] : vector<16x1xf32> to vector<1xf32>
    %1488 = vector.shape_cast %1487 : vector<1xf32> to vector<1x1xf32>
    %cst_527 = arith.constant 1.000000e+00 : f32
    %1489 = vector.broadcast %cst_527 : f32 to vector<1x1xf32>
    %1490 = arith.cmpf oeq, %1488, %1489 : vector<1x1xf32>
    %cst_528 = arith.constant 8.000000e-01 : f32
    %1491 = arith.minimumf %cst_528, %1450 : f32
    %cst_529 = arith.constant 8.000000e-01 : f32
    %1492 = arith.minimumf %cst_529, %1451 : f32
    %1493 = arith.mulf %1491, %1492 : f32
    %1494 = arith.mulf %1450, %1451 : f32
    %cst_530 = arith.constant 6.400000e-01 : f32
    %1495 = arith.addf %1494, %cst_530 : f32
    %1496 = arith.subf %1495, %1493 : f32
    %1497 = arith.divf %1493, %1496 : f32
    %cst_531 = arith.constant 0.000000e+00 : f32
    %1498 = vector.broadcast %cst_531 : f32 to vector<1x1xf32>
    %1499 = vector.broadcast %1497 : f32 to vector<1x1xf32>
    %1500 = arith.select %1466, %1498, %1499 : vector<1x1xi1>, vector<1x1xf32>
    %cst_532 = arith.constant 1.200000e+00 : f32
    %1501 = arith.minimumf %cst_532, %1450 : f32
    %cst_533 = arith.constant 2.000000e+00 : f32
    %1502 = arith.minimumf %cst_533, %1451 : f32
    %1503 = arith.mulf %1501, %1502 : f32
    %1504 = arith.mulf %1450, %1451 : f32
    %cst_534 = arith.constant 2.400000e+00 : f32
    %1505 = arith.addf %1504, %cst_534 : f32
    %1506 = arith.subf %1505, %1503 : f32
    %1507 = arith.divf %1503, %1506 : f32
    %cst_535 = arith.constant 0.000000e+00 : f32
    %1508 = vector.broadcast %cst_535 : f32 to vector<1x1xf32>
    %1509 = vector.broadcast %1507 : f32 to vector<1x1xf32>
    %1510 = arith.select %1478, %1508, %1509 : vector<1x1xi1>, vector<1x1xf32>
    %cst_536 = arith.constant 2.000000e+00 : f32
    %1511 = arith.minimumf %cst_536, %1450 : f32
    %cst_537 = arith.constant 1.200000e+00 : f32
    %1512 = arith.minimumf %cst_537, %1451 : f32
    %1513 = arith.mulf %1511, %1512 : f32
    %1514 = arith.mulf %1450, %1451 : f32
    %cst_538 = arith.constant 2.400000e+00 : f32
    %1515 = arith.addf %1514, %cst_538 : f32
    %1516 = arith.subf %1515, %1513 : f32
    %1517 = arith.divf %1513, %1516 : f32
    %cst_539 = arith.constant 0.000000e+00 : f32
    %1518 = vector.broadcast %cst_539 : f32 to vector<1x1xf32>
    %1519 = vector.broadcast %1517 : f32 to vector<1x1xf32>
    %1520 = arith.select %1490, %1518, %1519 : vector<1x1xi1>, vector<1x1xf32>
    %1521 = arith.maximumf %1500, %1510 : vector<1x1xf32>
    %1522 = arith.maximumf %1521, %1520 : vector<1x1xf32>
    %1523 = arith.cmpf oeq, %1510, %1522 : vector<1x1xf32>
    %c1_i32_540 = arith.constant 1 : i32
    %c2_i32_541 = arith.constant 2 : i32
    %1524 = vector.broadcast %c1_i32_540 : i32 to vector<1x1xi32>
    %1525 = vector.broadcast %c2_i32_541 : i32 to vector<1x1xi32>
    %1526 = arith.select %1523, %1524, %1525 : vector<1x1xi1>, vector<1x1xi32>
    %1527 = arith.cmpf oeq, %1500, %1522 : vector<1x1xf32>
    %c0_i32_542 = arith.constant 0 : i32
    %1528 = vector.broadcast %c0_i32_542 : i32 to vector<1x1xi32>
    %1529 = arith.select %1527, %1528, %1526 : vector<1x1xi1>, vector<1x1xi32>
    %cst_543 = arith.constant 4.000000e-01 : f32
    %1530 = vector.broadcast %cst_543 : f32 to vector<1x1xf32>
    %1531 = arith.cmpf oge, %1522, %1530 : vector<1x1xf32>
    %1532 = arith.cmpi slt, %c3_i32_427, %0 : i32
    %1533 = vector.broadcast %1532 : i1 to vector<1x1xi1>
    %1534 = arith.andi %1531, %1533 : vector<1x1xi1>
    %c1_i32_544 = arith.constant 1 : i32
    %1535 = vector.broadcast %c1_i32_544 : i32 to vector<1x1xi32>
    %1536 = arith.cmpi eq, %1529, %1535 : vector<1x1xi32>
    %cst_545 = arith.constant 1.200000e+00 : f32
    %cst_546 = arith.constant 8.000000e-01 : f32
    %1537 = vector.broadcast %cst_545 : f32 to vector<1x1xf32>
    %1538 = vector.broadcast %cst_546 : f32 to vector<1x1xf32>
    %1539 = arith.select %1536, %1537, %1538 : vector<1x1xi1>, vector<1x1xf32>
    %c1_i32_547 = arith.constant 1 : i32
    %1540 = vector.broadcast %c1_i32_547 : i32 to vector<1x1xi32>
    %1541 = arith.cmpi eq, %1529, %1540 : vector<1x1xi32>
    %cst_548 = arith.constant 2.000000e+00 : f32
    %cst_549 = arith.constant 8.000000e-01 : f32
    %1542 = vector.broadcast %cst_548 : f32 to vector<1x1xf32>
    %1543 = vector.broadcast %cst_549 : f32 to vector<1x1xf32>
    %1544 = arith.select %1541, %1542, %1543 : vector<1x1xi1>, vector<1x1xf32>
    %c2_i32_550 = arith.constant 2 : i32
    %1545 = vector.broadcast %c2_i32_550 : i32 to vector<1x1xi32>
    %1546 = arith.cmpi eq, %1529, %1545 : vector<1x1xi32>
    %cst_551 = arith.constant 2.000000e+00 : f32
    %1547 = vector.broadcast %cst_551 : f32 to vector<1x1xf32>
    %1548 = arith.select %1546, %1547, %1539 : vector<1x1xi1>, vector<1x1xf32>
    %c2_i32_552 = arith.constant 2 : i32
    %1549 = vector.broadcast %c2_i32_552 : i32 to vector<1x1xi32>
    %1550 = arith.cmpi eq, %1529, %1549 : vector<1x1xi32>
    %cst_553 = arith.constant 1.200000e+00 : f32
    %1551 = vector.broadcast %cst_553 : f32 to vector<1x1xf32>
    %1552 = arith.select %1550, %1551, %1544 : vector<1x1xi1>, vector<1x1xf32>
    %1553 = vector.broadcast %1450 : f32 to vector<1x1xf32>
    %1554 = arith.divf %1553, %1548 : vector<1x1xf32>
    %cst_554 = arith.constant 9.99999997E-7 : f32
    %1555 = vector.broadcast %cst_554 : f32 to vector<1x1xf32>
    %1556 = arith.addf %1554, %1555 : vector<1x1xf32>
    %1557 = math.log %1556 : vector<1x1xf32>
    %1558 = vector.broadcast %1451 : f32 to vector<1x1xf32>
    %1559 = arith.divf %1558, %1552 : vector<1x1xf32>
    %cst_555 = arith.constant 9.99999997E-7 : f32
    %1560 = vector.broadcast %cst_555 : f32 to vector<1x1xf32>
    %1561 = arith.addf %1559, %1560 : vector<1x1xf32>
    %1562 = math.log %1561 : vector<1x1xf32>
    %c6_i32_556 = arith.constant 6 : i32
    %1563 = vector.broadcast %c6_i32_556 : i32 to vector<1x1xi32>
    %1564 = arith.muli %1529, %1563 : vector<1x1xi32>
    %1565 = vector.broadcast %1454 : i32 to vector<1x1xi32>
    %1566 = arith.addi %1565, %1564 : vector<1x1xi32>
    %1567 = vector.broadcast %1566 : vector<1x1xi32> to vector<16x128xi32>
    %1568 = arith.subi %10, %1567 : vector<16x128xi32>
    %c1_i32_557 = arith.constant 1 : i32
    %1569 = vector.broadcast %c1_i32_557 : i32 to vector<16x128xi32>
    %1570 = arith.cmpi eq, %1568, %1569 : vector<16x128xi32>
    %c2_i32_558 = arith.constant 2 : i32
    %1571 = vector.broadcast %c2_i32_558 : i32 to vector<16x128xi32>
    %1572 = arith.cmpi eq, %1568, %1571 : vector<16x128xi32>
    %c3_i32_559 = arith.constant 3 : i32
    %1573 = vector.broadcast %c3_i32_559 : i32 to vector<16x128xi32>
    %1574 = arith.cmpi eq, %1568, %1573 : vector<16x128xi32>
    %c4_i32_560 = arith.constant 4 : i32
    %1575 = vector.broadcast %c4_i32_560 : i32 to vector<16x128xi32>
    %1576 = arith.cmpi eq, %1568, %1575 : vector<16x128xi32>
    %cst_561 = arith.constant 1.000000e+00 : f32
    %1577 = vector.shape_cast %1562 : vector<1x1xf32> to vector<1x1xf32>
    %1578 = vector.broadcast %1577 : vector<1x1xf32> to vector<16x128xf32>
    %1579 = vector.broadcast %cst_561 : f32 to vector<16x128xf32>
    %1580 = arith.select %1576, %1578, %1579 : vector<16x128xi1>, vector<16x128xf32>
    %1581 = vector.shape_cast %1557 : vector<1x1xf32> to vector<1x1xf32>
    %1582 = vector.broadcast %1581 : vector<1x1xf32> to vector<16x128xf32>
    %1583 = arith.select %1574, %1582, %1580 : vector<16x128xi1>, vector<16x128xf32>
    %1584 = vector.broadcast %1449 : f32 to vector<16x128xf32>
    %1585 = arith.select %1572, %1584, %1583 : vector<16x128xi1>, vector<16x128xf32>
    %1586 = vector.broadcast %1447 : f32 to vector<16x128xf32>
    %1587 = arith.select %1570, %1586, %1585 : vector<16x128xi1>, vector<16x128xf32>
    %c0_i32_562 = arith.constant 0 : i32
    %1588 = vector.broadcast %c0_i32_562 : i32 to vector<16x128xi32>
    %1589 = arith.cmpi sge, %1568, %1588 : vector<16x128xi32>
    %1590 = vector.broadcast %1534 : vector<1x1xi1> to vector<16x128xi1>
    %1591 = arith.andi %1590, %1589 : vector<16x128xi1>
    %c6_i32_563 = arith.constant 6 : i32
    %1592 = vector.broadcast %c6_i32_563 : i32 to vector<16x128xi32>
    %1593 = arith.cmpi slt, %1568, %1592 : vector<16x128xi32>
    %1594 = arith.andi %1591, %1593 : vector<16x128xi1>
    %1595 = arith.select %1594, %1587, %1230 : vector<16x128xi1>, vector<16x128xf32>
    %cst_564 = arith.constant 5.000000e-01 : f32
    %1596 = vector.broadcast %cst_564 : f32 to vector<1x1xf32>
    %1597 = arith.cmpf ogt, %1500, %1596 : vector<1x1xf32>
    %1598 = arith.cmpf one, %1500, %1522 : vector<1x1xf32>
    %1599 = arith.andi %1597, %1598 : vector<1x1xi1>
    %cst_565 = arith.constant 5.000000e-01 : f32
    %1600 = vector.broadcast %cst_565 : f32 to vector<1x1xf32>
    %1601 = arith.cmpf ogt, %1510, %1600 : vector<1x1xf32>
    %1602 = arith.cmpf one, %1510, %1522 : vector<1x1xf32>
    %1603 = arith.andi %1601, %1602 : vector<1x1xi1>
    %cst_566 = arith.constant 5.000000e-01 : f32
    %1604 = vector.broadcast %cst_566 : f32 to vector<1x1xf32>
    %1605 = arith.cmpf ogt, %1520, %1604 : vector<1x1xf32>
    %1606 = arith.cmpf one, %1520, %1522 : vector<1x1xf32>
    %1607 = arith.andi %1605, %1606 : vector<1x1xi1>
    %1608 = arith.extui %1599 : vector<1x1xi1> to vector<1x1xi32>
    %1609 = arith.extui %1603 : vector<1x1xi1> to vector<1x1xi32>
    %1610 = arith.addi %1608, %1609 : vector<1x1xi32>
    %1611 = arith.extui %1607 : vector<1x1xi1> to vector<1x1xi32>
    %1612 = arith.addi %1610, %1611 : vector<1x1xi32>
    %c2_i32_567 = arith.constant 2 : i32
    %1613 = vector.broadcast %c2_i32_567 : i32 to vector<1x1xi32>
    %1614 = arith.cmpi sge, %1612, %1613 : vector<1x1xi32>
    %1615 = arith.andi %1534, %1614 : vector<1x1xi1>
    %c0_i32_568 = arith.constant 0 : i32
    %1616 = arith.addi %1454, %c0_i32_568 : i32
    %1617 = vector.broadcast %1616 : i32 to vector<16x128xi32>
    %1618 = arith.cmpi eq, %10, %1617 : vector<16x128xi32>
    %1619 = vector.broadcast %1599 : vector<1x1xi1> to vector<16x128xi1>
    %1620 = arith.andi %1619, %1618 : vector<16x128xi1>
    %c6_i32_569 = arith.constant 6 : i32
    %1621 = arith.addi %1454, %c6_i32_569 : i32
    %1622 = vector.broadcast %1621 : i32 to vector<16x128xi32>
    %1623 = arith.cmpi eq, %10, %1622 : vector<16x128xi32>
    %1624 = vector.broadcast %1603 : vector<1x1xi1> to vector<16x128xi1>
    %1625 = arith.andi %1624, %1623 : vector<16x128xi1>
    %1626 = arith.ori %1620, %1625 : vector<16x128xi1>
    %c12_i32_570 = arith.constant 12 : i32
    %1627 = arith.addi %1454, %c12_i32_570 : i32
    %1628 = vector.broadcast %1627 : i32 to vector<16x128xi32>
    %1629 = arith.cmpi eq, %10, %1628 : vector<16x128xi32>
    %1630 = vector.broadcast %1607 : vector<1x1xi1> to vector<16x128xi1>
    %1631 = arith.andi %1630, %1629 : vector<16x128xi1>
    %1632 = arith.ori %1626, %1631 : vector<16x128xi1>
    %1633 = vector.broadcast %1615 : vector<1x1xi1> to vector<16x128xi1>
    %1634 = arith.andi %1633, %1632 : vector<16x128xi1>
    %cst_571 = arith.constant -1.000000e+00 : f32
    %1635 = vector.broadcast %cst_571 : f32 to vector<16x128xf32>
    %1636 = arith.select %1634, %1635, %1595 : vector<16x128xi1>, vector<16x128xf32>
    %c4_i32_572 = arith.constant 4 : i32
    %c4_i32_573 = arith.constant 4 : i32
    %1637 = arith.muli %c4_i32_573, %c4_i32_572 : i32
    %c0_i32_574 = arith.constant 0 : i32
    %1638 = arith.addi %1637, %c0_i32_574 : i32
    %1639 = arith.index_cast %1638 : i32 to index
    %1640 = memref.load %arg1[%1639] : memref<32xf32, #tpu.memory_space<smem>>
    %c4_i32_575 = arith.constant 4 : i32
    %1641 = arith.muli %c4_i32_575, %c4_i32_572 : i32
    %c1_i32_576 = arith.constant 1 : i32
    %1642 = arith.addi %1641, %c1_i32_576 : i32
    %1643 = arith.index_cast %1642 : i32 to index
    %1644 = memref.load %arg1[%1643] : memref<32xf32, #tpu.memory_space<smem>>
    %c4_i32_577 = arith.constant 4 : i32
    %1645 = arith.muli %c4_i32_577, %c4_i32_572 : i32
    %c2_i32_578 = arith.constant 2 : i32
    %1646 = arith.addi %1645, %c2_i32_578 : i32
    %1647 = arith.index_cast %1646 : i32 to index
    %1648 = memref.load %arg1[%1647] : memref<32xf32, #tpu.memory_space<smem>>
    %c4_i32_579 = arith.constant 4 : i32
    %1649 = arith.muli %c4_i32_579, %c4_i32_572 : i32
    %c3_i32_580 = arith.constant 3 : i32
    %1650 = arith.addi %1649, %c3_i32_580 : i32
    %1651 = arith.index_cast %1650 : i32 to index
    %1652 = memref.load %arg1[%1651] : memref<32xf32, #tpu.memory_space<smem>>
    %cst_581 = arith.constant 8.000000e+00 : f32
    %1653 = arith.divf %1640, %cst_581 : f32
    %cst_582 = arith.constant 8.000000e+00 : f32
    %1654 = arith.divf %1644, %cst_582 : f32
    %1655 = arith.fptosi %1653 : f32 to i32
    %1656 = arith.fptosi %1654 : f32 to i32
    %1657 = arith.sitofp %1655 : i32 to f32
    %1658 = arith.subf %1653, %1657 : f32
    %1659 = arith.sitofp %1656 : i32 to f32
    %1660 = arith.subf %1654, %1659 : f32
    %cst_583 = arith.constant 8.000000e+00 : f32
    %1661 = arith.divf %1648, %cst_583 : f32
    %cst_584 = arith.constant 8.000000e+00 : f32
    %1662 = arith.divf %1652, %cst_584 : f32
    %c4_i32_585 = arith.constant 4 : i32
    %1663 = arith.muli %1655, %c4_i32_585 : i32
    %1664 = arith.addi %1663, %1656 : i32
    %c18_i32_586 = arith.constant 18 : i32
    %1665 = arith.muli %1664, %c18_i32_586 : i32
    %c0_i32_587 = arith.constant 0 : i32
    %1666 = arith.addi %1665, %c0_i32_587 : i32
    %c5_i32_588 = arith.constant 5 : i32
    %1667 = arith.addi %1666, %c5_i32_588 : i32
    %1668 = vector.broadcast %1667 : i32 to vector<8x128xi32>
    %1669 = arith.cmpi eq, %5, %1668 : vector<8x128xi32>
    %cst_589 = arith.constant 0.000000e+00 : f32
    %1670 = vector.broadcast %cst_589 : f32 to vector<8x128xf32>
    %1671 = arith.select %1669, %1441, %1670 : vector<8x128xi1>, vector<8x128xf32>
    %cst_590 = arith.constant dense<0.000000e+00> : vector<8xf32>
    %1672 = vector.multi_reduction <add>, %1671, %cst_590 [1] : vector<8x128xf32> to vector<8xf32>
    %1673 = vector.shape_cast %1672 : vector<8xf32> to vector<8x1xf32>
    %cst_591 = arith.constant dense<0.000000e+00> : vector<1xf32>
    %1674 = vector.multi_reduction <add>, %1673, %cst_591 [0] : vector<8x1xf32> to vector<1xf32>
    %1675 = vector.shape_cast %1674 : vector<1xf32> to vector<1x1xf32>
    %cst_592 = arith.constant 1.000000e+00 : f32
    %1676 = vector.broadcast %cst_592 : f32 to vector<1x1xf32>
    %1677 = arith.cmpf oeq, %1675, %1676 : vector<1x1xf32>
    %c6_i32_593 = arith.constant 6 : i32
    %1678 = arith.addi %1665, %c6_i32_593 : i32
    %c5_i32_594 = arith.constant 5 : i32
    %1679 = arith.addi %1678, %c5_i32_594 : i32
    %1680 = vector.broadcast %1679 : i32 to vector<8x128xi32>
    %1681 = arith.cmpi eq, %5, %1680 : vector<8x128xi32>
    %cst_595 = arith.constant 0.000000e+00 : f32
    %1682 = vector.broadcast %cst_595 : f32 to vector<8x128xf32>
    %1683 = arith.select %1681, %1441, %1682 : vector<8x128xi1>, vector<8x128xf32>
    %cst_596 = arith.constant dense<0.000000e+00> : vector<8xf32>
    %1684 = vector.multi_reduction <add>, %1683, %cst_596 [1] : vector<8x128xf32> to vector<8xf32>
    %1685 = vector.shape_cast %1684 : vector<8xf32> to vector<8x1xf32>
    %cst_597 = arith.constant dense<0.000000e+00> : vector<1xf32>
    %1686 = vector.multi_reduction <add>, %1685, %cst_597 [0] : vector<8x1xf32> to vector<1xf32>
    %1687 = vector.shape_cast %1686 : vector<1xf32> to vector<1x1xf32>
    %cst_598 = arith.constant 1.000000e+00 : f32
    %1688 = vector.broadcast %cst_598 : f32 to vector<1x1xf32>
    %1689 = arith.cmpf oeq, %1687, %1688 : vector<1x1xf32>
    %c12_i32_599 = arith.constant 12 : i32
    %1690 = arith.addi %1665, %c12_i32_599 : i32
    %c5_i32_600 = arith.constant 5 : i32
    %1691 = arith.addi %1690, %c5_i32_600 : i32
    %1692 = vector.broadcast %1691 : i32 to vector<8x128xi32>
    %1693 = arith.cmpi eq, %5, %1692 : vector<8x128xi32>
    %cst_601 = arith.constant 0.000000e+00 : f32
    %1694 = vector.broadcast %cst_601 : f32 to vector<8x128xf32>
    %1695 = arith.select %1693, %1441, %1694 : vector<8x128xi1>, vector<8x128xf32>
    %cst_602 = arith.constant dense<0.000000e+00> : vector<8xf32>
    %1696 = vector.multi_reduction <add>, %1695, %cst_602 [1] : vector<8x128xf32> to vector<8xf32>
    %1697 = vector.shape_cast %1696 : vector<8xf32> to vector<8x1xf32>
    %cst_603 = arith.constant dense<0.000000e+00> : vector<1xf32>
    %1698 = vector.multi_reduction <add>, %1697, %cst_603 [0] : vector<8x1xf32> to vector<1xf32>
    %1699 = vector.shape_cast %1698 : vector<1xf32> to vector<1x1xf32>
    %cst_604 = arith.constant 1.000000e+00 : f32
    %1700 = vector.broadcast %cst_604 : f32 to vector<1x1xf32>
    %1701 = arith.cmpf oeq, %1699, %1700 : vector<1x1xf32>
    %cst_605 = arith.constant 1.500000e+00 : f32
    %1702 = arith.minimumf %cst_605, %1661 : f32
    %cst_606 = arith.constant 1.500000e+00 : f32
    %1703 = arith.minimumf %cst_606, %1662 : f32
    %1704 = arith.mulf %1702, %1703 : f32
    %1705 = arith.mulf %1661, %1662 : f32
    %cst_607 = arith.constant 2.250000e+00 : f32
    %1706 = arith.addf %1705, %cst_607 : f32
    %1707 = arith.subf %1706, %1704 : f32
    %1708 = arith.divf %1704, %1707 : f32
    %cst_608 = arith.constant 0.000000e+00 : f32
    %1709 = vector.broadcast %cst_608 : f32 to vector<1x1xf32>
    %1710 = vector.broadcast %1708 : f32 to vector<1x1xf32>
    %1711 = arith.select %1677, %1709, %1710 : vector<1x1xi1>, vector<1x1xf32>
    %cst_609 = arith.constant 2.000000e+00 : f32
    %1712 = arith.minimumf %cst_609, %1661 : f32
    %cst_610 = arith.constant 3.000000e+00 : f32
    %1713 = arith.minimumf %cst_610, %1662 : f32
    %1714 = arith.mulf %1712, %1713 : f32
    %1715 = arith.mulf %1661, %1662 : f32
    %cst_611 = arith.constant 6.000000e+00 : f32
    %1716 = arith.addf %1715, %cst_611 : f32
    %1717 = arith.subf %1716, %1714 : f32
    %1718 = arith.divf %1714, %1717 : f32
    %cst_612 = arith.constant 0.000000e+00 : f32
    %1719 = vector.broadcast %cst_612 : f32 to vector<1x1xf32>
    %1720 = vector.broadcast %1718 : f32 to vector<1x1xf32>
    %1721 = arith.select %1689, %1719, %1720 : vector<1x1xi1>, vector<1x1xf32>
    %cst_613 = arith.constant 3.500000e+00 : f32
    %1722 = arith.minimumf %cst_613, %1661 : f32
    %cst_614 = arith.constant 2.500000e+00 : f32
    %1723 = arith.minimumf %cst_614, %1662 : f32
    %1724 = arith.mulf %1722, %1723 : f32
    %1725 = arith.mulf %1661, %1662 : f32
    %cst_615 = arith.constant 8.750000e+00 : f32
    %1726 = arith.addf %1725, %cst_615 : f32
    %1727 = arith.subf %1726, %1724 : f32
    %1728 = arith.divf %1724, %1727 : f32
    %cst_616 = arith.constant 0.000000e+00 : f32
    %1729 = vector.broadcast %cst_616 : f32 to vector<1x1xf32>
    %1730 = vector.broadcast %1728 : f32 to vector<1x1xf32>
    %1731 = arith.select %1701, %1729, %1730 : vector<1x1xi1>, vector<1x1xf32>
    %1732 = arith.maximumf %1711, %1721 : vector<1x1xf32>
    %1733 = arith.maximumf %1732, %1731 : vector<1x1xf32>
    %1734 = arith.cmpf oeq, %1721, %1733 : vector<1x1xf32>
    %c1_i32_617 = arith.constant 1 : i32
    %c2_i32_618 = arith.constant 2 : i32
    %1735 = vector.broadcast %c1_i32_617 : i32 to vector<1x1xi32>
    %1736 = vector.broadcast %c2_i32_618 : i32 to vector<1x1xi32>
    %1737 = arith.select %1734, %1735, %1736 : vector<1x1xi1>, vector<1x1xi32>
    %1738 = arith.cmpf oeq, %1711, %1733 : vector<1x1xf32>
    %c0_i32_619 = arith.constant 0 : i32
    %1739 = vector.broadcast %c0_i32_619 : i32 to vector<1x1xi32>
    %1740 = arith.select %1738, %1739, %1737 : vector<1x1xi1>, vector<1x1xi32>
    %cst_620 = arith.constant 4.000000e-01 : f32
    %1741 = vector.broadcast %cst_620 : f32 to vector<1x1xf32>
    %1742 = arith.cmpf oge, %1733, %1741 : vector<1x1xf32>
    %1743 = arith.cmpi slt, %c4_i32_572, %0 : i32
    %1744 = vector.broadcast %1743 : i1 to vector<1x1xi1>
    %1745 = arith.andi %1742, %1744 : vector<1x1xi1>
    %c1_i32_621 = arith.constant 1 : i32
    %1746 = vector.broadcast %c1_i32_621 : i32 to vector<1x1xi32>
    %1747 = arith.cmpi eq, %1740, %1746 : vector<1x1xi32>
    %cst_622 = arith.constant 2.000000e+00 : f32
    %cst_623 = arith.constant 1.500000e+00 : f32
    %1748 = vector.broadcast %cst_622 : f32 to vector<1x1xf32>
    %1749 = vector.broadcast %cst_623 : f32 to vector<1x1xf32>
    %1750 = arith.select %1747, %1748, %1749 : vector<1x1xi1>, vector<1x1xf32>
    %c1_i32_624 = arith.constant 1 : i32
    %1751 = vector.broadcast %c1_i32_624 : i32 to vector<1x1xi32>
    %1752 = arith.cmpi eq, %1740, %1751 : vector<1x1xi32>
    %cst_625 = arith.constant 3.000000e+00 : f32
    %cst_626 = arith.constant 1.500000e+00 : f32
    %1753 = vector.broadcast %cst_625 : f32 to vector<1x1xf32>
    %1754 = vector.broadcast %cst_626 : f32 to vector<1x1xf32>
    %1755 = arith.select %1752, %1753, %1754 : vector<1x1xi1>, vector<1x1xf32>
    %c2_i32_627 = arith.constant 2 : i32
    %1756 = vector.broadcast %c2_i32_627 : i32 to vector<1x1xi32>
    %1757 = arith.cmpi eq, %1740, %1756 : vector<1x1xi32>
    %cst_628 = arith.constant 3.500000e+00 : f32
    %1758 = vector.broadcast %cst_628 : f32 to vector<1x1xf32>
    %1759 = arith.select %1757, %1758, %1750 : vector<1x1xi1>, vector<1x1xf32>
    %c2_i32_629 = arith.constant 2 : i32
    %1760 = vector.broadcast %c2_i32_629 : i32 to vector<1x1xi32>
    %1761 = arith.cmpi eq, %1740, %1760 : vector<1x1xi32>
    %cst_630 = arith.constant 2.500000e+00 : f32
    %1762 = vector.broadcast %cst_630 : f32 to vector<1x1xf32>
    %1763 = arith.select %1761, %1762, %1755 : vector<1x1xi1>, vector<1x1xf32>
    %1764 = vector.broadcast %1661 : f32 to vector<1x1xf32>
    %1765 = arith.divf %1764, %1759 : vector<1x1xf32>
    %cst_631 = arith.constant 9.99999997E-7 : f32
    %1766 = vector.broadcast %cst_631 : f32 to vector<1x1xf32>
    %1767 = arith.addf %1765, %1766 : vector<1x1xf32>
    %1768 = math.log %1767 : vector<1x1xf32>
    %1769 = vector.broadcast %1662 : f32 to vector<1x1xf32>
    %1770 = arith.divf %1769, %1763 : vector<1x1xf32>
    %cst_632 = arith.constant 9.99999997E-7 : f32
    %1771 = vector.broadcast %cst_632 : f32 to vector<1x1xf32>
    %1772 = arith.addf %1770, %1771 : vector<1x1xf32>
    %1773 = math.log %1772 : vector<1x1xf32>
    %c6_i32_633 = arith.constant 6 : i32
    %1774 = vector.broadcast %c6_i32_633 : i32 to vector<1x1xi32>
    %1775 = arith.muli %1740, %1774 : vector<1x1xi32>
    %1776 = vector.broadcast %1665 : i32 to vector<1x1xi32>
    %1777 = arith.addi %1776, %1775 : vector<1x1xi32>
    %1778 = vector.broadcast %1777 : vector<1x1xi32> to vector<8x128xi32>
    %1779 = arith.subi %5, %1778 : vector<8x128xi32>
    %c1_i32_634 = arith.constant 1 : i32
    %1780 = vector.broadcast %c1_i32_634 : i32 to vector<8x128xi32>
    %1781 = arith.cmpi eq, %1779, %1780 : vector<8x128xi32>
    %c2_i32_635 = arith.constant 2 : i32
    %1782 = vector.broadcast %c2_i32_635 : i32 to vector<8x128xi32>
    %1783 = arith.cmpi eq, %1779, %1782 : vector<8x128xi32>
    %c3_i32_636 = arith.constant 3 : i32
    %1784 = vector.broadcast %c3_i32_636 : i32 to vector<8x128xi32>
    %1785 = arith.cmpi eq, %1779, %1784 : vector<8x128xi32>
    %c4_i32_637 = arith.constant 4 : i32
    %1786 = vector.broadcast %c4_i32_637 : i32 to vector<8x128xi32>
    %1787 = arith.cmpi eq, %1779, %1786 : vector<8x128xi32>
    %cst_638 = arith.constant 1.000000e+00 : f32
    %1788 = vector.shape_cast %1773 : vector<1x1xf32> to vector<1x1xf32>
    %1789 = vector.broadcast %1788 : vector<1x1xf32> to vector<8x128xf32>
    %1790 = vector.broadcast %cst_638 : f32 to vector<8x128xf32>
    %1791 = arith.select %1787, %1789, %1790 : vector<8x128xi1>, vector<8x128xf32>
    %1792 = vector.shape_cast %1768 : vector<1x1xf32> to vector<1x1xf32>
    %1793 = vector.broadcast %1792 : vector<1x1xf32> to vector<8x128xf32>
    %1794 = arith.select %1785, %1793, %1791 : vector<8x128xi1>, vector<8x128xf32>
    %1795 = vector.broadcast %1660 : f32 to vector<8x128xf32>
    %1796 = arith.select %1783, %1795, %1794 : vector<8x128xi1>, vector<8x128xf32>
    %1797 = vector.broadcast %1658 : f32 to vector<8x128xf32>
    %1798 = arith.select %1781, %1797, %1796 : vector<8x128xi1>, vector<8x128xf32>
    %c0_i32_639 = arith.constant 0 : i32
    %1799 = vector.broadcast %c0_i32_639 : i32 to vector<8x128xi32>
    %1800 = arith.cmpi sge, %1779, %1799 : vector<8x128xi32>
    %1801 = vector.broadcast %1745 : vector<1x1xi1> to vector<8x128xi1>
    %1802 = arith.andi %1801, %1800 : vector<8x128xi1>
    %c6_i32_640 = arith.constant 6 : i32
    %1803 = vector.broadcast %c6_i32_640 : i32 to vector<8x128xi32>
    %1804 = arith.cmpi slt, %1779, %1803 : vector<8x128xi32>
    %1805 = arith.andi %1802, %1804 : vector<8x128xi1>
    %1806 = arith.select %1805, %1798, %1441 : vector<8x128xi1>, vector<8x128xf32>
    %cst_641 = arith.constant 5.000000e-01 : f32
    %1807 = vector.broadcast %cst_641 : f32 to vector<1x1xf32>
    %1808 = arith.cmpf ogt, %1711, %1807 : vector<1x1xf32>
    %1809 = arith.cmpf one, %1711, %1733 : vector<1x1xf32>
    %1810 = arith.andi %1808, %1809 : vector<1x1xi1>
    %cst_642 = arith.constant 5.000000e-01 : f32
    %1811 = vector.broadcast %cst_642 : f32 to vector<1x1xf32>
    %1812 = arith.cmpf ogt, %1721, %1811 : vector<1x1xf32>
    %1813 = arith.cmpf one, %1721, %1733 : vector<1x1xf32>
    %1814 = arith.andi %1812, %1813 : vector<1x1xi1>
    %cst_643 = arith.constant 5.000000e-01 : f32
    %1815 = vector.broadcast %cst_643 : f32 to vector<1x1xf32>
    %1816 = arith.cmpf ogt, %1731, %1815 : vector<1x1xf32>
    %1817 = arith.cmpf one, %1731, %1733 : vector<1x1xf32>
    %1818 = arith.andi %1816, %1817 : vector<1x1xi1>
    %1819 = arith.extui %1810 : vector<1x1xi1> to vector<1x1xi32>
    %1820 = arith.extui %1814 : vector<1x1xi1> to vector<1x1xi32>
    %1821 = arith.addi %1819, %1820 : vector<1x1xi32>
    %1822 = arith.extui %1818 : vector<1x1xi1> to vector<1x1xi32>
    %1823 = arith.addi %1821, %1822 : vector<1x1xi32>
    %c2_i32_644 = arith.constant 2 : i32
    %1824 = vector.broadcast %c2_i32_644 : i32 to vector<1x1xi32>
    %1825 = arith.cmpi sge, %1823, %1824 : vector<1x1xi32>
    %1826 = arith.andi %1745, %1825 : vector<1x1xi1>
    %c0_i32_645 = arith.constant 0 : i32
    %1827 = arith.addi %1665, %c0_i32_645 : i32
    %1828 = vector.broadcast %1827 : i32 to vector<8x128xi32>
    %1829 = arith.cmpi eq, %5, %1828 : vector<8x128xi32>
    %1830 = vector.broadcast %1810 : vector<1x1xi1> to vector<8x128xi1>
    %1831 = arith.andi %1830, %1829 : vector<8x128xi1>
    %c6_i32_646 = arith.constant 6 : i32
    %1832 = arith.addi %1665, %c6_i32_646 : i32
    %1833 = vector.broadcast %1832 : i32 to vector<8x128xi32>
    %1834 = arith.cmpi eq, %5, %1833 : vector<8x128xi32>
    %1835 = vector.broadcast %1814 : vector<1x1xi1> to vector<8x128xi1>
    %1836 = arith.andi %1835, %1834 : vector<8x128xi1>
    %1837 = arith.ori %1831, %1836 : vector<8x128xi1>
    %c12_i32_647 = arith.constant 12 : i32
    %1838 = arith.addi %1665, %c12_i32_647 : i32
    %1839 = vector.broadcast %1838 : i32 to vector<8x128xi32>
    %1840 = arith.cmpi eq, %5, %1839 : vector<8x128xi32>
    %1841 = vector.broadcast %1818 : vector<1x1xi1> to vector<8x128xi1>
    %1842 = arith.andi %1841, %1840 : vector<8x128xi1>
    %1843 = arith.ori %1837, %1842 : vector<8x128xi1>
    %1844 = vector.broadcast %1826 : vector<1x1xi1> to vector<8x128xi1>
    %1845 = arith.andi %1844, %1843 : vector<8x128xi1>
    %cst_648 = arith.constant -1.000000e+00 : f32
    %1846 = vector.broadcast %cst_648 : f32 to vector<8x128xf32>
    %1847 = arith.select %1845, %1846, %1806 : vector<8x128xi1>, vector<8x128xf32>
    %cst_649 = arith.constant 4.000000e+00 : f32
    %1848 = arith.divf %1640, %cst_649 : f32
    %cst_650 = arith.constant 4.000000e+00 : f32
    %1849 = arith.divf %1644, %cst_650 : f32
    %1850 = arith.fptosi %1848 : f32 to i32
    %1851 = arith.fptosi %1849 : f32 to i32
    %1852 = arith.sitofp %1850 : i32 to f32
    %1853 = arith.subf %1848, %1852 : f32
    %1854 = arith.sitofp %1851 : i32 to f32
    %1855 = arith.subf %1849, %1854 : f32
    %cst_651 = arith.constant 4.000000e+00 : f32
    %1856 = arith.divf %1648, %cst_651 : f32
    %cst_652 = arith.constant 4.000000e+00 : f32
    %1857 = arith.divf %1652, %cst_652 : f32
    %c8_i32_653 = arith.constant 8 : i32
    %1858 = arith.muli %1850, %c8_i32_653 : i32
    %1859 = arith.addi %1858, %1851 : i32
    %c18_i32_654 = arith.constant 18 : i32
    %1860 = arith.muli %1859, %c18_i32_654 : i32
    %c0_i32_655 = arith.constant 0 : i32
    %1861 = arith.addi %1860, %c0_i32_655 : i32
    %c5_i32_656 = arith.constant 5 : i32
    %1862 = arith.addi %1861, %c5_i32_656 : i32
    %1863 = vector.broadcast %1862 : i32 to vector<16x128xi32>
    %1864 = arith.cmpi eq, %10, %1863 : vector<16x128xi32>
    %cst_657 = arith.constant 0.000000e+00 : f32
    %1865 = vector.broadcast %cst_657 : f32 to vector<16x128xf32>
    %1866 = arith.select %1864, %1636, %1865 : vector<16x128xi1>, vector<16x128xf32>
    %cst_658 = arith.constant dense<0.000000e+00> : vector<16xf32>
    %1867 = vector.multi_reduction <add>, %1866, %cst_658 [1] : vector<16x128xf32> to vector<16xf32>
    %1868 = vector.shape_cast %1867 : vector<16xf32> to vector<16x1xf32>
    %cst_659 = arith.constant dense<0.000000e+00> : vector<1xf32>
    %1869 = vector.multi_reduction <add>, %1868, %cst_659 [0] : vector<16x1xf32> to vector<1xf32>
    %1870 = vector.shape_cast %1869 : vector<1xf32> to vector<1x1xf32>
    %cst_660 = arith.constant 1.000000e+00 : f32
    %1871 = vector.broadcast %cst_660 : f32 to vector<1x1xf32>
    %1872 = arith.cmpf oeq, %1870, %1871 : vector<1x1xf32>
    %c6_i32_661 = arith.constant 6 : i32
    %1873 = arith.addi %1860, %c6_i32_661 : i32
    %c5_i32_662 = arith.constant 5 : i32
    %1874 = arith.addi %1873, %c5_i32_662 : i32
    %1875 = vector.broadcast %1874 : i32 to vector<16x128xi32>
    %1876 = arith.cmpi eq, %10, %1875 : vector<16x128xi32>
    %cst_663 = arith.constant 0.000000e+00 : f32
    %1877 = vector.broadcast %cst_663 : f32 to vector<16x128xf32>
    %1878 = arith.select %1876, %1636, %1877 : vector<16x128xi1>, vector<16x128xf32>
    %cst_664 = arith.constant dense<0.000000e+00> : vector<16xf32>
    %1879 = vector.multi_reduction <add>, %1878, %cst_664 [1] : vector<16x128xf32> to vector<16xf32>
    %1880 = vector.shape_cast %1879 : vector<16xf32> to vector<16x1xf32>
    %cst_665 = arith.constant dense<0.000000e+00> : vector<1xf32>
    %1881 = vector.multi_reduction <add>, %1880, %cst_665 [0] : vector<16x1xf32> to vector<1xf32>
    %1882 = vector.shape_cast %1881 : vector<1xf32> to vector<1x1xf32>
    %cst_666 = arith.constant 1.000000e+00 : f32
    %1883 = vector.broadcast %cst_666 : f32 to vector<1x1xf32>
    %1884 = arith.cmpf oeq, %1882, %1883 : vector<1x1xf32>
    %c12_i32_667 = arith.constant 12 : i32
    %1885 = arith.addi %1860, %c12_i32_667 : i32
    %c5_i32_668 = arith.constant 5 : i32
    %1886 = arith.addi %1885, %c5_i32_668 : i32
    %1887 = vector.broadcast %1886 : i32 to vector<16x128xi32>
    %1888 = arith.cmpi eq, %10, %1887 : vector<16x128xi32>
    %cst_669 = arith.constant 0.000000e+00 : f32
    %1889 = vector.broadcast %cst_669 : f32 to vector<16x128xf32>
    %1890 = arith.select %1888, %1636, %1889 : vector<16x128xi1>, vector<16x128xf32>
    %cst_670 = arith.constant dense<0.000000e+00> : vector<16xf32>
    %1891 = vector.multi_reduction <add>, %1890, %cst_670 [1] : vector<16x128xf32> to vector<16xf32>
    %1892 = vector.shape_cast %1891 : vector<16xf32> to vector<16x1xf32>
    %cst_671 = arith.constant dense<0.000000e+00> : vector<1xf32>
    %1893 = vector.multi_reduction <add>, %1892, %cst_671 [0] : vector<16x1xf32> to vector<1xf32>
    %1894 = vector.shape_cast %1893 : vector<1xf32> to vector<1x1xf32>
    %cst_672 = arith.constant 1.000000e+00 : f32
    %1895 = vector.broadcast %cst_672 : f32 to vector<1x1xf32>
    %1896 = arith.cmpf oeq, %1894, %1895 : vector<1x1xf32>
    %cst_673 = arith.constant 8.000000e-01 : f32
    %1897 = arith.minimumf %cst_673, %1856 : f32
    %cst_674 = arith.constant 8.000000e-01 : f32
    %1898 = arith.minimumf %cst_674, %1857 : f32
    %1899 = arith.mulf %1897, %1898 : f32
    %1900 = arith.mulf %1856, %1857 : f32
    %cst_675 = arith.constant 6.400000e-01 : f32
    %1901 = arith.addf %1900, %cst_675 : f32
    %1902 = arith.subf %1901, %1899 : f32
    %1903 = arith.divf %1899, %1902 : f32
    %cst_676 = arith.constant 0.000000e+00 : f32
    %1904 = vector.broadcast %cst_676 : f32 to vector<1x1xf32>
    %1905 = vector.broadcast %1903 : f32 to vector<1x1xf32>
    %1906 = arith.select %1872, %1904, %1905 : vector<1x1xi1>, vector<1x1xf32>
    %cst_677 = arith.constant 1.200000e+00 : f32
    %1907 = arith.minimumf %cst_677, %1856 : f32
    %cst_678 = arith.constant 2.000000e+00 : f32
    %1908 = arith.minimumf %cst_678, %1857 : f32
    %1909 = arith.mulf %1907, %1908 : f32
    %1910 = arith.mulf %1856, %1857 : f32
    %cst_679 = arith.constant 2.400000e+00 : f32
    %1911 = arith.addf %1910, %cst_679 : f32
    %1912 = arith.subf %1911, %1909 : f32
    %1913 = arith.divf %1909, %1912 : f32
    %cst_680 = arith.constant 0.000000e+00 : f32
    %1914 = vector.broadcast %cst_680 : f32 to vector<1x1xf32>
    %1915 = vector.broadcast %1913 : f32 to vector<1x1xf32>
    %1916 = arith.select %1884, %1914, %1915 : vector<1x1xi1>, vector<1x1xf32>
    %cst_681 = arith.constant 2.000000e+00 : f32
    %1917 = arith.minimumf %cst_681, %1856 : f32
    %cst_682 = arith.constant 1.200000e+00 : f32
    %1918 = arith.minimumf %cst_682, %1857 : f32
    %1919 = arith.mulf %1917, %1918 : f32
    %1920 = arith.mulf %1856, %1857 : f32
    %cst_683 = arith.constant 2.400000e+00 : f32
    %1921 = arith.addf %1920, %cst_683 : f32
    %1922 = arith.subf %1921, %1919 : f32
    %1923 = arith.divf %1919, %1922 : f32
    %cst_684 = arith.constant 0.000000e+00 : f32
    %1924 = vector.broadcast %cst_684 : f32 to vector<1x1xf32>
    %1925 = vector.broadcast %1923 : f32 to vector<1x1xf32>
    %1926 = arith.select %1896, %1924, %1925 : vector<1x1xi1>, vector<1x1xf32>
    %1927 = arith.maximumf %1906, %1916 : vector<1x1xf32>
    %1928 = arith.maximumf %1927, %1926 : vector<1x1xf32>
    %1929 = arith.cmpf oeq, %1916, %1928 : vector<1x1xf32>
    %c1_i32_685 = arith.constant 1 : i32
    %c2_i32_686 = arith.constant 2 : i32
    %1930 = vector.broadcast %c1_i32_685 : i32 to vector<1x1xi32>
    %1931 = vector.broadcast %c2_i32_686 : i32 to vector<1x1xi32>
    %1932 = arith.select %1929, %1930, %1931 : vector<1x1xi1>, vector<1x1xi32>
    %1933 = arith.cmpf oeq, %1906, %1928 : vector<1x1xf32>
    %c0_i32_687 = arith.constant 0 : i32
    %1934 = vector.broadcast %c0_i32_687 : i32 to vector<1x1xi32>
    %1935 = arith.select %1933, %1934, %1932 : vector<1x1xi1>, vector<1x1xi32>
    %cst_688 = arith.constant 4.000000e-01 : f32
    %1936 = vector.broadcast %cst_688 : f32 to vector<1x1xf32>
    %1937 = arith.cmpf oge, %1928, %1936 : vector<1x1xf32>
    %1938 = arith.cmpi slt, %c4_i32_572, %0 : i32
    %1939 = vector.broadcast %1938 : i1 to vector<1x1xi1>
    %1940 = arith.andi %1937, %1939 : vector<1x1xi1>
    %c1_i32_689 = arith.constant 1 : i32
    %1941 = vector.broadcast %c1_i32_689 : i32 to vector<1x1xi32>
    %1942 = arith.cmpi eq, %1935, %1941 : vector<1x1xi32>
    %cst_690 = arith.constant 1.200000e+00 : f32
    %cst_691 = arith.constant 8.000000e-01 : f32
    %1943 = vector.broadcast %cst_690 : f32 to vector<1x1xf32>
    %1944 = vector.broadcast %cst_691 : f32 to vector<1x1xf32>
    %1945 = arith.select %1942, %1943, %1944 : vector<1x1xi1>, vector<1x1xf32>
    %c1_i32_692 = arith.constant 1 : i32
    %1946 = vector.broadcast %c1_i32_692 : i32 to vector<1x1xi32>
    %1947 = arith.cmpi eq, %1935, %1946 : vector<1x1xi32>
    %cst_693 = arith.constant 2.000000e+00 : f32
    %cst_694 = arith.constant 8.000000e-01 : f32
    %1948 = vector.broadcast %cst_693 : f32 to vector<1x1xf32>
    %1949 = vector.broadcast %cst_694 : f32 to vector<1x1xf32>
    %1950 = arith.select %1947, %1948, %1949 : vector<1x1xi1>, vector<1x1xf32>
    %c2_i32_695 = arith.constant 2 : i32
    %1951 = vector.broadcast %c2_i32_695 : i32 to vector<1x1xi32>
    %1952 = arith.cmpi eq, %1935, %1951 : vector<1x1xi32>
    %cst_696 = arith.constant 2.000000e+00 : f32
    %1953 = vector.broadcast %cst_696 : f32 to vector<1x1xf32>
    %1954 = arith.select %1952, %1953, %1945 : vector<1x1xi1>, vector<1x1xf32>
    %c2_i32_697 = arith.constant 2 : i32
    %1955 = vector.broadcast %c2_i32_697 : i32 to vector<1x1xi32>
    %1956 = arith.cmpi eq, %1935, %1955 : vector<1x1xi32>
    %cst_698 = arith.constant 1.200000e+00 : f32
    %1957 = vector.broadcast %cst_698 : f32 to vector<1x1xf32>
    %1958 = arith.select %1956, %1957, %1950 : vector<1x1xi1>, vector<1x1xf32>
    %1959 = vector.broadcast %1856 : f32 to vector<1x1xf32>
    %1960 = arith.divf %1959, %1954 : vector<1x1xf32>
    %cst_699 = arith.constant 9.99999997E-7 : f32
    %1961 = vector.broadcast %cst_699 : f32 to vector<1x1xf32>
    %1962 = arith.addf %1960, %1961 : vector<1x1xf32>
    %1963 = math.log %1962 : vector<1x1xf32>
    %1964 = vector.broadcast %1857 : f32 to vector<1x1xf32>
    %1965 = arith.divf %1964, %1958 : vector<1x1xf32>
    %cst_700 = arith.constant 9.99999997E-7 : f32
    %1966 = vector.broadcast %cst_700 : f32 to vector<1x1xf32>
    %1967 = arith.addf %1965, %1966 : vector<1x1xf32>
    %1968 = math.log %1967 : vector<1x1xf32>
    %c6_i32_701 = arith.constant 6 : i32
    %1969 = vector.broadcast %c6_i32_701 : i32 to vector<1x1xi32>
    %1970 = arith.muli %1935, %1969 : vector<1x1xi32>
    %1971 = vector.broadcast %1860 : i32 to vector<1x1xi32>
    %1972 = arith.addi %1971, %1970 : vector<1x1xi32>
    %1973 = vector.broadcast %1972 : vector<1x1xi32> to vector<16x128xi32>
    %1974 = arith.subi %10, %1973 : vector<16x128xi32>
    %c1_i32_702 = arith.constant 1 : i32
    %1975 = vector.broadcast %c1_i32_702 : i32 to vector<16x128xi32>
    %1976 = arith.cmpi eq, %1974, %1975 : vector<16x128xi32>
    %c2_i32_703 = arith.constant 2 : i32
    %1977 = vector.broadcast %c2_i32_703 : i32 to vector<16x128xi32>
    %1978 = arith.cmpi eq, %1974, %1977 : vector<16x128xi32>
    %c3_i32_704 = arith.constant 3 : i32
    %1979 = vector.broadcast %c3_i32_704 : i32 to vector<16x128xi32>
    %1980 = arith.cmpi eq, %1974, %1979 : vector<16x128xi32>
    %c4_i32_705 = arith.constant 4 : i32
    %1981 = vector.broadcast %c4_i32_705 : i32 to vector<16x128xi32>
    %1982 = arith.cmpi eq, %1974, %1981 : vector<16x128xi32>
    %cst_706 = arith.constant 1.000000e+00 : f32
    %1983 = vector.shape_cast %1968 : vector<1x1xf32> to vector<1x1xf32>
    %1984 = vector.broadcast %1983 : vector<1x1xf32> to vector<16x128xf32>
    %1985 = vector.broadcast %cst_706 : f32 to vector<16x128xf32>
    %1986 = arith.select %1982, %1984, %1985 : vector<16x128xi1>, vector<16x128xf32>
    %1987 = vector.shape_cast %1963 : vector<1x1xf32> to vector<1x1xf32>
    %1988 = vector.broadcast %1987 : vector<1x1xf32> to vector<16x128xf32>
    %1989 = arith.select %1980, %1988, %1986 : vector<16x128xi1>, vector<16x128xf32>
    %1990 = vector.broadcast %1855 : f32 to vector<16x128xf32>
    %1991 = arith.select %1978, %1990, %1989 : vector<16x128xi1>, vector<16x128xf32>
    %1992 = vector.broadcast %1853 : f32 to vector<16x128xf32>
    %1993 = arith.select %1976, %1992, %1991 : vector<16x128xi1>, vector<16x128xf32>
    %c0_i32_707 = arith.constant 0 : i32
    %1994 = vector.broadcast %c0_i32_707 : i32 to vector<16x128xi32>
    %1995 = arith.cmpi sge, %1974, %1994 : vector<16x128xi32>
    %1996 = vector.broadcast %1940 : vector<1x1xi1> to vector<16x128xi1>
    %1997 = arith.andi %1996, %1995 : vector<16x128xi1>
    %c6_i32_708 = arith.constant 6 : i32
    %1998 = vector.broadcast %c6_i32_708 : i32 to vector<16x128xi32>
    %1999 = arith.cmpi slt, %1974, %1998 : vector<16x128xi32>
    %2000 = arith.andi %1997, %1999 : vector<16x128xi1>
    %2001 = arith.select %2000, %1993, %1636 : vector<16x128xi1>, vector<16x128xf32>
    %cst_709 = arith.constant 5.000000e-01 : f32
    %2002 = vector.broadcast %cst_709 : f32 to vector<1x1xf32>
    %2003 = arith.cmpf ogt, %1906, %2002 : vector<1x1xf32>
    %2004 = arith.cmpf one, %1906, %1928 : vector<1x1xf32>
    %2005 = arith.andi %2003, %2004 : vector<1x1xi1>
    %cst_710 = arith.constant 5.000000e-01 : f32
    %2006 = vector.broadcast %cst_710 : f32 to vector<1x1xf32>
    %2007 = arith.cmpf ogt, %1916, %2006 : vector<1x1xf32>
    %2008 = arith.cmpf one, %1916, %1928 : vector<1x1xf32>
    %2009 = arith.andi %2007, %2008 : vector<1x1xi1>
    %cst_711 = arith.constant 5.000000e-01 : f32
    %2010 = vector.broadcast %cst_711 : f32 to vector<1x1xf32>
    %2011 = arith.cmpf ogt, %1926, %2010 : vector<1x1xf32>
    %2012 = arith.cmpf one, %1926, %1928 : vector<1x1xf32>
    %2013 = arith.andi %2011, %2012 : vector<1x1xi1>
    %2014 = arith.extui %2005 : vector<1x1xi1> to vector<1x1xi32>
    %2015 = arith.extui %2009 : vector<1x1xi1> to vector<1x1xi32>
    %2016 = arith.addi %2014, %2015 : vector<1x1xi32>
    %2017 = arith.extui %2013 : vector<1x1xi1> to vector<1x1xi32>
    %2018 = arith.addi %2016, %2017 : vector<1x1xi32>
    %c2_i32_712 = arith.constant 2 : i32
    %2019 = vector.broadcast %c2_i32_712 : i32 to vector<1x1xi32>
    %2020 = arith.cmpi sge, %2018, %2019 : vector<1x1xi32>
    %2021 = arith.andi %1940, %2020 : vector<1x1xi1>
    %c0_i32_713 = arith.constant 0 : i32
    %2022 = arith.addi %1860, %c0_i32_713 : i32
    %2023 = vector.broadcast %2022 : i32 to vector<16x128xi32>
    %2024 = arith.cmpi eq, %10, %2023 : vector<16x128xi32>
    %2025 = vector.broadcast %2005 : vector<1x1xi1> to vector<16x128xi1>
    %2026 = arith.andi %2025, %2024 : vector<16x128xi1>
    %c6_i32_714 = arith.constant 6 : i32
    %2027 = arith.addi %1860, %c6_i32_714 : i32
    %2028 = vector.broadcast %2027 : i32 to vector<16x128xi32>
    %2029 = arith.cmpi eq, %10, %2028 : vector<16x128xi32>
    %2030 = vector.broadcast %2009 : vector<1x1xi1> to vector<16x128xi1>
    %2031 = arith.andi %2030, %2029 : vector<16x128xi1>
    %2032 = arith.ori %2026, %2031 : vector<16x128xi1>
    %c12_i32_715 = arith.constant 12 : i32
    %2033 = arith.addi %1860, %c12_i32_715 : i32
    %2034 = vector.broadcast %2033 : i32 to vector<16x128xi32>
    %2035 = arith.cmpi eq, %10, %2034 : vector<16x128xi32>
    %2036 = vector.broadcast %2013 : vector<1x1xi1> to vector<16x128xi1>
    %2037 = arith.andi %2036, %2035 : vector<16x128xi1>
    %2038 = arith.ori %2032, %2037 : vector<16x128xi1>
    %2039 = vector.broadcast %2021 : vector<1x1xi1> to vector<16x128xi1>
    %2040 = arith.andi %2039, %2038 : vector<16x128xi1>
    %cst_716 = arith.constant -1.000000e+00 : f32
    %2041 = vector.broadcast %cst_716 : f32 to vector<16x128xf32>
    %2042 = arith.select %2040, %2041, %2001 : vector<16x128xi1>, vector<16x128xf32>
    %c5_i32_717 = arith.constant 5 : i32
    %c4_i32_718 = arith.constant 4 : i32
    %2043 = arith.muli %c4_i32_718, %c5_i32_717 : i32
    %c0_i32_719 = arith.constant 0 : i32
    %2044 = arith.addi %2043, %c0_i32_719 : i32
    %2045 = arith.index_cast %2044 : i32 to index
    %2046 = memref.load %arg1[%2045] : memref<32xf32, #tpu.memory_space<smem>>
    %c4_i32_720 = arith.constant 4 : i32
    %2047 = arith.muli %c4_i32_720, %c5_i32_717 : i32
    %c1_i32_721 = arith.constant 1 : i32
    %2048 = arith.addi %2047, %c1_i32_721 : i32
    %2049 = arith.index_cast %2048 : i32 to index
    %2050 = memref.load %arg1[%2049] : memref<32xf32, #tpu.memory_space<smem>>
    %c4_i32_722 = arith.constant 4 : i32
    %2051 = arith.muli %c4_i32_722, %c5_i32_717 : i32
    %c2_i32_723 = arith.constant 2 : i32
    %2052 = arith.addi %2051, %c2_i32_723 : i32
    %2053 = arith.index_cast %2052 : i32 to index
    %2054 = memref.load %arg1[%2053] : memref<32xf32, #tpu.memory_space<smem>>
    %c4_i32_724 = arith.constant 4 : i32
    %2055 = arith.muli %c4_i32_724, %c5_i32_717 : i32
    %c3_i32_725 = arith.constant 3 : i32
    %2056 = arith.addi %2055, %c3_i32_725 : i32
    %2057 = arith.index_cast %2056 : i32 to index
    %2058 = memref.load %arg1[%2057] : memref<32xf32, #tpu.memory_space<smem>>
    %cst_726 = arith.constant 8.000000e+00 : f32
    %2059 = arith.divf %2046, %cst_726 : f32
    %cst_727 = arith.constant 8.000000e+00 : f32
    %2060 = arith.divf %2050, %cst_727 : f32
    %2061 = arith.fptosi %2059 : f32 to i32
    %2062 = arith.fptosi %2060 : f32 to i32
    %2063 = arith.sitofp %2061 : i32 to f32
    %2064 = arith.subf %2059, %2063 : f32
    %2065 = arith.sitofp %2062 : i32 to f32
    %2066 = arith.subf %2060, %2065 : f32
    %cst_728 = arith.constant 8.000000e+00 : f32
    %2067 = arith.divf %2054, %cst_728 : f32
    %cst_729 = arith.constant 8.000000e+00 : f32
    %2068 = arith.divf %2058, %cst_729 : f32
    %c4_i32_730 = arith.constant 4 : i32
    %2069 = arith.muli %2061, %c4_i32_730 : i32
    %2070 = arith.addi %2069, %2062 : i32
    %c18_i32_731 = arith.constant 18 : i32
    %2071 = arith.muli %2070, %c18_i32_731 : i32
    %c0_i32_732 = arith.constant 0 : i32
    %2072 = arith.addi %2071, %c0_i32_732 : i32
    %c5_i32_733 = arith.constant 5 : i32
    %2073 = arith.addi %2072, %c5_i32_733 : i32
    %2074 = vector.broadcast %2073 : i32 to vector<8x128xi32>
    %2075 = arith.cmpi eq, %5, %2074 : vector<8x128xi32>
    %cst_734 = arith.constant 0.000000e+00 : f32
    %2076 = vector.broadcast %cst_734 : f32 to vector<8x128xf32>
    %2077 = arith.select %2075, %1847, %2076 : vector<8x128xi1>, vector<8x128xf32>
    %cst_735 = arith.constant dense<0.000000e+00> : vector<8xf32>
    %2078 = vector.multi_reduction <add>, %2077, %cst_735 [1] : vector<8x128xf32> to vector<8xf32>
    %2079 = vector.shape_cast %2078 : vector<8xf32> to vector<8x1xf32>
    %cst_736 = arith.constant dense<0.000000e+00> : vector<1xf32>
    %2080 = vector.multi_reduction <add>, %2079, %cst_736 [0] : vector<8x1xf32> to vector<1xf32>
    %2081 = vector.shape_cast %2080 : vector<1xf32> to vector<1x1xf32>
    %cst_737 = arith.constant 1.000000e+00 : f32
    %2082 = vector.broadcast %cst_737 : f32 to vector<1x1xf32>
    %2083 = arith.cmpf oeq, %2081, %2082 : vector<1x1xf32>
    %c6_i32_738 = arith.constant 6 : i32
    %2084 = arith.addi %2071, %c6_i32_738 : i32
    %c5_i32_739 = arith.constant 5 : i32
    %2085 = arith.addi %2084, %c5_i32_739 : i32
    %2086 = vector.broadcast %2085 : i32 to vector<8x128xi32>
    %2087 = arith.cmpi eq, %5, %2086 : vector<8x128xi32>
    %cst_740 = arith.constant 0.000000e+00 : f32
    %2088 = vector.broadcast %cst_740 : f32 to vector<8x128xf32>
    %2089 = arith.select %2087, %1847, %2088 : vector<8x128xi1>, vector<8x128xf32>
    %cst_741 = arith.constant dense<0.000000e+00> : vector<8xf32>
    %2090 = vector.multi_reduction <add>, %2089, %cst_741 [1] : vector<8x128xf32> to vector<8xf32>
    %2091 = vector.shape_cast %2090 : vector<8xf32> to vector<8x1xf32>
    %cst_742 = arith.constant dense<0.000000e+00> : vector<1xf32>
    %2092 = vector.multi_reduction <add>, %2091, %cst_742 [0] : vector<8x1xf32> to vector<1xf32>
    %2093 = vector.shape_cast %2092 : vector<1xf32> to vector<1x1xf32>
    %cst_743 = arith.constant 1.000000e+00 : f32
    %2094 = vector.broadcast %cst_743 : f32 to vector<1x1xf32>
    %2095 = arith.cmpf oeq, %2093, %2094 : vector<1x1xf32>
    %c12_i32_744 = arith.constant 12 : i32
    %2096 = arith.addi %2071, %c12_i32_744 : i32
    %c5_i32_745 = arith.constant 5 : i32
    %2097 = arith.addi %2096, %c5_i32_745 : i32
    %2098 = vector.broadcast %2097 : i32 to vector<8x128xi32>
    %2099 = arith.cmpi eq, %5, %2098 : vector<8x128xi32>
    %cst_746 = arith.constant 0.000000e+00 : f32
    %2100 = vector.broadcast %cst_746 : f32 to vector<8x128xf32>
    %2101 = arith.select %2099, %1847, %2100 : vector<8x128xi1>, vector<8x128xf32>
    %cst_747 = arith.constant dense<0.000000e+00> : vector<8xf32>
    %2102 = vector.multi_reduction <add>, %2101, %cst_747 [1] : vector<8x128xf32> to vector<8xf32>
    %2103 = vector.shape_cast %2102 : vector<8xf32> to vector<8x1xf32>
    %cst_748 = arith.constant dense<0.000000e+00> : vector<1xf32>
    %2104 = vector.multi_reduction <add>, %2103, %cst_748 [0] : vector<8x1xf32> to vector<1xf32>
    %2105 = vector.shape_cast %2104 : vector<1xf32> to vector<1x1xf32>
    %cst_749 = arith.constant 1.000000e+00 : f32
    %2106 = vector.broadcast %cst_749 : f32 to vector<1x1xf32>
    %2107 = arith.cmpf oeq, %2105, %2106 : vector<1x1xf32>
    %cst_750 = arith.constant 1.500000e+00 : f32
    %2108 = arith.minimumf %cst_750, %2067 : f32
    %cst_751 = arith.constant 1.500000e+00 : f32
    %2109 = arith.minimumf %cst_751, %2068 : f32
    %2110 = arith.mulf %2108, %2109 : f32
    %2111 = arith.mulf %2067, %2068 : f32
    %cst_752 = arith.constant 2.250000e+00 : f32
    %2112 = arith.addf %2111, %cst_752 : f32
    %2113 = arith.subf %2112, %2110 : f32
    %2114 = arith.divf %2110, %2113 : f32
    %cst_753 = arith.constant 0.000000e+00 : f32
    %2115 = vector.broadcast %cst_753 : f32 to vector<1x1xf32>
    %2116 = vector.broadcast %2114 : f32 to vector<1x1xf32>
    %2117 = arith.select %2083, %2115, %2116 : vector<1x1xi1>, vector<1x1xf32>
    %cst_754 = arith.constant 2.000000e+00 : f32
    %2118 = arith.minimumf %cst_754, %2067 : f32
    %cst_755 = arith.constant 3.000000e+00 : f32
    %2119 = arith.minimumf %cst_755, %2068 : f32
    %2120 = arith.mulf %2118, %2119 : f32
    %2121 = arith.mulf %2067, %2068 : f32
    %cst_756 = arith.constant 6.000000e+00 : f32
    %2122 = arith.addf %2121, %cst_756 : f32
    %2123 = arith.subf %2122, %2120 : f32
    %2124 = arith.divf %2120, %2123 : f32
    %cst_757 = arith.constant 0.000000e+00 : f32
    %2125 = vector.broadcast %cst_757 : f32 to vector<1x1xf32>
    %2126 = vector.broadcast %2124 : f32 to vector<1x1xf32>
    %2127 = arith.select %2095, %2125, %2126 : vector<1x1xi1>, vector<1x1xf32>
    %cst_758 = arith.constant 3.500000e+00 : f32
    %2128 = arith.minimumf %cst_758, %2067 : f32
    %cst_759 = arith.constant 2.500000e+00 : f32
    %2129 = arith.minimumf %cst_759, %2068 : f32
    %2130 = arith.mulf %2128, %2129 : f32
    %2131 = arith.mulf %2067, %2068 : f32
    %cst_760 = arith.constant 8.750000e+00 : f32
    %2132 = arith.addf %2131, %cst_760 : f32
    %2133 = arith.subf %2132, %2130 : f32
    %2134 = arith.divf %2130, %2133 : f32
    %cst_761 = arith.constant 0.000000e+00 : f32
    %2135 = vector.broadcast %cst_761 : f32 to vector<1x1xf32>
    %2136 = vector.broadcast %2134 : f32 to vector<1x1xf32>
    %2137 = arith.select %2107, %2135, %2136 : vector<1x1xi1>, vector<1x1xf32>
    %2138 = arith.maximumf %2117, %2127 : vector<1x1xf32>
    %2139 = arith.maximumf %2138, %2137 : vector<1x1xf32>
    %2140 = arith.cmpf oeq, %2127, %2139 : vector<1x1xf32>
    %c1_i32_762 = arith.constant 1 : i32
    %c2_i32_763 = arith.constant 2 : i32
    %2141 = vector.broadcast %c1_i32_762 : i32 to vector<1x1xi32>
    %2142 = vector.broadcast %c2_i32_763 : i32 to vector<1x1xi32>
    %2143 = arith.select %2140, %2141, %2142 : vector<1x1xi1>, vector<1x1xi32>
    %2144 = arith.cmpf oeq, %2117, %2139 : vector<1x1xf32>
    %c0_i32_764 = arith.constant 0 : i32
    %2145 = vector.broadcast %c0_i32_764 : i32 to vector<1x1xi32>
    %2146 = arith.select %2144, %2145, %2143 : vector<1x1xi1>, vector<1x1xi32>
    %cst_765 = arith.constant 4.000000e-01 : f32
    %2147 = vector.broadcast %cst_765 : f32 to vector<1x1xf32>
    %2148 = arith.cmpf oge, %2139, %2147 : vector<1x1xf32>
    %2149 = arith.cmpi slt, %c5_i32_717, %0 : i32
    %2150 = vector.broadcast %2149 : i1 to vector<1x1xi1>
    %2151 = arith.andi %2148, %2150 : vector<1x1xi1>
    %c1_i32_766 = arith.constant 1 : i32
    %2152 = vector.broadcast %c1_i32_766 : i32 to vector<1x1xi32>
    %2153 = arith.cmpi eq, %2146, %2152 : vector<1x1xi32>
    %cst_767 = arith.constant 2.000000e+00 : f32
    %cst_768 = arith.constant 1.500000e+00 : f32
    %2154 = vector.broadcast %cst_767 : f32 to vector<1x1xf32>
    %2155 = vector.broadcast %cst_768 : f32 to vector<1x1xf32>
    %2156 = arith.select %2153, %2154, %2155 : vector<1x1xi1>, vector<1x1xf32>
    %c1_i32_769 = arith.constant 1 : i32
    %2157 = vector.broadcast %c1_i32_769 : i32 to vector<1x1xi32>
    %2158 = arith.cmpi eq, %2146, %2157 : vector<1x1xi32>
    %cst_770 = arith.constant 3.000000e+00 : f32
    %cst_771 = arith.constant 1.500000e+00 : f32
    %2159 = vector.broadcast %cst_770 : f32 to vector<1x1xf32>
    %2160 = vector.broadcast %cst_771 : f32 to vector<1x1xf32>
    %2161 = arith.select %2158, %2159, %2160 : vector<1x1xi1>, vector<1x1xf32>
    %c2_i32_772 = arith.constant 2 : i32
    %2162 = vector.broadcast %c2_i32_772 : i32 to vector<1x1xi32>
    %2163 = arith.cmpi eq, %2146, %2162 : vector<1x1xi32>
    %cst_773 = arith.constant 3.500000e+00 : f32
    %2164 = vector.broadcast %cst_773 : f32 to vector<1x1xf32>
    %2165 = arith.select %2163, %2164, %2156 : vector<1x1xi1>, vector<1x1xf32>
    %c2_i32_774 = arith.constant 2 : i32
    %2166 = vector.broadcast %c2_i32_774 : i32 to vector<1x1xi32>
    %2167 = arith.cmpi eq, %2146, %2166 : vector<1x1xi32>
    %cst_775 = arith.constant 2.500000e+00 : f32
    %2168 = vector.broadcast %cst_775 : f32 to vector<1x1xf32>
    %2169 = arith.select %2167, %2168, %2161 : vector<1x1xi1>, vector<1x1xf32>
    %2170 = vector.broadcast %2067 : f32 to vector<1x1xf32>
    %2171 = arith.divf %2170, %2165 : vector<1x1xf32>
    %cst_776 = arith.constant 9.99999997E-7 : f32
    %2172 = vector.broadcast %cst_776 : f32 to vector<1x1xf32>
    %2173 = arith.addf %2171, %2172 : vector<1x1xf32>
    %2174 = math.log %2173 : vector<1x1xf32>
    %2175 = vector.broadcast %2068 : f32 to vector<1x1xf32>
    %2176 = arith.divf %2175, %2169 : vector<1x1xf32>
    %cst_777 = arith.constant 9.99999997E-7 : f32
    %2177 = vector.broadcast %cst_777 : f32 to vector<1x1xf32>
    %2178 = arith.addf %2176, %2177 : vector<1x1xf32>
    %2179 = math.log %2178 : vector<1x1xf32>
    %c6_i32_778 = arith.constant 6 : i32
    %2180 = vector.broadcast %c6_i32_778 : i32 to vector<1x1xi32>
    %2181 = arith.muli %2146, %2180 : vector<1x1xi32>
    %2182 = vector.broadcast %2071 : i32 to vector<1x1xi32>
    %2183 = arith.addi %2182, %2181 : vector<1x1xi32>
    %2184 = vector.broadcast %2183 : vector<1x1xi32> to vector<8x128xi32>
    %2185 = arith.subi %5, %2184 : vector<8x128xi32>
    %c1_i32_779 = arith.constant 1 : i32
    %2186 = vector.broadcast %c1_i32_779 : i32 to vector<8x128xi32>
    %2187 = arith.cmpi eq, %2185, %2186 : vector<8x128xi32>
    %c2_i32_780 = arith.constant 2 : i32
    %2188 = vector.broadcast %c2_i32_780 : i32 to vector<8x128xi32>
    %2189 = arith.cmpi eq, %2185, %2188 : vector<8x128xi32>
    %c3_i32_781 = arith.constant 3 : i32
    %2190 = vector.broadcast %c3_i32_781 : i32 to vector<8x128xi32>
    %2191 = arith.cmpi eq, %2185, %2190 : vector<8x128xi32>
    %c4_i32_782 = arith.constant 4 : i32
    %2192 = vector.broadcast %c4_i32_782 : i32 to vector<8x128xi32>
    %2193 = arith.cmpi eq, %2185, %2192 : vector<8x128xi32>
    %cst_783 = arith.constant 1.000000e+00 : f32
    %2194 = vector.shape_cast %2179 : vector<1x1xf32> to vector<1x1xf32>
    %2195 = vector.broadcast %2194 : vector<1x1xf32> to vector<8x128xf32>
    %2196 = vector.broadcast %cst_783 : f32 to vector<8x128xf32>
    %2197 = arith.select %2193, %2195, %2196 : vector<8x128xi1>, vector<8x128xf32>
    %2198 = vector.shape_cast %2174 : vector<1x1xf32> to vector<1x1xf32>
    %2199 = vector.broadcast %2198 : vector<1x1xf32> to vector<8x128xf32>
    %2200 = arith.select %2191, %2199, %2197 : vector<8x128xi1>, vector<8x128xf32>
    %2201 = vector.broadcast %2066 : f32 to vector<8x128xf32>
    %2202 = arith.select %2189, %2201, %2200 : vector<8x128xi1>, vector<8x128xf32>
    %2203 = vector.broadcast %2064 : f32 to vector<8x128xf32>
    %2204 = arith.select %2187, %2203, %2202 : vector<8x128xi1>, vector<8x128xf32>
    %c0_i32_784 = arith.constant 0 : i32
    %2205 = vector.broadcast %c0_i32_784 : i32 to vector<8x128xi32>
    %2206 = arith.cmpi sge, %2185, %2205 : vector<8x128xi32>
    %2207 = vector.broadcast %2151 : vector<1x1xi1> to vector<8x128xi1>
    %2208 = arith.andi %2207, %2206 : vector<8x128xi1>
    %c6_i32_785 = arith.constant 6 : i32
    %2209 = vector.broadcast %c6_i32_785 : i32 to vector<8x128xi32>
    %2210 = arith.cmpi slt, %2185, %2209 : vector<8x128xi32>
    %2211 = arith.andi %2208, %2210 : vector<8x128xi1>
    %2212 = arith.select %2211, %2204, %1847 : vector<8x128xi1>, vector<8x128xf32>
    %cst_786 = arith.constant 5.000000e-01 : f32
    %2213 = vector.broadcast %cst_786 : f32 to vector<1x1xf32>
    %2214 = arith.cmpf ogt, %2117, %2213 : vector<1x1xf32>
    %2215 = arith.cmpf one, %2117, %2139 : vector<1x1xf32>
    %2216 = arith.andi %2214, %2215 : vector<1x1xi1>
    %cst_787 = arith.constant 5.000000e-01 : f32
    %2217 = vector.broadcast %cst_787 : f32 to vector<1x1xf32>
    %2218 = arith.cmpf ogt, %2127, %2217 : vector<1x1xf32>
    %2219 = arith.cmpf one, %2127, %2139 : vector<1x1xf32>
    %2220 = arith.andi %2218, %2219 : vector<1x1xi1>
    %cst_788 = arith.constant 5.000000e-01 : f32
    %2221 = vector.broadcast %cst_788 : f32 to vector<1x1xf32>
    %2222 = arith.cmpf ogt, %2137, %2221 : vector<1x1xf32>
    %2223 = arith.cmpf one, %2137, %2139 : vector<1x1xf32>
    %2224 = arith.andi %2222, %2223 : vector<1x1xi1>
    %2225 = arith.extui %2216 : vector<1x1xi1> to vector<1x1xi32>
    %2226 = arith.extui %2220 : vector<1x1xi1> to vector<1x1xi32>
    %2227 = arith.addi %2225, %2226 : vector<1x1xi32>
    %2228 = arith.extui %2224 : vector<1x1xi1> to vector<1x1xi32>
    %2229 = arith.addi %2227, %2228 : vector<1x1xi32>
    %c2_i32_789 = arith.constant 2 : i32
    %2230 = vector.broadcast %c2_i32_789 : i32 to vector<1x1xi32>
    %2231 = arith.cmpi sge, %2229, %2230 : vector<1x1xi32>
    %2232 = arith.andi %2151, %2231 : vector<1x1xi1>
    %c0_i32_790 = arith.constant 0 : i32
    %2233 = arith.addi %2071, %c0_i32_790 : i32
    %2234 = vector.broadcast %2233 : i32 to vector<8x128xi32>
    %2235 = arith.cmpi eq, %5, %2234 : vector<8x128xi32>
    %2236 = vector.broadcast %2216 : vector<1x1xi1> to vector<8x128xi1>
    %2237 = arith.andi %2236, %2235 : vector<8x128xi1>
    %c6_i32_791 = arith.constant 6 : i32
    %2238 = arith.addi %2071, %c6_i32_791 : i32
    %2239 = vector.broadcast %2238 : i32 to vector<8x128xi32>
    %2240 = arith.cmpi eq, %5, %2239 : vector<8x128xi32>
    %2241 = vector.broadcast %2220 : vector<1x1xi1> to vector<8x128xi1>
    %2242 = arith.andi %2241, %2240 : vector<8x128xi1>
    %2243 = arith.ori %2237, %2242 : vector<8x128xi1>
    %c12_i32_792 = arith.constant 12 : i32
    %2244 = arith.addi %2071, %c12_i32_792 : i32
    %2245 = vector.broadcast %2244 : i32 to vector<8x128xi32>
    %2246 = arith.cmpi eq, %5, %2245 : vector<8x128xi32>
    %2247 = vector.broadcast %2224 : vector<1x1xi1> to vector<8x128xi1>
    %2248 = arith.andi %2247, %2246 : vector<8x128xi1>
    %2249 = arith.ori %2243, %2248 : vector<8x128xi1>
    %2250 = vector.broadcast %2232 : vector<1x1xi1> to vector<8x128xi1>
    %2251 = arith.andi %2250, %2249 : vector<8x128xi1>
    %cst_793 = arith.constant -1.000000e+00 : f32
    %2252 = vector.broadcast %cst_793 : f32 to vector<8x128xf32>
    %2253 = arith.select %2251, %2252, %2212 : vector<8x128xi1>, vector<8x128xf32>
    %cst_794 = arith.constant 4.000000e+00 : f32
    %2254 = arith.divf %2046, %cst_794 : f32
    %cst_795 = arith.constant 4.000000e+00 : f32
    %2255 = arith.divf %2050, %cst_795 : f32
    %2256 = arith.fptosi %2254 : f32 to i32
    %2257 = arith.fptosi %2255 : f32 to i32
    %2258 = arith.sitofp %2256 : i32 to f32
    %2259 = arith.subf %2254, %2258 : f32
    %2260 = arith.sitofp %2257 : i32 to f32
    %2261 = arith.subf %2255, %2260 : f32
    %cst_796 = arith.constant 4.000000e+00 : f32
    %2262 = arith.divf %2054, %cst_796 : f32
    %cst_797 = arith.constant 4.000000e+00 : f32
    %2263 = arith.divf %2058, %cst_797 : f32
    %c8_i32_798 = arith.constant 8 : i32
    %2264 = arith.muli %2256, %c8_i32_798 : i32
    %2265 = arith.addi %2264, %2257 : i32
    %c18_i32_799 = arith.constant 18 : i32
    %2266 = arith.muli %2265, %c18_i32_799 : i32
    %c0_i32_800 = arith.constant 0 : i32
    %2267 = arith.addi %2266, %c0_i32_800 : i32
    %c5_i32_801 = arith.constant 5 : i32
    %2268 = arith.addi %2267, %c5_i32_801 : i32
    %2269 = vector.broadcast %2268 : i32 to vector<16x128xi32>
    %2270 = arith.cmpi eq, %10, %2269 : vector<16x128xi32>
    %cst_802 = arith.constant 0.000000e+00 : f32
    %2271 = vector.broadcast %cst_802 : f32 to vector<16x128xf32>
    %2272 = arith.select %2270, %2042, %2271 : vector<16x128xi1>, vector<16x128xf32>
    %cst_803 = arith.constant dense<0.000000e+00> : vector<16xf32>
    %2273 = vector.multi_reduction <add>, %2272, %cst_803 [1] : vector<16x128xf32> to vector<16xf32>
    %2274 = vector.shape_cast %2273 : vector<16xf32> to vector<16x1xf32>
    %cst_804 = arith.constant dense<0.000000e+00> : vector<1xf32>
    %2275 = vector.multi_reduction <add>, %2274, %cst_804 [0] : vector<16x1xf32> to vector<1xf32>
    %2276 = vector.shape_cast %2275 : vector<1xf32> to vector<1x1xf32>
    %cst_805 = arith.constant 1.000000e+00 : f32
    %2277 = vector.broadcast %cst_805 : f32 to vector<1x1xf32>
    %2278 = arith.cmpf oeq, %2276, %2277 : vector<1x1xf32>
    %c6_i32_806 = arith.constant 6 : i32
    %2279 = arith.addi %2266, %c6_i32_806 : i32
    %c5_i32_807 = arith.constant 5 : i32
    %2280 = arith.addi %2279, %c5_i32_807 : i32
    %2281 = vector.broadcast %2280 : i32 to vector<16x128xi32>
    %2282 = arith.cmpi eq, %10, %2281 : vector<16x128xi32>
    %cst_808 = arith.constant 0.000000e+00 : f32
    %2283 = vector.broadcast %cst_808 : f32 to vector<16x128xf32>
    %2284 = arith.select %2282, %2042, %2283 : vector<16x128xi1>, vector<16x128xf32>
    %cst_809 = arith.constant dense<0.000000e+00> : vector<16xf32>
    %2285 = vector.multi_reduction <add>, %2284, %cst_809 [1] : vector<16x128xf32> to vector<16xf32>
    %2286 = vector.shape_cast %2285 : vector<16xf32> to vector<16x1xf32>
    %cst_810 = arith.constant dense<0.000000e+00> : vector<1xf32>
    %2287 = vector.multi_reduction <add>, %2286, %cst_810 [0] : vector<16x1xf32> to vector<1xf32>
    %2288 = vector.shape_cast %2287 : vector<1xf32> to vector<1x1xf32>
    %cst_811 = arith.constant 1.000000e+00 : f32
    %2289 = vector.broadcast %cst_811 : f32 to vector<1x1xf32>
    %2290 = arith.cmpf oeq, %2288, %2289 : vector<1x1xf32>
    %c12_i32_812 = arith.constant 12 : i32
    %2291 = arith.addi %2266, %c12_i32_812 : i32
    %c5_i32_813 = arith.constant 5 : i32
    %2292 = arith.addi %2291, %c5_i32_813 : i32
    %2293 = vector.broadcast %2292 : i32 to vector<16x128xi32>
    %2294 = arith.cmpi eq, %10, %2293 : vector<16x128xi32>
    %cst_814 = arith.constant 0.000000e+00 : f32
    %2295 = vector.broadcast %cst_814 : f32 to vector<16x128xf32>
    %2296 = arith.select %2294, %2042, %2295 : vector<16x128xi1>, vector<16x128xf32>
    %cst_815 = arith.constant dense<0.000000e+00> : vector<16xf32>
    %2297 = vector.multi_reduction <add>, %2296, %cst_815 [1] : vector<16x128xf32> to vector<16xf32>
    %2298 = vector.shape_cast %2297 : vector<16xf32> to vector<16x1xf32>
    %cst_816 = arith.constant dense<0.000000e+00> : vector<1xf32>
    %2299 = vector.multi_reduction <add>, %2298, %cst_816 [0] : vector<16x1xf32> to vector<1xf32>
    %2300 = vector.shape_cast %2299 : vector<1xf32> to vector<1x1xf32>
    %cst_817 = arith.constant 1.000000e+00 : f32
    %2301 = vector.broadcast %cst_817 : f32 to vector<1x1xf32>
    %2302 = arith.cmpf oeq, %2300, %2301 : vector<1x1xf32>
    %cst_818 = arith.constant 8.000000e-01 : f32
    %2303 = arith.minimumf %cst_818, %2262 : f32
    %cst_819 = arith.constant 8.000000e-01 : f32
    %2304 = arith.minimumf %cst_819, %2263 : f32
    %2305 = arith.mulf %2303, %2304 : f32
    %2306 = arith.mulf %2262, %2263 : f32
    %cst_820 = arith.constant 6.400000e-01 : f32
    %2307 = arith.addf %2306, %cst_820 : f32
    %2308 = arith.subf %2307, %2305 : f32
    %2309 = arith.divf %2305, %2308 : f32
    %cst_821 = arith.constant 0.000000e+00 : f32
    %2310 = vector.broadcast %cst_821 : f32 to vector<1x1xf32>
    %2311 = vector.broadcast %2309 : f32 to vector<1x1xf32>
    %2312 = arith.select %2278, %2310, %2311 : vector<1x1xi1>, vector<1x1xf32>
    %cst_822 = arith.constant 1.200000e+00 : f32
    %2313 = arith.minimumf %cst_822, %2262 : f32
    %cst_823 = arith.constant 2.000000e+00 : f32
    %2314 = arith.minimumf %cst_823, %2263 : f32
    %2315 = arith.mulf %2313, %2314 : f32
    %2316 = arith.mulf %2262, %2263 : f32
    %cst_824 = arith.constant 2.400000e+00 : f32
    %2317 = arith.addf %2316, %cst_824 : f32
    %2318 = arith.subf %2317, %2315 : f32
    %2319 = arith.divf %2315, %2318 : f32
    %cst_825 = arith.constant 0.000000e+00 : f32
    %2320 = vector.broadcast %cst_825 : f32 to vector<1x1xf32>
    %2321 = vector.broadcast %2319 : f32 to vector<1x1xf32>
    %2322 = arith.select %2290, %2320, %2321 : vector<1x1xi1>, vector<1x1xf32>
    %cst_826 = arith.constant 2.000000e+00 : f32
    %2323 = arith.minimumf %cst_826, %2262 : f32
    %cst_827 = arith.constant 1.200000e+00 : f32
    %2324 = arith.minimumf %cst_827, %2263 : f32
    %2325 = arith.mulf %2323, %2324 : f32
    %2326 = arith.mulf %2262, %2263 : f32
    %cst_828 = arith.constant 2.400000e+00 : f32
    %2327 = arith.addf %2326, %cst_828 : f32
    %2328 = arith.subf %2327, %2325 : f32
    %2329 = arith.divf %2325, %2328 : f32
    %cst_829 = arith.constant 0.000000e+00 : f32
    %2330 = vector.broadcast %cst_829 : f32 to vector<1x1xf32>
    %2331 = vector.broadcast %2329 : f32 to vector<1x1xf32>
    %2332 = arith.select %2302, %2330, %2331 : vector<1x1xi1>, vector<1x1xf32>
    %2333 = arith.maximumf %2312, %2322 : vector<1x1xf32>
    %2334 = arith.maximumf %2333, %2332 : vector<1x1xf32>
    %2335 = arith.cmpf oeq, %2322, %2334 : vector<1x1xf32>
    %c1_i32_830 = arith.constant 1 : i32
    %c2_i32_831 = arith.constant 2 : i32
    %2336 = vector.broadcast %c1_i32_830 : i32 to vector<1x1xi32>
    %2337 = vector.broadcast %c2_i32_831 : i32 to vector<1x1xi32>
    %2338 = arith.select %2335, %2336, %2337 : vector<1x1xi1>, vector<1x1xi32>
    %2339 = arith.cmpf oeq, %2312, %2334 : vector<1x1xf32>
    %c0_i32_832 = arith.constant 0 : i32
    %2340 = vector.broadcast %c0_i32_832 : i32 to vector<1x1xi32>
    %2341 = arith.select %2339, %2340, %2338 : vector<1x1xi1>, vector<1x1xi32>
    %cst_833 = arith.constant 4.000000e-01 : f32
    %2342 = vector.broadcast %cst_833 : f32 to vector<1x1xf32>
    %2343 = arith.cmpf oge, %2334, %2342 : vector<1x1xf32>
    %2344 = arith.cmpi slt, %c5_i32_717, %0 : i32
    %2345 = vector.broadcast %2344 : i1 to vector<1x1xi1>
    %2346 = arith.andi %2343, %2345 : vector<1x1xi1>
    %c1_i32_834 = arith.constant 1 : i32
    %2347 = vector.broadcast %c1_i32_834 : i32 to vector<1x1xi32>
    %2348 = arith.cmpi eq, %2341, %2347 : vector<1x1xi32>
    %cst_835 = arith.constant 1.200000e+00 : f32
    %cst_836 = arith.constant 8.000000e-01 : f32
    %2349 = vector.broadcast %cst_835 : f32 to vector<1x1xf32>
    %2350 = vector.broadcast %cst_836 : f32 to vector<1x1xf32>
    %2351 = arith.select %2348, %2349, %2350 : vector<1x1xi1>, vector<1x1xf32>
    %c1_i32_837 = arith.constant 1 : i32
    %2352 = vector.broadcast %c1_i32_837 : i32 to vector<1x1xi32>
    %2353 = arith.cmpi eq, %2341, %2352 : vector<1x1xi32>
    %cst_838 = arith.constant 2.000000e+00 : f32
    %cst_839 = arith.constant 8.000000e-01 : f32
    %2354 = vector.broadcast %cst_838 : f32 to vector<1x1xf32>
    %2355 = vector.broadcast %cst_839 : f32 to vector<1x1xf32>
    %2356 = arith.select %2353, %2354, %2355 : vector<1x1xi1>, vector<1x1xf32>
    %c2_i32_840 = arith.constant 2 : i32
    %2357 = vector.broadcast %c2_i32_840 : i32 to vector<1x1xi32>
    %2358 = arith.cmpi eq, %2341, %2357 : vector<1x1xi32>
    %cst_841 = arith.constant 2.000000e+00 : f32
    %2359 = vector.broadcast %cst_841 : f32 to vector<1x1xf32>
    %2360 = arith.select %2358, %2359, %2351 : vector<1x1xi1>, vector<1x1xf32>
    %c2_i32_842 = arith.constant 2 : i32
    %2361 = vector.broadcast %c2_i32_842 : i32 to vector<1x1xi32>
    %2362 = arith.cmpi eq, %2341, %2361 : vector<1x1xi32>
    %cst_843 = arith.constant 1.200000e+00 : f32
    %2363 = vector.broadcast %cst_843 : f32 to vector<1x1xf32>
    %2364 = arith.select %2362, %2363, %2356 : vector<1x1xi1>, vector<1x1xf32>
    %2365 = vector.broadcast %2262 : f32 to vector<1x1xf32>
    %2366 = arith.divf %2365, %2360 : vector<1x1xf32>
    %cst_844 = arith.constant 9.99999997E-7 : f32
    %2367 = vector.broadcast %cst_844 : f32 to vector<1x1xf32>
    %2368 = arith.addf %2366, %2367 : vector<1x1xf32>
    %2369 = math.log %2368 : vector<1x1xf32>
    %2370 = vector.broadcast %2263 : f32 to vector<1x1xf32>
    %2371 = arith.divf %2370, %2364 : vector<1x1xf32>
    %cst_845 = arith.constant 9.99999997E-7 : f32
    %2372 = vector.broadcast %cst_845 : f32 to vector<1x1xf32>
    %2373 = arith.addf %2371, %2372 : vector<1x1xf32>
    %2374 = math.log %2373 : vector<1x1xf32>
    %c6_i32_846 = arith.constant 6 : i32
    %2375 = vector.broadcast %c6_i32_846 : i32 to vector<1x1xi32>
    %2376 = arith.muli %2341, %2375 : vector<1x1xi32>
    %2377 = vector.broadcast %2266 : i32 to vector<1x1xi32>
    %2378 = arith.addi %2377, %2376 : vector<1x1xi32>
    %2379 = vector.broadcast %2378 : vector<1x1xi32> to vector<16x128xi32>
    %2380 = arith.subi %10, %2379 : vector<16x128xi32>
    %c1_i32_847 = arith.constant 1 : i32
    %2381 = vector.broadcast %c1_i32_847 : i32 to vector<16x128xi32>
    %2382 = arith.cmpi eq, %2380, %2381 : vector<16x128xi32>
    %c2_i32_848 = arith.constant 2 : i32
    %2383 = vector.broadcast %c2_i32_848 : i32 to vector<16x128xi32>
    %2384 = arith.cmpi eq, %2380, %2383 : vector<16x128xi32>
    %c3_i32_849 = arith.constant 3 : i32
    %2385 = vector.broadcast %c3_i32_849 : i32 to vector<16x128xi32>
    %2386 = arith.cmpi eq, %2380, %2385 : vector<16x128xi32>
    %c4_i32_850 = arith.constant 4 : i32
    %2387 = vector.broadcast %c4_i32_850 : i32 to vector<16x128xi32>
    %2388 = arith.cmpi eq, %2380, %2387 : vector<16x128xi32>
    %cst_851 = arith.constant 1.000000e+00 : f32
    %2389 = vector.shape_cast %2374 : vector<1x1xf32> to vector<1x1xf32>
    %2390 = vector.broadcast %2389 : vector<1x1xf32> to vector<16x128xf32>
    %2391 = vector.broadcast %cst_851 : f32 to vector<16x128xf32>
    %2392 = arith.select %2388, %2390, %2391 : vector<16x128xi1>, vector<16x128xf32>
    %2393 = vector.shape_cast %2369 : vector<1x1xf32> to vector<1x1xf32>
    %2394 = vector.broadcast %2393 : vector<1x1xf32> to vector<16x128xf32>
    %2395 = arith.select %2386, %2394, %2392 : vector<16x128xi1>, vector<16x128xf32>
    %2396 = vector.broadcast %2261 : f32 to vector<16x128xf32>
    %2397 = arith.select %2384, %2396, %2395 : vector<16x128xi1>, vector<16x128xf32>
    %2398 = vector.broadcast %2259 : f32 to vector<16x128xf32>
    %2399 = arith.select %2382, %2398, %2397 : vector<16x128xi1>, vector<16x128xf32>
    %c0_i32_852 = arith.constant 0 : i32
    %2400 = vector.broadcast %c0_i32_852 : i32 to vector<16x128xi32>
    %2401 = arith.cmpi sge, %2380, %2400 : vector<16x128xi32>
    %2402 = vector.broadcast %2346 : vector<1x1xi1> to vector<16x128xi1>
    %2403 = arith.andi %2402, %2401 : vector<16x128xi1>
    %c6_i32_853 = arith.constant 6 : i32
    %2404 = vector.broadcast %c6_i32_853 : i32 to vector<16x128xi32>
    %2405 = arith.cmpi slt, %2380, %2404 : vector<16x128xi32>
    %2406 = arith.andi %2403, %2405 : vector<16x128xi1>
    %2407 = arith.select %2406, %2399, %2042 : vector<16x128xi1>, vector<16x128xf32>
    %cst_854 = arith.constant 5.000000e-01 : f32
    %2408 = vector.broadcast %cst_854 : f32 to vector<1x1xf32>
    %2409 = arith.cmpf ogt, %2312, %2408 : vector<1x1xf32>
    %2410 = arith.cmpf one, %2312, %2334 : vector<1x1xf32>
    %2411 = arith.andi %2409, %2410 : vector<1x1xi1>
    %cst_855 = arith.constant 5.000000e-01 : f32
    %2412 = vector.broadcast %cst_855 : f32 to vector<1x1xf32>
    %2413 = arith.cmpf ogt, %2322, %2412 : vector<1x1xf32>
    %2414 = arith.cmpf one, %2322, %2334 : vector<1x1xf32>
    %2415 = arith.andi %2413, %2414 : vector<1x1xi1>
    %cst_856 = arith.constant 5.000000e-01 : f32
    %2416 = vector.broadcast %cst_856 : f32 to vector<1x1xf32>
    %2417 = arith.cmpf ogt, %2332, %2416 : vector<1x1xf32>
    %2418 = arith.cmpf one, %2332, %2334 : vector<1x1xf32>
    %2419 = arith.andi %2417, %2418 : vector<1x1xi1>
    %2420 = arith.extui %2411 : vector<1x1xi1> to vector<1x1xi32>
    %2421 = arith.extui %2415 : vector<1x1xi1> to vector<1x1xi32>
    %2422 = arith.addi %2420, %2421 : vector<1x1xi32>
    %2423 = arith.extui %2419 : vector<1x1xi1> to vector<1x1xi32>
    %2424 = arith.addi %2422, %2423 : vector<1x1xi32>
    %c2_i32_857 = arith.constant 2 : i32
    %2425 = vector.broadcast %c2_i32_857 : i32 to vector<1x1xi32>
    %2426 = arith.cmpi sge, %2424, %2425 : vector<1x1xi32>
    %2427 = arith.andi %2346, %2426 : vector<1x1xi1>
    %c0_i32_858 = arith.constant 0 : i32
    %2428 = arith.addi %2266, %c0_i32_858 : i32
    %2429 = vector.broadcast %2428 : i32 to vector<16x128xi32>
    %2430 = arith.cmpi eq, %10, %2429 : vector<16x128xi32>
    %2431 = vector.broadcast %2411 : vector<1x1xi1> to vector<16x128xi1>
    %2432 = arith.andi %2431, %2430 : vector<16x128xi1>
    %c6_i32_859 = arith.constant 6 : i32
    %2433 = arith.addi %2266, %c6_i32_859 : i32
    %2434 = vector.broadcast %2433 : i32 to vector<16x128xi32>
    %2435 = arith.cmpi eq, %10, %2434 : vector<16x128xi32>
    %2436 = vector.broadcast %2415 : vector<1x1xi1> to vector<16x128xi1>
    %2437 = arith.andi %2436, %2435 : vector<16x128xi1>
    %2438 = arith.ori %2432, %2437 : vector<16x128xi1>
    %c12_i32_860 = arith.constant 12 : i32
    %2439 = arith.addi %2266, %c12_i32_860 : i32
    %2440 = vector.broadcast %2439 : i32 to vector<16x128xi32>
    %2441 = arith.cmpi eq, %10, %2440 : vector<16x128xi32>
    %2442 = vector.broadcast %2419 : vector<1x1xi1> to vector<16x128xi1>
    %2443 = arith.andi %2442, %2441 : vector<16x128xi1>
    %2444 = arith.ori %2438, %2443 : vector<16x128xi1>
    %2445 = vector.broadcast %2427 : vector<1x1xi1> to vector<16x128xi1>
    %2446 = arith.andi %2445, %2444 : vector<16x128xi1>
    %cst_861 = arith.constant -1.000000e+00 : f32
    %2447 = vector.broadcast %cst_861 : f32 to vector<16x128xf32>
    %2448 = arith.select %2446, %2447, %2407 : vector<16x128xi1>, vector<16x128xf32>
    %c6_i32_862 = arith.constant 6 : i32
    %c4_i32_863 = arith.constant 4 : i32
    %2449 = arith.muli %c4_i32_863, %c6_i32_862 : i32
    %c0_i32_864 = arith.constant 0 : i32
    %2450 = arith.addi %2449, %c0_i32_864 : i32
    %2451 = arith.index_cast %2450 : i32 to index
    %2452 = memref.load %arg1[%2451] : memref<32xf32, #tpu.memory_space<smem>>
    %c4_i32_865 = arith.constant 4 : i32
    %2453 = arith.muli %c4_i32_865, %c6_i32_862 : i32
    %c1_i32_866 = arith.constant 1 : i32
    %2454 = arith.addi %2453, %c1_i32_866 : i32
    %2455 = arith.index_cast %2454 : i32 to index
    %2456 = memref.load %arg1[%2455] : memref<32xf32, #tpu.memory_space<smem>>
    %c4_i32_867 = arith.constant 4 : i32
    %2457 = arith.muli %c4_i32_867, %c6_i32_862 : i32
    %c2_i32_868 = arith.constant 2 : i32
    %2458 = arith.addi %2457, %c2_i32_868 : i32
    %2459 = arith.index_cast %2458 : i32 to index
    %2460 = memref.load %arg1[%2459] : memref<32xf32, #tpu.memory_space<smem>>
    %c4_i32_869 = arith.constant 4 : i32
    %2461 = arith.muli %c4_i32_869, %c6_i32_862 : i32
    %c3_i32_870 = arith.constant 3 : i32
    %2462 = arith.addi %2461, %c3_i32_870 : i32
    %2463 = arith.index_cast %2462 : i32 to index
    %2464 = memref.load %arg1[%2463] : memref<32xf32, #tpu.memory_space<smem>>
    %cst_871 = arith.constant 8.000000e+00 : f32
    %2465 = arith.divf %2452, %cst_871 : f32
    %cst_872 = arith.constant 8.000000e+00 : f32
    %2466 = arith.divf %2456, %cst_872 : f32
    %2467 = arith.fptosi %2465 : f32 to i32
    %2468 = arith.fptosi %2466 : f32 to i32
    %2469 = arith.sitofp %2467 : i32 to f32
    %2470 = arith.subf %2465, %2469 : f32
    %2471 = arith.sitofp %2468 : i32 to f32
    %2472 = arith.subf %2466, %2471 : f32
    %cst_873 = arith.constant 8.000000e+00 : f32
    %2473 = arith.divf %2460, %cst_873 : f32
    %cst_874 = arith.constant 8.000000e+00 : f32
    %2474 = arith.divf %2464, %cst_874 : f32
    %c4_i32_875 = arith.constant 4 : i32
    %2475 = arith.muli %2467, %c4_i32_875 : i32
    %2476 = arith.addi %2475, %2468 : i32
    %c18_i32_876 = arith.constant 18 : i32
    %2477 = arith.muli %2476, %c18_i32_876 : i32
    %c0_i32_877 = arith.constant 0 : i32
    %2478 = arith.addi %2477, %c0_i32_877 : i32
    %c5_i32_878 = arith.constant 5 : i32
    %2479 = arith.addi %2478, %c5_i32_878 : i32
    %2480 = vector.broadcast %2479 : i32 to vector<8x128xi32>
    %2481 = arith.cmpi eq, %5, %2480 : vector<8x128xi32>
    %cst_879 = arith.constant 0.000000e+00 : f32
    %2482 = vector.broadcast %cst_879 : f32 to vector<8x128xf32>
    %2483 = arith.select %2481, %2253, %2482 : vector<8x128xi1>, vector<8x128xf32>
    %cst_880 = arith.constant dense<0.000000e+00> : vector<8xf32>
    %2484 = vector.multi_reduction <add>, %2483, %cst_880 [1] : vector<8x128xf32> to vector<8xf32>
    %2485 = vector.shape_cast %2484 : vector<8xf32> to vector<8x1xf32>
    %cst_881 = arith.constant dense<0.000000e+00> : vector<1xf32>
    %2486 = vector.multi_reduction <add>, %2485, %cst_881 [0] : vector<8x1xf32> to vector<1xf32>
    %2487 = vector.shape_cast %2486 : vector<1xf32> to vector<1x1xf32>
    %cst_882 = arith.constant 1.000000e+00 : f32
    %2488 = vector.broadcast %cst_882 : f32 to vector<1x1xf32>
    %2489 = arith.cmpf oeq, %2487, %2488 : vector<1x1xf32>
    %c6_i32_883 = arith.constant 6 : i32
    %2490 = arith.addi %2477, %c6_i32_883 : i32
    %c5_i32_884 = arith.constant 5 : i32
    %2491 = arith.addi %2490, %c5_i32_884 : i32
    %2492 = vector.broadcast %2491 : i32 to vector<8x128xi32>
    %2493 = arith.cmpi eq, %5, %2492 : vector<8x128xi32>
    %cst_885 = arith.constant 0.000000e+00 : f32
    %2494 = vector.broadcast %cst_885 : f32 to vector<8x128xf32>
    %2495 = arith.select %2493, %2253, %2494 : vector<8x128xi1>, vector<8x128xf32>
    %cst_886 = arith.constant dense<0.000000e+00> : vector<8xf32>
    %2496 = vector.multi_reduction <add>, %2495, %cst_886 [1] : vector<8x128xf32> to vector<8xf32>
    %2497 = vector.shape_cast %2496 : vector<8xf32> to vector<8x1xf32>
    %cst_887 = arith.constant dense<0.000000e+00> : vector<1xf32>
    %2498 = vector.multi_reduction <add>, %2497, %cst_887 [0] : vector<8x1xf32> to vector<1xf32>
    %2499 = vector.shape_cast %2498 : vector<1xf32> to vector<1x1xf32>
    %cst_888 = arith.constant 1.000000e+00 : f32
    %2500 = vector.broadcast %cst_888 : f32 to vector<1x1xf32>
    %2501 = arith.cmpf oeq, %2499, %2500 : vector<1x1xf32>
    %c12_i32_889 = arith.constant 12 : i32
    %2502 = arith.addi %2477, %c12_i32_889 : i32
    %c5_i32_890 = arith.constant 5 : i32
    %2503 = arith.addi %2502, %c5_i32_890 : i32
    %2504 = vector.broadcast %2503 : i32 to vector<8x128xi32>
    %2505 = arith.cmpi eq, %5, %2504 : vector<8x128xi32>
    %cst_891 = arith.constant 0.000000e+00 : f32
    %2506 = vector.broadcast %cst_891 : f32 to vector<8x128xf32>
    %2507 = arith.select %2505, %2253, %2506 : vector<8x128xi1>, vector<8x128xf32>
    %cst_892 = arith.constant dense<0.000000e+00> : vector<8xf32>
    %2508 = vector.multi_reduction <add>, %2507, %cst_892 [1] : vector<8x128xf32> to vector<8xf32>
    %2509 = vector.shape_cast %2508 : vector<8xf32> to vector<8x1xf32>
    %cst_893 = arith.constant dense<0.000000e+00> : vector<1xf32>
    %2510 = vector.multi_reduction <add>, %2509, %cst_893 [0] : vector<8x1xf32> to vector<1xf32>
    %2511 = vector.shape_cast %2510 : vector<1xf32> to vector<1x1xf32>
    %cst_894 = arith.constant 1.000000e+00 : f32
    %2512 = vector.broadcast %cst_894 : f32 to vector<1x1xf32>
    %2513 = arith.cmpf oeq, %2511, %2512 : vector<1x1xf32>
    %cst_895 = arith.constant 1.500000e+00 : f32
    %2514 = arith.minimumf %cst_895, %2473 : f32
    %cst_896 = arith.constant 1.500000e+00 : f32
    %2515 = arith.minimumf %cst_896, %2474 : f32
    %2516 = arith.mulf %2514, %2515 : f32
    %2517 = arith.mulf %2473, %2474 : f32
    %cst_897 = arith.constant 2.250000e+00 : f32
    %2518 = arith.addf %2517, %cst_897 : f32
    %2519 = arith.subf %2518, %2516 : f32
    %2520 = arith.divf %2516, %2519 : f32
    %cst_898 = arith.constant 0.000000e+00 : f32
    %2521 = vector.broadcast %cst_898 : f32 to vector<1x1xf32>
    %2522 = vector.broadcast %2520 : f32 to vector<1x1xf32>
    %2523 = arith.select %2489, %2521, %2522 : vector<1x1xi1>, vector<1x1xf32>
    %cst_899 = arith.constant 2.000000e+00 : f32
    %2524 = arith.minimumf %cst_899, %2473 : f32
    %cst_900 = arith.constant 3.000000e+00 : f32
    %2525 = arith.minimumf %cst_900, %2474 : f32
    %2526 = arith.mulf %2524, %2525 : f32
    %2527 = arith.mulf %2473, %2474 : f32
    %cst_901 = arith.constant 6.000000e+00 : f32
    %2528 = arith.addf %2527, %cst_901 : f32
    %2529 = arith.subf %2528, %2526 : f32
    %2530 = arith.divf %2526, %2529 : f32
    %cst_902 = arith.constant 0.000000e+00 : f32
    %2531 = vector.broadcast %cst_902 : f32 to vector<1x1xf32>
    %2532 = vector.broadcast %2530 : f32 to vector<1x1xf32>
    %2533 = arith.select %2501, %2531, %2532 : vector<1x1xi1>, vector<1x1xf32>
    %cst_903 = arith.constant 3.500000e+00 : f32
    %2534 = arith.minimumf %cst_903, %2473 : f32
    %cst_904 = arith.constant 2.500000e+00 : f32
    %2535 = arith.minimumf %cst_904, %2474 : f32
    %2536 = arith.mulf %2534, %2535 : f32
    %2537 = arith.mulf %2473, %2474 : f32
    %cst_905 = arith.constant 8.750000e+00 : f32
    %2538 = arith.addf %2537, %cst_905 : f32
    %2539 = arith.subf %2538, %2536 : f32
    %2540 = arith.divf %2536, %2539 : f32
    %cst_906 = arith.constant 0.000000e+00 : f32
    %2541 = vector.broadcast %cst_906 : f32 to vector<1x1xf32>
    %2542 = vector.broadcast %2540 : f32 to vector<1x1xf32>
    %2543 = arith.select %2513, %2541, %2542 : vector<1x1xi1>, vector<1x1xf32>
    %2544 = arith.maximumf %2523, %2533 : vector<1x1xf32>
    %2545 = arith.maximumf %2544, %2543 : vector<1x1xf32>
    %2546 = arith.cmpf oeq, %2533, %2545 : vector<1x1xf32>
    %c1_i32_907 = arith.constant 1 : i32
    %c2_i32_908 = arith.constant 2 : i32
    %2547 = vector.broadcast %c1_i32_907 : i32 to vector<1x1xi32>
    %2548 = vector.broadcast %c2_i32_908 : i32 to vector<1x1xi32>
    %2549 = arith.select %2546, %2547, %2548 : vector<1x1xi1>, vector<1x1xi32>
    %2550 = arith.cmpf oeq, %2523, %2545 : vector<1x1xf32>
    %c0_i32_909 = arith.constant 0 : i32
    %2551 = vector.broadcast %c0_i32_909 : i32 to vector<1x1xi32>
    %2552 = arith.select %2550, %2551, %2549 : vector<1x1xi1>, vector<1x1xi32>
    %cst_910 = arith.constant 4.000000e-01 : f32
    %2553 = vector.broadcast %cst_910 : f32 to vector<1x1xf32>
    %2554 = arith.cmpf oge, %2545, %2553 : vector<1x1xf32>
    %2555 = arith.cmpi slt, %c6_i32_862, %0 : i32
    %2556 = vector.broadcast %2555 : i1 to vector<1x1xi1>
    %2557 = arith.andi %2554, %2556 : vector<1x1xi1>
    %c1_i32_911 = arith.constant 1 : i32
    %2558 = vector.broadcast %c1_i32_911 : i32 to vector<1x1xi32>
    %2559 = arith.cmpi eq, %2552, %2558 : vector<1x1xi32>
    %cst_912 = arith.constant 2.000000e+00 : f32
    %cst_913 = arith.constant 1.500000e+00 : f32
    %2560 = vector.broadcast %cst_912 : f32 to vector<1x1xf32>
    %2561 = vector.broadcast %cst_913 : f32 to vector<1x1xf32>
    %2562 = arith.select %2559, %2560, %2561 : vector<1x1xi1>, vector<1x1xf32>
    %c1_i32_914 = arith.constant 1 : i32
    %2563 = vector.broadcast %c1_i32_914 : i32 to vector<1x1xi32>
    %2564 = arith.cmpi eq, %2552, %2563 : vector<1x1xi32>
    %cst_915 = arith.constant 3.000000e+00 : f32
    %cst_916 = arith.constant 1.500000e+00 : f32
    %2565 = vector.broadcast %cst_915 : f32 to vector<1x1xf32>
    %2566 = vector.broadcast %cst_916 : f32 to vector<1x1xf32>
    %2567 = arith.select %2564, %2565, %2566 : vector<1x1xi1>, vector<1x1xf32>
    %c2_i32_917 = arith.constant 2 : i32
    %2568 = vector.broadcast %c2_i32_917 : i32 to vector<1x1xi32>
    %2569 = arith.cmpi eq, %2552, %2568 : vector<1x1xi32>
    %cst_918 = arith.constant 3.500000e+00 : f32
    %2570 = vector.broadcast %cst_918 : f32 to vector<1x1xf32>
    %2571 = arith.select %2569, %2570, %2562 : vector<1x1xi1>, vector<1x1xf32>
    %c2_i32_919 = arith.constant 2 : i32
    %2572 = vector.broadcast %c2_i32_919 : i32 to vector<1x1xi32>
    %2573 = arith.cmpi eq, %2552, %2572 : vector<1x1xi32>
    %cst_920 = arith.constant 2.500000e+00 : f32
    %2574 = vector.broadcast %cst_920 : f32 to vector<1x1xf32>
    %2575 = arith.select %2573, %2574, %2567 : vector<1x1xi1>, vector<1x1xf32>
    %2576 = vector.broadcast %2473 : f32 to vector<1x1xf32>
    %2577 = arith.divf %2576, %2571 : vector<1x1xf32>
    %cst_921 = arith.constant 9.99999997E-7 : f32
    %2578 = vector.broadcast %cst_921 : f32 to vector<1x1xf32>
    %2579 = arith.addf %2577, %2578 : vector<1x1xf32>
    %2580 = math.log %2579 : vector<1x1xf32>
    %2581 = vector.broadcast %2474 : f32 to vector<1x1xf32>
    %2582 = arith.divf %2581, %2575 : vector<1x1xf32>
    %cst_922 = arith.constant 9.99999997E-7 : f32
    %2583 = vector.broadcast %cst_922 : f32 to vector<1x1xf32>
    %2584 = arith.addf %2582, %2583 : vector<1x1xf32>
    %2585 = math.log %2584 : vector<1x1xf32>
    %c6_i32_923 = arith.constant 6 : i32
    %2586 = vector.broadcast %c6_i32_923 : i32 to vector<1x1xi32>
    %2587 = arith.muli %2552, %2586 : vector<1x1xi32>
    %2588 = vector.broadcast %2477 : i32 to vector<1x1xi32>
    %2589 = arith.addi %2588, %2587 : vector<1x1xi32>
    %2590 = vector.broadcast %2589 : vector<1x1xi32> to vector<8x128xi32>
    %2591 = arith.subi %5, %2590 : vector<8x128xi32>
    %c1_i32_924 = arith.constant 1 : i32
    %2592 = vector.broadcast %c1_i32_924 : i32 to vector<8x128xi32>
    %2593 = arith.cmpi eq, %2591, %2592 : vector<8x128xi32>
    %c2_i32_925 = arith.constant 2 : i32
    %2594 = vector.broadcast %c2_i32_925 : i32 to vector<8x128xi32>
    %2595 = arith.cmpi eq, %2591, %2594 : vector<8x128xi32>
    %c3_i32_926 = arith.constant 3 : i32
    %2596 = vector.broadcast %c3_i32_926 : i32 to vector<8x128xi32>
    %2597 = arith.cmpi eq, %2591, %2596 : vector<8x128xi32>
    %c4_i32_927 = arith.constant 4 : i32
    %2598 = vector.broadcast %c4_i32_927 : i32 to vector<8x128xi32>
    %2599 = arith.cmpi eq, %2591, %2598 : vector<8x128xi32>
    %cst_928 = arith.constant 1.000000e+00 : f32
    %2600 = vector.shape_cast %2585 : vector<1x1xf32> to vector<1x1xf32>
    %2601 = vector.broadcast %2600 : vector<1x1xf32> to vector<8x128xf32>
    %2602 = vector.broadcast %cst_928 : f32 to vector<8x128xf32>
    %2603 = arith.select %2599, %2601, %2602 : vector<8x128xi1>, vector<8x128xf32>
    %2604 = vector.shape_cast %2580 : vector<1x1xf32> to vector<1x1xf32>
    %2605 = vector.broadcast %2604 : vector<1x1xf32> to vector<8x128xf32>
    %2606 = arith.select %2597, %2605, %2603 : vector<8x128xi1>, vector<8x128xf32>
    %2607 = vector.broadcast %2472 : f32 to vector<8x128xf32>
    %2608 = arith.select %2595, %2607, %2606 : vector<8x128xi1>, vector<8x128xf32>
    %2609 = vector.broadcast %2470 : f32 to vector<8x128xf32>
    %2610 = arith.select %2593, %2609, %2608 : vector<8x128xi1>, vector<8x128xf32>
    %c0_i32_929 = arith.constant 0 : i32
    %2611 = vector.broadcast %c0_i32_929 : i32 to vector<8x128xi32>
    %2612 = arith.cmpi sge, %2591, %2611 : vector<8x128xi32>
    %2613 = vector.broadcast %2557 : vector<1x1xi1> to vector<8x128xi1>
    %2614 = arith.andi %2613, %2612 : vector<8x128xi1>
    %c6_i32_930 = arith.constant 6 : i32
    %2615 = vector.broadcast %c6_i32_930 : i32 to vector<8x128xi32>
    %2616 = arith.cmpi slt, %2591, %2615 : vector<8x128xi32>
    %2617 = arith.andi %2614, %2616 : vector<8x128xi1>
    %2618 = arith.select %2617, %2610, %2253 : vector<8x128xi1>, vector<8x128xf32>
    %cst_931 = arith.constant 5.000000e-01 : f32
    %2619 = vector.broadcast %cst_931 : f32 to vector<1x1xf32>
    %2620 = arith.cmpf ogt, %2523, %2619 : vector<1x1xf32>
    %2621 = arith.cmpf one, %2523, %2545 : vector<1x1xf32>
    %2622 = arith.andi %2620, %2621 : vector<1x1xi1>
    %cst_932 = arith.constant 5.000000e-01 : f32
    %2623 = vector.broadcast %cst_932 : f32 to vector<1x1xf32>
    %2624 = arith.cmpf ogt, %2533, %2623 : vector<1x1xf32>
    %2625 = arith.cmpf one, %2533, %2545 : vector<1x1xf32>
    %2626 = arith.andi %2624, %2625 : vector<1x1xi1>
    %cst_933 = arith.constant 5.000000e-01 : f32
    %2627 = vector.broadcast %cst_933 : f32 to vector<1x1xf32>
    %2628 = arith.cmpf ogt, %2543, %2627 : vector<1x1xf32>
    %2629 = arith.cmpf one, %2543, %2545 : vector<1x1xf32>
    %2630 = arith.andi %2628, %2629 : vector<1x1xi1>
    %2631 = arith.extui %2622 : vector<1x1xi1> to vector<1x1xi32>
    %2632 = arith.extui %2626 : vector<1x1xi1> to vector<1x1xi32>
    %2633 = arith.addi %2631, %2632 : vector<1x1xi32>
    %2634 = arith.extui %2630 : vector<1x1xi1> to vector<1x1xi32>
    %2635 = arith.addi %2633, %2634 : vector<1x1xi32>
    %c2_i32_934 = arith.constant 2 : i32
    %2636 = vector.broadcast %c2_i32_934 : i32 to vector<1x1xi32>
    %2637 = arith.cmpi sge, %2635, %2636 : vector<1x1xi32>
    %2638 = arith.andi %2557, %2637 : vector<1x1xi1>
    %c0_i32_935 = arith.constant 0 : i32
    %2639 = arith.addi %2477, %c0_i32_935 : i32
    %2640 = vector.broadcast %2639 : i32 to vector<8x128xi32>
    %2641 = arith.cmpi eq, %5, %2640 : vector<8x128xi32>
    %2642 = vector.broadcast %2622 : vector<1x1xi1> to vector<8x128xi1>
    %2643 = arith.andi %2642, %2641 : vector<8x128xi1>
    %c6_i32_936 = arith.constant 6 : i32
    %2644 = arith.addi %2477, %c6_i32_936 : i32
    %2645 = vector.broadcast %2644 : i32 to vector<8x128xi32>
    %2646 = arith.cmpi eq, %5, %2645 : vector<8x128xi32>
    %2647 = vector.broadcast %2626 : vector<1x1xi1> to vector<8x128xi1>
    %2648 = arith.andi %2647, %2646 : vector<8x128xi1>
    %2649 = arith.ori %2643, %2648 : vector<8x128xi1>
    %c12_i32_937 = arith.constant 12 : i32
    %2650 = arith.addi %2477, %c12_i32_937 : i32
    %2651 = vector.broadcast %2650 : i32 to vector<8x128xi32>
    %2652 = arith.cmpi eq, %5, %2651 : vector<8x128xi32>
    %2653 = vector.broadcast %2630 : vector<1x1xi1> to vector<8x128xi1>
    %2654 = arith.andi %2653, %2652 : vector<8x128xi1>
    %2655 = arith.ori %2649, %2654 : vector<8x128xi1>
    %2656 = vector.broadcast %2638 : vector<1x1xi1> to vector<8x128xi1>
    %2657 = arith.andi %2656, %2655 : vector<8x128xi1>
    %cst_938 = arith.constant -1.000000e+00 : f32
    %2658 = vector.broadcast %cst_938 : f32 to vector<8x128xf32>
    %2659 = arith.select %2657, %2658, %2618 : vector<8x128xi1>, vector<8x128xf32>
    %cst_939 = arith.constant 4.000000e+00 : f32
    %2660 = arith.divf %2452, %cst_939 : f32
    %cst_940 = arith.constant 4.000000e+00 : f32
    %2661 = arith.divf %2456, %cst_940 : f32
    %2662 = arith.fptosi %2660 : f32 to i32
    %2663 = arith.fptosi %2661 : f32 to i32
    %2664 = arith.sitofp %2662 : i32 to f32
    %2665 = arith.subf %2660, %2664 : f32
    %2666 = arith.sitofp %2663 : i32 to f32
    %2667 = arith.subf %2661, %2666 : f32
    %cst_941 = arith.constant 4.000000e+00 : f32
    %2668 = arith.divf %2460, %cst_941 : f32
    %cst_942 = arith.constant 4.000000e+00 : f32
    %2669 = arith.divf %2464, %cst_942 : f32
    %c8_i32_943 = arith.constant 8 : i32
    %2670 = arith.muli %2662, %c8_i32_943 : i32
    %2671 = arith.addi %2670, %2663 : i32
    %c18_i32_944 = arith.constant 18 : i32
    %2672 = arith.muli %2671, %c18_i32_944 : i32
    %c0_i32_945 = arith.constant 0 : i32
    %2673 = arith.addi %2672, %c0_i32_945 : i32
    %c5_i32_946 = arith.constant 5 : i32
    %2674 = arith.addi %2673, %c5_i32_946 : i32
    %2675 = vector.broadcast %2674 : i32 to vector<16x128xi32>
    %2676 = arith.cmpi eq, %10, %2675 : vector<16x128xi32>
    %cst_947 = arith.constant 0.000000e+00 : f32
    %2677 = vector.broadcast %cst_947 : f32 to vector<16x128xf32>
    %2678 = arith.select %2676, %2448, %2677 : vector<16x128xi1>, vector<16x128xf32>
    %cst_948 = arith.constant dense<0.000000e+00> : vector<16xf32>
    %2679 = vector.multi_reduction <add>, %2678, %cst_948 [1] : vector<16x128xf32> to vector<16xf32>
    %2680 = vector.shape_cast %2679 : vector<16xf32> to vector<16x1xf32>
    %cst_949 = arith.constant dense<0.000000e+00> : vector<1xf32>
    %2681 = vector.multi_reduction <add>, %2680, %cst_949 [0] : vector<16x1xf32> to vector<1xf32>
    %2682 = vector.shape_cast %2681 : vector<1xf32> to vector<1x1xf32>
    %cst_950 = arith.constant 1.000000e+00 : f32
    %2683 = vector.broadcast %cst_950 : f32 to vector<1x1xf32>
    %2684 = arith.cmpf oeq, %2682, %2683 : vector<1x1xf32>
    %c6_i32_951 = arith.constant 6 : i32
    %2685 = arith.addi %2672, %c6_i32_951 : i32
    %c5_i32_952 = arith.constant 5 : i32
    %2686 = arith.addi %2685, %c5_i32_952 : i32
    %2687 = vector.broadcast %2686 : i32 to vector<16x128xi32>
    %2688 = arith.cmpi eq, %10, %2687 : vector<16x128xi32>
    %cst_953 = arith.constant 0.000000e+00 : f32
    %2689 = vector.broadcast %cst_953 : f32 to vector<16x128xf32>
    %2690 = arith.select %2688, %2448, %2689 : vector<16x128xi1>, vector<16x128xf32>
    %cst_954 = arith.constant dense<0.000000e+00> : vector<16xf32>
    %2691 = vector.multi_reduction <add>, %2690, %cst_954 [1] : vector<16x128xf32> to vector<16xf32>
    %2692 = vector.shape_cast %2691 : vector<16xf32> to vector<16x1xf32>
    %cst_955 = arith.constant dense<0.000000e+00> : vector<1xf32>
    %2693 = vector.multi_reduction <add>, %2692, %cst_955 [0] : vector<16x1xf32> to vector<1xf32>
    %2694 = vector.shape_cast %2693 : vector<1xf32> to vector<1x1xf32>
    %cst_956 = arith.constant 1.000000e+00 : f32
    %2695 = vector.broadcast %cst_956 : f32 to vector<1x1xf32>
    %2696 = arith.cmpf oeq, %2694, %2695 : vector<1x1xf32>
    %c12_i32_957 = arith.constant 12 : i32
    %2697 = arith.addi %2672, %c12_i32_957 : i32
    %c5_i32_958 = arith.constant 5 : i32
    %2698 = arith.addi %2697, %c5_i32_958 : i32
    %2699 = vector.broadcast %2698 : i32 to vector<16x128xi32>
    %2700 = arith.cmpi eq, %10, %2699 : vector<16x128xi32>
    %cst_959 = arith.constant 0.000000e+00 : f32
    %2701 = vector.broadcast %cst_959 : f32 to vector<16x128xf32>
    %2702 = arith.select %2700, %2448, %2701 : vector<16x128xi1>, vector<16x128xf32>
    %cst_960 = arith.constant dense<0.000000e+00> : vector<16xf32>
    %2703 = vector.multi_reduction <add>, %2702, %cst_960 [1] : vector<16x128xf32> to vector<16xf32>
    %2704 = vector.shape_cast %2703 : vector<16xf32> to vector<16x1xf32>
    %cst_961 = arith.constant dense<0.000000e+00> : vector<1xf32>
    %2705 = vector.multi_reduction <add>, %2704, %cst_961 [0] : vector<16x1xf32> to vector<1xf32>
    %2706 = vector.shape_cast %2705 : vector<1xf32> to vector<1x1xf32>
    %cst_962 = arith.constant 1.000000e+00 : f32
    %2707 = vector.broadcast %cst_962 : f32 to vector<1x1xf32>
    %2708 = arith.cmpf oeq, %2706, %2707 : vector<1x1xf32>
    %cst_963 = arith.constant 8.000000e-01 : f32
    %2709 = arith.minimumf %cst_963, %2668 : f32
    %cst_964 = arith.constant 8.000000e-01 : f32
    %2710 = arith.minimumf %cst_964, %2669 : f32
    %2711 = arith.mulf %2709, %2710 : f32
    %2712 = arith.mulf %2668, %2669 : f32
    %cst_965 = arith.constant 6.400000e-01 : f32
    %2713 = arith.addf %2712, %cst_965 : f32
    %2714 = arith.subf %2713, %2711 : f32
    %2715 = arith.divf %2711, %2714 : f32
    %cst_966 = arith.constant 0.000000e+00 : f32
    %2716 = vector.broadcast %cst_966 : f32 to vector<1x1xf32>
    %2717 = vector.broadcast %2715 : f32 to vector<1x1xf32>
    %2718 = arith.select %2684, %2716, %2717 : vector<1x1xi1>, vector<1x1xf32>
    %cst_967 = arith.constant 1.200000e+00 : f32
    %2719 = arith.minimumf %cst_967, %2668 : f32
    %cst_968 = arith.constant 2.000000e+00 : f32
    %2720 = arith.minimumf %cst_968, %2669 : f32
    %2721 = arith.mulf %2719, %2720 : f32
    %2722 = arith.mulf %2668, %2669 : f32
    %cst_969 = arith.constant 2.400000e+00 : f32
    %2723 = arith.addf %2722, %cst_969 : f32
    %2724 = arith.subf %2723, %2721 : f32
    %2725 = arith.divf %2721, %2724 : f32
    %cst_970 = arith.constant 0.000000e+00 : f32
    %2726 = vector.broadcast %cst_970 : f32 to vector<1x1xf32>
    %2727 = vector.broadcast %2725 : f32 to vector<1x1xf32>
    %2728 = arith.select %2696, %2726, %2727 : vector<1x1xi1>, vector<1x1xf32>
    %cst_971 = arith.constant 2.000000e+00 : f32
    %2729 = arith.minimumf %cst_971, %2668 : f32
    %cst_972 = arith.constant 1.200000e+00 : f32
    %2730 = arith.minimumf %cst_972, %2669 : f32
    %2731 = arith.mulf %2729, %2730 : f32
    %2732 = arith.mulf %2668, %2669 : f32
    %cst_973 = arith.constant 2.400000e+00 : f32
    %2733 = arith.addf %2732, %cst_973 : f32
    %2734 = arith.subf %2733, %2731 : f32
    %2735 = arith.divf %2731, %2734 : f32
    %cst_974 = arith.constant 0.000000e+00 : f32
    %2736 = vector.broadcast %cst_974 : f32 to vector<1x1xf32>
    %2737 = vector.broadcast %2735 : f32 to vector<1x1xf32>
    %2738 = arith.select %2708, %2736, %2737 : vector<1x1xi1>, vector<1x1xf32>
    %2739 = arith.maximumf %2718, %2728 : vector<1x1xf32>
    %2740 = arith.maximumf %2739, %2738 : vector<1x1xf32>
    %2741 = arith.cmpf oeq, %2728, %2740 : vector<1x1xf32>
    %c1_i32_975 = arith.constant 1 : i32
    %c2_i32_976 = arith.constant 2 : i32
    %2742 = vector.broadcast %c1_i32_975 : i32 to vector<1x1xi32>
    %2743 = vector.broadcast %c2_i32_976 : i32 to vector<1x1xi32>
    %2744 = arith.select %2741, %2742, %2743 : vector<1x1xi1>, vector<1x1xi32>
    %2745 = arith.cmpf oeq, %2718, %2740 : vector<1x1xf32>
    %c0_i32_977 = arith.constant 0 : i32
    %2746 = vector.broadcast %c0_i32_977 : i32 to vector<1x1xi32>
    %2747 = arith.select %2745, %2746, %2744 : vector<1x1xi1>, vector<1x1xi32>
    %cst_978 = arith.constant 4.000000e-01 : f32
    %2748 = vector.broadcast %cst_978 : f32 to vector<1x1xf32>
    %2749 = arith.cmpf oge, %2740, %2748 : vector<1x1xf32>
    %2750 = arith.cmpi slt, %c6_i32_862, %0 : i32
    %2751 = vector.broadcast %2750 : i1 to vector<1x1xi1>
    %2752 = arith.andi %2749, %2751 : vector<1x1xi1>
    %c1_i32_979 = arith.constant 1 : i32
    %2753 = vector.broadcast %c1_i32_979 : i32 to vector<1x1xi32>
    %2754 = arith.cmpi eq, %2747, %2753 : vector<1x1xi32>
    %cst_980 = arith.constant 1.200000e+00 : f32
    %cst_981 = arith.constant 8.000000e-01 : f32
    %2755 = vector.broadcast %cst_980 : f32 to vector<1x1xf32>
    %2756 = vector.broadcast %cst_981 : f32 to vector<1x1xf32>
    %2757 = arith.select %2754, %2755, %2756 : vector<1x1xi1>, vector<1x1xf32>
    %c1_i32_982 = arith.constant 1 : i32
    %2758 = vector.broadcast %c1_i32_982 : i32 to vector<1x1xi32>
    %2759 = arith.cmpi eq, %2747, %2758 : vector<1x1xi32>
    %cst_983 = arith.constant 2.000000e+00 : f32
    %cst_984 = arith.constant 8.000000e-01 : f32
    %2760 = vector.broadcast %cst_983 : f32 to vector<1x1xf32>
    %2761 = vector.broadcast %cst_984 : f32 to vector<1x1xf32>
    %2762 = arith.select %2759, %2760, %2761 : vector<1x1xi1>, vector<1x1xf32>
    %c2_i32_985 = arith.constant 2 : i32
    %2763 = vector.broadcast %c2_i32_985 : i32 to vector<1x1xi32>
    %2764 = arith.cmpi eq, %2747, %2763 : vector<1x1xi32>
    %cst_986 = arith.constant 2.000000e+00 : f32
    %2765 = vector.broadcast %cst_986 : f32 to vector<1x1xf32>
    %2766 = arith.select %2764, %2765, %2757 : vector<1x1xi1>, vector<1x1xf32>
    %c2_i32_987 = arith.constant 2 : i32
    %2767 = vector.broadcast %c2_i32_987 : i32 to vector<1x1xi32>
    %2768 = arith.cmpi eq, %2747, %2767 : vector<1x1xi32>
    %cst_988 = arith.constant 1.200000e+00 : f32
    %2769 = vector.broadcast %cst_988 : f32 to vector<1x1xf32>
    %2770 = arith.select %2768, %2769, %2762 : vector<1x1xi1>, vector<1x1xf32>
    %2771 = vector.broadcast %2668 : f32 to vector<1x1xf32>
    %2772 = arith.divf %2771, %2766 : vector<1x1xf32>
    %cst_989 = arith.constant 9.99999997E-7 : f32
    %2773 = vector.broadcast %cst_989 : f32 to vector<1x1xf32>
    %2774 = arith.addf %2772, %2773 : vector<1x1xf32>
    %2775 = math.log %2774 : vector<1x1xf32>
    %2776 = vector.broadcast %2669 : f32 to vector<1x1xf32>
    %2777 = arith.divf %2776, %2770 : vector<1x1xf32>
    %cst_990 = arith.constant 9.99999997E-7 : f32
    %2778 = vector.broadcast %cst_990 : f32 to vector<1x1xf32>
    %2779 = arith.addf %2777, %2778 : vector<1x1xf32>
    %2780 = math.log %2779 : vector<1x1xf32>
    %c6_i32_991 = arith.constant 6 : i32
    %2781 = vector.broadcast %c6_i32_991 : i32 to vector<1x1xi32>
    %2782 = arith.muli %2747, %2781 : vector<1x1xi32>
    %2783 = vector.broadcast %2672 : i32 to vector<1x1xi32>
    %2784 = arith.addi %2783, %2782 : vector<1x1xi32>
    %2785 = vector.broadcast %2784 : vector<1x1xi32> to vector<16x128xi32>
    %2786 = arith.subi %10, %2785 : vector<16x128xi32>
    %c1_i32_992 = arith.constant 1 : i32
    %2787 = vector.broadcast %c1_i32_992 : i32 to vector<16x128xi32>
    %2788 = arith.cmpi eq, %2786, %2787 : vector<16x128xi32>
    %c2_i32_993 = arith.constant 2 : i32
    %2789 = vector.broadcast %c2_i32_993 : i32 to vector<16x128xi32>
    %2790 = arith.cmpi eq, %2786, %2789 : vector<16x128xi32>
    %c3_i32_994 = arith.constant 3 : i32
    %2791 = vector.broadcast %c3_i32_994 : i32 to vector<16x128xi32>
    %2792 = arith.cmpi eq, %2786, %2791 : vector<16x128xi32>
    %c4_i32_995 = arith.constant 4 : i32
    %2793 = vector.broadcast %c4_i32_995 : i32 to vector<16x128xi32>
    %2794 = arith.cmpi eq, %2786, %2793 : vector<16x128xi32>
    %cst_996 = arith.constant 1.000000e+00 : f32
    %2795 = vector.shape_cast %2780 : vector<1x1xf32> to vector<1x1xf32>
    %2796 = vector.broadcast %2795 : vector<1x1xf32> to vector<16x128xf32>
    %2797 = vector.broadcast %cst_996 : f32 to vector<16x128xf32>
    %2798 = arith.select %2794, %2796, %2797 : vector<16x128xi1>, vector<16x128xf32>
    %2799 = vector.shape_cast %2775 : vector<1x1xf32> to vector<1x1xf32>
    %2800 = vector.broadcast %2799 : vector<1x1xf32> to vector<16x128xf32>
    %2801 = arith.select %2792, %2800, %2798 : vector<16x128xi1>, vector<16x128xf32>
    %2802 = vector.broadcast %2667 : f32 to vector<16x128xf32>
    %2803 = arith.select %2790, %2802, %2801 : vector<16x128xi1>, vector<16x128xf32>
    %2804 = vector.broadcast %2665 : f32 to vector<16x128xf32>
    %2805 = arith.select %2788, %2804, %2803 : vector<16x128xi1>, vector<16x128xf32>
    %c0_i32_997 = arith.constant 0 : i32
    %2806 = vector.broadcast %c0_i32_997 : i32 to vector<16x128xi32>
    %2807 = arith.cmpi sge, %2786, %2806 : vector<16x128xi32>
    %2808 = vector.broadcast %2752 : vector<1x1xi1> to vector<16x128xi1>
    %2809 = arith.andi %2808, %2807 : vector<16x128xi1>
    %c6_i32_998 = arith.constant 6 : i32
    %2810 = vector.broadcast %c6_i32_998 : i32 to vector<16x128xi32>
    %2811 = arith.cmpi slt, %2786, %2810 : vector<16x128xi32>
    %2812 = arith.andi %2809, %2811 : vector<16x128xi1>
    %2813 = arith.select %2812, %2805, %2448 : vector<16x128xi1>, vector<16x128xf32>
    %cst_999 = arith.constant 5.000000e-01 : f32
    %2814 = vector.broadcast %cst_999 : f32 to vector<1x1xf32>
    %2815 = arith.cmpf ogt, %2718, %2814 : vector<1x1xf32>
    %2816 = arith.cmpf one, %2718, %2740 : vector<1x1xf32>
    %2817 = arith.andi %2815, %2816 : vector<1x1xi1>
    %cst_1000 = arith.constant 5.000000e-01 : f32
    %2818 = vector.broadcast %cst_1000 : f32 to vector<1x1xf32>
    %2819 = arith.cmpf ogt, %2728, %2818 : vector<1x1xf32>
    %2820 = arith.cmpf one, %2728, %2740 : vector<1x1xf32>
    %2821 = arith.andi %2819, %2820 : vector<1x1xi1>
    %cst_1001 = arith.constant 5.000000e-01 : f32
    %2822 = vector.broadcast %cst_1001 : f32 to vector<1x1xf32>
    %2823 = arith.cmpf ogt, %2738, %2822 : vector<1x1xf32>
    %2824 = arith.cmpf one, %2738, %2740 : vector<1x1xf32>
    %2825 = arith.andi %2823, %2824 : vector<1x1xi1>
    %2826 = arith.extui %2817 : vector<1x1xi1> to vector<1x1xi32>
    %2827 = arith.extui %2821 : vector<1x1xi1> to vector<1x1xi32>
    %2828 = arith.addi %2826, %2827 : vector<1x1xi32>
    %2829 = arith.extui %2825 : vector<1x1xi1> to vector<1x1xi32>
    %2830 = arith.addi %2828, %2829 : vector<1x1xi32>
    %c2_i32_1002 = arith.constant 2 : i32
    %2831 = vector.broadcast %c2_i32_1002 : i32 to vector<1x1xi32>
    %2832 = arith.cmpi sge, %2830, %2831 : vector<1x1xi32>
    %2833 = arith.andi %2752, %2832 : vector<1x1xi1>
    %c0_i32_1003 = arith.constant 0 : i32
    %2834 = arith.addi %2672, %c0_i32_1003 : i32
    %2835 = vector.broadcast %2834 : i32 to vector<16x128xi32>
    %2836 = arith.cmpi eq, %10, %2835 : vector<16x128xi32>
    %2837 = vector.broadcast %2817 : vector<1x1xi1> to vector<16x128xi1>
    %2838 = arith.andi %2837, %2836 : vector<16x128xi1>
    %c6_i32_1004 = arith.constant 6 : i32
    %2839 = arith.addi %2672, %c6_i32_1004 : i32
    %2840 = vector.broadcast %2839 : i32 to vector<16x128xi32>
    %2841 = arith.cmpi eq, %10, %2840 : vector<16x128xi32>
    %2842 = vector.broadcast %2821 : vector<1x1xi1> to vector<16x128xi1>
    %2843 = arith.andi %2842, %2841 : vector<16x128xi1>
    %2844 = arith.ori %2838, %2843 : vector<16x128xi1>
    %c12_i32_1005 = arith.constant 12 : i32
    %2845 = arith.addi %2672, %c12_i32_1005 : i32
    %2846 = vector.broadcast %2845 : i32 to vector<16x128xi32>
    %2847 = arith.cmpi eq, %10, %2846 : vector<16x128xi32>
    %2848 = vector.broadcast %2825 : vector<1x1xi1> to vector<16x128xi1>
    %2849 = arith.andi %2848, %2847 : vector<16x128xi1>
    %2850 = arith.ori %2844, %2849 : vector<16x128xi1>
    %2851 = vector.broadcast %2833 : vector<1x1xi1> to vector<16x128xi1>
    %2852 = arith.andi %2851, %2850 : vector<16x128xi1>
    %cst_1006 = arith.constant -1.000000e+00 : f32
    %2853 = vector.broadcast %cst_1006 : f32 to vector<16x128xf32>
    %2854 = arith.select %2852, %2853, %2813 : vector<16x128xi1>, vector<16x128xf32>
    %c7_i32 = arith.constant 7 : i32
    %c4_i32_1007 = arith.constant 4 : i32
    %2855 = arith.muli %c4_i32_1007, %c7_i32 : i32
    %c0_i32_1008 = arith.constant 0 : i32
    %2856 = arith.addi %2855, %c0_i32_1008 : i32
    %2857 = arith.index_cast %2856 : i32 to index
    %2858 = memref.load %arg1[%2857] : memref<32xf32, #tpu.memory_space<smem>>
    %c4_i32_1009 = arith.constant 4 : i32
    %2859 = arith.muli %c4_i32_1009, %c7_i32 : i32
    %c1_i32_1010 = arith.constant 1 : i32
    %2860 = arith.addi %2859, %c1_i32_1010 : i32
    %2861 = arith.index_cast %2860 : i32 to index
    %2862 = memref.load %arg1[%2861] : memref<32xf32, #tpu.memory_space<smem>>
    %c4_i32_1011 = arith.constant 4 : i32
    %2863 = arith.muli %c4_i32_1011, %c7_i32 : i32
    %c2_i32_1012 = arith.constant 2 : i32
    %2864 = arith.addi %2863, %c2_i32_1012 : i32
    %2865 = arith.index_cast %2864 : i32 to index
    %2866 = memref.load %arg1[%2865] : memref<32xf32, #tpu.memory_space<smem>>
    %c4_i32_1013 = arith.constant 4 : i32
    %2867 = arith.muli %c4_i32_1013, %c7_i32 : i32
    %c3_i32_1014 = arith.constant 3 : i32
    %2868 = arith.addi %2867, %c3_i32_1014 : i32
    %2869 = arith.index_cast %2868 : i32 to index
    %2870 = memref.load %arg1[%2869] : memref<32xf32, #tpu.memory_space<smem>>
    %cst_1015 = arith.constant 8.000000e+00 : f32
    %2871 = arith.divf %2858, %cst_1015 : f32
    %cst_1016 = arith.constant 8.000000e+00 : f32
    %2872 = arith.divf %2862, %cst_1016 : f32
    %2873 = arith.fptosi %2871 : f32 to i32
    %2874 = arith.fptosi %2872 : f32 to i32
    %2875 = arith.sitofp %2873 : i32 to f32
    %2876 = arith.subf %2871, %2875 : f32
    %2877 = arith.sitofp %2874 : i32 to f32
    %2878 = arith.subf %2872, %2877 : f32
    %cst_1017 = arith.constant 8.000000e+00 : f32
    %2879 = arith.divf %2866, %cst_1017 : f32
    %cst_1018 = arith.constant 8.000000e+00 : f32
    %2880 = arith.divf %2870, %cst_1018 : f32
    %c4_i32_1019 = arith.constant 4 : i32
    %2881 = arith.muli %2873, %c4_i32_1019 : i32
    %2882 = arith.addi %2881, %2874 : i32
    %c18_i32_1020 = arith.constant 18 : i32
    %2883 = arith.muli %2882, %c18_i32_1020 : i32
    %c0_i32_1021 = arith.constant 0 : i32
    %2884 = arith.addi %2883, %c0_i32_1021 : i32
    %c5_i32_1022 = arith.constant 5 : i32
    %2885 = arith.addi %2884, %c5_i32_1022 : i32
    %2886 = vector.broadcast %2885 : i32 to vector<8x128xi32>
    %2887 = arith.cmpi eq, %5, %2886 : vector<8x128xi32>
    %cst_1023 = arith.constant 0.000000e+00 : f32
    %2888 = vector.broadcast %cst_1023 : f32 to vector<8x128xf32>
    %2889 = arith.select %2887, %2659, %2888 : vector<8x128xi1>, vector<8x128xf32>
    %cst_1024 = arith.constant dense<0.000000e+00> : vector<8xf32>
    %2890 = vector.multi_reduction <add>, %2889, %cst_1024 [1] : vector<8x128xf32> to vector<8xf32>
    %2891 = vector.shape_cast %2890 : vector<8xf32> to vector<8x1xf32>
    %cst_1025 = arith.constant dense<0.000000e+00> : vector<1xf32>
    %2892 = vector.multi_reduction <add>, %2891, %cst_1025 [0] : vector<8x1xf32> to vector<1xf32>
    %2893 = vector.shape_cast %2892 : vector<1xf32> to vector<1x1xf32>
    %cst_1026 = arith.constant 1.000000e+00 : f32
    %2894 = vector.broadcast %cst_1026 : f32 to vector<1x1xf32>
    %2895 = arith.cmpf oeq, %2893, %2894 : vector<1x1xf32>
    %c6_i32_1027 = arith.constant 6 : i32
    %2896 = arith.addi %2883, %c6_i32_1027 : i32
    %c5_i32_1028 = arith.constant 5 : i32
    %2897 = arith.addi %2896, %c5_i32_1028 : i32
    %2898 = vector.broadcast %2897 : i32 to vector<8x128xi32>
    %2899 = arith.cmpi eq, %5, %2898 : vector<8x128xi32>
    %cst_1029 = arith.constant 0.000000e+00 : f32
    %2900 = vector.broadcast %cst_1029 : f32 to vector<8x128xf32>
    %2901 = arith.select %2899, %2659, %2900 : vector<8x128xi1>, vector<8x128xf32>
    %cst_1030 = arith.constant dense<0.000000e+00> : vector<8xf32>
    %2902 = vector.multi_reduction <add>, %2901, %cst_1030 [1] : vector<8x128xf32> to vector<8xf32>
    %2903 = vector.shape_cast %2902 : vector<8xf32> to vector<8x1xf32>
    %cst_1031 = arith.constant dense<0.000000e+00> : vector<1xf32>
    %2904 = vector.multi_reduction <add>, %2903, %cst_1031 [0] : vector<8x1xf32> to vector<1xf32>
    %2905 = vector.shape_cast %2904 : vector<1xf32> to vector<1x1xf32>
    %cst_1032 = arith.constant 1.000000e+00 : f32
    %2906 = vector.broadcast %cst_1032 : f32 to vector<1x1xf32>
    %2907 = arith.cmpf oeq, %2905, %2906 : vector<1x1xf32>
    %c12_i32_1033 = arith.constant 12 : i32
    %2908 = arith.addi %2883, %c12_i32_1033 : i32
    %c5_i32_1034 = arith.constant 5 : i32
    %2909 = arith.addi %2908, %c5_i32_1034 : i32
    %2910 = vector.broadcast %2909 : i32 to vector<8x128xi32>
    %2911 = arith.cmpi eq, %5, %2910 : vector<8x128xi32>
    %cst_1035 = arith.constant 0.000000e+00 : f32
    %2912 = vector.broadcast %cst_1035 : f32 to vector<8x128xf32>
    %2913 = arith.select %2911, %2659, %2912 : vector<8x128xi1>, vector<8x128xf32>
    %cst_1036 = arith.constant dense<0.000000e+00> : vector<8xf32>
    %2914 = vector.multi_reduction <add>, %2913, %cst_1036 [1] : vector<8x128xf32> to vector<8xf32>
    %2915 = vector.shape_cast %2914 : vector<8xf32> to vector<8x1xf32>
    %cst_1037 = arith.constant dense<0.000000e+00> : vector<1xf32>
    %2916 = vector.multi_reduction <add>, %2915, %cst_1037 [0] : vector<8x1xf32> to vector<1xf32>
    %2917 = vector.shape_cast %2916 : vector<1xf32> to vector<1x1xf32>
    %cst_1038 = arith.constant 1.000000e+00 : f32
    %2918 = vector.broadcast %cst_1038 : f32 to vector<1x1xf32>
    %2919 = arith.cmpf oeq, %2917, %2918 : vector<1x1xf32>
    %cst_1039 = arith.constant 1.500000e+00 : f32
    %2920 = arith.minimumf %cst_1039, %2879 : f32
    %cst_1040 = arith.constant 1.500000e+00 : f32
    %2921 = arith.minimumf %cst_1040, %2880 : f32
    %2922 = arith.mulf %2920, %2921 : f32
    %2923 = arith.mulf %2879, %2880 : f32
    %cst_1041 = arith.constant 2.250000e+00 : f32
    %2924 = arith.addf %2923, %cst_1041 : f32
    %2925 = arith.subf %2924, %2922 : f32
    %2926 = arith.divf %2922, %2925 : f32
    %cst_1042 = arith.constant 0.000000e+00 : f32
    %2927 = vector.broadcast %cst_1042 : f32 to vector<1x1xf32>
    %2928 = vector.broadcast %2926 : f32 to vector<1x1xf32>
    %2929 = arith.select %2895, %2927, %2928 : vector<1x1xi1>, vector<1x1xf32>
    %cst_1043 = arith.constant 2.000000e+00 : f32
    %2930 = arith.minimumf %cst_1043, %2879 : f32
    %cst_1044 = arith.constant 3.000000e+00 : f32
    %2931 = arith.minimumf %cst_1044, %2880 : f32
    %2932 = arith.mulf %2930, %2931 : f32
    %2933 = arith.mulf %2879, %2880 : f32
    %cst_1045 = arith.constant 6.000000e+00 : f32
    %2934 = arith.addf %2933, %cst_1045 : f32
    %2935 = arith.subf %2934, %2932 : f32
    %2936 = arith.divf %2932, %2935 : f32
    %cst_1046 = arith.constant 0.000000e+00 : f32
    %2937 = vector.broadcast %cst_1046 : f32 to vector<1x1xf32>
    %2938 = vector.broadcast %2936 : f32 to vector<1x1xf32>
    %2939 = arith.select %2907, %2937, %2938 : vector<1x1xi1>, vector<1x1xf32>
    %cst_1047 = arith.constant 3.500000e+00 : f32
    %2940 = arith.minimumf %cst_1047, %2879 : f32
    %cst_1048 = arith.constant 2.500000e+00 : f32
    %2941 = arith.minimumf %cst_1048, %2880 : f32
    %2942 = arith.mulf %2940, %2941 : f32
    %2943 = arith.mulf %2879, %2880 : f32
    %cst_1049 = arith.constant 8.750000e+00 : f32
    %2944 = arith.addf %2943, %cst_1049 : f32
    %2945 = arith.subf %2944, %2942 : f32
    %2946 = arith.divf %2942, %2945 : f32
    %cst_1050 = arith.constant 0.000000e+00 : f32
    %2947 = vector.broadcast %cst_1050 : f32 to vector<1x1xf32>
    %2948 = vector.broadcast %2946 : f32 to vector<1x1xf32>
    %2949 = arith.select %2919, %2947, %2948 : vector<1x1xi1>, vector<1x1xf32>
    %2950 = arith.maximumf %2929, %2939 : vector<1x1xf32>
    %2951 = arith.maximumf %2950, %2949 : vector<1x1xf32>
    %2952 = arith.cmpf oeq, %2939, %2951 : vector<1x1xf32>
    %c1_i32_1051 = arith.constant 1 : i32
    %c2_i32_1052 = arith.constant 2 : i32
    %2953 = vector.broadcast %c1_i32_1051 : i32 to vector<1x1xi32>
    %2954 = vector.broadcast %c2_i32_1052 : i32 to vector<1x1xi32>
    %2955 = arith.select %2952, %2953, %2954 : vector<1x1xi1>, vector<1x1xi32>
    %2956 = arith.cmpf oeq, %2929, %2951 : vector<1x1xf32>
    %c0_i32_1053 = arith.constant 0 : i32
    %2957 = vector.broadcast %c0_i32_1053 : i32 to vector<1x1xi32>
    %2958 = arith.select %2956, %2957, %2955 : vector<1x1xi1>, vector<1x1xi32>
    %cst_1054 = arith.constant 4.000000e-01 : f32
    %2959 = vector.broadcast %cst_1054 : f32 to vector<1x1xf32>
    %2960 = arith.cmpf oge, %2951, %2959 : vector<1x1xf32>
    %2961 = arith.cmpi slt, %c7_i32, %0 : i32
    %2962 = vector.broadcast %2961 : i1 to vector<1x1xi1>
    %2963 = arith.andi %2960, %2962 : vector<1x1xi1>
    %c1_i32_1055 = arith.constant 1 : i32
    %2964 = vector.broadcast %c1_i32_1055 : i32 to vector<1x1xi32>
    %2965 = arith.cmpi eq, %2958, %2964 : vector<1x1xi32>
    %cst_1056 = arith.constant 2.000000e+00 : f32
    %cst_1057 = arith.constant 1.500000e+00 : f32
    %2966 = vector.broadcast %cst_1056 : f32 to vector<1x1xf32>
    %2967 = vector.broadcast %cst_1057 : f32 to vector<1x1xf32>
    %2968 = arith.select %2965, %2966, %2967 : vector<1x1xi1>, vector<1x1xf32>
    %c1_i32_1058 = arith.constant 1 : i32
    %2969 = vector.broadcast %c1_i32_1058 : i32 to vector<1x1xi32>
    %2970 = arith.cmpi eq, %2958, %2969 : vector<1x1xi32>
    %cst_1059 = arith.constant 3.000000e+00 : f32
    %cst_1060 = arith.constant 1.500000e+00 : f32
    %2971 = vector.broadcast %cst_1059 : f32 to vector<1x1xf32>
    %2972 = vector.broadcast %cst_1060 : f32 to vector<1x1xf32>
    %2973 = arith.select %2970, %2971, %2972 : vector<1x1xi1>, vector<1x1xf32>
    %c2_i32_1061 = arith.constant 2 : i32
    %2974 = vector.broadcast %c2_i32_1061 : i32 to vector<1x1xi32>
    %2975 = arith.cmpi eq, %2958, %2974 : vector<1x1xi32>
    %cst_1062 = arith.constant 3.500000e+00 : f32
    %2976 = vector.broadcast %cst_1062 : f32 to vector<1x1xf32>
    %2977 = arith.select %2975, %2976, %2968 : vector<1x1xi1>, vector<1x1xf32>
    %c2_i32_1063 = arith.constant 2 : i32
    %2978 = vector.broadcast %c2_i32_1063 : i32 to vector<1x1xi32>
    %2979 = arith.cmpi eq, %2958, %2978 : vector<1x1xi32>
    %cst_1064 = arith.constant 2.500000e+00 : f32
    %2980 = vector.broadcast %cst_1064 : f32 to vector<1x1xf32>
    %2981 = arith.select %2979, %2980, %2973 : vector<1x1xi1>, vector<1x1xf32>
    %2982 = vector.broadcast %2879 : f32 to vector<1x1xf32>
    %2983 = arith.divf %2982, %2977 : vector<1x1xf32>
    %cst_1065 = arith.constant 9.99999997E-7 : f32
    %2984 = vector.broadcast %cst_1065 : f32 to vector<1x1xf32>
    %2985 = arith.addf %2983, %2984 : vector<1x1xf32>
    %2986 = math.log %2985 : vector<1x1xf32>
    %2987 = vector.broadcast %2880 : f32 to vector<1x1xf32>
    %2988 = arith.divf %2987, %2981 : vector<1x1xf32>
    %cst_1066 = arith.constant 9.99999997E-7 : f32
    %2989 = vector.broadcast %cst_1066 : f32 to vector<1x1xf32>
    %2990 = arith.addf %2988, %2989 : vector<1x1xf32>
    %2991 = math.log %2990 : vector<1x1xf32>
    %c6_i32_1067 = arith.constant 6 : i32
    %2992 = vector.broadcast %c6_i32_1067 : i32 to vector<1x1xi32>
    %2993 = arith.muli %2958, %2992 : vector<1x1xi32>
    %2994 = vector.broadcast %2883 : i32 to vector<1x1xi32>
    %2995 = arith.addi %2994, %2993 : vector<1x1xi32>
    %2996 = vector.broadcast %2995 : vector<1x1xi32> to vector<8x128xi32>
    %2997 = arith.subi %5, %2996 : vector<8x128xi32>
    %c1_i32_1068 = arith.constant 1 : i32
    %2998 = vector.broadcast %c1_i32_1068 : i32 to vector<8x128xi32>
    %2999 = arith.cmpi eq, %2997, %2998 : vector<8x128xi32>
    %c2_i32_1069 = arith.constant 2 : i32
    %3000 = vector.broadcast %c2_i32_1069 : i32 to vector<8x128xi32>
    %3001 = arith.cmpi eq, %2997, %3000 : vector<8x128xi32>
    %c3_i32_1070 = arith.constant 3 : i32
    %3002 = vector.broadcast %c3_i32_1070 : i32 to vector<8x128xi32>
    %3003 = arith.cmpi eq, %2997, %3002 : vector<8x128xi32>
    %c4_i32_1071 = arith.constant 4 : i32
    %3004 = vector.broadcast %c4_i32_1071 : i32 to vector<8x128xi32>
    %3005 = arith.cmpi eq, %2997, %3004 : vector<8x128xi32>
    %cst_1072 = arith.constant 1.000000e+00 : f32
    %3006 = vector.shape_cast %2991 : vector<1x1xf32> to vector<1x1xf32>
    %3007 = vector.broadcast %3006 : vector<1x1xf32> to vector<8x128xf32>
    %3008 = vector.broadcast %cst_1072 : f32 to vector<8x128xf32>
    %3009 = arith.select %3005, %3007, %3008 : vector<8x128xi1>, vector<8x128xf32>
    %3010 = vector.shape_cast %2986 : vector<1x1xf32> to vector<1x1xf32>
    %3011 = vector.broadcast %3010 : vector<1x1xf32> to vector<8x128xf32>
    %3012 = arith.select %3003, %3011, %3009 : vector<8x128xi1>, vector<8x128xf32>
    %3013 = vector.broadcast %2878 : f32 to vector<8x128xf32>
    %3014 = arith.select %3001, %3013, %3012 : vector<8x128xi1>, vector<8x128xf32>
    %3015 = vector.broadcast %2876 : f32 to vector<8x128xf32>
    %3016 = arith.select %2999, %3015, %3014 : vector<8x128xi1>, vector<8x128xf32>
    %c0_i32_1073 = arith.constant 0 : i32
    %3017 = vector.broadcast %c0_i32_1073 : i32 to vector<8x128xi32>
    %3018 = arith.cmpi sge, %2997, %3017 : vector<8x128xi32>
    %3019 = vector.broadcast %2963 : vector<1x1xi1> to vector<8x128xi1>
    %3020 = arith.andi %3019, %3018 : vector<8x128xi1>
    %c6_i32_1074 = arith.constant 6 : i32
    %3021 = vector.broadcast %c6_i32_1074 : i32 to vector<8x128xi32>
    %3022 = arith.cmpi slt, %2997, %3021 : vector<8x128xi32>
    %3023 = arith.andi %3020, %3022 : vector<8x128xi1>
    %3024 = arith.select %3023, %3016, %2659 : vector<8x128xi1>, vector<8x128xf32>
    %cst_1075 = arith.constant 5.000000e-01 : f32
    %3025 = vector.broadcast %cst_1075 : f32 to vector<1x1xf32>
    %3026 = arith.cmpf ogt, %2929, %3025 : vector<1x1xf32>
    %3027 = arith.cmpf one, %2929, %2951 : vector<1x1xf32>
    %3028 = arith.andi %3026, %3027 : vector<1x1xi1>
    %cst_1076 = arith.constant 5.000000e-01 : f32
    %3029 = vector.broadcast %cst_1076 : f32 to vector<1x1xf32>
    %3030 = arith.cmpf ogt, %2939, %3029 : vector<1x1xf32>
    %3031 = arith.cmpf one, %2939, %2951 : vector<1x1xf32>
    %3032 = arith.andi %3030, %3031 : vector<1x1xi1>
    %cst_1077 = arith.constant 5.000000e-01 : f32
    %3033 = vector.broadcast %cst_1077 : f32 to vector<1x1xf32>
    %3034 = arith.cmpf ogt, %2949, %3033 : vector<1x1xf32>
    %3035 = arith.cmpf one, %2949, %2951 : vector<1x1xf32>
    %3036 = arith.andi %3034, %3035 : vector<1x1xi1>
    %3037 = arith.extui %3028 : vector<1x1xi1> to vector<1x1xi32>
    %3038 = arith.extui %3032 : vector<1x1xi1> to vector<1x1xi32>
    %3039 = arith.addi %3037, %3038 : vector<1x1xi32>
    %3040 = arith.extui %3036 : vector<1x1xi1> to vector<1x1xi32>
    %3041 = arith.addi %3039, %3040 : vector<1x1xi32>
    %c2_i32_1078 = arith.constant 2 : i32
    %3042 = vector.broadcast %c2_i32_1078 : i32 to vector<1x1xi32>
    %3043 = arith.cmpi sge, %3041, %3042 : vector<1x1xi32>
    %3044 = arith.andi %2963, %3043 : vector<1x1xi1>
    %c0_i32_1079 = arith.constant 0 : i32
    %3045 = arith.addi %2883, %c0_i32_1079 : i32
    %3046 = vector.broadcast %3045 : i32 to vector<8x128xi32>
    %3047 = arith.cmpi eq, %5, %3046 : vector<8x128xi32>
    %3048 = vector.broadcast %3028 : vector<1x1xi1> to vector<8x128xi1>
    %3049 = arith.andi %3048, %3047 : vector<8x128xi1>
    %c6_i32_1080 = arith.constant 6 : i32
    %3050 = arith.addi %2883, %c6_i32_1080 : i32
    %3051 = vector.broadcast %3050 : i32 to vector<8x128xi32>
    %3052 = arith.cmpi eq, %5, %3051 : vector<8x128xi32>
    %3053 = vector.broadcast %3032 : vector<1x1xi1> to vector<8x128xi1>
    %3054 = arith.andi %3053, %3052 : vector<8x128xi1>
    %3055 = arith.ori %3049, %3054 : vector<8x128xi1>
    %c12_i32_1081 = arith.constant 12 : i32
    %3056 = arith.addi %2883, %c12_i32_1081 : i32
    %3057 = vector.broadcast %3056 : i32 to vector<8x128xi32>
    %3058 = arith.cmpi eq, %5, %3057 : vector<8x128xi32>
    %3059 = vector.broadcast %3036 : vector<1x1xi1> to vector<8x128xi1>
    %3060 = arith.andi %3059, %3058 : vector<8x128xi1>
    %3061 = arith.ori %3055, %3060 : vector<8x128xi1>
    %3062 = vector.broadcast %3044 : vector<1x1xi1> to vector<8x128xi1>
    %3063 = arith.andi %3062, %3061 : vector<8x128xi1>
    %cst_1082 = arith.constant -1.000000e+00 : f32
    %3064 = vector.broadcast %cst_1082 : f32 to vector<8x128xf32>
    %3065 = arith.select %3063, %3064, %3024 : vector<8x128xi1>, vector<8x128xf32>
    %cst_1083 = arith.constant 4.000000e+00 : f32
    %3066 = arith.divf %2858, %cst_1083 : f32
    %cst_1084 = arith.constant 4.000000e+00 : f32
    %3067 = arith.divf %2862, %cst_1084 : f32
    %3068 = arith.fptosi %3066 : f32 to i32
    %3069 = arith.fptosi %3067 : f32 to i32
    %3070 = arith.sitofp %3068 : i32 to f32
    %3071 = arith.subf %3066, %3070 : f32
    %3072 = arith.sitofp %3069 : i32 to f32
    %3073 = arith.subf %3067, %3072 : f32
    %cst_1085 = arith.constant 4.000000e+00 : f32
    %3074 = arith.divf %2866, %cst_1085 : f32
    %cst_1086 = arith.constant 4.000000e+00 : f32
    %3075 = arith.divf %2870, %cst_1086 : f32
    %c8_i32_1087 = arith.constant 8 : i32
    %3076 = arith.muli %3068, %c8_i32_1087 : i32
    %3077 = arith.addi %3076, %3069 : i32
    %c18_i32_1088 = arith.constant 18 : i32
    %3078 = arith.muli %3077, %c18_i32_1088 : i32
    %c0_i32_1089 = arith.constant 0 : i32
    %3079 = arith.addi %3078, %c0_i32_1089 : i32
    %c5_i32_1090 = arith.constant 5 : i32
    %3080 = arith.addi %3079, %c5_i32_1090 : i32
    %3081 = vector.broadcast %3080 : i32 to vector<16x128xi32>
    %3082 = arith.cmpi eq, %10, %3081 : vector<16x128xi32>
    %cst_1091 = arith.constant 0.000000e+00 : f32
    %3083 = vector.broadcast %cst_1091 : f32 to vector<16x128xf32>
    %3084 = arith.select %3082, %2854, %3083 : vector<16x128xi1>, vector<16x128xf32>
    %cst_1092 = arith.constant dense<0.000000e+00> : vector<16xf32>
    %3085 = vector.multi_reduction <add>, %3084, %cst_1092 [1] : vector<16x128xf32> to vector<16xf32>
    %3086 = vector.shape_cast %3085 : vector<16xf32> to vector<16x1xf32>
    %cst_1093 = arith.constant dense<0.000000e+00> : vector<1xf32>
    %3087 = vector.multi_reduction <add>, %3086, %cst_1093 [0] : vector<16x1xf32> to vector<1xf32>
    %3088 = vector.shape_cast %3087 : vector<1xf32> to vector<1x1xf32>
    %cst_1094 = arith.constant 1.000000e+00 : f32
    %3089 = vector.broadcast %cst_1094 : f32 to vector<1x1xf32>
    %3090 = arith.cmpf oeq, %3088, %3089 : vector<1x1xf32>
    %c6_i32_1095 = arith.constant 6 : i32
    %3091 = arith.addi %3078, %c6_i32_1095 : i32
    %c5_i32_1096 = arith.constant 5 : i32
    %3092 = arith.addi %3091, %c5_i32_1096 : i32
    %3093 = vector.broadcast %3092 : i32 to vector<16x128xi32>
    %3094 = arith.cmpi eq, %10, %3093 : vector<16x128xi32>
    %cst_1097 = arith.constant 0.000000e+00 : f32
    %3095 = vector.broadcast %cst_1097 : f32 to vector<16x128xf32>
    %3096 = arith.select %3094, %2854, %3095 : vector<16x128xi1>, vector<16x128xf32>
    %cst_1098 = arith.constant dense<0.000000e+00> : vector<16xf32>
    %3097 = vector.multi_reduction <add>, %3096, %cst_1098 [1] : vector<16x128xf32> to vector<16xf32>
    %3098 = vector.shape_cast %3097 : vector<16xf32> to vector<16x1xf32>
    %cst_1099 = arith.constant dense<0.000000e+00> : vector<1xf32>
    %3099 = vector.multi_reduction <add>, %3098, %cst_1099 [0] : vector<16x1xf32> to vector<1xf32>
    %3100 = vector.shape_cast %3099 : vector<1xf32> to vector<1x1xf32>
    %cst_1100 = arith.constant 1.000000e+00 : f32
    %3101 = vector.broadcast %cst_1100 : f32 to vector<1x1xf32>
    %3102 = arith.cmpf oeq, %3100, %3101 : vector<1x1xf32>
    %c12_i32_1101 = arith.constant 12 : i32
    %3103 = arith.addi %3078, %c12_i32_1101 : i32
    %c5_i32_1102 = arith.constant 5 : i32
    %3104 = arith.addi %3103, %c5_i32_1102 : i32
    %3105 = vector.broadcast %3104 : i32 to vector<16x128xi32>
    %3106 = arith.cmpi eq, %10, %3105 : vector<16x128xi32>
    %cst_1103 = arith.constant 0.000000e+00 : f32
    %3107 = vector.broadcast %cst_1103 : f32 to vector<16x128xf32>
    %3108 = arith.select %3106, %2854, %3107 : vector<16x128xi1>, vector<16x128xf32>
    %cst_1104 = arith.constant dense<0.000000e+00> : vector<16xf32>
    %3109 = vector.multi_reduction <add>, %3108, %cst_1104 [1] : vector<16x128xf32> to vector<16xf32>
    %3110 = vector.shape_cast %3109 : vector<16xf32> to vector<16x1xf32>
    %cst_1105 = arith.constant dense<0.000000e+00> : vector<1xf32>
    %3111 = vector.multi_reduction <add>, %3110, %cst_1105 [0] : vector<16x1xf32> to vector<1xf32>
    %3112 = vector.shape_cast %3111 : vector<1xf32> to vector<1x1xf32>
    %cst_1106 = arith.constant 1.000000e+00 : f32
    %3113 = vector.broadcast %cst_1106 : f32 to vector<1x1xf32>
    %3114 = arith.cmpf oeq, %3112, %3113 : vector<1x1xf32>
    %cst_1107 = arith.constant 8.000000e-01 : f32
    %3115 = arith.minimumf %cst_1107, %3074 : f32
    %cst_1108 = arith.constant 8.000000e-01 : f32
    %3116 = arith.minimumf %cst_1108, %3075 : f32
    %3117 = arith.mulf %3115, %3116 : f32
    %3118 = arith.mulf %3074, %3075 : f32
    %cst_1109 = arith.constant 6.400000e-01 : f32
    %3119 = arith.addf %3118, %cst_1109 : f32
    %3120 = arith.subf %3119, %3117 : f32
    %3121 = arith.divf %3117, %3120 : f32
    %cst_1110 = arith.constant 0.000000e+00 : f32
    %3122 = vector.broadcast %cst_1110 : f32 to vector<1x1xf32>
    %3123 = vector.broadcast %3121 : f32 to vector<1x1xf32>
    %3124 = arith.select %3090, %3122, %3123 : vector<1x1xi1>, vector<1x1xf32>
    %cst_1111 = arith.constant 1.200000e+00 : f32
    %3125 = arith.minimumf %cst_1111, %3074 : f32
    %cst_1112 = arith.constant 2.000000e+00 : f32
    %3126 = arith.minimumf %cst_1112, %3075 : f32
    %3127 = arith.mulf %3125, %3126 : f32
    %3128 = arith.mulf %3074, %3075 : f32
    %cst_1113 = arith.constant 2.400000e+00 : f32
    %3129 = arith.addf %3128, %cst_1113 : f32
    %3130 = arith.subf %3129, %3127 : f32
    %3131 = arith.divf %3127, %3130 : f32
    %cst_1114 = arith.constant 0.000000e+00 : f32
    %3132 = vector.broadcast %cst_1114 : f32 to vector<1x1xf32>
    %3133 = vector.broadcast %3131 : f32 to vector<1x1xf32>
    %3134 = arith.select %3102, %3132, %3133 : vector<1x1xi1>, vector<1x1xf32>
    %cst_1115 = arith.constant 2.000000e+00 : f32
    %3135 = arith.minimumf %cst_1115, %3074 : f32
    %cst_1116 = arith.constant 1.200000e+00 : f32
    %3136 = arith.minimumf %cst_1116, %3075 : f32
    %3137 = arith.mulf %3135, %3136 : f32
    %3138 = arith.mulf %3074, %3075 : f32
    %cst_1117 = arith.constant 2.400000e+00 : f32
    %3139 = arith.addf %3138, %cst_1117 : f32
    %3140 = arith.subf %3139, %3137 : f32
    %3141 = arith.divf %3137, %3140 : f32
    %cst_1118 = arith.constant 0.000000e+00 : f32
    %3142 = vector.broadcast %cst_1118 : f32 to vector<1x1xf32>
    %3143 = vector.broadcast %3141 : f32 to vector<1x1xf32>
    %3144 = arith.select %3114, %3142, %3143 : vector<1x1xi1>, vector<1x1xf32>
    %3145 = arith.maximumf %3124, %3134 : vector<1x1xf32>
    %3146 = arith.maximumf %3145, %3144 : vector<1x1xf32>
    %3147 = arith.cmpf oeq, %3134, %3146 : vector<1x1xf32>
    %c1_i32_1119 = arith.constant 1 : i32
    %c2_i32_1120 = arith.constant 2 : i32
    %3148 = vector.broadcast %c1_i32_1119 : i32 to vector<1x1xi32>
    %3149 = vector.broadcast %c2_i32_1120 : i32 to vector<1x1xi32>
    %3150 = arith.select %3147, %3148, %3149 : vector<1x1xi1>, vector<1x1xi32>
    %3151 = arith.cmpf oeq, %3124, %3146 : vector<1x1xf32>
    %c0_i32_1121 = arith.constant 0 : i32
    %3152 = vector.broadcast %c0_i32_1121 : i32 to vector<1x1xi32>
    %3153 = arith.select %3151, %3152, %3150 : vector<1x1xi1>, vector<1x1xi32>
    %cst_1122 = arith.constant 4.000000e-01 : f32
    %3154 = vector.broadcast %cst_1122 : f32 to vector<1x1xf32>
    %3155 = arith.cmpf oge, %3146, %3154 : vector<1x1xf32>
    %3156 = arith.cmpi slt, %c7_i32, %0 : i32
    %3157 = vector.broadcast %3156 : i1 to vector<1x1xi1>
    %3158 = arith.andi %3155, %3157 : vector<1x1xi1>
    %c1_i32_1123 = arith.constant 1 : i32
    %3159 = vector.broadcast %c1_i32_1123 : i32 to vector<1x1xi32>
    %3160 = arith.cmpi eq, %3153, %3159 : vector<1x1xi32>
    %cst_1124 = arith.constant 1.200000e+00 : f32
    %cst_1125 = arith.constant 8.000000e-01 : f32
    %3161 = vector.broadcast %cst_1124 : f32 to vector<1x1xf32>
    %3162 = vector.broadcast %cst_1125 : f32 to vector<1x1xf32>
    %3163 = arith.select %3160, %3161, %3162 : vector<1x1xi1>, vector<1x1xf32>
    %c1_i32_1126 = arith.constant 1 : i32
    %3164 = vector.broadcast %c1_i32_1126 : i32 to vector<1x1xi32>
    %3165 = arith.cmpi eq, %3153, %3164 : vector<1x1xi32>
    %cst_1127 = arith.constant 2.000000e+00 : f32
    %cst_1128 = arith.constant 8.000000e-01 : f32
    %3166 = vector.broadcast %cst_1127 : f32 to vector<1x1xf32>
    %3167 = vector.broadcast %cst_1128 : f32 to vector<1x1xf32>
    %3168 = arith.select %3165, %3166, %3167 : vector<1x1xi1>, vector<1x1xf32>
    %c2_i32_1129 = arith.constant 2 : i32
    %3169 = vector.broadcast %c2_i32_1129 : i32 to vector<1x1xi32>
    %3170 = arith.cmpi eq, %3153, %3169 : vector<1x1xi32>
    %cst_1130 = arith.constant 2.000000e+00 : f32
    %3171 = vector.broadcast %cst_1130 : f32 to vector<1x1xf32>
    %3172 = arith.select %3170, %3171, %3163 : vector<1x1xi1>, vector<1x1xf32>
    %c2_i32_1131 = arith.constant 2 : i32
    %3173 = vector.broadcast %c2_i32_1131 : i32 to vector<1x1xi32>
    %3174 = arith.cmpi eq, %3153, %3173 : vector<1x1xi32>
    %cst_1132 = arith.constant 1.200000e+00 : f32
    %3175 = vector.broadcast %cst_1132 : f32 to vector<1x1xf32>
    %3176 = arith.select %3174, %3175, %3168 : vector<1x1xi1>, vector<1x1xf32>
    %3177 = vector.broadcast %3074 : f32 to vector<1x1xf32>
    %3178 = arith.divf %3177, %3172 : vector<1x1xf32>
    %cst_1133 = arith.constant 9.99999997E-7 : f32
    %3179 = vector.broadcast %cst_1133 : f32 to vector<1x1xf32>
    %3180 = arith.addf %3178, %3179 : vector<1x1xf32>
    %3181 = math.log %3180 : vector<1x1xf32>
    %3182 = vector.broadcast %3075 : f32 to vector<1x1xf32>
    %3183 = arith.divf %3182, %3176 : vector<1x1xf32>
    %cst_1134 = arith.constant 9.99999997E-7 : f32
    %3184 = vector.broadcast %cst_1134 : f32 to vector<1x1xf32>
    %3185 = arith.addf %3183, %3184 : vector<1x1xf32>
    %3186 = math.log %3185 : vector<1x1xf32>
    %c6_i32_1135 = arith.constant 6 : i32
    %3187 = vector.broadcast %c6_i32_1135 : i32 to vector<1x1xi32>
    %3188 = arith.muli %3153, %3187 : vector<1x1xi32>
    %3189 = vector.broadcast %3078 : i32 to vector<1x1xi32>
    %3190 = arith.addi %3189, %3188 : vector<1x1xi32>
    %3191 = vector.broadcast %3190 : vector<1x1xi32> to vector<16x128xi32>
    %3192 = arith.subi %10, %3191 : vector<16x128xi32>
    %c1_i32_1136 = arith.constant 1 : i32
    %3193 = vector.broadcast %c1_i32_1136 : i32 to vector<16x128xi32>
    %3194 = arith.cmpi eq, %3192, %3193 : vector<16x128xi32>
    %c2_i32_1137 = arith.constant 2 : i32
    %3195 = vector.broadcast %c2_i32_1137 : i32 to vector<16x128xi32>
    %3196 = arith.cmpi eq, %3192, %3195 : vector<16x128xi32>
    %c3_i32_1138 = arith.constant 3 : i32
    %3197 = vector.broadcast %c3_i32_1138 : i32 to vector<16x128xi32>
    %3198 = arith.cmpi eq, %3192, %3197 : vector<16x128xi32>
    %c4_i32_1139 = arith.constant 4 : i32
    %3199 = vector.broadcast %c4_i32_1139 : i32 to vector<16x128xi32>
    %3200 = arith.cmpi eq, %3192, %3199 : vector<16x128xi32>
    %cst_1140 = arith.constant 1.000000e+00 : f32
    %3201 = vector.shape_cast %3186 : vector<1x1xf32> to vector<1x1xf32>
    %3202 = vector.broadcast %3201 : vector<1x1xf32> to vector<16x128xf32>
    %3203 = vector.broadcast %cst_1140 : f32 to vector<16x128xf32>
    %3204 = arith.select %3200, %3202, %3203 : vector<16x128xi1>, vector<16x128xf32>
    %3205 = vector.shape_cast %3181 : vector<1x1xf32> to vector<1x1xf32>
    %3206 = vector.broadcast %3205 : vector<1x1xf32> to vector<16x128xf32>
    %3207 = arith.select %3198, %3206, %3204 : vector<16x128xi1>, vector<16x128xf32>
    %3208 = vector.broadcast %3073 : f32 to vector<16x128xf32>
    %3209 = arith.select %3196, %3208, %3207 : vector<16x128xi1>, vector<16x128xf32>
    %3210 = vector.broadcast %3071 : f32 to vector<16x128xf32>
    %3211 = arith.select %3194, %3210, %3209 : vector<16x128xi1>, vector<16x128xf32>
    %c0_i32_1141 = arith.constant 0 : i32
    %3212 = vector.broadcast %c0_i32_1141 : i32 to vector<16x128xi32>
    %3213 = arith.cmpi sge, %3192, %3212 : vector<16x128xi32>
    %3214 = vector.broadcast %3158 : vector<1x1xi1> to vector<16x128xi1>
    %3215 = arith.andi %3214, %3213 : vector<16x128xi1>
    %c6_i32_1142 = arith.constant 6 : i32
    %3216 = vector.broadcast %c6_i32_1142 : i32 to vector<16x128xi32>
    %3217 = arith.cmpi slt, %3192, %3216 : vector<16x128xi32>
    %3218 = arith.andi %3215, %3217 : vector<16x128xi1>
    %3219 = arith.select %3218, %3211, %2854 : vector<16x128xi1>, vector<16x128xf32>
    %cst_1143 = arith.constant 5.000000e-01 : f32
    %3220 = vector.broadcast %cst_1143 : f32 to vector<1x1xf32>
    %3221 = arith.cmpf ogt, %3124, %3220 : vector<1x1xf32>
    %3222 = arith.cmpf one, %3124, %3146 : vector<1x1xf32>
    %3223 = arith.andi %3221, %3222 : vector<1x1xi1>
    %cst_1144 = arith.constant 5.000000e-01 : f32
    %3224 = vector.broadcast %cst_1144 : f32 to vector<1x1xf32>
    %3225 = arith.cmpf ogt, %3134, %3224 : vector<1x1xf32>
    %3226 = arith.cmpf one, %3134, %3146 : vector<1x1xf32>
    %3227 = arith.andi %3225, %3226 : vector<1x1xi1>
    %cst_1145 = arith.constant 5.000000e-01 : f32
    %3228 = vector.broadcast %cst_1145 : f32 to vector<1x1xf32>
    %3229 = arith.cmpf ogt, %3144, %3228 : vector<1x1xf32>
    %3230 = arith.cmpf one, %3144, %3146 : vector<1x1xf32>
    %3231 = arith.andi %3229, %3230 : vector<1x1xi1>
    %3232 = arith.extui %3223 : vector<1x1xi1> to vector<1x1xi32>
    %3233 = arith.extui %3227 : vector<1x1xi1> to vector<1x1xi32>
    %3234 = arith.addi %3232, %3233 : vector<1x1xi32>
    %3235 = arith.extui %3231 : vector<1x1xi1> to vector<1x1xi32>
    %3236 = arith.addi %3234, %3235 : vector<1x1xi32>
    %c2_i32_1146 = arith.constant 2 : i32
    %3237 = vector.broadcast %c2_i32_1146 : i32 to vector<1x1xi32>
    %3238 = arith.cmpi sge, %3236, %3237 : vector<1x1xi32>
    %3239 = arith.andi %3158, %3238 : vector<1x1xi1>
    %c0_i32_1147 = arith.constant 0 : i32
    %3240 = arith.addi %3078, %c0_i32_1147 : i32
    %3241 = vector.broadcast %3240 : i32 to vector<16x128xi32>
    %3242 = arith.cmpi eq, %10, %3241 : vector<16x128xi32>
    %3243 = vector.broadcast %3223 : vector<1x1xi1> to vector<16x128xi1>
    %3244 = arith.andi %3243, %3242 : vector<16x128xi1>
    %c6_i32_1148 = arith.constant 6 : i32
    %3245 = arith.addi %3078, %c6_i32_1148 : i32
    %3246 = vector.broadcast %3245 : i32 to vector<16x128xi32>
    %3247 = arith.cmpi eq, %10, %3246 : vector<16x128xi32>
    %3248 = vector.broadcast %3227 : vector<1x1xi1> to vector<16x128xi1>
    %3249 = arith.andi %3248, %3247 : vector<16x128xi1>
    %3250 = arith.ori %3244, %3249 : vector<16x128xi1>
    %c12_i32_1149 = arith.constant 12 : i32
    %3251 = arith.addi %3078, %c12_i32_1149 : i32
    %3252 = vector.broadcast %3251 : i32 to vector<16x128xi32>
    %3253 = arith.cmpi eq, %10, %3252 : vector<16x128xi32>
    %3254 = vector.broadcast %3231 : vector<1x1xi1> to vector<16x128xi1>
    %3255 = arith.andi %3254, %3253 : vector<16x128xi1>
    %3256 = arith.ori %3250, %3255 : vector<16x128xi1>
    %3257 = vector.broadcast %3239 : vector<1x1xi1> to vector<16x128xi1>
    %3258 = arith.andi %3257, %3256 : vector<16x128xi1>
    %cst_1150 = arith.constant -1.000000e+00 : f32
    %3259 = vector.broadcast %cst_1150 : f32 to vector<16x128xf32>
    %3260 = arith.select %3258, %3259, %3219 : vector<16x128xi1>, vector<16x128xf32>
    %c8_i32_1151 = arith.constant 8 : i32
    %c0_1152 = arith.constant 0 : index
    %c0_1153 = arith.constant 0 : index
    %3261 = vector.load %arg2[%c0_1152, %c0_1153] : memref<24x128xf32, #tpu.memory_space<vmem>>, vector<8x128xf32>
    tpu.vector_store %arg2[%c0_1152, %c0_1153], %3065 {strides = array<i32>} : memref<24x128xf32, #tpu.memory_space<vmem>>, vector<8x128xf32>,
    %c8 = arith.constant 8 : index
    %c0_1154 = arith.constant 0 : index
    %3262 = vector.load %arg2[%c8, %c0_1154] : memref<24x128xf32, #tpu.memory_space<vmem>>, vector<16x128xf32>
    tpu.vector_store %arg2[%c8, %c0_1154], %3260 {strides = array<i32>} : memref<24x128xf32, #tpu.memory_space<vmem>>, vector<16x128xf32>,
    return
  }
}

</mosaic_0001>

<llo_original>
// kernel: _encode_targets.1
$region0: #{_encode_targets.1}
  #allocation0 [shape = 'u32[]', space=smem, size = 0x4, offset = 0x4, fixed_abs, tag = 'smem constant byte address 0x4 - core index']
  #allocation1 [shape = 'u32[144,128]{1,0:T(1,128)}', space=vmem, size = 0x12000, scoped, tag = 'internal scratch']
  #allocation2 [shape = 's32[1]{0:T(128)S(6)}', space=smem, size = 0x200, scoped, tag = 'scoped memory for _encode_targets.1']
  %s0 = inlined_call_operand.<no memory space> [shape: s32[1], index: 0, kind: input, shape index: {}]
  %s1 = inlined_call_operand.vmem [shape: f32[32], index: 1, kind: input, shape index: {}]
  %s2 = inlined_call_operand.vmem [shape: f32[24,128], index: 2, kind: output, shape index: {}]
  %s3 = sld [smem:[#allocation0]]
  $region22: #{_encode_targets.1} parent=0
    _
  %s5 = ssub.s32 1, %s3
  %s6 = scalar_select 0, %s5, %s3
  %7 = sst [smem:[#allocation2]] %s0
  $region1: #{_encode_targets.1} parent=0
    #allocation3 [shape = 'u8[512]{0}', space=smem, size = 0x200, scoped, tag = 'input window, operand 1, single buffered']
    #allocation4 [shape = 's32[1]{0}', space=sflag, size = 0x4, scoped, tag = 'scoped memory for _encode_targets.1']
    %8 = vsyncpa [#allocation4], 0
    // Predicated region
    $region2: #{_encode_targets.1} parent=1 // pred_check
      _
    $region3: #{_encode_targets.1} parent=1 // pred_check_branch
      %10 = sbr.rel (0) target = $region5
    $region4: #{_encode_targets.1} parent=1 // pred_region
      _
    $region5: #{_encode_targets.1} parent=1 // pred_fallthru
      _
    // Predicated region
    $region6: #{_encode_targets.1} parent=1 // pred_check
      _
    $region7: #{_encode_targets.1} parent=1 // pred_check_branch
      %12 = sbr.rel (0) target = $region9
    $region8: #{_encode_targets.1} parent=1 // pred_region
      %s14 = ssub.s32 16, 16
      %15 = vsyncadd [#allocation4], %s14
      %s17 = sshll.u32 %s1, 4
      %s18 = int_to_ptr.vmem [resolvable:$true] %s17
      %20 = dma.vmem_to_smem %s18, 16, [#allocation3], [#allocation4]
    $region9: #{_encode_targets.1} parent=1 // pred_fallthru
      _
    // Predicated region
    $region10: #{_encode_targets.1} parent=1 // pred_check
      _
    $region11: #{_encode_targets.1} parent=1 // pred_check_branch
      %22 = sbr.rel (0) target = $region13
    $region12: #{_encode_targets.1} parent=1 // pred_region
      %23 = dma.done [#allocation4], 16
    $region13: #{_encode_targets.1} parent=1 // pred_fallthru
      _
    %24 = sfence
    %s25 = sld [smem:[#allocation2]]
    %v26 = vlaneseq
    %v27 = vshrl.u32 %v26, 7
    %v28 = vlaneseq
    %v29 = vand.u32 %v28, 127
    %v30 = vmul.u32 %v27, 128
    %v31 = vadd.s32 %v30, %v29
    %v32 = vadd.s32 %v27, 8
    %v33 = vmul.u32 %v32, 128
    %v34 = vadd.s32 %v33, %v29
    %s35 = sld [smem:[#allocation3]]
    %s36 = sld [smem:[#allocation3 + $0x1]]
    %s37 = sld [smem:[#allocation3 + $0x2]]
    %s38 = sld [smem:[#allocation3 + $0x3]]
    %v39 = vrcp.pop 8.0
    %s40 = vtos %v39
    %s41 = smul.f32 %s35, %s40
    %v42 = vrcp.pop 8.0
    %s43 = vtos %v42
    %s44 = smul.f32 %s36, %s43
    %s45 = scvt.f32.s32.to.zero.pseudo %s41
    %s46 = scvt.f32.s32.to.zero.pseudo %s44
    %s47 = scvt.s32.f32 %s45
    %s48 = ssub.f32 %s41, %s47
    %s49 = scvt.s32.f32 %s46
    %s50 = ssub.f32 %s44, %s49
    %v51 = vrcp.pop 8.0
    %s52 = vtos %v51
    %s53 = smul.f32 %s37, %s52
    %v54 = vrcp.pop 8.0
    %s55 = vtos %v54
    %s56 = smul.f32 %s38, %s55
    %s57 = smul.u32 %s45, 4
    %s58 = sadd.s32 %s57, %s46
    %s59 = smul.u32 %s58, 18
    %60 = vadd.xlane.f32.xlu0 0.0
    %v61 = vpop.xlane.xlu0 %60
    %v62 = vrot.slane %v61, 4
    %v63 = vadd.f32 %v61, %v62
    %v64 = vrot.slane %v63, 2
    %v65 = vadd.f32 %v63, %v64
    %v66 = vrot.slane %v65, 1
    %v67 = vadd.f32 %v65, %v66
    %vm68 = vcmp.eq.f32.partialorder %v67, 1.0
    %s69 = smin.f32 %s53, 1.5
    %s70 = smin.f32 %s56, 1.5
    %s71 = smul.f32 %s69, %s70
    %s72 = smul.f32 %s53, %s56
    %s73 = sadd.f32 %s72, 2.25
    %s74 = ssub.f32 %s73, %s71
    %v75 = vstv %s74
    %v76 = vrcp.pop %v75
    %s77 = vtos %v76
    %s78 = smul.f32 %s71, %s77
    %v79 = vstv %s78
    %v80 = vsel %vm68, 0.0, %v79
    %s81 = smin.f32 %s53, 2.0
    %s82 = smin.f32 %s56, 3.0
    %s83 = smul.f32 %s81, %s82
    %s84 = sadd.f32 %s72, 6.0
    %s85 = ssub.f32 %s84, %s83
    %v86 = vstv %s85
    %v87 = vrcp.pop %v86
    %s88 = vtos %v87
    %s89 = smul.f32 %s83, %s88
    %v90 = vstv %s89
    %v91 = vsel %vm68, 0.0, %v90
    %s92 = smin.f32 %s53, 3.5
    %s93 = smin.f32 %s56, 2.5
    %s94 = smul.f32 %s92, %s93
    %s95 = sadd.f32 %s72, 8.75
    %s96 = ssub.f32 %s95, %s94
    %v97 = vstv %s96
    %v98 = vrcp.pop %v97
    %s99 = vtos %v98
    %s100 = smul.f32 %s94, %s99
    %v101 = vstv %s100
    %v102 = vsel %vm68, 0.0, %v101
    %v103 = vmax.f32 %v80, %v91
    %v104 = vmax.f32 %v103, %v102
    %vm105 = vcmp.eq.f32.partialorder %v91, %v104
    %v106 = vsel %vm105, 1, 2
    %vm107 = vcmp.eq.f32.partialorder %v80, %v104
    %v108 = vsel %vm107, 0, %v106
    %vm109 = vcmp.ge.f32.partialorder %v104, 0.4
    %p110 = scmp.gt.s32.totalorder %s25, 0
    %s111 = scalar_select %p110, 1, 0
    %v112 = vstv %s111
    %vm113 = vcmp.eq.s32.totalorder %v112, 1
    %vm114 = vmand %vm109, %vm113
    %vm115 = vcmp.eq.s32.totalorder %v108, 1
    %v116 = vsel %vm115, 2.0, 1.5
    %v117 = vsel %vm115, 3.0, 1.5
    %vm118 = vcmp.eq.s32.totalorder %v108, 2
    %v119 = vsel %vm118, 3.5, %v116
    %v120 = vsel %vm118, 2.5, %v117
    %v121 = vstv %s53
    %v122 = vrcp.pop %v119
    %v123 = vmul.f32 %v121, %v122
    %v124 = vadd.f32 %v123, 1e-06
    %v125 = vlog2.pop %v124
    %v126 = vmul.f32 %v125, 0.6931472
    %v127 = vstv %s56
    %v128 = vrcp.pop %v120
    %v129 = vmul.f32 %v127, %v128
    %v130 = vadd.f32 %v129, 1e-06
    %v131 = vlog2.pop %v130
    %v132 = vmul.f32 %v131, 0.6931472
    %v133 = vmul.u32 %v108, 6
    %v134 = vstv %s59
    %v135 = vadd.s32 %v134, %v133
    %v136 = vsub.s32 %v31, %v135
    %vm137 = vcmp.eq.s32.totalorder %v136, 1
    %vm138 = vcmp.eq.s32.totalorder %v136, 2
    %vm139 = vcmp.eq.s32.totalorder %v136, 3
    %vm140 = vcmp.eq.s32.totalorder %v136, 4
    %v141 = vsel %vm140, %v132, 1.0
    %v142 = vsel %vm139, %v126, %v141
    %v143 = vstv %s50
    %v144 = vsel %vm138, %v143, %v142
    %v145 = vstv %s48
    %v146 = vsel %vm137, %v145, %v144
    %vm147 = vcmp.ge.s32.totalorder %v136, 0
    %v148 = vsel %vm114, 1, 0
    %vm149 = vcmp.eq.s32.totalorder %v148, 1
    %vm150 = vmand %vm149, %vm147
    %vm151 = vcmp.lt.s32.totalorder %v136, 6
    %vm152 = vmand %vm150, %vm151
    %v153 = vsel %vm152, %v146, 0.0
    %vm154 = vcmp.gt.f32.partialorder %v80, 0.5
    %vm155 = vcmp.ne.f32.partialorder %v80, %v104
    %vm156 = vmand %vm154, %vm155
    %vm157 = vcmp.gt.f32.partialorder %v91, 0.5
    %vm158 = vcmp.ne.f32.partialorder %v91, %v104
    %vm159 = vmand %vm157, %vm158
    %vm160 = vcmp.gt.f32.partialorder %v102, 0.5
    %vm161 = vcmp.ne.f32.partialorder %v102, %v104
    %vm162 = vmand %vm160, %vm161
    %v163 = vsel %vm156, 1, 0
    %v164 = vsel %vm159, 1, 0
    %v165 = vadd.s32 %v163, %v164
    %v166 = vsel %vm162, 1, 0
    %v167 = vadd.s32 %v165, %v166
    %vm168 = vcmp.ge.s32.totalorder %v167, 2
    %vm169 = vmand %vm114, %vm168
    %vm170 = vcmp.eq.s32.totalorder %v31, %v134
    %vm171 = vcmp.eq.s32.totalorder %v163, 1
    %vm172 = vmand %vm171, %vm170
    %s173 = sadd.s32 %s59, 6
    %v174 = vstv %s173
    %vm175 = vcmp.eq.s32.totalorder %v31, %v174
    %vm176 = vcmp.eq.s32.totalorder %v164, 1
    %vm177 = vmand %vm176, %vm175
    %vm178 = vmor %vm172, %vm177
    %s179 = sadd.s32 %s59, 12
    %v180 = vstv %s179
    %vm181 = vcmp.eq.s32.totalorder %v31, %v180
    %vm182 = vcmp.eq.s32.totalorder %v166, 1
    %vm183 = vmand %vm182, %vm181
    %vm184 = vmor %vm178, %vm183
    %v185 = vsel %vm169, 1, 0
    %vm186 = vcmp.eq.s32.totalorder %v185, 1
    %vm187 = vmand %vm186, %vm184
    %v188 = vsel %vm187, -1.0, %v153
    %v189 = vrcp.pop 4.0
    %s190 = vtos %v189
    %s191 = smul.f32 %s35, %s190
    %v192 = vrcp.pop 4.0
    %s193 = vtos %v192
    %s194 = smul.f32 %s36, %s193
    %s195 = scvt.f32.s32.to.zero.pseudo %s191
    %s196 = scvt.f32.s32.to.zero.pseudo %s194
    %s197 = scvt.s32.f32 %s195
    %s198 = ssub.f32 %s191, %s197
    %s199 = scvt.s32.f32 %s196
    %s200 = ssub.f32 %s194, %s199
    %v201 = vrcp.pop 4.0
    %s202 = vtos %v201
    %s203 = smul.f32 %s37, %s202
    %v204 = vrcp.pop 4.0
    %s205 = vtos %v204
    %s206 = smul.f32 %s38, %s205
    %s207 = smul.u32 %s195, 8
    %s208 = sadd.s32 %s207, %s196
    %s209 = smul.u32 %s208, 18
    %v210 = vadd.f32 %v61, %v61
    %v211 = vrot.slane %v210, 4
    %v212 = vadd.f32 %v210, %v211
    %v213 = vrot.slane %v212, 2
    %v214 = vadd.f32 %v212, %v213
    %v215 = vrot.slane %v214, 1
    %v216 = vadd.f32 %v214, %v215
    %vm217 = vcmp.eq.f32.partialorder %v216, 1.0
    %s218 = smin.f32 %s203, 0.8
    %s219 = smin.f32 %s206, 0.8
    %s220 = smul.f32 %s218, %s219
    %s221 = smul.f32 %s203, %s206
    %s222 = sadd.f32 %s221, 0.64
    %s223 = ssub.f32 %s222, %s220
    %v224 = vstv %s223
    %v225 = vrcp.pop %v224
    %s226 = vtos %v225
    %s227 = smul.f32 %s220, %s226
    %v228 = vstv %s227
    %v229 = vsel %vm217, 0.0, %v228
    %s230 = smin.f32 %s203, 1.2
    %s231 = smin.f32 %s206, 2.0
    %s232 = smul.f32 %s230, %s231
    %s233 = sadd.f32 %s221, 2.4
    %s234 = ssub.f32 %s233, %s232
    %v235 = vstv %s234
    %v236 = vrcp.pop %v235
    %s237 = vtos %v236
    %s238 = smul.f32 %s232, %s237
    %v239 = vstv %s238
    %v240 = vsel %vm217, 0.0, %v239
    %s241 = smin.f32 %s203, 2.0
    %s242 = smin.f32 %s206, 1.2
    %s243 = smul.f32 %s241, %s242
    %s244 = ssub.f32 %s233, %s243
    %v245 = vstv %s244
    %v246 = vrcp.pop %v245
    %s247 = vtos %v246
    %s248 = smul.f32 %s243, %s247
    %v249 = vstv %s248
    %v250 = vsel %vm217, 0.0, %v249
    %v251 = vmax.f32 %v229, %v240
    %v252 = vmax.f32 %v251, %v250
    %vm253 = vcmp.eq.f32.partialorder %v240, %v252
    %v254 = vsel %vm253, 1, 2
    %vm255 = vcmp.eq.f32.partialorder %v229, %v252
    %v256 = vsel %vm255, 0, %v254
    %vm257 = vcmp.ge.f32.partialorder %v252, 0.4
    %vm258 = vmand %vm257, %vm113
    %vm259 = vcmp.eq.s32.totalorder %v256, 1
    %v260 = vsel %vm259, 1.2, 0.8
    %v261 = vsel %vm259, 2.0, 0.8
    %vm262 = vcmp.eq.s32.totalorder %v256, 2
    %v263 = vsel %vm262, 2.0, %v260
    %v264 = vsel %vm262, 1.2, %v261
    %v265 = vstv %s203
    %v266 = vrcp.pop %v263
    %v267 = vmul.f32 %v265, %v266
    %v268 = vadd.f32 %v267, 1e-06
    %v269 = vlog2.pop %v268
    %v270 = vmul.f32 %v269, 0.6931472
    %v271 = vstv %s206
    %v272 = vrcp.pop %v264
    %v273 = vmul.f32 %v271, %v272
    %v274 = vadd.f32 %v273, 1e-06
    %v275 = vlog2.pop %v274
    %v276 = vmul.f32 %v275, 0.6931472
    %v277 = vmul.u32 %v256, 6
    %v278 = vstv %s209
    %v279 = vadd.s32 %v278, %v277
    %v280 = vsub.s32 %v31, %v279
    %v281 = vsub.s32 %v34, %v279
    %vm282 = vcmp.eq.s32.totalorder %v280, 1
    %vm283 = vcmp.eq.s32.totalorder %v281, 1
    %vm284 = vcmp.eq.s32.totalorder %v280, 2
    %vm285 = vcmp.eq.s32.totalorder %v281, 2
    %vm286 = vcmp.eq.s32.totalorder %v280, 3
    %vm287 = vcmp.eq.s32.totalorder %v281, 3
    %vm288 = vcmp.eq.s32.totalorder %v280, 4
    %vm289 = vcmp.eq.s32.totalorder %v281, 4
    %v290 = vsel %vm288, %v276, 1.0
    %v291 = vsel %vm289, %v276, 1.0
    %v292 = vsel %vm286, %v270, %v290
    %v293 = vsel %vm287, %v270, %v291
    %v294 = vstv %s200
    %v295 = vsel %vm284, %v294, %v292
    %v296 = vsel %vm285, %v294, %v293
    %v297 = vstv %s198
    %v298 = vsel %vm282, %v297, %v295
    %v299 = vsel %vm283, %v297, %v296
    %vm300 = vcmp.ge.s32.totalorder %v280, 0
    %vm301 = vcmp.ge.s32.totalorder %v281, 0
    %v302 = vsel %vm258, 1, 0
    %vm303 = vcmp.eq.s32.totalorder %v302, 1
    %vm304 = vmand %vm303, %vm300
    %vm305 = vmand %vm303, %vm301
    %vm306 = vcmp.lt.s32.totalorder %v280, 6
    %vm307 = vcmp.lt.s32.totalorder %v281, 6
    %vm308 = vmand %vm304, %vm306
    %vm309 = vmand %vm305, %vm307
    %v310 = vsel %vm308, %v298, 0.0
    %v311 = vsel %vm309, %v299, 0.0
    %vm312 = vcmp.gt.f32.partialorder %v229, 0.5
    %vm313 = vcmp.ne.f32.partialorder %v229, %v252
    %vm314 = vmand %vm312, %vm313
    %vm315 = vcmp.gt.f32.partialorder %v240, 0.5
    %vm316 = vcmp.ne.f32.partialorder %v240, %v252
    %vm317 = vmand %vm315, %vm316
    %vm318 = vcmp.gt.f32.partialorder %v250, 0.5
    %vm319 = vcmp.ne.f32.partialorder %v250, %v252
    %vm320 = vmand %vm318, %vm319
    %v321 = vsel %vm314, 1, 0
    %v322 = vsel %vm317, 1, 0
    %v323 = vadd.s32 %v321, %v322
    %v324 = vsel %vm320, 1, 0
    %v325 = vadd.s32 %v323, %v324
    %vm326 = vcmp.ge.s32.totalorder %v325, 2
    %vm327 = vmand %vm258, %vm326
    %vm328 = vcmp.eq.s32.totalorder %v31, %v278
    %vm329 = vcmp.eq.s32.totalorder %v34, %v278
    %vm330 = vcmp.eq.s32.totalorder %v321, 1
    %vm331 = vmand %vm330, %vm328
    %vm332 = vmand %vm330, %vm329
    %s333 = sadd.s32 %s209, 6
    %v334 = vstv %s333
    %vm335 = vcmp.eq.s32.totalorder %v31, %v334
    %vm336 = vcmp.eq.s32.totalorder %v34, %v334
    %vm337 = vcmp.eq.s32.totalorder %v322, 1
    %vm338 = vmand %vm337, %vm335
    %vm339 = vmand %vm337, %vm336
    %vm340 = vmor %vm331, %vm338
    %vm341 = vmor %vm332, %vm339
    %s342 = sadd.s32 %s209, 12
    %v343 = vstv %s342
    %vm344 = vcmp.eq.s32.totalorder %v31, %v343
    %vm345 = vcmp.eq.s32.totalorder %v34, %v343
    %vm346 = vcmp.eq.s32.totalorder %v324, 1
    %vm347 = vmand %vm346, %vm344
    %vm348 = vmand %vm346, %vm345
    %vm349 = vmor %vm340, %vm347
    %vm350 = vmor %vm341, %vm348
    %v351 = vsel %vm327, 1, 0
    %vm352 = vcmp.eq.s32.totalorder %v351, 1
    %vm353 = vmand %vm352, %vm349
    %vm354 = vmand %vm352, %vm350
    %v355 = vsel %vm353, -1.0, %v310
    %v356 = vsel %vm354, -1.0, %v311
    %s357 = sld [smem:[#allocation3 + $0x4]]
    %s358 = sld [smem:[#allocation3 + $0x5]]
    %s359 = sld [smem:[#allocation3 + $0x6]]
    %s360 = sld [smem:[#allocation3 + $0x7]]
    %v361 = vrcp.pop 8.0
    %s362 = vtos %v361
    %s363 = smul.f32 %s357, %s362
    %v364 = vrcp.pop 8.0
    %s365 = vtos %v364
    %s366 = smul.f32 %s358, %s365
    %s367 = scvt.f32.s32.to.zero.pseudo %s363
    %s368 = scvt.f32.s32.to.zero.pseudo %s366
    %s369 = scvt.s32.f32 %s367
    %s370 = ssub.f32 %s363, %s369
    %s371 = scvt.s32.f32 %s368
    %s372 = ssub.f32 %s366, %s371
    %v373 = vrcp.pop 8.0
    %s374 = vtos %v373
    %s375 = smul.f32 %s359, %s374
    %v376 = vrcp.pop 8.0
    %s377 = vtos %v376
    %s378 = smul.f32 %s360, %s377
    %s379 = smul.u32 %s367, 4
    %s380 = sadd.s32 %s379, %s368
    %s381 = smul.u32 %s380, 18
    %s382 = sadd.s32 %s381, 5
    %v383 = vstv %s382
    %vm384 = vcmp.eq.s32.totalorder %v31, %v383
    %v385 = vsel %vm384, %v188, 0.0
    %386 = vadd.xlane.f32.xlu0 %v385
    %v387 = vpop.xlane.xlu0 %386
    %v388 = vrot.slane %v387, 4
    %v389 = vadd.f32 %v387, %v388
    %v390 = vrot.slane %v389, 2
    %v391 = vadd.f32 %v389, %v390
    %v392 = vrot.slane %v391, 1
    %v393 = vadd.f32 %v391, %v392
    %vm394 = vcmp.eq.f32.partialorder %v393, 1.0
    %s395 = sadd.s32 %s381, 11
    %v396 = vstv %s395
    %vm397 = vcmp.eq.s32.totalorder %v31, %v396
    %v398 = vsel %vm397, %v188, 0.0
    %399 = vadd.xlane.f32.xlu0 %v398
    %v400 = vpop.xlane.xlu0 %399
    %v401 = vrot.slane %v400, 4
    %v402 = vadd.f32 %v400, %v401
    %v403 = vrot.slane %v402, 2
    %v404 = vadd.f32 %v402, %v403
    %v405 = vrot.slane %v404, 1
    %v406 = vadd.f32 %v404, %v405
    %vm407 = vcmp.eq.f32.partialorder %v406, 1.0
    %s408 = sadd.s32 %s381, 17
    %v409 = vstv %s408
    %vm410 = vcmp.eq.s32.totalorder %v31, %v409
    %v411 = vsel %vm410, %v188, 0.0
    %412 = vadd.xlane.f32.xlu0 %v411
    %v413 = vpop.xlane.xlu0 %412
    %v414 = vrot.slane %v413, 4
    %v415 = vadd.f32 %v413, %v414
    %v416 = vrot.slane %v415, 2
    %v417 = vadd.f32 %v415, %v416
    %v418 = vrot.slane %v417, 1
    %v419 = vadd.f32 %v417, %v418
    %vm420 = vcmp.eq.f32.partialorder %v419, 1.0
    %s421 = smin.f32 %s375, 1.5
    %s422 = smin.f32 %s378, 1.5
    %s423 = smul.f32 %s421, %s422
    %s424 = smul.f32 %s375, %s378
    %s425 = sadd.f32 %s424, 2.25
    %s426 = ssub.f32 %s425, %s423
    %v427 = vstv %s426
    %v428 = vrcp.pop %v427
    %s429 = vtos %v428
    %s430 = smul.f32 %s423, %s429
    %v431 = vstv %s430
    %v432 = vsel %vm394, 0.0, %v431
    %s433 = smin.f32 %s375, 2.0
    %s434 = smin.f32 %s378, 3.0
    %s435 = smul.f32 %s433, %s434
    %s436 = sadd.f32 %s424, 6.0
    %s437 = ssub.f32 %s436, %s435
    %v438 = vstv %s437
    %v439 = vrcp.pop %v438
    %s440 = vtos %v439
    %s441 = smul.f32 %s435, %s440
    %v442 = vstv %s441
    %v443 = vsel %vm407, 0.0, %v442
    %s444 = smin.f32 %s375, 3.5
    %s445 = smin.f32 %s378, 2.5
    %s446 = smul.f32 %s444, %s445
    %s447 = sadd.f32 %s424, 8.75
    %s448 = ssub.f32 %s447, %s446
    %v449 = vstv %s448
    %v450 = vrcp.pop %v449
    %s451 = vtos %v450
    %s452 = smul.f32 %s446, %s451
    %v453 = vstv %s452
    %v454 = vsel %vm420, 0.0, %v453
    %v455 = vmax.f32 %v432, %v443
    %v456 = vmax.f32 %v455, %v454
    %vm457 = vcmp.eq.f32.partialorder %v443, %v456
    %v458 = vsel %vm457, 1, 2
    %vm459 = vcmp.eq.f32.partialorder %v432, %v456
    %v460 = vsel %vm459, 0, %v458
    %vm461 = vcmp.ge.f32.partialorder %v456, 0.4
    %p462 = scmp.gt.s32.totalorder %s25, 1
    %s463 = scalar_select %p462, 1, 0
    %v464 = vstv %s463
    %vm465 = vcmp.eq.s32.totalorder %v464, 1
    %vm466 = vmand %vm461, %vm465
    %vm467 = vcmp.eq.s32.totalorder %v460, 1
    %v468 = vsel %vm467, 2.0, 1.5
    %v469 = vsel %vm467, 3.0, 1.5
    %vm470 = vcmp.eq.s32.totalorder %v460, 2
    %v471 = vsel %vm470, 3.5, %v468
    %v472 = vsel %vm470, 2.5, %v469
    %v473 = vstv %s375
    %v474 = vrcp.pop %v471
    %v475 = vmul.f32 %v473, %v474
    %v476 = vadd.f32 %v475, 1e-06
    %v477 = vlog2.pop %v476
    %v478 = vmul.f32 %v477, 0.6931472
    %v479 = vstv %s378
    %v480 = vrcp.pop %v472
    %v481 = vmul.f32 %v479, %v480
    %v482 = vadd.f32 %v481, 1e-06
    %v483 = vlog2.pop %v482
    %v484 = vmul.f32 %v483, 0.6931472
    %v485 = vmul.u32 %v460, 6
    %v486 = vstv %s381
    %v487 = vadd.s32 %v486, %v485
    %v488 = vsub.s32 %v31, %v487
    %vm489 = vcmp.eq.s32.totalorder %v488, 1
    %vm490 = vcmp.eq.s32.totalorder %v488, 2
    %vm491 = vcmp.eq.s32.totalorder %v488, 3
    %vm492 = vcmp.eq.s32.totalorder %v488, 4
    %v493 = vsel %vm492, %v484, 1.0
    %v494 = vsel %vm491, %v478, %v493
    %v495 = vstv %s372
    %v496 = vsel %vm490, %v495, %v494
    %v497 = vstv %s370
    %v498 = vsel %vm489, %v497, %v496
    %vm499 = vcmp.ge.s32.totalorder %v488, 0
    %v500 = vsel %vm466, 1, 0
    %vm501 = vcmp.eq.s32.totalorder %v500, 1
    %vm502 = vmand %vm501, %vm499
    %vm503 = vcmp.lt.s32.totalorder %v488, 6
    %vm504 = vmand %vm502, %vm503
    %v505 = vsel %vm504, %v498, %v188
    %vm506 = vcmp.gt.f32.partialorder %v432, 0.5
    %vm507 = vcmp.ne.f32.partialorder %v432, %v456
    %vm508 = vmand %vm506, %vm507
    %vm509 = vcmp.gt.f32.partialorder %v443, 0.5
    %vm510 = vcmp.ne.f32.partialorder %v443, %v456
    %vm511 = vmand %vm509, %vm510
    %vm512 = vcmp.gt.f32.partialorder %v454, 0.5
    %vm513 = vcmp.ne.f32.partialorder %v454, %v456
    %vm514 = vmand %vm512, %vm513
    %v515 = vsel %vm508, 1, 0
    %v516 = vsel %vm511, 1, 0
    %v517 = vadd.s32 %v515, %v516
    %v518 = vsel %vm514, 1, 0
    %v519 = vadd.s32 %v517, %v518
    %vm520 = vcmp.ge.s32.totalorder %v519, 2
    %vm521 = vmand %vm466, %vm520
    %vm522 = vcmp.eq.s32.totalorder %v31, %v486
    %vm523 = vcmp.eq.s32.totalorder %v515, 1
    %vm524 = vmand %vm523, %vm522
    %s525 = sadd.s32 %s381, 6
    %v526 = vstv %s525
    %vm527 = vcmp.eq.s32.totalorder %v31, %v526
    %vm528 = vcmp.eq.s32.totalorder %v516, 1
    %vm529 = vmand %vm528, %vm527
    %vm530 = vmor %vm524, %vm529
    %s531 = sadd.s32 %s381, 12
    %v532 = vstv %s531
    %vm533 = vcmp.eq.s32.totalorder %v31, %v532
    %vm534 = vcmp.eq.s32.totalorder %v518, 1
    %vm535 = vmand %vm534, %vm533
    %vm536 = vmor %vm530, %vm535
    %v537 = vsel %vm521, 1, 0
    %vm538 = vcmp.eq.s32.totalorder %v537, 1
    %vm539 = vmand %vm538, %vm536
    %v540 = vsel %vm539, -1.0, %v505
    %v541 = vrcp.pop 4.0
    %s542 = vtos %v541
    %s543 = smul.f32 %s357, %s542
    %v544 = vrcp.pop 4.0
    %s545 = vtos %v544
    %s546 = smul.f32 %s358, %s545
    %s547 = scvt.f32.s32.to.zero.pseudo %s543
    %s548 = scvt.f32.s32.to.zero.pseudo %s546
    %s549 = scvt.s32.f32 %s547
    %s550 = ssub.f32 %s543, %s549
    %s551 = scvt.s32.f32 %s548
    %s552 = ssub.f32 %s546, %s551
    %v553 = vrcp.pop 4.0
    %s554 = vtos %v553
    %s555 = smul.f32 %s359, %s554
    %v556 = vrcp.pop 4.0
    %s557 = vtos %v556
    %s558 = smul.f32 %s360, %s557
    %s559 = smul.u32 %s547, 8
    %s560 = sadd.s32 %s559, %s548
    %s561 = smul.u32 %s560, 18
    %s562 = sadd.s32 %s561, 5
    %v563 = vstv %s562
    %vm564 = vcmp.eq.s32.totalorder %v31, %v563
    %vm565 = vcmp.eq.s32.totalorder %v34, %v563
    %v566 = vsel %vm564, %v355, 0.0
    %v567 = vsel %vm565, %v356, 0.0
    %568 = vadd.xlane.f32.xlu0 %v566
    %v569 = vpop.xlane.xlu0 %568
    %570 = vadd.xlane.f32.xlu0 %v567
    %v571 = vpop.xlane.xlu0 %570
    %v572 = vadd.f32 %v569, %v571
    %v573 = vrot.slane %v572, 4
    %v574 = vadd.f32 %v572, %v573
    %v575 = vrot.slane %v574, 2
    %v576 = vadd.f32 %v574, %v575
    %v577 = vrot.slane %v576, 1
    %v578 = vadd.f32 %v576, %v577
    %vm579 = vcmp.eq.f32.partialorder %v578, 1.0
    %s580 = sadd.s32 %s561, 11
    %v581 = vstv %s580
    %vm582 = vcmp.eq.s32.totalorder %v31, %v581
    %vm583 = vcmp.eq.s32.totalorder %v34, %v581
    %v584 = vsel %vm582, %v355, 0.0
    %v585 = vsel %vm583, %v356, 0.0
    %586 = vadd.xlane.f32.xlu0 %v584
    %v587 = vpop.xlane.xlu0 %586
    %588 = vadd.xlane.f32.xlu0 %v585
    %v589 = vpop.xlane.xlu0 %588
    %v590 = vadd.f32 %v587, %v589
    %v591 = vrot.slane %v590, 4
    %v592 = vadd.f32 %v590, %v591
    %v593 = vrot.slane %v592, 2
    %v594 = vadd.f32 %v592, %v593
    %v595 = vrot.slane %v594, 1
    %v596 = vadd.f32 %v594, %v595
    %vm597 = vcmp.eq.f32.partialorder %v596, 1.0
    %s598 = sadd.s32 %s561, 17
    %v599 = vstv %s598
    %vm600 = vcmp.eq.s32.totalorder %v31, %v599
    %vm601 = vcmp.eq.s32.totalorder %v34, %v599
    %v602 = vsel %vm600, %v355, 0.0
    %v603 = vsel %vm601, %v356, 0.0
    %604 = vadd.xlane.f32.xlu0 %v602
    %v605 = vpop.xlane.xlu0 %604
    %606 = vadd.xlane.f32.xlu0 %v603
    %v607 = vpop.xlane.xlu0 %606
    %v608 = vadd.f32 %v605, %v607
    %v609 = vrot.slane %v608, 4
    %v610 = vadd.f32 %v608, %v609
    %v611 = vrot.slane %v610, 2
    %v612 = vadd.f32 %v610, %v611
    %v613 = vrot.slane %v612, 1
    %v614 = vadd.f32 %v612, %v613
    %vm615 = vcmp.eq.f32.partialorder %v614, 1.0
    %s616 = smin.f32 %s555, 0.8
    %s617 = smin.f32 %s558, 0.8
    %s618 = smul.f32 %s616, %s617
    %s619 = smul.f32 %s555, %s558
    %s620 = sadd.f32 %s619, 0.64
    %s621 = ssub.f32 %s620, %s618
    %v622 = vstv %s621
    %v623 = vrcp.pop %v622
    %s624 = vtos %v623
    %s625 = smul.f32 %s618, %s624
    %v626 = vstv %s625
    %v627 = vsel %vm579, 0.0, %v626
    %s628 = smin.f32 %s555, 1.2
    %s629 = smin.f32 %s558, 2.0
    %s630 = smul.f32 %s628, %s629
    %s631 = sadd.f32 %s619, 2.4
    %s632 = ssub.f32 %s631, %s630
    %v633 = vstv %s632
    %v634 = vrcp.pop %v633
    %s635 = vtos %v634
    %s636 = smul.f32 %s630, %s635
    %v637 = vstv %s636
    %v638 = vsel %vm597, 0.0, %v637
    %s639 = smin.f32 %s555, 2.0
    %s640 = smin.f32 %s558, 1.2
    %s641 = smul.f32 %s639, %s640
    %s642 = ssub.f32 %s631, %s641
    %v643 = vstv %s642
    %v644 = vrcp.pop %v643
    %s645 = vtos %v644
    %s646 = smul.f32 %s641, %s645
    %v647 = vstv %s646
    %v648 = vsel %vm615, 0.0, %v647
    %v649 = vmax.f32 %v627, %v638
    %v650 = vmax.f32 %v649, %v648
    %vm651 = vcmp.eq.f32.partialorder %v638, %v650
    %v652 = vsel %vm651, 1, 2
    %vm653 = vcmp.eq.f32.partialorder %v627, %v650
    %v654 = vsel %vm653, 0, %v652
    %vm655 = vcmp.ge.f32.partialorder %v650, 0.4
    %vm656 = vmand %vm655, %vm465
    %vm657 = vcmp.eq.s32.totalorder %v654, 1
    %v658 = vsel %vm657, 1.2, 0.8
    %v659 = vsel %vm657, 2.0, 0.8
    %vm660 = vcmp.eq.s32.totalorder %v654, 2
    %v661 = vsel %vm660, 2.0, %v658
    %v662 = vsel %vm660, 1.2, %v659
    %v663 = vstv %s555
    %v664 = vrcp.pop %v661
    %v665 = vmul.f32 %v663, %v664
    %v666 = vadd.f32 %v665, 1e-06
    %v667 = vlog2.pop %v666
    %v668 = vmul.f32 %v667, 0.6931472
    %v669 = vstv %s558
    %v670 = vrcp.pop %v662
    %v671 = vmul.f32 %v669, %v670
    %v672 = vadd.f32 %v671, 1e-06
    %v673 = vlog2.pop %v672
    %v674 = vmul.f32 %v673, 0.6931472
    %v675 = vmul.u32 %v654, 6
    %v676 = vstv %s561
    %v677 = vadd.s32 %v676, %v675
    %v678 = vsub.s32 %v31, %v677
    %v679 = vsub.s32 %v34, %v677
    %vm680 = vcmp.eq.s32.totalorder %v678, 1
    %vm681 = vcmp.eq.s32.totalorder %v679, 1
    %vm682 = vcmp.eq.s32.totalorder %v678, 2
    %vm683 = vcmp.eq.s32.totalorder %v679, 2
    %vm684 = vcmp.eq.s32.totalorder %v678, 3
    %vm685 = vcmp.eq.s32.totalorder %v679, 3
    %vm686 = vcmp.eq.s32.totalorder %v678, 4
    %vm687 = vcmp.eq.s32.totalorder %v679, 4
    %v688 = vsel %vm686, %v674, 1.0
    %v689 = vsel %vm687, %v674, 1.0
    %v690 = vsel %vm684, %v668, %v688
    %v691 = vsel %vm685, %v668, %v689
    %v692 = vstv %s552
    %v693 = vsel %vm682, %v692, %v690
    %v694 = vsel %vm683, %v692, %v691
    %v695 = vstv %s550
    %v696 = vsel %vm680, %v695, %v693
    %v697 = vsel %vm681, %v695, %v694
    %vm698 = vcmp.ge.s32.totalorder %v678, 0
    %vm699 = vcmp.ge.s32.totalorder %v679, 0
    %v700 = vsel %vm656, 1, 0
    %vm701 = vcmp.eq.s32.totalorder %v700, 1
    %vm702 = vmand %vm701, %vm698
    %vm703 = vmand %vm701, %vm699
    %vm704 = vcmp.lt.s32.totalorder %v678, 6
    %vm705 = vcmp.lt.s32.totalorder %v679, 6
    %vm706 = vmand %vm702, %vm704
    %vm707 = vmand %vm703, %vm705
    %v708 = vsel %vm706, %v696, %v355
    %v709 = vsel %vm707, %v697, %v356
    %vm710 = vcmp.gt.f32.partialorder %v627, 0.5
    %vm711 = vcmp.ne.f32.partialorder %v627, %v650
    %vm712 = vmand %vm710, %vm711
    %vm713 = vcmp.gt.f32.partialorder %v638, 0.5
    %vm714 = vcmp.ne.f32.partialorder %v638, %v650
    %vm715 = vmand %vm713, %vm714
    %vm716 = vcmp.gt.f32.partialorder %v648, 0.5
    %vm717 = vcmp.ne.f32.partialorder %v648, %v650
    %vm718 = vmand %vm716, %vm717
    %v719 = vsel %vm712, 1, 0
    %v720 = vsel %vm715, 1, 0
    %v721 = vadd.s32 %v719, %v720
    %v722 = vsel %vm718, 1, 0
    %v723 = vadd.s32 %v721, %v722
    %vm724 = vcmp.ge.s32.totalorder %v723, 2
    %vm725 = vmand %vm656, %vm724
    %vm726 = vcmp.eq.s32.totalorder %v31, %v676
    %vm727 = vcmp.eq.s32.totalorder %v34, %v676
    %vm728 = vcmp.eq.s32.totalorder %v719, 1
    %vm729 = vmand %vm728, %vm726
    %vm730 = vmand %vm728, %vm727
    %s731 = sadd.s32 %s561, 6
    %v732 = vstv %s731
    %vm733 = vcmp.eq.s32.totalorder %v31, %v732
    %vm734 = vcmp.eq.s32.totalorder %v34, %v732
    %vm735 = vcmp.eq.s32.totalorder %v720, 1
    %vm736 = vmand %vm735, %vm733
    %vm737 = vmand %vm735, %vm734
    %vm738 = vmor %vm729, %vm736
    %vm739 = vmor %vm730, %vm737
    %s740 = sadd.s32 %s561, 12
    %v741 = vstv %s740
    %vm742 = vcmp.eq.s32.totalorder %v31, %v741
    %vm743 = vcmp.eq.s32.totalorder %v34, %v741
    %vm744 = vcmp.eq.s32.totalorder %v722, 1
    %vm745 = vmand %vm744, %vm742
    %vm746 = vmand %vm744, %vm743
    %vm747 = vmor %vm738, %vm745
    %vm748 = vmor %vm739, %vm746
    %v749 = vsel %vm725, 1, 0
    %vm750 = vcmp.eq.s32.totalorder %v749, 1
    %vm751 = vmand %vm750, %vm747
    %vm752 = vmand %vm750, %vm748
    %v753 = vsel %vm751, -1.0, %v708
    %v754 = vsel %vm752, -1.0, %v709
    %s755 = sld [smem:[#allocation3 + $0x8]]
    %s756 = sld [smem:[#allocation3 + $0x9]]
    %s757 = sld [smem:[#allocation3 + $0xa]]
    %s758 = sld [smem:[#allocation3 + $0xb]]
    %v759 = vrcp.pop 8.0
    %s760 = vtos %v759
    %s761 = smul.f32 %s755, %s760
    %v762 = vrcp.pop 8.0
    %s763 = vtos %v762
    %s764 = smul.f32 %s756, %s763
    %s765 = scvt.f32.s32.to.zero.pseudo %s761
    %s766 = scvt.f32.s32.to.zero.pseudo %s764
    %s767 = scvt.s32.f32 %s765
    %s768 = ssub.f32 %s761, %s767
    %s769 = scvt.s32.f32 %s766
    %s770 = ssub.f32 %s764, %s769
    %v771 = vrcp.pop 8.0
    %s772 = vtos %v771
    %s773 = smul.f32 %s757, %s772
    %v774 = vrcp.pop 8.0
    %s775 = vtos %v774
    %s776 = smul.f32 %s758, %s775
    %s777 = smul.u32 %s765, 4
    %s778 = sadd.s32 %s777, %s766
    %s779 = smul.u32 %s778, 18
    %s780 = sadd.s32 %s779, 5
    %v781 = vstv %s780
    %vm782 = vcmp.eq.s32.totalorder %v31, %v781
    %v783 = vsel %vm782, %v540, 0.0
    %784 = vadd.xlane.f32.xlu0 %v783
    %v785 = vpop.xlane.xlu0 %784
    %v786 = vrot.slane %v785, 4
    %v787 = vadd.f32 %v785, %v786
    %v788 = vrot.slane %v787, 2
    %v789 = vadd.f32 %v787, %v788
    %v790 = vrot.slane %v789, 1
    %v791 = vadd.f32 %v789, %v790
    %vm792 = vcmp.eq.f32.partialorder %v791, 1.0
    %s793 = sadd.s32 %s779, 11
    %v794 = vstv %s793
    %vm795 = vcmp.eq.s32.totalorder %v31, %v794
    %v796 = vsel %vm795, %v540, 0.0
    %797 = vadd.xlane.f32.xlu0 %v796
    %v798 = vpop.xlane.xlu0 %797
    %v799 = vrot.slane %v798, 4
    %v800 = vadd.f32 %v798, %v799
    %v801 = vrot.slane %v800, 2
    %v802 = vadd.f32 %v800, %v801
    %v803 = vrot.slane %v802, 1
    %v804 = vadd.f32 %v802, %v803
    %vm805 = vcmp.eq.f32.partialorder %v804, 1.0
    %s806 = sadd.s32 %s779, 17
    %v807 = vstv %s806
    %vm808 = vcmp.eq.s32.totalorder %v31, %v807
    %v809 = vsel %vm808, %v540, 0.0
    %810 = vadd.xlane.f32.xlu0 %v809
    %v811 = vpop.xlane.xlu0 %810
    %v812 = vrot.slane %v811, 4
    %v813 = vadd.f32 %v811, %v812
    %v814 = vrot.slane %v813, 2
    %v815 = vadd.f32 %v813, %v814
    %v816 = vrot.slane %v815, 1
    %v817 = vadd.f32 %v815, %v816
    %vm818 = vcmp.eq.f32.partialorder %v817, 1.0
    %s819 = smin.f32 %s773, 1.5
    %s820 = smin.f32 %s776, 1.5
    %s821 = smul.f32 %s819, %s820
    %s822 = smul.f32 %s773, %s776
    %s823 = sadd.f32 %s822, 2.25
    %s824 = ssub.f32 %s823, %s821
    %v825 = vstv %s824
    %v826 = vrcp.pop %v825
    %s827 = vtos %v826
    %s828 = smul.f32 %s821, %s827
    %v829 = vstv %s828
    %v830 = vsel %vm792, 0.0, %v829
    %s831 = smin.f32 %s773, 2.0
    %s832 = smin.f32 %s776, 3.0
    %s833 = smul.f32 %s831, %s832
    %s834 = sadd.f32 %s822, 6.0
    %s835 = ssub.f32 %s834, %s833
    %v836 = vstv %s835
    %v837 = vrcp.pop %v836
    %s838 = vtos %v837
    %s839 = smul.f32 %s833, %s838
    %v840 = vstv %s839
    %v841 = vsel %vm805, 0.0, %v840
    %s842 = smin.f32 %s773, 3.5
    %s843 = smin.f32 %s776, 2.5
    %s844 = smul.f32 %s842, %s843
    %s845 = sadd.f32 %s822, 8.75
    %s846 = ssub.f32 %s845, %s844
    %v847 = vstv %s846
    %v848 = vrcp.pop %v847
    %s849 = vtos %v848
    %s850 = smul.f32 %s844, %s849
    %v851 = vstv %s850
    %v852 = vsel %vm818, 0.0, %v851
    %v853 = vmax.f32 %v830, %v841
    %v854 = vmax.f32 %v853, %v852
    %vm855 = vcmp.eq.f32.partialorder %v841, %v854
    %v856 = vsel %vm855, 1, 2
    %vm857 = vcmp.eq.f32.partialorder %v830, %v854
    %v858 = vsel %vm857, 0, %v856
    %vm859 = vcmp.ge.f32.partialorder %v854, 0.4
    %p860 = scmp.gt.s32.totalorder %s25, 2
    %s861 = scalar_select %p860, 1, 0
    %v862 = vstv %s861
    %vm863 = vcmp.eq.s32.totalorder %v862, 1
    %vm864 = vmand %vm859, %vm863
    %vm865 = vcmp.eq.s32.totalorder %v858, 1
    %v866 = vsel %vm865, 2.0, 1.5
    %v867 = vsel %vm865, 3.0, 1.5
    %vm868 = vcmp.eq.s32.totalorder %v858, 2
    %v869 = vsel %vm868, 3.5, %v866
    %v870 = vsel %vm868, 2.5, %v867
    %v871 = vstv %s773
    %v872 = vrcp.pop %v869
    %v873 = vmul.f32 %v871, %v872
    %v874 = vadd.f32 %v873, 1e-06
    %v875 = vlog2.pop %v874
    %v876 = vmul.f32 %v875, 0.6931472
    %v877 = vstv %s776
    %v878 = vrcp.pop %v870
    %v879 = vmul.f32 %v877, %v878
    %v880 = vadd.f32 %v879, 1e-06
    %v881 = vlog2.pop %v880
    %v882 = vmul.f32 %v881, 0.6931472
    %v883 = vmul.u32 %v858, 6
    %v884 = vstv %s779
    %v885 = vadd.s32 %v884, %v883
    %v886 = vsub.s32 %v31, %v885
    %vm887 = vcmp.eq.s32.totalorder %v886, 1
    %vm888 = vcmp.eq.s32.totalorder %v886, 2
    %vm889 = vcmp.eq.s32.totalorder %v886, 3
    %vm890 = vcmp.eq.s32.totalorder %v886, 4
    %v891 = vsel %vm890, %v882, 1.0
    %v892 = vsel %vm889, %v876, %v891
    %v893 = vstv %s770
    %v894 = vsel %vm888, %v893, %v892
    %v895 = vstv %s768
    %v896 = vsel %vm887, %v895, %v894
    %vm897 = vcmp.ge.s32.totalorder %v886, 0
    %v898 = vsel %vm864, 1, 0
    %vm899 = vcmp.eq.s32.totalorder %v898, 1
    %vm900 = vmand %vm899, %vm897
    %vm901 = vcmp.lt.s32.totalorder %v886, 6
    %vm902 = vmand %vm900, %vm901
    %v903 = vsel %vm902, %v896, %v540
    %vm904 = vcmp.gt.f32.partialorder %v830, 0.5
    %vm905 = vcmp.ne.f32.partialorder %v830, %v854
    %vm906 = vmand %vm904, %vm905
    %vm907 = vcmp.gt.f32.partialorder %v841, 0.5
    %vm908 = vcmp.ne.f32.partialorder %v841, %v854
    %vm909 = vmand %vm907, %vm908
    %vm910 = vcmp.gt.f32.partialorder %v852, 0.5
    %vm911 = vcmp.ne.f32.partialorder %v852, %v854
    %vm912 = vmand %vm910, %vm911
    %v913 = vsel %vm906, 1, 0
    %v914 = vsel %vm909, 1, 0
    %v915 = vadd.s32 %v913, %v914
    %v916 = vsel %vm912, 1, 0
    %v917 = vadd.s32 %v915, %v916
    %vm918 = vcmp.ge.s32.totalorder %v917, 2
    %vm919 = vmand %vm864, %vm918
    %vm920 = vcmp.eq.s32.totalorder %v31, %v884
    %vm921 = vcmp.eq.s32.totalorder %v913, 1
    %vm922 = vmand %vm921, %vm920
    %s923 = sadd.s32 %s779, 6
    %v924 = vstv %s923
    %vm925 = vcmp.eq.s32.totalorder %v31, %v924
    %vm926 = vcmp.eq.s32.totalorder %v914, 1
    %vm927 = vmand %vm926, %vm925
    %vm928 = vmor %vm922, %vm927
    %s929 = sadd.s32 %s779, 12
    %v930 = vstv %s929
    %vm931 = vcmp.eq.s32.totalorder %v31, %v930
    %vm932 = vcmp.eq.s32.totalorder %v916, 1
    %vm933 = vmand %vm932, %vm931
    %vm934 = vmor %vm928, %vm933
    %v935 = vsel %vm919, 1, 0
    %vm936 = vcmp.eq.s32.totalorder %v935, 1
    %vm937 = vmand %vm936, %vm934
    %v938 = vsel %vm937, -1.0, %v903
    %v939 = vrcp.pop 4.0
    %s940 = vtos %v939
    %s941 = smul.f32 %s755, %s940
    %v942 = vrcp.pop 4.0
    %s943 = vtos %v942
    %s944 = smul.f32 %s756, %s943
    %s945 = scvt.f32.s32.to.zero.pseudo %s941
    %s946 = scvt.f32.s32.to.zero.pseudo %s944
    %s947 = scvt.s32.f32 %s945
    %s948 = ssub.f32 %s941, %s947
    %s949 = scvt.s32.f32 %s946
    %s950 = ssub.f32 %s944, %s949
    %v951 = vrcp.pop 4.0
    %s952 = vtos %v951
    %s953 = smul.f32 %s757, %s952
    %v954 = vrcp.pop 4.0
    %s955 = vtos %v954
    %s956 = smul.f32 %s758, %s955
    %s957 = smul.u32 %s945, 8
    %s958 = sadd.s32 %s957, %s946
    %s959 = smul.u32 %s958, 18
    %s960 = sadd.s32 %s959, 5
    %v961 = vstv %s960
    %vm962 = vcmp.eq.s32.totalorder %v31, %v961
    %vm963 = vcmp.eq.s32.totalorder %v34, %v961
    %v964 = vsel %vm962, %v753, 0.0
    %v965 = vsel %vm963, %v754, 0.0
    %966 = vadd.xlane.f32.xlu0 %v964
    %v967 = vpop.xlane.xlu0 %966
    %968 = vadd.xlane.f32.xlu0 %v965
    %v969 = vpop.xlane.xlu0 %968
    %v970 = vadd.f32 %v967, %v969
    %v971 = vrot.slane %v970, 4
    %v972 = vadd.f32 %v970, %v971
    %v973 = vrot.slane %v972, 2
    %v974 = vadd.f32 %v972, %v973
    %v975 = vrot.slane %v974, 1
    %v976 = vadd.f32 %v974, %v975
    %vm977 = vcmp.eq.f32.partialorder %v976, 1.0
    %s978 = sadd.s32 %s959, 11
    %v979 = vstv %s978
    %vm980 = vcmp.eq.s32.totalorder %v31, %v979
    %vm981 = vcmp.eq.s32.totalorder %v34, %v979
    %v982 = vsel %vm980, %v753, 0.0
    %v983 = vsel %vm981, %v754, 0.0
    %984 = vadd.xlane.f32.xlu0 %v982
    %v985 = vpop.xlane.xlu0 %984
    %986 = vadd.xlane.f32.xlu0 %v983
    %v987 = vpop.xlane.xlu0 %986
    %v988 = vadd.f32 %v985, %v987
    %v989 = vrot.slane %v988, 4
    %v990 = vadd.f32 %v988, %v989
    %v991 = vrot.slane %v990, 2
    %v992 = vadd.f32 %v990, %v991
    %v993 = vrot.slane %v992, 1
    %v994 = vadd.f32 %v992, %v993
    %vm995 = vcmp.eq.f32.partialorder %v994, 1.0
    %s996 = sadd.s32 %s959, 17
    %v997 = vstv %s996
    %vm998 = vcmp.eq.s32.totalorder %v31, %v997
    %vm999 = vcmp.eq.s32.totalorder %v34, %v997
    %v1000 = vsel %vm998, %v753, 0.0
    %v1001 = vsel %vm999, %v754, 0.0
    %1002 = vadd.xlane.f32.xlu0 %v1000
    %v1003 = vpop.xlane.xlu0 %1002
    %1004 = vadd.xlane.f32.xlu0 %v1001
    %v1005 = vpop.xlane.xlu0 %1004
    %v1006 = vadd.f32 %v1003, %v1005
    %v1007 = vrot.slane %v1006, 4
    %v1008 = vadd.f32 %v1006, %v1007
    %v1009 = vrot.slane %v1008, 2
    %v1010 = vadd.f32 %v1008, %v1009
    %v1011 = vrot.slane %v1010, 1
    %v1012 = vadd.f32 %v1010, %v1011
    %vm1013 = vcmp.eq.f32.partialorder %v1012, 1.0
    %s1014 = smin.f32 %s953, 0.8
    %s1015 = smin.f32 %s956, 0.8
    %s1016 = smul.f32 %s1014, %s1015
    %s1017 = smul.f32 %s953, %s956
    %s1018 = sadd.f32 %s1017, 0.64
    %s1019 = ssub.f32 %s1018, %s1016
    %v1020 = vstv %s1019
    %v1021 = vrcp.pop %v1020
    %s1022 = vtos %v1021
    %s1023 = smul.f32 %s1016, %s1022
    %v1024 = vstv %s1023
    %v1025 = vsel %vm977, 0.0, %v1024
    %s1026 = smin.f32 %s953, 1.2
    %s1027 = smin.f32 %s956, 2.0
    %s1028 = smul.f32 %s1026, %s1027
    %s1029 = sadd.f32 %s1017, 2.4
    %s1030 = ssub.f32 %s1029, %s1028
    %v1031 = vstv %s1030
    %v1032 = vrcp.pop %v1031
    %s1033 = vtos %v1032
    %s1034 = smul.f32 %s1028, %s1033
    %v1035 = vstv %s1034
    %v1036 = vsel %vm995, 0.0, %v1035
    %s1037 = smin.f32 %s953, 2.0
    %s1038 = smin.f32 %s956, 1.2
    %s1039 = smul.f32 %s1037, %s1038
    %s1040 = ssub.f32 %s1029, %s1039
    %v1041 = vstv %s1040
    %v1042 = vrcp.pop %v1041
    %s1043 = vtos %v1042
    %s1044 = smul.f32 %s1039, %s1043
    %v1045 = vstv %s1044
    %v1046 = vsel %vm1013, 0.0, %v1045
    %v1047 = vmax.f32 %v1025, %v1036
    %v1048 = vmax.f32 %v1047, %v1046
    %vm1049 = vcmp.eq.f32.partialorder %v1036, %v1048
    %v1050 = vsel %vm1049, 1, 2
    %vm1051 = vcmp.eq.f32.partialorder %v1025, %v1048
    %v1052 = vsel %vm1051, 0, %v1050
    %vm1053 = vcmp.ge.f32.partialorder %v1048, 0.4
    %vm1054 = vmand %vm1053, %vm863
    %vm1055 = vcmp.eq.s32.totalorder %v1052, 1
    %v1056 = vsel %vm1055, 1.2, 0.8
    %v1057 = vsel %vm1055, 2.0, 0.8
    %vm1058 = vcmp.eq.s32.totalorder %v1052, 2
    %v1059 = vsel %vm1058, 2.0, %v1056
    %v1060 = vsel %vm1058, 1.2, %v1057
    %v1061 = vstv %s953
    %v1062 = vrcp.pop %v1059
    %v1063 = vmul.f32 %v1061, %v1062
    %v1064 = vadd.f32 %v1063, 1e-06
    %v1065 = vlog2.pop %v1064
    %v1066 = vmul.f32 %v1065, 0.6931472
    %v1067 = vstv %s956
    %v1068 = vrcp.pop %v1060
    %v1069 = vmul.f32 %v1067, %v1068
    %v1070 = vadd.f32 %v1069, 1e-06
    %v1071 = vlog2.pop %v1070
    %v1072 = vmul.f32 %v1071, 0.6931472
    %v1073 = vmul.u32 %v1052, 6
    %v1074 = vstv %s959
    %v1075 = vadd.s32 %v1074, %v1073
    %v1076 = vsub.s32 %v31, %v1075
    %v1077 = vsub.s32 %v34, %v1075
    %vm1078 = vcmp.eq.s32.totalorder %v1076, 1
    %vm1079 = vcmp.eq.s32.totalorder %v1077, 1
    %vm1080 = vcmp.eq.s32.totalorder %v1076, 2
    %vm1081 = vcmp.eq.s32.totalorder %v1077, 2
    %vm1082 = vcmp.eq.s32.totalorder %v1076, 3
    %vm1083 = vcmp.eq.s32.totalorder %v1077, 3
    %vm1084 = vcmp.eq.s32.totalorder %v1076, 4
    %vm1085 = vcmp.eq.s32.totalorder %v1077, 4
    %v1086 = vsel %vm1084, %v1072, 1.0
    %v1087 = vsel %vm1085, %v1072, 1.0
    %v1088 = vsel %vm1082, %v1066, %v1086
    %v1089 = vsel %vm1083, %v1066, %v1087
    %v1090 = vstv %s950
    %v1091 = vsel %vm1080, %v1090, %v1088
    %v1092 = vsel %vm1081, %v1090, %v1089
    %v1093 = vstv %s948
    %v1094 = vsel %vm1078, %v1093, %v1091
    %v1095 = vsel %vm1079, %v1093, %v1092
    %vm1096 = vcmp.ge.s32.totalorder %v1076, 0
    %vm1097 = vcmp.ge.s32.totalorder %v1077, 0
    %v1098 = vsel %vm1054, 1, 0
    %vm1099 = vcmp.eq.s32.totalorder %v1098, 1
    %vm1100 = vmand %vm1099, %vm1096
    %vm1101 = vmand %vm1099, %vm1097
    %vm1102 = vcmp.lt.s32.totalorder %v1076, 6
    %vm1103 = vcmp.lt.s32.totalorder %v1077, 6
    %vm1104 = vmand %vm1100, %vm1102
    %vm1105 = vmand %vm1101, %vm1103
    %v1106 = vsel %vm1104, %v1094, %v753
    %v1107 = vsel %vm1105, %v1095, %v754
    %vm1108 = vcmp.gt.f32.partialorder %v1025, 0.5
    %vm1109 = vcmp.ne.f32.partialorder %v1025, %v1048
    %vm1110 = vmand %vm1108, %vm1109
    %vm1111 = vcmp.gt.f32.partialorder %v1036, 0.5
    %vm1112 = vcmp.ne.f32.partialorder %v1036, %v1048
    %vm1113 = vmand %vm1111, %vm1112
    %vm1114 = vcmp.gt.f32.partialorder %v1046, 0.5
    %vm1115 = vcmp.ne.f32.partialorder %v1046, %v1048
    %vm1116 = vmand %vm1114, %vm1115
    %v1117 = vsel %vm1110, 1, 0
    %v1118 = vsel %vm1113, 1, 0
    %v1119 = vadd.s32 %v1117, %v1118
    %v1120 = vsel %vm1116, 1, 0
    %v1121 = vadd.s32 %v1119, %v1120
    %vm1122 = vcmp.ge.s32.totalorder %v1121, 2
    %vm1123 = vmand %vm1054, %vm1122
    %vm1124 = vcmp.eq.s32.totalorder %v31, %v1074
    %vm1125 = vcmp.eq.s32.totalorder %v34, %v1074
    %vm1126 = vcmp.eq.s32.totalorder %v1117, 1
    %vm1127 = vmand %vm1126, %vm1124
    %vm1128 = vmand %vm1126, %vm1125
    %s1129 = sadd.s32 %s959, 6
    %v1130 = vstv %s1129
    %vm1131 = vcmp.eq.s32.totalorder %v31, %v1130
    %vm1132 = vcmp.eq.s32.totalorder %v34, %v1130
    %vm1133 = vcmp.eq.s32.totalorder %v1118, 1
    %vm1134 = vmand %vm1133, %vm1131
    %vm1135 = vmand %vm1133, %vm1132
    %vm1136 = vmor %vm1127, %vm1134
    %vm1137 = vmor %vm1128, %vm1135
    %s1138 = sadd.s32 %s959, 12
    %v1139 = vstv %s1138
    %vm1140 = vcmp.eq.s32.totalorder %v31, %v1139
    %vm1141 = vcmp.eq.s32.totalorder %v34, %v1139
    %vm1142 = vcmp.eq.s32.totalorder %v1120, 1
    %vm1143 = vmand %vm1142, %vm1140
    %vm1144 = vmand %vm1142, %vm1141
    %vm1145 = vmor %vm1136, %vm1143
    %vm1146 = vmor %vm1137, %vm1144
    %v1147 = vsel %vm1123, 1, 0
    %vm1148 = vcmp.eq.s32.totalorder %v1147, 1
    %vm1149 = vmand %vm1148, %vm1145
    %vm1150 = vmand %vm1148, %vm1146
    %v1151 = vsel %vm1149, -1.0, %v1106
    %v1152 = vsel %vm1150, -1.0, %v1107
    %s1153 = sld [smem:[#allocation3 + $0xc]]
    %s1154 = sld [smem:[#allocation3 + $0xd]]
    %s1155 = sld [smem:[#allocation3 + $0xe]]
    %s1156 = sld [smem:[#allocation3 + $0xf]]
    %v1157 = vrcp.pop 8.0
    %s1158 = vtos %v1157
    %s1159 = smul.f32 %s1153, %s1158
    %v1160 = vrcp.pop 8.0
    %s1161 = vtos %v1160
    %s1162 = smul.f32 %s1154, %s1161
    %s1163 = scvt.f32.s32.to.zero.pseudo %s1159
    %s1164 = scvt.f32.s32.to.zero.pseudo %s1162
    %s1165 = scvt.s32.f32 %s1163
    %s1166 = ssub.f32 %s1159, %s1165
    %s1167 = scvt.s32.f32 %s1164
    %s1168 = ssub.f32 %s1162, %s1167
    %v1169 = vrcp.pop 8.0
    %s1170 = vtos %v1169
    %s1171 = smul.f32 %s1155, %s1170
    %v1172 = vrcp.pop 8.0
    %s1173 = vtos %v1172
    %s1174 = smul.f32 %s1156, %s1173
    %s1175 = smul.u32 %s1163, 4
    %s1176 = sadd.s32 %s1175, %s1164
    %s1177 = smul.u32 %s1176, 18
    %s1178 = sadd.s32 %s1177, 5
    %v1179 = vstv %s1178
    %vm1180 = vcmp.eq.s32.totalorder %v31, %v1179
    %v1181 = vsel %vm1180, %v938, 0.0
    %1182 = vadd.xlane.f32.xlu0 %v1181
    %v1183 = vpop.xlane.xlu0 %1182
    %v1184 = vrot.slane %v1183, 4
    %v1185 = vadd.f32 %v1183, %v1184
    %v1186 = vrot.slane %v1185, 2
    %v1187 = vadd.f32 %v1185, %v1186
    %v1188 = vrot.slane %v1187, 1
    %v1189 = vadd.f32 %v1187, %v1188
    %vm1190 = vcmp.eq.f32.partialorder %v1189, 1.0
    %s1191 = sadd.s32 %s1177, 11
    %v1192 = vstv %s1191
    %vm1193 = vcmp.eq.s32.totalorder %v31, %v1192
    %v1194 = vsel %vm1193, %v938, 0.0
    %1195 = vadd.xlane.f32.xlu0 %v1194
    %v1196 = vpop.xlane.xlu0 %1195
    %v1197 = vrot.slane %v1196, 4
    %v1198 = vadd.f32 %v1196, %v1197
    %v1199 = vrot.slane %v1198, 2
    %v1200 = vadd.f32 %v1198, %v1199
    %v1201 = vrot.slane %v1200, 1
    %v1202 = vadd.f32 %v1200, %v1201
    %vm1203 = vcmp.eq.f32.partialorder %v1202, 1.0
    %s1204 = sadd.s32 %s1177, 17
    %v1205 = vstv %s1204
    %vm1206 = vcmp.eq.s32.totalorder %v31, %v1205
    %v1207 = vsel %vm1206, %v938, 0.0
    %1208 = vadd.xlane.f32.xlu0 %v1207
    %v1209 = vpop.xlane.xlu0 %1208
    %v1210 = vrot.slane %v1209, 4
    %v1211 = vadd.f32 %v1209, %v1210
    %v1212 = vrot.slane %v1211, 2
    %v1213 = vadd.f32 %v1211, %v1212
    %v1214 = vrot.slane %v1213, 1
    %v1215 = vadd.f32 %v1213, %v1214
    %vm1216 = vcmp.eq.f32.partialorder %v1215, 1.0
    %s1217 = smin.f32 %s1171, 1.5
    %s1218 = smin.f32 %s1174, 1.5
    %s1219 = smul.f32 %s1217, %s1218
    %s1220 = smul.f32 %s1171, %s1174
    %s1221 = sadd.f32 %s1220, 2.25
    %s1222 = ssub.f32 %s1221, %s1219
    %v1223 = vstv %s1222
    %v1224 = vrcp.pop %v1223
    %s1225 = vtos %v1224
    %s1226 = smul.f32 %s1219, %s1225
    %v1227 = vstv %s1226
    %v1228 = vsel %vm1190, 0.0, %v1227
    %s1229 = smin.f32 %s1171, 2.0
    %s1230 = smin.f32 %s1174, 3.0
    %s1231 = smul.f32 %s1229, %s1230
    %s1232 = sadd.f32 %s1220, 6.0
    %s1233 = ssub.f32 %s1232, %s1231
    %v1234 = vstv %s1233
    %v1235 = vrcp.pop %v1234
    %s1236 = vtos %v1235
    %s1237 = smul.f32 %s1231, %s1236
    %v1238 = vstv %s1237
    %v1239 = vsel %vm1203, 0.0, %v1238
    %s1240 = smin.f32 %s1171, 3.5
    %s1241 = smin.f32 %s1174, 2.5
    %s1242 = smul.f32 %s1240, %s1241
    %s1243 = sadd.f32 %s1220, 8.75
    %s1244 = ssub.f32 %s1243, %s1242
    %v1245 = vstv %s1244
    %v1246 = vrcp.pop %v1245
    %s1247 = vtos %v1246
    %s1248 = smul.f32 %s1242, %s1247
    %v1249 = vstv %s1248
    %v1250 = vsel %vm1216, 0.0, %v1249
    %v1251 = vmax.f32 %v1228, %v1239
    %v1252 = vmax.f32 %v1251, %v1250
    %vm1253 = vcmp.eq.f32.partialorder %v1239, %v1252
    %v1254 = vsel %vm1253, 1, 2
    %vm1255 = vcmp.eq.f32.partialorder %v1228, %v1252
    %v1256 = vsel %vm1255, 0, %v1254
    %vm1257 = vcmp.ge.f32.partialorder %v1252, 0.4
    %p1258 = scmp.gt.s32.totalorder %s25, 3
    %s1259 = scalar_select %p1258, 1, 0
    %v1260 = vstv %s1259
    %vm1261 = vcmp.eq.s32.totalorder %v1260, 1
    %vm1262 = vmand %vm1257, %vm1261
    %vm1263 = vcmp.eq.s32.totalorder %v1256, 1
    %v1264 = vsel %vm1263, 2.0, 1.5
    %v1265 = vsel %vm1263, 3.0, 1.5
    %vm1266 = vcmp.eq.s32.totalorder %v1256, 2
    %v1267 = vsel %vm1266, 3.5, %v1264
    %v1268 = vsel %vm1266, 2.5, %v1265
    %v1269 = vstv %s1171
    %v1270 = vrcp.pop %v1267
    %v1271 = vmul.f32 %v1269, %v1270
    %v1272 = vadd.f32 %v1271, 1e-06
    %v1273 = vlog2.pop %v1272
    %v1274 = vmul.f32 %v1273, 0.6931472
    %v1275 = vstv %s1174
    %v1276 = vrcp.pop %v1268
    %v1277 = vmul.f32 %v1275, %v1276
    %v1278 = vadd.f32 %v1277, 1e-06
    %v1279 = vlog2.pop %v1278
    %v1280 = vmul.f32 %v1279, 0.6931472
    %v1281 = vmul.u32 %v1256, 6
    %v1282 = vstv %s1177
    %v1283 = vadd.s32 %v1282, %v1281
    %v1284 = vsub.s32 %v31, %v1283
    %vm1285 = vcmp.eq.s32.totalorder %v1284, 1
    %vm1286 = vcmp.eq.s32.totalorder %v1284, 2
    %vm1287 = vcmp.eq.s32.totalorder %v1284, 3
    %vm1288 = vcmp.eq.s32.totalorder %v1284, 4
    %v1289 = vsel %vm1288, %v1280, 1.0
    %v1290 = vsel %vm1287, %v1274, %v1289
    %v1291 = vstv %s1168
    %v1292 = vsel %vm1286, %v1291, %v1290
    %v1293 = vstv %s1166
    %v1294 = vsel %vm1285, %v1293, %v1292
    %vm1295 = vcmp.ge.s32.totalorder %v1284, 0
    %v1296 = vsel %vm1262, 1, 0
    %vm1297 = vcmp.eq.s32.totalorder %v1296, 1
    %vm1298 = vmand %vm1297, %vm1295
    %vm1299 = vcmp.lt.s32.totalorder %v1284, 6
    %vm1300 = vmand %vm1298, %vm1299
    %v1301 = vsel %vm1300, %v1294, %v938
    %vm1302 = vcmp.gt.f32.partialorder %v1228, 0.5
    %vm1303 = vcmp.ne.f32.partialorder %v1228, %v1252
    %vm1304 = vmand %vm1302, %vm1303
    %vm1305 = vcmp.gt.f32.partialorder %v1239, 0.5
    %vm1306 = vcmp.ne.f32.partialorder %v1239, %v1252
    %vm1307 = vmand %vm1305, %vm1306
    %vm1308 = vcmp.gt.f32.partialorder %v1250, 0.5
    %vm1309 = vcmp.ne.f32.partialorder %v1250, %v1252
    %vm1310 = vmand %vm1308, %vm1309
    %v1311 = vsel %vm1304, 1, 0
    %v1312 = vsel %vm1307, 1, 0
    %v1313 = vadd.s32 %v1311, %v1312
    %v1314 = vsel %vm1310, 1, 0
    %v1315 = vadd.s32 %v1313, %v1314
    %vm1316 = vcmp.ge.s32.totalorder %v1315, 2
    %vm1317 = vmand %vm1262, %vm1316
    %vm1318 = vcmp.eq.s32.totalorder %v31, %v1282
    %vm1319 = vcmp.eq.s32.totalorder %v1311, 1
    %vm1320 = vmand %vm1319, %vm1318
    %s1321 = sadd.s32 %s1177, 6
    %v1322 = vstv %s1321
    %vm1323 = vcmp.eq.s32.totalorder %v31, %v1322
    %vm1324 = vcmp.eq.s32.totalorder %v1312, 1
    %vm1325 = vmand %vm1324, %vm1323
    %vm1326 = vmor %vm1320, %vm1325
    %s1327 = sadd.s32 %s1177, 12
    %v1328 = vstv %s1327
    %vm1329 = vcmp.eq.s32.totalorder %v31, %v1328
    %vm1330 = vcmp.eq.s32.totalorder %v1314, 1
    %vm1331 = vmand %vm1330, %vm1329
    %vm1332 = vmor %vm1326, %vm1331
    %v1333 = vsel %vm1317, 1, 0
    %vm1334 = vcmp.eq.s32.totalorder %v1333, 1
    %vm1335 = vmand %vm1334, %vm1332
    %v1336 = vsel %vm1335, -1.0, %v1301
    %v1337 = vrcp.pop 4.0
    %s1338 = vtos %v1337
    %s1339 = smul.f32 %s1153, %s1338
    %v1340 = vrcp.pop 4.0
    %s1341 = vtos %v1340
    %s1342 = smul.f32 %s1154, %s1341
    %s1343 = scvt.f32.s32.to.zero.pseudo %s1339
    %s1344 = scvt.f32.s32.to.zero.pseudo %s1342
    %s1345 = scvt.s32.f32 %s1343
    %s1346 = ssub.f32 %s1339, %s1345
    %s1347 = scvt.s32.f32 %s1344
    %s1348 = ssub.f32 %s1342, %s1347
    %v1349 = vrcp.pop 4.0
    %s1350 = vtos %v1349
    %s1351 = smul.f32 %s1155, %s1350
    %v1352 = vrcp.pop 4.0
    %s1353 = vtos %v1352
    %s1354 = smul.f32 %s1156, %s1353
    %s1355 = smul.u32 %s1343, 8
    %s1356 = sadd.s32 %s1355, %s1344
    %s1357 = smul.u32 %s1356, 18
    %s1358 = sadd.s32 %s1357, 5
    %v1359 = vstv %s1358
    %vm1360 = vcmp.eq.s32.totalorder %v31, %v1359
    %vm1361 = vcmp.eq.s32.totalorder %v34, %v1359
    %v1362 = vsel %vm1360, %v1151, 0.0
    %v1363 = vsel %vm1361, %v1152, 0.0
    %1364 = vadd.xlane.f32.xlu0 %v1362
    %v1365 = vpop.xlane.xlu0 %1364
    %1366 = vadd.xlane.f32.xlu0 %v1363
    %v1367 = vpop.xlane.xlu0 %1366
    %v1368 = vadd.f32 %v1365, %v1367
    %v1369 = vrot.slane %v1368, 4
    %v1370 = vadd.f32 %v1368, %v1369
    %v1371 = vrot.slane %v1370, 2
    %v1372 = vadd.f32 %v1370, %v1371
    %v1373 = vrot.slane %v1372, 1
    %v1374 = vadd.f32 %v1372, %v1373
    %vm1375 = vcmp.eq.f32.partialorder %v1374, 1.0
    %s1376 = sadd.s32 %s1357, 11
    %v1377 = vstv %s1376
    %vm1378 = vcmp.eq.s32.totalorder %v31, %v1377
    %vm1379 = vcmp.eq.s32.totalorder %v34, %v1377
    %v1380 = vsel %vm1378, %v1151, 0.0
    %v1381 = vsel %vm1379, %v1152, 0.0
    %1382 = vadd.xlane.f32.xlu0 %v1380
    %v1383 = vpop.xlane.xlu0 %1382
    %1384 = vadd.xlane.f32.xlu0 %v1381
    %v1385 = vpop.xlane.xlu0 %1384
    %v1386 = vadd.f32 %v1383, %v1385
    %v1387 = vrot.slane %v1386, 4
    %v1388 = vadd.f32 %v1386, %v1387
    %v1389 = vrot.slane %v1388, 2
    %v1390 = vadd.f32 %v1388, %v1389
    %v1391 = vrot.slane %v1390, 1
    %v1392 = vadd.f32 %v1390, %v1391
    %vm1393 = vcmp.eq.f32.partialorder %v1392, 1.0
    %s1394 = sadd.s32 %s1357, 17
    %v1395 = vstv %s1394
    %vm1396 = vcmp.eq.s32.totalorder %v31, %v1395
    %vm1397 = vcmp.eq.s32.totalorder %v34, %v1395
    %v1398 = vsel %vm1396, %v1151, 0.0
    %v1399 = vsel %vm1397, %v1152, 0.0
    %1400 = vadd.xlane.f32.xlu0 %v1398
    %v1401 = vpop.xlane.xlu0 %1400
    %1402 = vadd.xlane.f32.xlu0 %v1399
    %v1403 = vpop.xlane.xlu0 %1402
    %v1404 = vadd.f32 %v1401, %v1403
    %v1405 = vrot.slane %v1404, 4
    %v1406 = vadd.f32 %v1404, %v1405
    %v1407 = vrot.slane %v1406, 2
    %v1408 = vadd.f32 %v1406, %v1407
    %v1409 = vrot.slane %v1408, 1
    %v1410 = vadd.f32 %v1408, %v1409
    %vm1411 = vcmp.eq.f32.partialorder %v1410, 1.0
    %s1412 = smin.f32 %s1351, 0.8
    %s1413 = smin.f32 %s1354, 0.8
    %s1414 = smul.f32 %s1412, %s1413
    %s1415 = smul.f32 %s1351, %s1354
    %s1416 = sadd.f32 %s1415, 0.64
    %s1417 = ssub.f32 %s1416, %s1414
    %v1418 = vstv %s1417
    %v1419 = vrcp.pop %v1418
    %s1420 = vtos %v1419
    %s1421 = smul.f32 %s1414, %s1420
    %v1422 = vstv %s1421
    %v1423 = vsel %vm1375, 0.0, %v1422
    %s1424 = smin.f32 %s1351, 1.2
    %s1425 = smin.f32 %s1354, 2.0
    %s1426 = smul.f32 %s1424, %s1425
    %s1427 = sadd.f32 %s1415, 2.4
    %s1428 = ssub.f32 %s1427, %s1426
    %v1429 = vstv %s1428
    %v1430 = vrcp.pop %v1429
    %s1431 = vtos %v1430
    %s1432 = smul.f32 %s1426, %s1431
    %v1433 = vstv %s1432
    %v1434 = vsel %vm1393, 0.0, %v1433
    %s1435 = smin.f32 %s1351, 2.0
    %s1436 = smin.f32 %s1354, 1.2
    %s1437 = smul.f32 %s1435, %s1436
    %s1438 = ssub.f32 %s1427, %s1437
    %v1439 = vstv %s1438
    %v1440 = vrcp.pop %v1439
    %s1441 = vtos %v1440
    %s1442 = smul.f32 %s1437, %s1441
    %v1443 = vstv %s1442
    %v1444 = vsel %vm1411, 0.0, %v1443
    %v1445 = vmax.f32 %v1423, %v1434
    %v1446 = vmax.f32 %v1445, %v1444
    %vm1447 = vcmp.eq.f32.partialorder %v1434, %v1446
    %v1448 = vsel %vm1447, 1, 2
    %vm1449 = vcmp.eq.f32.partialorder %v1423, %v1446
    %v1450 = vsel %vm1449, 0, %v1448
    %vm1451 = vcmp.ge.f32.partialorder %v1446, 0.4
    %vm1452 = vmand %vm1451, %vm1261
    %vm1453 = vcmp.eq.s32.totalorder %v1450, 1
    %v1454 = vsel %vm1453, 1.2, 0.8
    %v1455 = vsel %vm1453, 2.0, 0.8
    %vm1456 = vcmp.eq.s32.totalorder %v1450, 2
    %v1457 = vsel %vm1456, 2.0, %v1454
    %v1458 = vsel %vm1456, 1.2, %v1455
    %v1459 = vstv %s1351
    %v1460 = vrcp.pop %v1457
    %v1461 = vmul.f32 %v1459, %v1460
    %v1462 = vadd.f32 %v1461, 1e-06
    %v1463 = vlog2.pop %v1462
    %v1464 = vmul.f32 %v1463, 0.6931472
    %v1465 = vstv %s1354
    %v1466 = vrcp.pop %v1458
    %v1467 = vmul.f32 %v1465, %v1466
    %v1468 = vadd.f32 %v1467, 1e-06
    %v1469 = vlog2.pop %v1468
    %v1470 = vmul.f32 %v1469, 0.6931472
    %v1471 = vmul.u32 %v1450, 6
    %v1472 = vstv %s1357
    %v1473 = vadd.s32 %v1472, %v1471
    %v1474 = vsub.s32 %v31, %v1473
    %v1475 = vsub.s32 %v34, %v1473
    %vm1476 = vcmp.eq.s32.totalorder %v1474, 1
    %vm1477 = vcmp.eq.s32.totalorder %v1475, 1
    %vm1478 = vcmp.eq.s32.totalorder %v1474, 2
    %vm1479 = vcmp.eq.s32.totalorder %v1475, 2
    %vm1480 = vcmp.eq.s32.totalorder %v1474, 3
    %vm1481 = vcmp.eq.s32.totalorder %v1475, 3
    %vm1482 = vcmp.eq.s32.totalorder %v1474, 4
    %vm1483 = vcmp.eq.s32.totalorder %v1475, 4
    %v1484 = vsel %vm1482, %v1470, 1.0
    %v1485 = vsel %vm1483, %v1470, 1.0
    %v1486 = vsel %vm1480, %v1464, %v1484
    %v1487 = vsel %vm1481, %v1464, %v1485
    %v1488 = vstv %s1348
    %v1489 = vsel %vm1478, %v1488, %v1486
    %v1490 = vsel %vm1479, %v1488, %v1487
    %v1491 = vstv %s1346
    %v1492 = vsel %vm1476, %v1491, %v1489
    %v1493 = vsel %vm1477, %v1491, %v1490
    %vm1494 = vcmp.ge.s32.totalorder %v1474, 0
    %vm1495 = vcmp.ge.s32.totalorder %v1475, 0
    %v1496 = vsel %vm1452, 1, 0
    %vm1497 = vcmp.eq.s32.totalorder %v1496, 1
    %vm1498 = vmand %vm1497, %vm1494
    %vm1499 = vmand %vm1497, %vm1495
    %vm1500 = vcmp.lt.s32.totalorder %v1474, 6
    %vm1501 = vcmp.lt.s32.totalorder %v1475, 6
    %vm1502 = vmand %vm1498, %vm1500
    %vm1503 = vmand %vm1499, %vm1501
    %v1504 = vsel %vm1502, %v1492, %v1151
    %v1505 = vsel %vm1503, %v1493, %v1152
    %vm1506 = vcmp.gt.f32.partialorder %v1423, 0.5
    %vm1507 = vcmp.ne.f32.partialorder %v1423, %v1446
    %vm1508 = vmand %vm1506, %vm1507
    %vm1509 = vcmp.gt.f32.partialorder %v1434, 0.5
    %vm1510 = vcmp.ne.f32.partialorder %v1434, %v1446
    %vm1511 = vmand %vm1509, %vm1510
    %vm1512 = vcmp.gt.f32.partialorder %v1444, 0.5
    %vm1513 = vcmp.ne.f32.partialorder %v1444, %v1446
    %vm1514 = vmand %vm1512, %vm1513
    %v1515 = vsel %vm1508, 1, 0
    %v1516 = vsel %vm1511, 1, 0
    %v1517 = vadd.s32 %v1515, %v1516
    %v1518 = vsel %vm1514, 1, 0
    %v1519 = vadd.s32 %v1517, %v1518
    %vm1520 = vcmp.ge.s32.totalorder %v1519, 2
    %vm1521 = vmand %vm1452, %vm1520
    %vm1522 = vcmp.eq.s32.totalorder %v31, %v1472
    %vm1523 = vcmp.eq.s32.totalorder %v34, %v1472
    %vm1524 = vcmp.eq.s32.totalorder %v1515, 1
    %vm1525 = vmand %vm1524, %vm1522
    %vm1526 = vmand %vm1524, %vm1523
    %s1527 = sadd.s32 %s1357, 6
    %v1528 = vstv %s1527
    %vm1529 = vcmp.eq.s32.totalorder %v31, %v1528
    %vm1530 = vcmp.eq.s32.totalorder %v34, %v1528
    %vm1531 = vcmp.eq.s32.totalorder %v1516, 1
    %vm1532 = vmand %vm1531, %vm1529
    %vm1533 = vmand %vm1531, %vm1530
    %vm1534 = vmor %vm1525, %vm1532
    %vm1535 = vmor %vm1526, %vm1533
    %s1536 = sadd.s32 %s1357, 12
    %v1537 = vstv %s1536
    %vm1538 = vcmp.eq.s32.totalorder %v31, %v1537
    %vm1539 = vcmp.eq.s32.totalorder %v34, %v1537
    %vm1540 = vcmp.eq.s32.totalorder %v1518, 1
    %vm1541 = vmand %vm1540, %vm1538
    %vm1542 = vmand %vm1540, %vm1539
    %vm1543 = vmor %vm1534, %vm1541
    %vm1544 = vmor %vm1535, %vm1542
    %v1545 = vsel %vm1521, 1, 0
    %vm1546 = vcmp.eq.s32.totalorder %v1545, 1
    %vm1547 = vmand %vm1546, %vm1543
    %vm1548 = vmand %vm1546, %vm1544
    %v1549 = vsel %vm1547, -1.0, %v1504
    %v1550 = vsel %vm1548, -1.0, %v1505
    %s1551 = sld [smem:[#allocation3 + $0x10]]
    %s1552 = sld [smem:[#allocation3 + $0x11]]
    %s1553 = sld [smem:[#allocation3 + $0x12]]
    %s1554 = sld [smem:[#allocation3 + $0x13]]
    %v1555 = vrcp.pop 8.0
    %s1556 = vtos %v1555
    %s1557 = smul.f32 %s1551, %s1556
    %v1558 = vrcp.pop 8.0
    %s1559 = vtos %v1558
    %s1560 = smul.f32 %s1552, %s1559
    %s1561 = scvt.f32.s32.to.zero.pseudo %s1557
    %s1562 = scvt.f32.s32.to.zero.pseudo %s1560
    %s1563 = scvt.s32.f32 %s1561
    %s1564 = ssub.f32 %s1557, %s1563
    %s1565 = scvt.s32.f32 %s1562
    %s1566 = ssub.f32 %s1560, %s1565
    %v1567 = vrcp.pop 8.0
    %s1568 = vtos %v1567
    %s1569 = smul.f32 %s1553, %s1568
    %v1570 = vrcp.pop 8.0
    %s1571 = vtos %v1570
    %s1572 = smul.f32 %s1554, %s1571
    %s1573 = smul.u32 %s1561, 4
    %s1574 = sadd.s32 %s1573, %s1562
    %s1575 = smul.u32 %s1574, 18
    %s1576 = sadd.s32 %s1575, 5
    %v1577 = vstv %s1576
    %vm1578 = vcmp.eq.s32.totalorder %v31, %v1577
    %v1579 = vsel %vm1578, %v1336, 0.0
    %1580 = vadd.xlane.f32.xlu0 %v1579
    %v1581 = vpop.xlane.xlu0 %1580
    %v1582 = vrot.slane %v1581, 4
    %v1583 = vadd.f32 %v1581, %v1582
    %v1584 = vrot.slane %v1583, 2
    %v1585 = vadd.f32 %v1583, %v1584
    %v1586 = vrot.slane %v1585, 1
    %v1587 = vadd.f32 %v1585, %v1586
    %vm1588 = vcmp.eq.f32.partialorder %v1587, 1.0
    %s1589 = sadd.s32 %s1575, 11
    %v1590 = vstv %s1589
    %vm1591 = vcmp.eq.s32.totalorder %v31, %v1590
    %v1592 = vsel %vm1591, %v1336, 0.0
    %1593 = vadd.xlane.f32.xlu0 %v1592
    %v1594 = vpop.xlane.xlu0 %1593
    %v1595 = vrot.slane %v1594, 4
    %v1596 = vadd.f32 %v1594, %v1595
    %v1597 = vrot.slane %v1596, 2
    %v1598 = vadd.f32 %v1596, %v1597
    %v1599 = vrot.slane %v1598, 1
    %v1600 = vadd.f32 %v1598, %v1599
    %vm1601 = vcmp.eq.f32.partialorder %v1600, 1.0
    %s1602 = sadd.s32 %s1575, 17
    %v1603 = vstv %s1602
    %vm1604 = vcmp.eq.s32.totalorder %v31, %v1603
    %v1605 = vsel %vm1604, %v1336, 0.0
    %1606 = vadd.xlane.f32.xlu0 %v1605
    %v1607 = vpop.xlane.xlu0 %1606
    %v1608 = vrot.slane %v1607, 4
    %v1609 = vadd.f32 %v1607, %v1608
    %v1610 = vrot.slane %v1609, 2
    %v1611 = vadd.f32 %v1609, %v1610
    %v1612 = vrot.slane %v1611, 1
    %v1613 = vadd.f32 %v1611, %v1612
    %vm1614 = vcmp.eq.f32.partialorder %v1613, 1.0
    %s1615 = smin.f32 %s1569, 1.5
    %s1616 = smin.f32 %s1572, 1.5
    %s1617 = smul.f32 %s1615, %s1616
    %s1618 = smul.f32 %s1569, %s1572
    %s1619 = sadd.f32 %s1618, 2.25
    %s1620 = ssub.f32 %s1619, %s1617
    %v1621 = vstv %s1620
    %v1622 = vrcp.pop %v1621
    %s1623 = vtos %v1622
    %s1624 = smul.f32 %s1617, %s1623
    %v1625 = vstv %s1624
    %v1626 = vsel %vm1588, 0.0, %v1625
    %s1627 = smin.f32 %s1569, 2.0
    %s1628 = smin.f32 %s1572, 3.0
    %s1629 = smul.f32 %s1627, %s1628
    %s1630 = sadd.f32 %s1618, 6.0
    %s1631 = ssub.f32 %s1630, %s1629
    %v1632 = vstv %s1631
    %v1633 = vrcp.pop %v1632
    %s1634 = vtos %v1633
    %s1635 = smul.f32 %s1629, %s1634
    %v1636 = vstv %s1635
    %v1637 = vsel %vm1601, 0.0, %v1636
    %s1638 = smin.f32 %s1569, 3.5
    %s1639 = smin.f32 %s1572, 2.5
    %s1640 = smul.f32 %s1638, %s1639
    %s1641 = sadd.f32 %s1618, 8.75
    %s1642 = ssub.f32 %s1641, %s1640
    %v1643 = vstv %s1642
    %v1644 = vrcp.pop %v1643
    %s1645 = vtos %v1644
    %s1646 = smul.f32 %s1640, %s1645
    %v1647 = vstv %s1646
    %v1648 = vsel %vm1614, 0.0, %v1647
    %v1649 = vmax.f32 %v1626, %v1637
    %v1650 = vmax.f32 %v1649, %v1648
    %vm1651 = vcmp.eq.f32.partialorder %v1637, %v1650
    %v1652 = vsel %vm1651, 1, 2
    %vm1653 = vcmp.eq.f32.partialorder %v1626, %v1650
    %v1654 = vsel %vm1653, 0, %v1652
    %vm1655 = vcmp.ge.f32.partialorder %v1650, 0.4
    %p1656 = scmp.gt.s32.totalorder %s25, 4
    %s1657 = scalar_select %p1656, 1, 0
    %v1658 = vstv %s1657
    %vm1659 = vcmp.eq.s32.totalorder %v1658, 1
    %vm1660 = vmand %vm1655, %vm1659
    %vm1661 = vcmp.eq.s32.totalorder %v1654, 1
    %v1662 = vsel %vm1661, 2.0, 1.5
    %v1663 = vsel %vm1661, 3.0, 1.5
    %vm1664 = vcmp.eq.s32.totalorder %v1654, 2
    %v1665 = vsel %vm1664, 3.5, %v1662
    %v1666 = vsel %vm1664, 2.5, %v1663
    %v1667 = vstv %s1569
    %v1668 = vrcp.pop %v1665
    %v1669 = vmul.f32 %v1667, %v1668
    %v1670 = vadd.f32 %v1669, 1e-06
    %v1671 = vlog2.pop %v1670
    %v1672 = vmul.f32 %v1671, 0.6931472
    %v1673 = vstv %s1572
    %v1674 = vrcp.pop %v1666
    %v1675 = vmul.f32 %v1673, %v1674
    %v1676 = vadd.f32 %v1675, 1e-06
    %v1677 = vlog2.pop %v1676
    %v1678 = vmul.f32 %v1677, 0.6931472
    %v1679 = vmul.u32 %v1654, 6
    %v1680 = vstv %s1575
    %v1681 = vadd.s32 %v1680, %v1679
    %v1682 = vsub.s32 %v31, %v1681
    %vm1683 = vcmp.eq.s32.totalorder %v1682, 1
    %vm1684 = vcmp.eq.s32.totalorder %v1682, 2
    %vm1685 = vcmp.eq.s32.totalorder %v1682, 3
    %vm1686 = vcmp.eq.s32.totalorder %v1682, 4
    %v1687 = vsel %vm1686, %v1678, 1.0
    %v1688 = vsel %vm1685, %v1672, %v1687
    %v1689 = vstv %s1566
    %v1690 = vsel %vm1684, %v1689, %v1688
    %v1691 = vstv %s1564
    %v1692 = vsel %vm1683, %v1691, %v1690
    %vm1693 = vcmp.ge.s32.totalorder %v1682, 0
    %v1694 = vsel %vm1660, 1, 0
    %vm1695 = vcmp.eq.s32.totalorder %v1694, 1
    %vm1696 = vmand %vm1695, %vm1693
    %vm1697 = vcmp.lt.s32.totalorder %v1682, 6
    %vm1698 = vmand %vm1696, %vm1697
    %v1699 = vsel %vm1698, %v1692, %v1336
    %vm1700 = vcmp.gt.f32.partialorder %v1626, 0.5
    %vm1701 = vcmp.ne.f32.partialorder %v1626, %v1650
    %vm1702 = vmand %vm1700, %vm1701
    %vm1703 = vcmp.gt.f32.partialorder %v1637, 0.5
    %vm1704 = vcmp.ne.f32.partialorder %v1637, %v1650
    %vm1705 = vmand %vm1703, %vm1704
    %vm1706 = vcmp.gt.f32.partialorder %v1648, 0.5
    %vm1707 = vcmp.ne.f32.partialorder %v1648, %v1650
    %vm1708 = vmand %vm1706, %vm1707
    %v1709 = vsel %vm1702, 1, 0
    %v1710 = vsel %vm1705, 1, 0
    %v1711 = vadd.s32 %v1709, %v1710
    %v1712 = vsel %vm1708, 1, 0
    %v1713 = vadd.s32 %v1711, %v1712
    %vm1714 = vcmp.ge.s32.totalorder %v1713, 2
    %vm1715 = vmand %vm1660, %vm1714
    %vm1716 = vcmp.eq.s32.totalorder %v31, %v1680
    %vm1717 = vcmp.eq.s32.totalorder %v1709, 1
    %vm1718 = vmand %vm1717, %vm1716
    %s1719 = sadd.s32 %s1575, 6
    %v1720 = vstv %s1719
    %vm1721 = vcmp.eq.s32.totalorder %v31, %v1720
    %vm1722 = vcmp.eq.s32.totalorder %v1710, 1
    %vm1723 = vmand %vm1722, %vm1721
    %vm1724 = vmor %vm1718, %vm1723
    %s1725 = sadd.s32 %s1575, 12
    %v1726 = vstv %s1725
    %vm1727 = vcmp.eq.s32.totalorder %v31, %v1726
    %vm1728 = vcmp.eq.s32.totalorder %v1712, 1
    %vm1729 = vmand %vm1728, %vm1727
    %vm1730 = vmor %vm1724, %vm1729
    %v1731 = vsel %vm1715, 1, 0
    %vm1732 = vcmp.eq.s32.totalorder %v1731, 1
    %vm1733 = vmand %vm1732, %vm1730
    %v1734 = vsel %vm1733, -1.0, %v1699
    %v1735 = vrcp.pop 4.0
    %s1736 = vtos %v1735
    %s1737 = smul.f32 %s1551, %s1736
    %v1738 = vrcp.pop 4.0
    %s1739 = vtos %v1738
    %s1740 = smul.f32 %s1552, %s1739
    %s1741 = scvt.f32.s32.to.zero.pseudo %s1737
    %s1742 = scvt.f32.s32.to.zero.pseudo %s1740
    %s1743 = scvt.s32.f32 %s1741
    %s1744 = ssub.f32 %s1737, %s1743
    %s1745 = scvt.s32.f32 %s1742
    %s1746 = ssub.f32 %s1740, %s1745
    %v1747 = vrcp.pop 4.0
    %s1748 = vtos %v1747
    %s1749 = smul.f32 %s1553, %s1748
    %v1750 = vrcp.pop 4.0
    %s1751 = vtos %v1750
    %s1752 = smul.f32 %s1554, %s1751
    %s1753 = smul.u32 %s1741, 8
    %s1754 = sadd.s32 %s1753, %s1742
    %s1755 = smul.u32 %s1754, 18
    %s1756 = sadd.s32 %s1755, 5
    %v1757 = vstv %s1756
    %vm1758 = vcmp.eq.s32.totalorder %v31, %v1757
    %vm1759 = vcmp.eq.s32.totalorder %v34, %v1757
    %v1760 = vsel %vm1758, %v1549, 0.0
    %v1761 = vsel %vm1759, %v1550, 0.0
    %1762 = vadd.xlane.f32.xlu0 %v1760
    %v1763 = vpop.xlane.xlu0 %1762
    %1764 = vadd.xlane.f32.xlu0 %v1761
    %v1765 = vpop.xlane.xlu0 %1764
    %v1766 = vadd.f32 %v1763, %v1765
    %v1767 = vrot.slane %v1766, 4
    %v1768 = vadd.f32 %v1766, %v1767
    %v1769 = vrot.slane %v1768, 2
    %v1770 = vadd.f32 %v1768, %v1769
    %v1771 = vrot.slane %v1770, 1
    %v1772 = vadd.f32 %v1770, %v1771
    %vm1773 = vcmp.eq.f32.partialorder %v1772, 1.0
    %s1774 = sadd.s32 %s1755, 11
    %v1775 = vstv %s1774
    %vm1776 = vcmp.eq.s32.totalorder %v31, %v1775
    %vm1777 = vcmp.eq.s32.totalorder %v34, %v1775
    %v1778 = vsel %vm1776, %v1549, 0.0
    %v1779 = vsel %vm1777, %v1550, 0.0
    %1780 = vadd.xlane.f32.xlu0 %v1778
    %v1781 = vpop.xlane.xlu0 %1780
    %1782 = vadd.xlane.f32.xlu0 %v1779
    %v1783 = vpop.xlane.xlu0 %1782
    %v1784 = vadd.f32 %v1781, %v1783
    %v1785 = vrot.slane %v1784, 4
    %v1786 = vadd.f32 %v1784, %v1785
    %v1787 = vrot.slane %v1786, 2
    %v1788 = vadd.f32 %v1786, %v1787
    %v1789 = vrot.slane %v1788, 1
    %v1790 = vadd.f32 %v1788, %v1789
    %vm1791 = vcmp.eq.f32.partialorder %v1790, 1.0
    %s1792 = sadd.s32 %s1755, 17
    %v1793 = vstv %s1792
    %vm1794 = vcmp.eq.s32.totalorder %v31, %v1793
    %vm1795 = vcmp.eq.s32.totalorder %v34, %v1793
    %v1796 = vsel %vm1794, %v1549, 0.0
    %v1797 = vsel %vm1795, %v1550, 0.0
    %1798 = vadd.xlane.f32.xlu0 %v1796
    %v1799 = vpop.xlane.xlu0 %1798
    %1800 = vadd.xlane.f32.xlu0 %v1797
    %v1801 = vpop.xlane.xlu0 %1800
    %v1802 = vadd.f32 %v1799, %v1801
    %v1803 = vrot.slane %v1802, 4
    %v1804 = vadd.f32 %v1802, %v1803
    %v1805 = vrot.slane %v1804, 2
    %v1806 = vadd.f32 %v1804, %v1805
    %v1807 = vrot.slane %v1806, 1
    %v1808 = vadd.f32 %v1806, %v1807
    %vm1809 = vcmp.eq.f32.partialorder %v1808, 1.0
    %s1810 = smin.f32 %s1749, 0.8
    %s1811 = smin.f32 %s1752, 0.8
    %s1812 = smul.f32 %s1810, %s1811
    %s1813 = smul.f32 %s1749, %s1752
    %s1814 = sadd.f32 %s1813, 0.64
    %s1815 = ssub.f32 %s1814, %s1812
    %v1816 = vstv %s1815
    %v1817 = vrcp.pop %v1816
    %s1818 = vtos %v1817
    %s1819 = smul.f32 %s1812, %s1818
    %v1820 = vstv %s1819
    %v1821 = vsel %vm1773, 0.0, %v1820
    %s1822 = smin.f32 %s1749, 1.2
    %s1823 = smin.f32 %s1752, 2.0
    %s1824 = smul.f32 %s1822, %s1823
    %s1825 = sadd.f32 %s1813, 2.4
    %s1826 = ssub.f32 %s1825, %s1824
    %v1827 = vstv %s1826
    %v1828 = vrcp.pop %v1827
    %s1829 = vtos %v1828
    %s1830 = smul.f32 %s1824, %s1829
    %v1831 = vstv %s1830
    %v1832 = vsel %vm1791, 0.0, %v1831
    %s1833 = smin.f32 %s1749, 2.0
    %s1834 = smin.f32 %s1752, 1.2
    %s1835 = smul.f32 %s1833, %s1834
    %s1836 = ssub.f32 %s1825, %s1835
    %v1837 = vstv %s1836
    %v1838 = vrcp.pop %v1837
    %s1839 = vtos %v1838
    %s1840 = smul.f32 %s1835, %s1839
    %v1841 = vstv %s1840
    %v1842 = vsel %vm1809, 0.0, %v1841
    %v1843 = vmax.f32 %v1821, %v1832
    %v1844 = vmax.f32 %v1843, %v1842
    %vm1845 = vcmp.eq.f32.partialorder %v1832, %v1844
    %v1846 = vsel %vm1845, 1, 2
    %vm1847 = vcmp.eq.f32.partialorder %v1821, %v1844
    %v1848 = vsel %vm1847, 0, %v1846
    %vm1849 = vcmp.ge.f32.partialorder %v1844, 0.4
    %vm1850 = vmand %vm1849, %vm1659
    %vm1851 = vcmp.eq.s32.totalorder %v1848, 1
    %v1852 = vsel %vm1851, 1.2, 0.8
    %v1853 = vsel %vm1851, 2.0, 0.8
    %vm1854 = vcmp.eq.s32.totalorder %v1848, 2
    %v1855 = vsel %vm1854, 2.0, %v1852
    %v1856 = vsel %vm1854, 1.2, %v1853
    %v1857 = vstv %s1749
    %v1858 = vrcp.pop %v1855
    %v1859 = vmul.f32 %v1857, %v1858
    %v1860 = vadd.f32 %v1859, 1e-06
    %v1861 = vlog2.pop %v1860
    %v1862 = vmul.f32 %v1861, 0.6931472
    %v1863 = vstv %s1752
    %v1864 = vrcp.pop %v1856
    %v1865 = vmul.f32 %v1863, %v1864
    %v1866 = vadd.f32 %v1865, 1e-06
    %v1867 = vlog2.pop %v1866
    %v1868 = vmul.f32 %v1867, 0.6931472
    %v1869 = vmul.u32 %v1848, 6
    %v1870 = vstv %s1755
    %v1871 = vadd.s32 %v1870, %v1869
    %v1872 = vsub.s32 %v31, %v1871
    %v1873 = vsub.s32 %v34, %v1871
    %vm1874 = vcmp.eq.s32.totalorder %v1872, 1
    %vm1875 = vcmp.eq.s32.totalorder %v1873, 1
    %vm1876 = vcmp.eq.s32.totalorder %v1872, 2
    %vm1877 = vcmp.eq.s32.totalorder %v1873, 2
    %vm1878 = vcmp.eq.s32.totalorder %v1872, 3
    %vm1879 = vcmp.eq.s32.totalorder %v1873, 3
    %vm1880 = vcmp.eq.s32.totalorder %v1872, 4
    %vm1881 = vcmp.eq.s32.totalorder %v1873, 4
    %v1882 = vsel %vm1880, %v1868, 1.0
    %v1883 = vsel %vm1881, %v1868, 1.0
    %v1884 = vsel %vm1878, %v1862, %v1882
    %v1885 = vsel %vm1879, %v1862, %v1883
    %v1886 = vstv %s1746
    %v1887 = vsel %vm1876, %v1886, %v1884
    %v1888 = vsel %vm1877, %v1886, %v1885
    %v1889 = vstv %s1744
    %v1890 = vsel %vm1874, %v1889, %v1887
    %v1891 = vsel %vm1875, %v1889, %v1888
    %vm1892 = vcmp.ge.s32.totalorder %v1872, 0
    %vm1893 = vcmp.ge.s32.totalorder %v1873, 0
    %v1894 = vsel %vm1850, 1, 0
    %vm1895 = vcmp.eq.s32.totalorder %v1894, 1
    %vm1896 = vmand %vm1895, %vm1892
    %vm1897 = vmand %vm1895, %vm1893
    %vm1898 = vcmp.lt.s32.totalorder %v1872, 6
    %vm1899 = vcmp.lt.s32.totalorder %v1873, 6
    %vm1900 = vmand %vm1896, %vm1898
    %vm1901 = vmand %vm1897, %vm1899
    %v1902 = vsel %vm1900, %v1890, %v1549
    %v1903 = vsel %vm1901, %v1891, %v1550
    %vm1904 = vcmp.gt.f32.partialorder %v1821, 0.5
    %vm1905 = vcmp.ne.f32.partialorder %v1821, %v1844
    %vm1906 = vmand %vm1904, %vm1905
    %vm1907 = vcmp.gt.f32.partialorder %v1832, 0.5
    %vm1908 = vcmp.ne.f32.partialorder %v1832, %v1844
    %vm1909 = vmand %vm1907, %vm1908
    %vm1910 = vcmp.gt.f32.partialorder %v1842, 0.5
    %vm1911 = vcmp.ne.f32.partialorder %v1842, %v1844
    %vm1912 = vmand %vm1910, %vm1911
    %v1913 = vsel %vm1906, 1, 0
    %v1914 = vsel %vm1909, 1, 0
    %v1915 = vadd.s32 %v1913, %v1914
    %v1916 = vsel %vm1912, 1, 0
    %v1917 = vadd.s32 %v1915, %v1916
    %vm1918 = vcmp.ge.s32.totalorder %v1917, 2
    %vm1919 = vmand %vm1850, %vm1918
    %vm1920 = vcmp.eq.s32.totalorder %v31, %v1870
    %vm1921 = vcmp.eq.s32.totalorder %v34, %v1870
    %vm1922 = vcmp.eq.s32.totalorder %v1913, 1
    %vm1923 = vmand %vm1922, %vm1920
    %vm1924 = vmand %vm1922, %vm1921
    %s1925 = sadd.s32 %s1755, 6
    %v1926 = vstv %s1925
    %vm1927 = vcmp.eq.s32.totalorder %v31, %v1926
    %vm1928 = vcmp.eq.s32.totalorder %v34, %v1926
    %vm1929 = vcmp.eq.s32.totalorder %v1914, 1
    %vm1930 = vmand %vm1929, %vm1927
    %vm1931 = vmand %vm1929, %vm1928
    %vm1932 = vmor %vm1923, %vm1930
    %vm1933 = vmor %vm1924, %vm1931
    %s1934 = sadd.s32 %s1755, 12
    %v1935 = vstv %s1934
    %vm1936 = vcmp.eq.s32.totalorder %v31, %v1935
    %vm1937 = vcmp.eq.s32.totalorder %v34, %v1935
    %vm1938 = vcmp.eq.s32.totalorder %v1916, 1
    %vm1939 = vmand %vm1938, %vm1936
    %vm1940 = vmand %vm1938, %vm1937
    %vm1941 = vmor %vm1932, %vm1939
    %vm1942 = vmor %vm1933, %vm1940
    %v1943 = vsel %vm1919, 1, 0
    %vm1944 = vcmp.eq.s32.totalorder %v1943, 1
    %vm1945 = vmand %vm1944, %vm1941
    %vm1946 = vmand %vm1944, %vm1942
    %v1947 = vsel %vm1945, -1.0, %v1902
    %v1948 = vsel %vm1946, -1.0, %v1903
    %s1949 = sld [smem:[#allocation3 + $0x14]]
    %s1950 = sld [smem:[#allocation3 + $0x15]]
    %s1951 = sld [smem:[#allocation3 + $0x16]]
    %s1952 = sld [smem:[#allocation3 + $0x17]]
    %v1953 = vrcp.pop 8.0
    %s1954 = vtos %v1953
    %s1955 = smul.f32 %s1949, %s1954
    %v1956 = vrcp.pop 8.0
    %s1957 = vtos %v1956
    %s1958 = smul.f32 %s1950, %s1957
    %s1959 = scvt.f32.s32.to.zero.pseudo %s1955
    %s1960 = scvt.f32.s32.to.zero.pseudo %s1958
    %s1961 = scvt.s32.f32 %s1959
    %s1962 = ssub.f32 %s1955, %s1961
    %s1963 = scvt.s32.f32 %s1960
    %s1964 = ssub.f32 %s1958, %s1963
    %v1965 = vrcp.pop 8.0
    %s1966 = vtos %v1965
    %s1967 = smul.f32 %s1951, %s1966
    %v1968 = vrcp.pop 8.0
    %s1969 = vtos %v1968
    %s1970 = smul.f32 %s1952, %s1969
    %s1971 = smul.u32 %s1959, 4
    %s1972 = sadd.s32 %s1971, %s1960
    %s1973 = smul.u32 %s1972, 18
    %s1974 = sadd.s32 %s1973, 5
    %v1975 = vstv %s1974
    %vm1976 = vcmp.eq.s32.totalorder %v31, %v1975
    %v1977 = vsel %vm1976, %v1734, 0.0
    %1978 = vadd.xlane.f32.xlu0 %v1977
    %v1979 = vpop.xlane.xlu0 %1978
    %v1980 = vrot.slane %v1979, 4
    %v1981 = vadd.f32 %v1979, %v1980
    %v1982 = vrot.slane %v1981, 2
    %v1983 = vadd.f32 %v1981, %v1982
    %v1984 = vrot.slane %v1983, 1
    %v1985 = vadd.f32 %v1983, %v1984
    %vm1986 = vcmp.eq.f32.partialorder %v1985, 1.0
    %s1987 = sadd.s32 %s1973, 11
    %v1988 = vstv %s1987
    %vm1989 = vcmp.eq.s32.totalorder %v31, %v1988
    %v1990 = vsel %vm1989, %v1734, 0.0
    %1991 = vadd.xlane.f32.xlu0 %v1990
    %v1992 = vpop.xlane.xlu0 %1991
    %v1993 = vrot.slane %v1992, 4
    %v1994 = vadd.f32 %v1992, %v1993
    %v1995 = vrot.slane %v1994, 2
    %v1996 = vadd.f32 %v1994, %v1995
    %v1997 = vrot.slane %v1996, 1
    %v1998 = vadd.f32 %v1996, %v1997
    %vm1999 = vcmp.eq.f32.partialorder %v1998, 1.0
    %s2000 = sadd.s32 %s1973, 17
    %v2001 = vstv %s2000
    %vm2002 = vcmp.eq.s32.totalorder %v31, %v2001
    %v2003 = vsel %vm2002, %v1734, 0.0
    %2004 = vadd.xlane.f32.xlu0 %v2003
    %v2005 = vpop.xlane.xlu0 %2004
    %v2006 = vrot.slane %v2005, 4
    %v2007 = vadd.f32 %v2005, %v2006
    %v2008 = vrot.slane %v2007, 2
    %v2009 = vadd.f32 %v2007, %v2008
    %v2010 = vrot.slane %v2009, 1
    %v2011 = vadd.f32 %v2009, %v2010
    %vm2012 = vcmp.eq.f32.partialorder %v2011, 1.0
    %s2013 = smin.f32 %s1967, 1.5
    %s2014 = smin.f32 %s1970, 1.5
    %s2015 = smul.f32 %s2013, %s2014
    %s2016 = smul.f32 %s1967, %s1970
    %s2017 = sadd.f32 %s2016, 2.25
    %s2018 = ssub.f32 %s2017, %s2015
    %v2019 = vstv %s2018
    %v2020 = vrcp.pop %v2019
    %s2021 = vtos %v2020
    %s2022 = smul.f32 %s2015, %s2021
    %v2023 = vstv %s2022
    %v2024 = vsel %vm1986, 0.0, %v2023
    %s2025 = smin.f32 %s1967, 2.0
    %s2026 = smin.f32 %s1970, 3.0
    %s2027 = smul.f32 %s2025, %s2026
    %s2028 = sadd.f32 %s2016, 6.0
    %s2029 = ssub.f32 %s2028, %s2027
    %v2030 = vstv %s2029
    %v2031 = vrcp.pop %v2030
    %s2032 = vtos %v2031
    %s2033 = smul.f32 %s2027, %s2032
    %v2034 = vstv %s2033
    %v2035 = vsel %vm1999, 0.0, %v2034
    %s2036 = smin.f32 %s1967, 3.5
    %s2037 = smin.f32 %s1970, 2.5
    %s2038 = smul.f32 %s2036, %s2037
    %s2039 = sadd.f32 %s2016, 8.75
    %s2040 = ssub.f32 %s2039, %s2038
    %v2041 = vstv %s2040
    %v2042 = vrcp.pop %v2041
    %s2043 = vtos %v2042
    %s2044 = smul.f32 %s2038, %s2043
    %v2045 = vstv %s2044
    %v2046 = vsel %vm2012, 0.0, %v2045
    %v2047 = vmax.f32 %v2024, %v2035
    %v2048 = vmax.f32 %v2047, %v2046
    %vm2049 = vcmp.eq.f32.partialorder %v2035, %v2048
    %v2050 = vsel %vm2049, 1, 2
    %vm2051 = vcmp.eq.f32.partialorder %v2024, %v2048
    %v2052 = vsel %vm2051, 0, %v2050
    %vm2053 = vcmp.ge.f32.partialorder %v2048, 0.4
    %p2054 = scmp.gt.s32.totalorder %s25, 5
    %s2055 = scalar_select %p2054, 1, 0
    %v2056 = vstv %s2055
    %vm2057 = vcmp.eq.s32.totalorder %v2056, 1
    %vm2058 = vmand %vm2053, %vm2057
    %vm2059 = vcmp.eq.s32.totalorder %v2052, 1
    %v2060 = vsel %vm2059, 2.0, 1.5
    %v2061 = vsel %vm2059, 3.0, 1.5
    %vm2062 = vcmp.eq.s32.totalorder %v2052, 2
    %v2063 = vsel %vm2062, 3.5, %v2060
    %v2064 = vsel %vm2062, 2.5, %v2061
    %v2065 = vstv %s1967
    %v2066 = vrcp.pop %v2063
    %v2067 = vmul.f32 %v2065, %v2066
    %v2068 = vadd.f32 %v2067, 1e-06
    %v2069 = vlog2.pop %v2068
    %v2070 = vmul.f32 %v2069, 0.6931472
    %v2071 = vstv %s1970
    %v2072 = vrcp.pop %v2064
    %v2073 = vmul.f32 %v2071, %v2072
    %v2074 = vadd.f32 %v2073, 1e-06
    %v2075 = vlog2.pop %v2074
    %v2076 = vmul.f32 %v2075, 0.6931472
    %v2077 = vmul.u32 %v2052, 6
    %v2078 = vstv %s1973
    %v2079 = vadd.s32 %v2078, %v2077
    %v2080 = vsub.s32 %v31, %v2079
    %vm2081 = vcmp.eq.s32.totalorder %v2080, 1
    %vm2082 = vcmp.eq.s32.totalorder %v2080, 2
    %vm2083 = vcmp.eq.s32.totalorder %v2080, 3
    %vm2084 = vcmp.eq.s32.totalorder %v2080, 4
    %v2085 = vsel %vm2084, %v2076, 1.0
    %v2086 = vsel %vm2083, %v2070, %v2085
    %v2087 = vstv %s1964
    %v2088 = vsel %vm2082, %v2087, %v2086
    %v2089 = vstv %s1962
    %v2090 = vsel %vm2081, %v2089, %v2088
    %vm2091 = vcmp.ge.s32.totalorder %v2080, 0
    %v2092 = vsel %vm2058, 1, 0
    %vm2093 = vcmp.eq.s32.totalorder %v2092, 1
    %vm2094 = vmand %vm2093, %vm2091
    %vm2095 = vcmp.lt.s32.totalorder %v2080, 6
    %vm2096 = vmand %vm2094, %vm2095
    %v2097 = vsel %vm2096, %v2090, %v1734
    %vm2098 = vcmp.gt.f32.partialorder %v2024, 0.5
    %vm2099 = vcmp.ne.f32.partialorder %v2024, %v2048
    %vm2100 = vmand %vm2098, %vm2099
    %vm2101 = vcmp.gt.f32.partialorder %v2035, 0.5
    %vm2102 = vcmp.ne.f32.partialorder %v2035, %v2048
    %vm2103 = vmand %vm2101, %vm2102
    %vm2104 = vcmp.gt.f32.partialorder %v2046, 0.5
    %vm2105 = vcmp.ne.f32.partialorder %v2046, %v2048
    %vm2106 = vmand %vm2104, %vm2105
    %v2107 = vsel %vm2100, 1, 0
    %v2108 = vsel %vm2103, 1, 0
    %v2109 = vadd.s32 %v2107, %v2108
    %v2110 = vsel %vm2106, 1, 0
    %v2111 = vadd.s32 %v2109, %v2110
    %vm2112 = vcmp.ge.s32.totalorder %v2111, 2
    %vm2113 = vmand %vm2058, %vm2112
    %vm2114 = vcmp.eq.s32.totalorder %v31, %v2078
    %vm2115 = vcmp.eq.s32.totalorder %v2107, 1
    %vm2116 = vmand %vm2115, %vm2114
    %s2117 = sadd.s32 %s1973, 6
    %v2118 = vstv %s2117
    %vm2119 = vcmp.eq.s32.totalorder %v31, %v2118
    %vm2120 = vcmp.eq.s32.totalorder %v2108, 1
    %vm2121 = vmand %vm2120, %vm2119
    %vm2122 = vmor %vm2116, %vm2121
    %s2123 = sadd.s32 %s1973, 12
    %v2124 = vstv %s2123
    %vm2125 = vcmp.eq.s32.totalorder %v31, %v2124
    %vm2126 = vcmp.eq.s32.totalorder %v2110, 1
    %vm2127 = vmand %vm2126, %vm2125
    %vm2128 = vmor %vm2122, %vm2127
    %v2129 = vsel %vm2113, 1, 0
    %vm2130 = vcmp.eq.s32.totalorder %v2129, 1
    %vm2131 = vmand %vm2130, %vm2128
    %v2132 = vsel %vm2131, -1.0, %v2097
    %v2133 = vrcp.pop 4.0
    %s2134 = vtos %v2133
    %s2135 = smul.f32 %s1949, %s2134
    %v2136 = vrcp.pop 4.0
    %s2137 = vtos %v2136
    %s2138 = smul.f32 %s1950, %s2137
    %s2139 = scvt.f32.s32.to.zero.pseudo %s2135
    %s2140 = scvt.f32.s32.to.zero.pseudo %s2138
    %s2141 = scvt.s32.f32 %s2139
    %s2142 = ssub.f32 %s2135, %s2141
    %s2143 = scvt.s32.f32 %s2140
    %s2144 = ssub.f32 %s2138, %s2143
    %v2145 = vrcp.pop 4.0
    %s2146 = vtos %v2145
    %s2147 = smul.f32 %s1951, %s2146
    %v2148 = vrcp.pop 4.0
    %s2149 = vtos %v2148
    %s2150 = smul.f32 %s1952, %s2149
    %s2151 = smul.u32 %s2139, 8
    %s2152 = sadd.s32 %s2151, %s2140
    %s2153 = smul.u32 %s2152, 18
    %s2154 = sadd.s32 %s2153, 5
    %v2155 = vstv %s2154
    %vm2156 = vcmp.eq.s32.totalorder %v31, %v2155
    %vm2157 = vcmp.eq.s32.totalorder %v34, %v2155
    %v2158 = vsel %vm2156, %v1947, 0.0
    %v2159 = vsel %vm2157, %v1948, 0.0
    %2160 = vadd.xlane.f32.xlu0 %v2158
    %v2161 = vpop.xlane.xlu0 %2160
    %2162 = vadd.xlane.f32.xlu0 %v2159
    %v2163 = vpop.xlane.xlu0 %2162
    %v2164 = vadd.f32 %v2161, %v2163
    %v2165 = vrot.slane %v2164, 4
    %v2166 = vadd.f32 %v2164, %v2165
    %v2167 = vrot.slane %v2166, 2
    %v2168 = vadd.f32 %v2166, %v2167
    %v2169 = vrot.slane %v2168, 1
    %v2170 = vadd.f32 %v2168, %v2169
    %vm2171 = vcmp.eq.f32.partialorder %v2170, 1.0
    %s2172 = sadd.s32 %s2153, 11
    %v2173 = vstv %s2172
    %vm2174 = vcmp.eq.s32.totalorder %v31, %v2173
    %vm2175 = vcmp.eq.s32.totalorder %v34, %v2173
    %v2176 = vsel %vm2174, %v1947, 0.0
    %v2177 = vsel %vm2175, %v1948, 0.0
    %2178 = vadd.xlane.f32.xlu0 %v2176
    %v2179 = vpop.xlane.xlu0 %2178
    %2180 = vadd.xlane.f32.xlu0 %v2177
    %v2181 = vpop.xlane.xlu0 %2180
    %v2182 = vadd.f32 %v2179, %v2181
    %v2183 = vrot.slane %v2182, 4
    %v2184 = vadd.f32 %v2182, %v2183
    %v2185 = vrot.slane %v2184, 2
    %v2186 = vadd.f32 %v2184, %v2185
    %v2187 = vrot.slane %v2186, 1
    %v2188 = vadd.f32 %v2186, %v2187
    %vm2189 = vcmp.eq.f32.partialorder %v2188, 1.0
    %s2190 = sadd.s32 %s2153, 17
    %v2191 = vstv %s2190
    %vm2192 = vcmp.eq.s32.totalorder %v31, %v2191
    %vm2193 = vcmp.eq.s32.totalorder %v34, %v2191
    %v2194 = vsel %vm2192, %v1947, 0.0
    %v2195 = vsel %vm2193, %v1948, 0.0
    %2196 = vadd.xlane.f32.xlu0 %v2194
    %v2197 = vpop.xlane.xlu0 %2196
    %2198 = vadd.xlane.f32.xlu0 %v2195
    %v2199 = vpop.xlane.xlu0 %2198
    %v2200 = vadd.f32 %v2197, %v2199
    %v2201 = vrot.slane %v2200, 4
    %v2202 = vadd.f32 %v2200, %v2201
    %v2203 = vrot.slane %v2202, 2
    %v2204 = vadd.f32 %v2202, %v2203
    %v2205 = vrot.slane %v2204, 1
    %v2206 = vadd.f32 %v2204, %v2205
    %vm2207 = vcmp.eq.f32.partialorder %v2206, 1.0
    %s2208 = smin.f32 %s2147, 0.8
    %s2209 = smin.f32 %s2150, 0.8
    %s2210 = smul.f32 %s2208, %s2209
    %s2211 = smul.f32 %s2147, %s2150
    %s2212 = sadd.f32 %s2211, 0.64
    %s2213 = ssub.f32 %s2212, %s2210
    %v2214 = vstv %s2213
    %v2215 = vrcp.pop %v2214
    %s2216 = vtos %v2215
    %s2217 = smul.f32 %s2210, %s2216
    %v2218 = vstv %s2217
    %v2219 = vsel %vm2171, 0.0, %v2218
    %s2220 = smin.f32 %s2147, 1.2
    %s2221 = smin.f32 %s2150, 2.0
    %s2222 = smul.f32 %s2220, %s2221
    %s2223 = sadd.f32 %s2211, 2.4
    %s2224 = ssub.f32 %s2223, %s2222
    %v2225 = vstv %s2224
    %v2226 = vrcp.pop %v2225
    %s2227 = vtos %v2226
    %s2228 = smul.f32 %s2222, %s2227
    %v2229 = vstv %s2228
    %v2230 = vsel %vm2189, 0.0, %v2229
    %s2231 = smin.f32 %s2147, 2.0
    %s2232 = smin.f32 %s2150, 1.2
    %s2233 = smul.f32 %s2231, %s2232
    %s2234 = ssub.f32 %s2223, %s2233
    %v2235 = vstv %s2234
    %v2236 = vrcp.pop %v2235
    %s2237 = vtos %v2236
    %s2238 = smul.f32 %s2233, %s2237
    %v2239 = vstv %s2238
    %v2240 = vsel %vm2207, 0.0, %v2239
    %v2241 = vmax.f32 %v2219, %v2230
    %v2242 = vmax.f32 %v2241, %v2240
    %vm2243 = vcmp.eq.f32.partialorder %v2230, %v2242
    %v2244 = vsel %vm2243, 1, 2
    %vm2245 = vcmp.eq.f32.partialorder %v2219, %v2242
    %v2246 = vsel %vm2245, 0, %v2244
    %vm2247 = vcmp.ge.f32.partialorder %v2242, 0.4
    %vm2248 = vmand %vm2247, %vm2057
    %vm2249 = vcmp.eq.s32.totalorder %v2246, 1
    %v2250 = vsel %vm2249, 1.2, 0.8
    %v2251 = vsel %vm2249, 2.0, 0.8
    %vm2252 = vcmp.eq.s32.totalorder %v2246, 2
    %v2253 = vsel %vm2252, 2.0, %v2250
    %v2254 = vsel %vm2252, 1.2, %v2251
    %v2255 = vstv %s2147
    %v2256 = vrcp.pop %v2253
    %v2257 = vmul.f32 %v2255, %v2256
    %v2258 = vadd.f32 %v2257, 1e-06
    %v2259 = vlog2.pop %v2258
    %v2260 = vmul.f32 %v2259, 0.6931472
    %v2261 = vstv %s2150
    %v2262 = vrcp.pop %v2254
    %v2263 = vmul.f32 %v2261, %v2262
    %v2264 = vadd.f32 %v2263, 1e-06
    %v2265 = vlog2.pop %v2264
    %v2266 = vmul.f32 %v2265, 0.6931472
    %v2267 = vmul.u32 %v2246, 6
    %v2268 = vstv %s2153
    %v2269 = vadd.s32 %v2268, %v2267
    %v2270 = vsub.s32 %v31, %v2269
    %v2271 = vsub.s32 %v34, %v2269
    %vm2272 = vcmp.eq.s32.totalorder %v2270, 1
    %vm2273 = vcmp.eq.s32.totalorder %v2271, 1
    %vm2274 = vcmp.eq.s32.totalorder %v2270, 2
    %vm2275 = vcmp.eq.s32.totalorder %v2271, 2
    %vm2276 = vcmp.eq.s32.totalorder %v2270, 3
    %vm2277 = vcmp.eq.s32.totalorder %v2271, 3
    %vm2278 = vcmp.eq.s32.totalorder %v2270, 4
    %vm2279 = vcmp.eq.s32.totalorder %v2271, 4
    %v2280 = vsel %vm2278, %v2266, 1.0
    %v2281 = vsel %vm2279, %v2266, 1.0
    %v2282 = vsel %vm2276, %v2260, %v2280
    %v2283 = vsel %vm2277, %v2260, %v2281
    %v2284 = vstv %s2144
    %v2285 = vsel %vm2274, %v2284, %v2282
    %v2286 = vsel %vm2275, %v2284, %v2283
    %v2287 = vstv %s2142
    %v2288 = vsel %vm2272, %v2287, %v2285
    %v2289 = vsel %vm2273, %v2287, %v2286
    %vm2290 = vcmp.ge.s32.totalorder %v2270, 0
    %vm2291 = vcmp.ge.s32.totalorder %v2271, 0
    %v2292 = vsel %vm2248, 1, 0
    %vm2293 = vcmp.eq.s32.totalorder %v2292, 1
    %vm2294 = vmand %vm2293, %vm2290
    %vm2295 = vmand %vm2293, %vm2291
    %vm2296 = vcmp.lt.s32.totalorder %v2270, 6
    %vm2297 = vcmp.lt.s32.totalorder %v2271, 6
    %vm2298 = vmand %vm2294, %vm2296
    %vm2299 = vmand %vm2295, %vm2297
    %v2300 = vsel %vm2298, %v2288, %v1947
    %v2301 = vsel %vm2299, %v2289, %v1948
    %vm2302 = vcmp.gt.f32.partialorder %v2219, 0.5
    %vm2303 = vcmp.ne.f32.partialorder %v2219, %v2242
    %vm2304 = vmand %vm2302, %vm2303
    %vm2305 = vcmp.gt.f32.partialorder %v2230, 0.5
    %vm2306 = vcmp.ne.f32.partialorder %v2230, %v2242
    %vm2307 = vmand %vm2305, %vm2306
    %vm2308 = vcmp.gt.f32.partialorder %v2240, 0.5
    %vm2309 = vcmp.ne.f32.partialorder %v2240, %v2242
    %vm2310 = vmand %vm2308, %vm2309
    %v2311 = vsel %vm2304, 1, 0
    %v2312 = vsel %vm2307, 1, 0
    %v2313 = vadd.s32 %v2311, %v2312
    %v2314 = vsel %vm2310, 1, 0
    %v2315 = vadd.s32 %v2313, %v2314
    %vm2316 = vcmp.ge.s32.totalorder %v2315, 2
    %vm2317 = vmand %vm2248, %vm2316
    %vm2318 = vcmp.eq.s32.totalorder %v31, %v2268
    %vm2319 = vcmp.eq.s32.totalorder %v34, %v2268
    %vm2320 = vcmp.eq.s32.totalorder %v2311, 1
    %vm2321 = vmand %vm2320, %vm2318
    %vm2322 = vmand %vm2320, %vm2319
    %s2323 = sadd.s32 %s2153, 6
    %v2324 = vstv %s2323
    %vm2325 = vcmp.eq.s32.totalorder %v31, %v2324
    %vm2326 = vcmp.eq.s32.totalorder %v34, %v2324
    %vm2327 = vcmp.eq.s32.totalorder %v2312, 1
    %vm2328 = vmand %vm2327, %vm2325
    %vm2329 = vmand %vm2327, %vm2326
    %vm2330 = vmor %vm2321, %vm2328
    %vm2331 = vmor %vm2322, %vm2329
    %s2332 = sadd.s32 %s2153, 12
    %v2333 = vstv %s2332
    %vm2334 = vcmp.eq.s32.totalorder %v31, %v2333
    %vm2335 = vcmp.eq.s32.totalorder %v34, %v2333
    %vm2336 = vcmp.eq.s32.totalorder %v2314, 1
    %vm2337 = vmand %vm2336, %vm2334
    %vm2338 = vmand %vm2336, %vm2335
    %vm2339 = vmor %vm2330, %vm2337
    %vm2340 = vmor %vm2331, %vm2338
    %v2341 = vsel %vm2317, 1, 0
    %vm2342 = vcmp.eq.s32.totalorder %v2341, 1
    %vm2343 = vmand %vm2342, %vm2339
    %vm2344 = vmand %vm2342, %vm2340
    %v2345 = vsel %vm2343, -1.0, %v2300
    %v2346 = vsel %vm2344, -1.0, %v2301
    %s2347 = sld [smem:[#allocation3 + $0x18]]
    %s2348 = sld [smem:[#allocation3 + $0x19]]
    %s2349 = sld [smem:[#allocation3 + $0x1a]]
    %s2350 = sld [smem:[#allocation3 + $0x1b]]
    %v2351 = vrcp.pop 8.0
    %s2352 = vtos %v2351
    %s2353 = smul.f32 %s2347, %s2352
    %v2354 = vrcp.pop 8.0
    %s2355 = vtos %v2354
    %s2356 = smul.f32 %s2348, %s2355
    %s2357 = scvt.f32.s32.to.zero.pseudo %s2353
    %s2358 = scvt.f32.s32.to.zero.pseudo %s2356
    %s2359 = scvt.s32.f32 %s2357
    %s2360 = ssub.f32 %s2353, %s2359
    %s2361 = scvt.s32.f32 %s2358
    %s2362 = ssub.f32 %s2356, %s2361
    %v2363 = vrcp.pop 8.0
    %s2364 = vtos %v2363
    %s2365 = smul.f32 %s2349, %s2364
    %v2366 = vrcp.pop 8.0
    %s2367 = vtos %v2366
    %s2368 = smul.f32 %s2350, %s2367
    %s2369 = smul.u32 %s2357, 4
    %s2370 = sadd.s32 %s2369, %s2358
    %s2371 = smul.u32 %s2370, 18
    %s2372 = sadd.s32 %s2371, 5
    %v2373 = vstv %s2372
    %vm2374 = vcmp.eq.s32.totalorder %v31, %v2373
    %v2375 = vsel %vm2374, %v2132, 0.0
    %2376 = vadd.xlane.f32.xlu0 %v2375
    %v2377 = vpop.xlane.xlu0 %2376
    %v2378 = vrot.slane %v2377, 4
    %v2379 = vadd.f32 %v2377, %v2378
    %v2380 = vrot.slane %v2379, 2
    %v2381 = vadd.f32 %v2379, %v2380
    %v2382 = vrot.slane %v2381, 1
    %v2383 = vadd.f32 %v2381, %v2382
    %vm2384 = vcmp.eq.f32.partialorder %v2383, 1.0
    %s2385 = sadd.s32 %s2371, 11
    %v2386 = vstv %s2385
    %vm2387 = vcmp.eq.s32.totalorder %v31, %v2386
    %v2388 = vsel %vm2387, %v2132, 0.0
    %2389 = vadd.xlane.f32.xlu0 %v2388
    %v2390 = vpop.xlane.xlu0 %2389
    %v2391 = vrot.slane %v2390, 4
    %v2392 = vadd.f32 %v2390, %v2391
    %v2393 = vrot.slane %v2392, 2
    %v2394 = vadd.f32 %v2392, %v2393
    %v2395 = vrot.slane %v2394, 1
    %v2396 = vadd.f32 %v2394, %v2395
    %vm2397 = vcmp.eq.f32.partialorder %v2396, 1.0
    %s2398 = sadd.s32 %s2371, 17
    %v2399 = vstv %s2398
    %vm2400 = vcmp.eq.s32.totalorder %v31, %v2399
    %v2401 = vsel %vm2400, %v2132, 0.0
    %2402 = vadd.xlane.f32.xlu0 %v2401
    %v2403 = vpop.xlane.xlu0 %2402
    %v2404 = vrot.slane %v2403, 4
    %v2405 = vadd.f32 %v2403, %v2404
    %v2406 = vrot.slane %v2405, 2
    %v2407 = vadd.f32 %v2405, %v2406
    %v2408 = vrot.slane %v2407, 1
    %v2409 = vadd.f32 %v2407, %v2408
    %vm2410 = vcmp.eq.f32.partialorder %v2409, 1.0
    %s2411 = smin.f32 %s2365, 1.5
    %s2412 = smin.f32 %s2368, 1.5
    %s2413 = smul.f32 %s2411, %s2412
    %s2414 = smul.f32 %s2365, %s2368
    %s2415 = sadd.f32 %s2414, 2.25
    %s2416 = ssub.f32 %s2415, %s2413
    %v2417 = vstv %s2416
    %v2418 = vrcp.pop %v2417
    %s2419 = vtos %v2418
    %s2420 = smul.f32 %s2413, %s2419
    %v2421 = vstv %s2420
    %v2422 = vsel %vm2384, 0.0, %v2421
    %s2423 = smin.f32 %s2365, 2.0
    %s2424 = smin.f32 %s2368, 3.0
    %s2425 = smul.f32 %s2423, %s2424
    %s2426 = sadd.f32 %s2414, 6.0
    %s2427 = ssub.f32 %s2426, %s2425
    %v2428 = vstv %s2427
    %v2429 = vrcp.pop %v2428
    %s2430 = vtos %v2429
    %s2431 = smul.f32 %s2425, %s2430
    %v2432 = vstv %s2431
    %v2433 = vsel %vm2397, 0.0, %v2432
    %s2434 = smin.f32 %s2365, 3.5
    %s2435 = smin.f32 %s2368, 2.5
    %s2436 = smul.f32 %s2434, %s2435
    %s2437 = sadd.f32 %s2414, 8.75
    %s2438 = ssub.f32 %s2437, %s2436
    %v2439 = vstv %s2438
    %v2440 = vrcp.pop %v2439
    %s2441 = vtos %v2440
    %s2442 = smul.f32 %s2436, %s2441
    %v2443 = vstv %s2442
    %v2444 = vsel %vm2410, 0.0, %v2443
    %v2445 = vmax.f32 %v2422, %v2433
    %v2446 = vmax.f32 %v2445, %v2444
    %vm2447 = vcmp.eq.f32.partialorder %v2433, %v2446
    %v2448 = vsel %vm2447, 1, 2
    %vm2449 = vcmp.eq.f32.partialorder %v2422, %v2446
    %v2450 = vsel %vm2449, 0, %v2448
    %vm2451 = vcmp.ge.f32.partialorder %v2446, 0.4
    %p2452 = scmp.gt.s32.totalorder %s25, 6
    %s2453 = scalar_select %p2452, 1, 0
    %v2454 = vstv %s2453
    %vm2455 = vcmp.eq.s32.totalorder %v2454, 1
    %vm2456 = vmand %vm2451, %vm2455
    %vm2457 = vcmp.eq.s32.totalorder %v2450, 1
    %v2458 = vsel %vm2457, 2.0, 1.5
    %v2459 = vsel %vm2457, 3.0, 1.5
    %vm2460 = vcmp.eq.s32.totalorder %v2450, 2
    %v2461 = vsel %vm2460, 3.5, %v2458
    %v2462 = vsel %vm2460, 2.5, %v2459
    %v2463 = vstv %s2365
    %v2464 = vrcp.pop %v2461
    %v2465 = vmul.f32 %v2463, %v2464
    %v2466 = vadd.f32 %v2465, 1e-06
    %v2467 = vlog2.pop %v2466
    %v2468 = vmul.f32 %v2467, 0.6931472
    %v2469 = vstv %s2368
    %v2470 = vrcp.pop %v2462
    %v2471 = vmul.f32 %v2469, %v2470
    %v2472 = vadd.f32 %v2471, 1e-06
    %v2473 = vlog2.pop %v2472
    %v2474 = vmul.f32 %v2473, 0.6931472
    %v2475 = vmul.u32 %v2450, 6
    %v2476 = vstv %s2371
    %v2477 = vadd.s32 %v2476, %v2475
    %v2478 = vsub.s32 %v31, %v2477
    %vm2479 = vcmp.eq.s32.totalorder %v2478, 1
    %vm2480 = vcmp.eq.s32.totalorder %v2478, 2
    %vm2481 = vcmp.eq.s32.totalorder %v2478, 3
    %vm2482 = vcmp.eq.s32.totalorder %v2478, 4
    %v2483 = vsel %vm2482, %v2474, 1.0
    %v2484 = vsel %vm2481, %v2468, %v2483
    %v2485 = vstv %s2362
    %v2486 = vsel %vm2480, %v2485, %v2484
    %v2487 = vstv %s2360
    %v2488 = vsel %vm2479, %v2487, %v2486
    %vm2489 = vcmp.ge.s32.totalorder %v2478, 0
    %v2490 = vsel %vm2456, 1, 0
    %vm2491 = vcmp.eq.s32.totalorder %v2490, 1
    %vm2492 = vmand %vm2491, %vm2489
    %vm2493 = vcmp.lt.s32.totalorder %v2478, 6
    %vm2494 = vmand %vm2492, %vm2493
    %v2495 = vsel %vm2494, %v2488, %v2132
    %vm2496 = vcmp.gt.f32.partialorder %v2422, 0.5
    %vm2497 = vcmp.ne.f32.partialorder %v2422, %v2446
    %vm2498 = vmand %vm2496, %vm2497
    %vm2499 = vcmp.gt.f32.partialorder %v2433, 0.5
    %vm2500 = vcmp.ne.f32.partialorder %v2433, %v2446
    %vm2501 = vmand %vm2499, %vm2500
    %vm2502 = vcmp.gt.f32.partialorder %v2444, 0.5
    %vm2503 = vcmp.ne.f32.partialorder %v2444, %v2446
    %vm2504 = vmand %vm2502, %vm2503
    %v2505 = vsel %vm2498, 1, 0
    %v2506 = vsel %vm2501, 1, 0
    %v2507 = vadd.s32 %v2505, %v2506
    %v2508 = vsel %vm2504, 1, 0
    %v2509 = vadd.s32 %v2507, %v2508
    %vm2510 = vcmp.ge.s32.totalorder %v2509, 2
    %vm2511 = vmand %vm2456, %vm2510
    %vm2512 = vcmp.eq.s32.totalorder %v31, %v2476
    %vm2513 = vcmp.eq.s32.totalorder %v2505, 1
    %vm2514 = vmand %vm2513, %vm2512
    %s2515 = sadd.s32 %s2371, 6
    %v2516 = vstv %s2515
    %vm2517 = vcmp.eq.s32.totalorder %v31, %v2516
    %vm2518 = vcmp.eq.s32.totalorder %v2506, 1
    %vm2519 = vmand %vm2518, %vm2517
    %vm2520 = vmor %vm2514, %vm2519
    %s2521 = sadd.s32 %s2371, 12
    %v2522 = vstv %s2521
    %vm2523 = vcmp.eq.s32.totalorder %v31, %v2522
    %vm2524 = vcmp.eq.s32.totalorder %v2508, 1
    %vm2525 = vmand %vm2524, %vm2523
    %vm2526 = vmor %vm2520, %vm2525
    %v2527 = vsel %vm2511, 1, 0
    %vm2528 = vcmp.eq.s32.totalorder %v2527, 1
    %vm2529 = vmand %vm2528, %vm2526
    %v2530 = vsel %vm2529, -1.0, %v2495
    %v2531 = vrcp.pop 4.0
    %s2532 = vtos %v2531
    %s2533 = smul.f32 %s2347, %s2532
    %v2534 = vrcp.pop 4.0
    %s2535 = vtos %v2534
    %s2536 = smul.f32 %s2348, %s2535
    %s2537 = scvt.f32.s32.to.zero.pseudo %s2533
    %s2538 = scvt.f32.s32.to.zero.pseudo %s2536
    %s2539 = scvt.s32.f32 %s2537
    %s2540 = ssub.f32 %s2533, %s2539
    %s2541 = scvt.s32.f32 %s2538
    %s2542 = ssub.f32 %s2536, %s2541
    %v2543 = vrcp.pop 4.0
    %s2544 = vtos %v2543
    %s2545 = smul.f32 %s2349, %s2544
    %v2546 = vrcp.pop 4.0
    %s2547 = vtos %v2546
    %s2548 = smul.f32 %s2350, %s2547
    %s2549 = smul.u32 %s2537, 8
    %s2550 = sadd.s32 %s2549, %s2538
    %s2551 = smul.u32 %s2550, 18
    %s2552 = sadd.s32 %s2551, 5
    %v2553 = vstv %s2552
    %vm2554 = vcmp.eq.s32.totalorder %v31, %v2553
    %vm2555 = vcmp.eq.s32.totalorder %v34, %v2553
    %v2556 = vsel %vm2554, %v2345, 0.0
    %v2557 = vsel %vm2555, %v2346, 0.0
    %2558 = vadd.xlane.f32.xlu0 %v2556
    %v2559 = vpop.xlane.xlu0 %2558
    %2560 = vadd.xlane.f32.xlu0 %v2557
    %v2561 = vpop.xlane.xlu0 %2560
    %v2562 = vadd.f32 %v2559, %v2561
    %v2563 = vrot.slane %v2562, 4
    %v2564 = vadd.f32 %v2562, %v2563
    %v2565 = vrot.slane %v2564, 2
    %v2566 = vadd.f32 %v2564, %v2565
    %v2567 = vrot.slane %v2566, 1
    %v2568 = vadd.f32 %v2566, %v2567
    %vm2569 = vcmp.eq.f32.partialorder %v2568, 1.0
    %s2570 = sadd.s32 %s2551, 11
    %v2571 = vstv %s2570
    %vm2572 = vcmp.eq.s32.totalorder %v31, %v2571
    %vm2573 = vcmp.eq.s32.totalorder %v34, %v2571
    %v2574 = vsel %vm2572, %v2345, 0.0
    %v2575 = vsel %vm2573, %v2346, 0.0
    %2576 = vadd.xlane.f32.xlu0 %v2574
    %v2577 = vpop.xlane.xlu0 %2576
    %2578 = vadd.xlane.f32.xlu0 %v2575
    %v2579 = vpop.xlane.xlu0 %2578
    %v2580 = vadd.f32 %v2577, %v2579
    %v2581 = vrot.slane %v2580, 4
    %v2582 = vadd.f32 %v2580, %v2581
    %v2583 = vrot.slane %v2582, 2
    %v2584 = vadd.f32 %v2582, %v2583
    %v2585 = vrot.slane %v2584, 1
    %v2586 = vadd.f32 %v2584, %v2585
    %vm2587 = vcmp.eq.f32.partialorder %v2586, 1.0
    %s2588 = sadd.s32 %s2551, 17
    %v2589 = vstv %s2588
    %vm2590 = vcmp.eq.s32.totalorder %v31, %v2589
    %vm2591 = vcmp.eq.s32.totalorder %v34, %v2589
    %v2592 = vsel %vm2590, %v2345, 0.0
    %v2593 = vsel %vm2591, %v2346, 0.0
    %2594 = vadd.xlane.f32.xlu0 %v2592
    %v2595 = vpop.xlane.xlu0 %2594
    %2596 = vadd.xlane.f32.xlu0 %v2593
    %v2597 = vpop.xlane.xlu0 %2596
    %v2598 = vadd.f32 %v2595, %v2597
    %v2599 = vrot.slane %v2598, 4
    %v2600 = vadd.f32 %v2598, %v2599
    %v2601 = vrot.slane %v2600, 2
    %v2602 = vadd.f32 %v2600, %v2601
    %v2603 = vrot.slane %v2602, 1
    %v2604 = vadd.f32 %v2602, %v2603
    %vm2605 = vcmp.eq.f32.partialorder %v2604, 1.0
    %s2606 = smin.f32 %s2545, 0.8
    %s2607 = smin.f32 %s2548, 0.8
    %s2608 = smul.f32 %s2606, %s2607
    %s2609 = smul.f32 %s2545, %s2548
    %s2610 = sadd.f32 %s2609, 0.64
    %s2611 = ssub.f32 %s2610, %s2608
    %v2612 = vstv %s2611
    %v2613 = vrcp.pop %v2612
    %s2614 = vtos %v2613
    %s2615 = smul.f32 %s2608, %s2614
    %v2616 = vstv %s2615
    %v2617 = vsel %vm2569, 0.0, %v2616
    %s2618 = smin.f32 %s2545, 1.2
    %s2619 = smin.f32 %s2548, 2.0
    %s2620 = smul.f32 %s2618, %s2619
    %s2621 = sadd.f32 %s2609, 2.4
    %s2622 = ssub.f32 %s2621, %s2620
    %v2623 = vstv %s2622
    %v2624 = vrcp.pop %v2623
    %s2625 = vtos %v2624
    %s2626 = smul.f32 %s2620, %s2625
    %v2627 = vstv %s2626
    %v2628 = vsel %vm2587, 0.0, %v2627
    %s2629 = smin.f32 %s2545, 2.0
    %s2630 = smin.f32 %s2548, 1.2
    %s2631 = smul.f32 %s2629, %s2630
    %s2632 = ssub.f32 %s2621, %s2631
    %v2633 = vstv %s2632
    %v2634 = vrcp.pop %v2633
    %s2635 = vtos %v2634
    %s2636 = smul.f32 %s2631, %s2635
    %v2637 = vstv %s2636
    %v2638 = vsel %vm2605, 0.0, %v2637
    %v2639 = vmax.f32 %v2617, %v2628
    %v2640 = vmax.f32 %v2639, %v2638
    %vm2641 = vcmp.eq.f32.partialorder %v2628, %v2640
    %v2642 = vsel %vm2641, 1, 2
    %vm2643 = vcmp.eq.f32.partialorder %v2617, %v2640
    %v2644 = vsel %vm2643, 0, %v2642
    %vm2645 = vcmp.ge.f32.partialorder %v2640, 0.4
    %vm2646 = vmand %vm2645, %vm2455
    %vm2647 = vcmp.eq.s32.totalorder %v2644, 1
    %v2648 = vsel %vm2647, 1.2, 0.8
    %v2649 = vsel %vm2647, 2.0, 0.8
    %vm2650 = vcmp.eq.s32.totalorder %v2644, 2
    %v2651 = vsel %vm2650, 2.0, %v2648
    %v2652 = vsel %vm2650, 1.2, %v2649
    %v2653 = vstv %s2545
    %v2654 = vrcp.pop %v2651
    %v2655 = vmul.f32 %v2653, %v2654
    %v2656 = vadd.f32 %v2655, 1e-06
    %v2657 = vlog2.pop %v2656
    %v2658 = vmul.f32 %v2657, 0.6931472
    %v2659 = vstv %s2548
    %v2660 = vrcp.pop %v2652
    %v2661 = vmul.f32 %v2659, %v2660
    %v2662 = vadd.f32 %v2661, 1e-06
    %v2663 = vlog2.pop %v2662
    %v2664 = vmul.f32 %v2663, 0.6931472
    %v2665 = vmul.u32 %v2644, 6
    %v2666 = vstv %s2551
    %v2667 = vadd.s32 %v2666, %v2665
    %v2668 = vsub.s32 %v31, %v2667
    %v2669 = vsub.s32 %v34, %v2667
    %vm2670 = vcmp.eq.s32.totalorder %v2668, 1
    %vm2671 = vcmp.eq.s32.totalorder %v2669, 1
    %vm2672 = vcmp.eq.s32.totalorder %v2668, 2
    %vm2673 = vcmp.eq.s32.totalorder %v2669, 2
    %vm2674 = vcmp.eq.s32.totalorder %v2668, 3
    %vm2675 = vcmp.eq.s32.totalorder %v2669, 3
    %vm2676 = vcmp.eq.s32.totalorder %v2668, 4
    %vm2677 = vcmp.eq.s32.totalorder %v2669, 4
    %v2678 = vsel %vm2676, %v2664, 1.0
    %v2679 = vsel %vm2677, %v2664, 1.0
    %v2680 = vsel %vm2674, %v2658, %v2678
    %v2681 = vsel %vm2675, %v2658, %v2679
    %v2682 = vstv %s2542
    %v2683 = vsel %vm2672, %v2682, %v2680
    %v2684 = vsel %vm2673, %v2682, %v2681
    %v2685 = vstv %s2540
    %v2686 = vsel %vm2670, %v2685, %v2683
    %v2687 = vsel %vm2671, %v2685, %v2684
    %vm2688 = vcmp.ge.s32.totalorder %v2668, 0
    %vm2689 = vcmp.ge.s32.totalorder %v2669, 0
    %v2690 = vsel %vm2646, 1, 0
    %vm2691 = vcmp.eq.s32.totalorder %v2690, 1
    %vm2692 = vmand %vm2691, %vm2688
    %vm2693 = vmand %vm2691, %vm2689
    %vm2694 = vcmp.lt.s32.totalorder %v2668, 6
    %vm2695 = vcmp.lt.s32.totalorder %v2669, 6
    %vm2696 = vmand %vm2692, %vm2694
    %vm2697 = vmand %vm2693, %vm2695
    %v2698 = vsel %vm2696, %v2686, %v2345
    %v2699 = vsel %vm2697, %v2687, %v2346
    %vm2700 = vcmp.gt.f32.partialorder %v2617, 0.5
    %vm2701 = vcmp.ne.f32.partialorder %v2617, %v2640
    %vm2702 = vmand %vm2700, %vm2701
    %vm2703 = vcmp.gt.f32.partialorder %v2628, 0.5
    %vm2704 = vcmp.ne.f32.partialorder %v2628, %v2640
    %vm2705 = vmand %vm2703, %vm2704
    %vm2706 = vcmp.gt.f32.partialorder %v2638, 0.5
    %vm2707 = vcmp.ne.f32.partialorder %v2638, %v2640
    %vm2708 = vmand %vm2706, %vm2707
    %v2709 = vsel %vm2702, 1, 0
    %v2710 = vsel %vm2705, 1, 0
    %v2711 = vadd.s32 %v2709, %v2710
    %v2712 = vsel %vm2708, 1, 0
    %v2713 = vadd.s32 %v2711, %v2712
    %vm2714 = vcmp.ge.s32.totalorder %v2713, 2
    %vm2715 = vmand %vm2646, %vm2714
    %vm2716 = vcmp.eq.s32.totalorder %v31, %v2666
    %vm2717 = vcmp.eq.s32.totalorder %v34, %v2666
    %vm2718 = vcmp.eq.s32.totalorder %v2709, 1
    %vm2719 = vmand %vm2718, %vm2716
    %vm2720 = vmand %vm2718, %vm2717
    %s2721 = sadd.s32 %s2551, 6
    %v2722 = vstv %s2721
    %vm2723 = vcmp.eq.s32.totalorder %v31, %v2722
    %vm2724 = vcmp.eq.s32.totalorder %v34, %v2722
    %vm2725 = vcmp.eq.s32.totalorder %v2710, 1
    %vm2726 = vmand %vm2725, %vm2723
    %vm2727 = vmand %vm2725, %vm2724
    %vm2728 = vmor %vm2719, %vm2726
    %vm2729 = vmor %vm2720, %vm2727
    %s2730 = sadd.s32 %s2551, 12
    %v2731 = vstv %s2730
    %vm2732 = vcmp.eq.s32.totalorder %v31, %v2731
    %vm2733 = vcmp.eq.s32.totalorder %v34, %v2731
    %vm2734 = vcmp.eq.s32.totalorder %v2712, 1
    %vm2735 = vmand %vm2734, %vm2732
    %vm2736 = vmand %vm2734, %vm2733
    %vm2737 = vmor %vm2728, %vm2735
    %vm2738 = vmor %vm2729, %vm2736
    %v2739 = vsel %vm2715, 1, 0
    %vm2740 = vcmp.eq.s32.totalorder %v2739, 1
    %vm2741 = vmand %vm2740, %vm2737
    %vm2742 = vmand %vm2740, %vm2738
    %v2743 = vsel %vm2741, -1.0, %v2698
    %v2744 = vsel %vm2742, -1.0, %v2699
    %s2745 = sld [smem:[#allocation3 + $0x1c]]
    %s2746 = sld [smem:[#allocation3 + $0x1d]]
    %s2747 = sld [smem:[#allocation3 + $0x1e]]
    %s2748 = sld [smem:[#allocation3 + $0x1f]]
    %v2749 = vrcp.pop 8.0
    %s2750 = vtos %v2749
    %s2751 = smul.f32 %s2745, %s2750
    %v2752 = vrcp.pop 8.0
    %s2753 = vtos %v2752
    %s2754 = smul.f32 %s2746, %s2753
    %s2755 = scvt.f32.s32.to.zero.pseudo %s2751
    %s2756 = scvt.f32.s32.to.zero.pseudo %s2754
    %s2757 = scvt.s32.f32 %s2755
    %s2758 = ssub.f32 %s2751, %s2757
    %s2759 = scvt.s32.f32 %s2756
    %s2760 = ssub.f32 %s2754, %s2759
    %v2761 = vrcp.pop 8.0
    %s2762 = vtos %v2761
    %s2763 = smul.f32 %s2747, %s2762
    %v2764 = vrcp.pop 8.0
    %s2765 = vtos %v2764
    %s2766 = smul.f32 %s2748, %s2765
    %s2767 = smul.u32 %s2755, 4
    %s2768 = sadd.s32 %s2767, %s2756
    %s2769 = smul.u32 %s2768, 18
    %s2770 = sadd.s32 %s2769, 5
    %v2771 = vstv %s2770
    %vm2772 = vcmp.eq.s32.totalorder %v31, %v2771
    %v2773 = vsel %vm2772, %v2530, 0.0
    %2774 = vadd.xlane.f32.xlu0 %v2773
    %v2775 = vpop.xlane.xlu0 %2774
    %v2776 = vrot.slane %v2775, 4
    %v2777 = vadd.f32 %v2775, %v2776
    %v2778 = vrot.slane %v2777, 2
    %v2779 = vadd.f32 %v2777, %v2778
    %v2780 = vrot.slane %v2779, 1
    %v2781 = vadd.f32 %v2779, %v2780
    %vm2782 = vcmp.eq.f32.partialorder %v2781, 1.0
    %s2783 = sadd.s32 %s2769, 11
    %v2784 = vstv %s2783
    %vm2785 = vcmp.eq.s32.totalorder %v31, %v2784
    %v2786 = vsel %vm2785, %v2530, 0.0
    %2787 = vadd.xlane.f32.xlu0 %v2786
    %v2788 = vpop.xlane.xlu0 %2787
    %v2789 = vrot.slane %v2788, 4
    %v2790 = vadd.f32 %v2788, %v2789
    %v2791 = vrot.slane %v2790, 2
    %v2792 = vadd.f32 %v2790, %v2791
    %v2793 = vrot.slane %v2792, 1
    %v2794 = vadd.f32 %v2792, %v2793
    %vm2795 = vcmp.eq.f32.partialorder %v2794, 1.0
    %s2796 = sadd.s32 %s2769, 17
    %v2797 = vstv %s2796
    %vm2798 = vcmp.eq.s32.totalorder %v31, %v2797
    %v2799 = vsel %vm2798, %v2530, 0.0
    %2800 = vadd.xlane.f32.xlu0 %v2799
    %v2801 = vpop.xlane.xlu0 %2800
    %v2802 = vrot.slane %v2801, 4
    %v2803 = vadd.f32 %v2801, %v2802
    %v2804 = vrot.slane %v2803, 2
    %v2805 = vadd.f32 %v2803, %v2804
    %v2806 = vrot.slane %v2805, 1
    %v2807 = vadd.f32 %v2805, %v2806
    %vm2808 = vcmp.eq.f32.partialorder %v2807, 1.0
    %s2809 = smin.f32 %s2763, 1.5
    %s2810 = smin.f32 %s2766, 1.5
    %s2811 = smul.f32 %s2809, %s2810
    %s2812 = smul.f32 %s2763, %s2766
    %s2813 = sadd.f32 %s2812, 2.25
    %s2814 = ssub.f32 %s2813, %s2811
    %v2815 = vstv %s2814
    %v2816 = vrcp.pop %v2815
    %s2817 = vtos %v2816
    %s2818 = smul.f32 %s2811, %s2817
    %v2819 = vstv %s2818
    %v2820 = vsel %vm2782, 0.0, %v2819
    %s2821 = smin.f32 %s2763, 2.0
    %s2822 = smin.f32 %s2766, 3.0
    %s2823 = smul.f32 %s2821, %s2822
    %s2824 = sadd.f32 %s2812, 6.0
    %s2825 = ssub.f32 %s2824, %s2823
    %v2826 = vstv %s2825
    %v2827 = vrcp.pop %v2826
    %s2828 = vtos %v2827
    %s2829 = smul.f32 %s2823, %s2828
    %v2830 = vstv %s2829
    %v2831 = vsel %vm2795, 0.0, %v2830
    %s2832 = smin.f32 %s2763, 3.5
    %s2833 = smin.f32 %s2766, 2.5
    %s2834 = smul.f32 %s2832, %s2833
    %s2835 = sadd.f32 %s2812, 8.75
    %s2836 = ssub.f32 %s2835, %s2834
    %v2837 = vstv %s2836
    %v2838 = vrcp.pop %v2837
    %s2839 = vtos %v2838
    %s2840 = smul.f32 %s2834, %s2839
    %v2841 = vstv %s2840
    %v2842 = vsel %vm2808, 0.0, %v2841
    %v2843 = vmax.f32 %v2820, %v2831
    %v2844 = vmax.f32 %v2843, %v2842
    %vm2845 = vcmp.eq.f32.partialorder %v2831, %v2844
    %v2846 = vsel %vm2845, 1, 2
    %vm2847 = vcmp.eq.f32.partialorder %v2820, %v2844
    %v2848 = vsel %vm2847, 0, %v2846
    %vm2849 = vcmp.ge.f32.partialorder %v2844, 0.4
    %p2850 = scmp.gt.s32.totalorder %s25, 7
    %s2851 = scalar_select %p2850, 1, 0
    %v2852 = vstv %s2851
    %vm2853 = vcmp.eq.s32.totalorder %v2852, 1
    %vm2854 = vmand %vm2849, %vm2853
    %vm2855 = vcmp.eq.s32.totalorder %v2848, 1
    %v2856 = vsel %vm2855, 2.0, 1.5
    %v2857 = vsel %vm2855, 3.0, 1.5
    %vm2858 = vcmp.eq.s32.totalorder %v2848, 2
    %v2859 = vsel %vm2858, 3.5, %v2856
    %v2860 = vsel %vm2858, 2.5, %v2857
    %v2861 = vstv %s2763
    %v2862 = vrcp.pop %v2859
    %v2863 = vmul.f32 %v2861, %v2862
    %v2864 = vadd.f32 %v2863, 1e-06
    %v2865 = vlog2.pop %v2864
    %v2866 = vmul.f32 %v2865, 0.6931472
    %v2867 = vstv %s2766
    %v2868 = vrcp.pop %v2860
    %v2869 = vmul.f32 %v2867, %v2868
    %v2870 = vadd.f32 %v2869, 1e-06
    %v2871 = vlog2.pop %v2870
    %v2872 = vmul.f32 %v2871, 0.6931472
    %v2873 = vmul.u32 %v2848, 6
    %v2874 = vstv %s2769
    %v2875 = vadd.s32 %v2874, %v2873
    %v2876 = vsub.s32 %v31, %v2875
    %vm2877 = vcmp.eq.s32.totalorder %v2876, 1
    %vm2878 = vcmp.eq.s32.totalorder %v2876, 2
    %vm2879 = vcmp.eq.s32.totalorder %v2876, 3
    %vm2880 = vcmp.eq.s32.totalorder %v2876, 4
    %v2881 = vsel %vm2880, %v2872, 1.0
    %v2882 = vsel %vm2879, %v2866, %v2881
    %v2883 = vstv %s2760
    %v2884 = vsel %vm2878, %v2883, %v2882
    %v2885 = vstv %s2758
    %v2886 = vsel %vm2877, %v2885, %v2884
    %vm2887 = vcmp.ge.s32.totalorder %v2876, 0
    %v2888 = vsel %vm2854, 1, 0
    %vm2889 = vcmp.eq.s32.totalorder %v2888, 1
    %vm2890 = vmand %vm2889, %vm2887
    %vm2891 = vcmp.lt.s32.totalorder %v2876, 6
    %vm2892 = vmand %vm2890, %vm2891
    %v2893 = vsel %vm2892, %v2886, %v2530
    %vm2894 = vcmp.gt.f32.partialorder %v2820, 0.5
    %vm2895 = vcmp.ne.f32.partialorder %v2820, %v2844
    %vm2896 = vmand %vm2894, %vm2895
    %vm2897 = vcmp.gt.f32.partialorder %v2831, 0.5
    %vm2898 = vcmp.ne.f32.partialorder %v2831, %v2844
    %vm2899 = vmand %vm2897, %vm2898
    %vm2900 = vcmp.gt.f32.partialorder %v2842, 0.5
    %vm2901 = vcmp.ne.f32.partialorder %v2842, %v2844
    %vm2902 = vmand %vm2900, %vm2901
    %v2903 = vsel %vm2896, 1, 0
    %v2904 = vsel %vm2899, 1, 0
    %v2905 = vadd.s32 %v2903, %v2904
    %v2906 = vsel %vm2902, 1, 0
    %v2907 = vadd.s32 %v2905, %v2906
    %vm2908 = vcmp.ge.s32.totalorder %v2907, 2
    %vm2909 = vmand %vm2854, %vm2908
    %vm2910 = vcmp.eq.s32.totalorder %v31, %v2874
    %vm2911 = vcmp.eq.s32.totalorder %v2903, 1
    %vm2912 = vmand %vm2911, %vm2910
    %s2913 = sadd.s32 %s2769, 6
    %v2914 = vstv %s2913
    %vm2915 = vcmp.eq.s32.totalorder %v31, %v2914
    %vm2916 = vcmp.eq.s32.totalorder %v2904, 1
    %vm2917 = vmand %vm2916, %vm2915
    %vm2918 = vmor %vm2912, %vm2917
    %s2919 = sadd.s32 %s2769, 12
    %v2920 = vstv %s2919
    %vm2921 = vcmp.eq.s32.totalorder %v31, %v2920
    %vm2922 = vcmp.eq.s32.totalorder %v2906, 1
    %vm2923 = vmand %vm2922, %vm2921
    %vm2924 = vmor %vm2918, %vm2923
    %v2925 = vsel %vm2909, 1, 0
    %vm2926 = vcmp.eq.s32.totalorder %v2925, 1
    %vm2927 = vmand %vm2926, %vm2924
    %v2928 = vsel %vm2927, -1.0, %v2893
    %v2929 = vrcp.pop 4.0
    %s2930 = vtos %v2929
    %s2931 = smul.f32 %s2745, %s2930
    %v2932 = vrcp.pop 4.0
    %s2933 = vtos %v2932
    %s2934 = smul.f32 %s2746, %s2933
    %s2935 = scvt.f32.s32.to.zero.pseudo %s2931
    %s2936 = scvt.f32.s32.to.zero.pseudo %s2934
    %s2937 = scvt.s32.f32 %s2935
    %s2938 = ssub.f32 %s2931, %s2937
    %s2939 = scvt.s32.f32 %s2936
    %s2940 = ssub.f32 %s2934, %s2939
    %v2941 = vrcp.pop 4.0
    %s2942 = vtos %v2941
    %s2943 = smul.f32 %s2747, %s2942
    %v2944 = vrcp.pop 4.0
    %s2945 = vtos %v2944
    %s2946 = smul.f32 %s2748, %s2945
    %s2947 = smul.u32 %s2935, 8
    %s2948 = sadd.s32 %s2947, %s2936
    %s2949 = smul.u32 %s2948, 18
    %s2950 = sadd.s32 %s2949, 5
    %v2951 = vstv %s2950
    %vm2952 = vcmp.eq.s32.totalorder %v31, %v2951
    %vm2953 = vcmp.eq.s32.totalorder %v34, %v2951
    %v2954 = vsel %vm2952, %v2743, 0.0
    %v2955 = vsel %vm2953, %v2744, 0.0
    %2956 = vadd.xlane.f32.xlu0 %v2954
    %v2957 = vpop.xlane.xlu0 %2956
    %2958 = vadd.xlane.f32.xlu0 %v2955
    %v2959 = vpop.xlane.xlu0 %2958
    %v2960 = vadd.f32 %v2957, %v2959
    %v2961 = vrot.slane %v2960, 4
    %v2962 = vadd.f32 %v2960, %v2961
    %v2963 = vrot.slane %v2962, 2
    %v2964 = vadd.f32 %v2962, %v2963
    %v2965 = vrot.slane %v2964, 1
    %v2966 = vadd.f32 %v2964, %v2965
    %vm2967 = vcmp.eq.f32.partialorder %v2966, 1.0
    %s2968 = sadd.s32 %s2949, 11
    %v2969 = vstv %s2968
    %vm2970 = vcmp.eq.s32.totalorder %v31, %v2969
    %vm2971 = vcmp.eq.s32.totalorder %v34, %v2969
    %v2972 = vsel %vm2970, %v2743, 0.0
    %v2973 = vsel %vm2971, %v2744, 0.0
    %2974 = vadd.xlane.f32.xlu0 %v2972
    %v2975 = vpop.xlane.xlu0 %2974
    %2976 = vadd.xlane.f32.xlu0 %v2973
    %v2977 = vpop.xlane.xlu0 %2976
    %v2978 = vadd.f32 %v2975, %v2977
    %v2979 = vrot.slane %v2978, 4
    %v2980 = vadd.f32 %v2978, %v2979
    %v2981 = vrot.slane %v2980, 2
    %v2982 = vadd.f32 %v2980, %v2981
    %v2983 = vrot.slane %v2982, 1
    %v2984 = vadd.f32 %v2982, %v2983
    %vm2985 = vcmp.eq.f32.partialorder %v2984, 1.0
    %s2986 = sadd.s32 %s2949, 17
    %v2987 = vstv %s2986
    %vm2988 = vcmp.eq.s32.totalorder %v31, %v2987
    %vm2989 = vcmp.eq.s32.totalorder %v34, %v2987
    %v2990 = vsel %vm2988, %v2743, 0.0
    %v2991 = vsel %vm2989, %v2744, 0.0
    %2992 = vadd.xlane.f32.xlu0 %v2990
    %v2993 = vpop.xlane.xlu0 %2992
    %2994 = vadd.xlane.f32.xlu0 %v2991
    %v2995 = vpop.xlane.xlu0 %2994
    %v2996 = vadd.f32 %v2993, %v2995
    %v2997 = vrot.slane %v2996, 4
    %v2998 = vadd.f32 %v2996, %v2997
    %v2999 = vrot.slane %v2998, 2
    %v3000 = vadd.f32 %v2998, %v2999
    %v3001 = vrot.slane %v3000, 1
    %v3002 = vadd.f32 %v3000, %v3001
    %vm3003 = vcmp.eq.f32.partialorder %v3002, 1.0
    %s3004 = smin.f32 %s2943, 0.8
    %s3005 = smin.f32 %s2946, 0.8
    %s3006 = smul.f32 %s3004, %s3005
    %s3007 = smul.f32 %s2943, %s2946
    %s3008 = sadd.f32 %s3007, 0.64
    %s3009 = ssub.f32 %s3008, %s3006
    %v3010 = vstv %s3009
    %v3011 = vrcp.pop %v3010
    %s3012 = vtos %v3011
    %s3013 = smul.f32 %s3006, %s3012
    %v3014 = vstv %s3013
    %v3015 = vsel %vm2967, 0.0, %v3014
    %s3016 = smin.f32 %s2943, 1.2
    %s3017 = smin.f32 %s2946, 2.0
    %s3018 = smul.f32 %s3016, %s3017
    %s3019 = sadd.f32 %s3007, 2.4
    %s3020 = ssub.f32 %s3019, %s3018
    %v3021 = vstv %s3020
    %v3022 = vrcp.pop %v3021
    %s3023 = vtos %v3022
    %s3024 = smul.f32 %s3018, %s3023
    %v3025 = vstv %s3024
    %v3026 = vsel %vm2985, 0.0, %v3025
    %s3027 = smin.f32 %s2943, 2.0
    %s3028 = smin.f32 %s2946, 1.2
    %s3029 = smul.f32 %s3027, %s3028
    %s3030 = ssub.f32 %s3019, %s3029
    %v3031 = vstv %s3030
    %v3032 = vrcp.pop %v3031
    %s3033 = vtos %v3032
    %s3034 = smul.f32 %s3029, %s3033
    %v3035 = vstv %s3034
    %v3036 = vsel %vm3003, 0.0, %v3035
    %v3037 = vmax.f32 %v3015, %v3026
    %v3038 = vmax.f32 %v3037, %v3036
    %vm3039 = vcmp.eq.f32.partialorder %v3026, %v3038
    %v3040 = vsel %vm3039, 1, 2
    %vm3041 = vcmp.eq.f32.partialorder %v3015, %v3038
    %v3042 = vsel %vm3041, 0, %v3040
    %vm3043 = vcmp.ge.f32.partialorder %v3038, 0.4
    %vm3044 = vmand %vm3043, %vm2853
    %vm3045 = vcmp.eq.s32.totalorder %v3042, 1
    %v3046 = vsel %vm3045, 1.2, 0.8
    %v3047 = vsel %vm3045, 2.0, 0.8
    %vm3048 = vcmp.eq.s32.totalorder %v3042, 2
    %v3049 = vsel %vm3048, 2.0, %v3046
    %v3050 = vsel %vm3048, 1.2, %v3047
    %v3051 = vstv %s2943
    %v3052 = vrcp.pop %v3049
    %v3053 = vmul.f32 %v3051, %v3052
    %v3054 = vadd.f32 %v3053, 1e-06
    %v3055 = vlog2.pop %v3054
    %v3056 = vmul.f32 %v3055, 0.6931472
    %v3057 = vstv %s2946
    %v3058 = vrcp.pop %v3050
    %v3059 = vmul.f32 %v3057, %v3058
    %v3060 = vadd.f32 %v3059, 1e-06
    %v3061 = vlog2.pop %v3060
    %v3062 = vmul.f32 %v3061, 0.6931472
    %v3063 = vmul.u32 %v3042, 6
    %v3064 = vstv %s2949
    %v3065 = vadd.s32 %v3064, %v3063
    %v3066 = vsub.s32 %v31, %v3065
    %v3067 = vsub.s32 %v34, %v3065
    %vm3068 = vcmp.eq.s32.totalorder %v3066, 1
    %vm3069 = vcmp.eq.s32.totalorder %v3067, 1
    %vm3070 = vcmp.eq.s32.totalorder %v3066, 2
    %vm3071 = vcmp.eq.s32.totalorder %v3067, 2
    %vm3072 = vcmp.eq.s32.totalorder %v3066, 3
    %vm3073 = vcmp.eq.s32.totalorder %v3067, 3
    %vm3074 = vcmp.eq.s32.totalorder %v3066, 4
    %vm3075 = vcmp.eq.s32.totalorder %v3067, 4
    %v3076 = vsel %vm3074, %v3062, 1.0
    %v3077 = vsel %vm3075, %v3062, 1.0
    %v3078 = vsel %vm3072, %v3056, %v3076
    %v3079 = vsel %vm3073, %v3056, %v3077
    %v3080 = vstv %s2940
    %v3081 = vsel %vm3070, %v3080, %v3078
    %v3082 = vsel %vm3071, %v3080, %v3079
    %v3083 = vstv %s2938
    %v3084 = vsel %vm3068, %v3083, %v3081
    %v3085 = vsel %vm3069, %v3083, %v3082
    %vm3086 = vcmp.ge.s32.totalorder %v3066, 0
    %vm3087 = vcmp.ge.s32.totalorder %v3067, 0
    %v3088 = vsel %vm3044, 1, 0
    %vm3089 = vcmp.eq.s32.totalorder %v3088, 1
    %vm3090 = vmand %vm3089, %vm3086
    %vm3091 = vmand %vm3089, %vm3087
    %vm3092 = vcmp.lt.s32.totalorder %v3066, 6
    %vm3093 = vcmp.lt.s32.totalorder %v3067, 6
    %vm3094 = vmand %vm3090, %vm3092
    %vm3095 = vmand %vm3091, %vm3093
    %v3096 = vsel %vm3094, %v3084, %v2743
    %v3097 = vsel %vm3095, %v3085, %v2744
    %vm3098 = vcmp.gt.f32.partialorder %v3015, 0.5
    %vm3099 = vcmp.ne.f32.partialorder %v3015, %v3038
    %vm3100 = vmand %vm3098, %vm3099
    %vm3101 = vcmp.gt.f32.partialorder %v3026, 0.5
    %vm3102 = vcmp.ne.f32.partialorder %v3026, %v3038
    %vm3103 = vmand %vm3101, %vm3102
    %vm3104 = vcmp.gt.f32.partialorder %v3036, 0.5
    %vm3105 = vcmp.ne.f32.partialorder %v3036, %v3038
    %vm3106 = vmand %vm3104, %vm3105
    %v3107 = vsel %vm3100, 1, 0
    %v3108 = vsel %vm3103, 1, 0
    %v3109 = vadd.s32 %v3107, %v3108
    %v3110 = vsel %vm3106, 1, 0
    %v3111 = vadd.s32 %v3109, %v3110
    %vm3112 = vcmp.ge.s32.totalorder %v3111, 2
    %vm3113 = vmand %vm3044, %vm3112
    %vm3114 = vcmp.eq.s32.totalorder %v31, %v3064
    %vm3115 = vcmp.eq.s32.totalorder %v34, %v3064
    %vm3116 = vcmp.eq.s32.totalorder %v3107, 1
    %vm3117 = vmand %vm3116, %vm3114
    %vm3118 = vmand %vm3116, %vm3115
    %s3119 = sadd.s32 %s2949, 6
    %v3120 = vstv %s3119
    %vm3121 = vcmp.eq.s32.totalorder %v31, %v3120
    %vm3122 = vcmp.eq.s32.totalorder %v34, %v3120
    %vm3123 = vcmp.eq.s32.totalorder %v3108, 1
    %vm3124 = vmand %vm3123, %vm3121
    %vm3125 = vmand %vm3123, %vm3122
    %vm3126 = vmor %vm3117, %vm3124
    %vm3127 = vmor %vm3118, %vm3125
    %s3128 = sadd.s32 %s2949, 12
    %v3129 = vstv %s3128
    %vm3130 = vcmp.eq.s32.totalorder %v31, %v3129
    %vm3131 = vcmp.eq.s32.totalorder %v34, %v3129
    %vm3132 = vcmp.eq.s32.totalorder %v3110, 1
    %vm3133 = vmand %vm3132, %vm3130
    %vm3134 = vmand %vm3132, %vm3131
    %vm3135 = vmor %vm3126, %vm3133
    %vm3136 = vmor %vm3127, %vm3134
    %v3137 = vsel %vm3113, 1, 0
    %vm3138 = vcmp.eq.s32.totalorder %v3137, 1
    %vm3139 = vmand %vm3138, %vm3135
    %vm3140 = vmand %vm3138, %vm3136
    %v3141 = vsel %vm3139, -1.0, %v3096
    %v3142 = vsel %vm3140, -1.0, %v3097
    %3143 = vst [vmem:[%s2] sm:$0xff] %v2928
    %3144 = vst [vmem:[%s2 + $0x8] sm:$0xff] %v3141
    %3145 = vst [vmem:[%s2 + $0x10] sm:$0xff] %v3142
    // Predicated region
    $region14: #{_encode_targets.1} parent=1 // pred_check
      _
    $region15: #{_encode_targets.1} parent=1 // pred_check_branch
      %3147 = sbr.rel (0) target = $region17
    $region16: #{_encode_targets.1} parent=1 // pred_region
      _
    $region17: #{_encode_targets.1} parent=1 // pred_fallthru
      _
    // Predicated region
    $region18: #{_encode_targets.1} parent=1 // pred_check
      _
    $region19: #{_encode_targets.1} parent=1 // pred_check_branch
      %3149 = sbr.rel (0) target = $region21
    $region20: #{_encode_targets.1} parent=1 // pred_region
      _
    $region21: #{_encode_targets.1} parent=1 // pred_fallthru
      _
    %3150 = vsyncpa [#allocation4], 1

</llo_original>
